<compile_context>
chip_gen: v6e
topology: v6e:2x2x1
jax: 0.10.0
libtpu: 0.0.40
codegen_flags: <defaults>
</compile_context>

<pallas_src>
import functools

import jax
import jax.numpy as jnp
from jax.experimental import pallas as pl
from jax.experimental.pallas import tpu as pltpu


# ----------------------------------------------------------------------------
# Fused kernel helpers (traced inside the kernel body)
# ----------------------------------------------------------------------------
def _im2col(pad_ref, N, H, W, C, dtype):
    """Build the (N*H*W, 9*C) patch matrix from a padded (N,H+2,W+2,C) buffer.

    Each 3x3 tap is cast to `dtype` BEFORE the reshape/concatenate so the
    copy traffic and the patch buffer are in the (narrow) matmul operand dtype.
    """
    taps = []
    for ky in range(3):
        for kx in range(3):
            tap = pad_ref[:, ky:ky + H, kx:kx + W, :]
            taps.append(tap.astype(dtype).reshape(N * H * W, C))
    return jnp.concatenate(taps, axis=1)


def _bn_relu(x, g, b, eps):
    """Training-mode BatchNorm (batch stats, biased var) + ReLU, f32 math."""
    inv_m = 1.0 / x.shape[0]
    mean = jnp.sum(x, axis=0, keepdims=True) * inv_m
    var = jnp.sum(x * x, axis=0, keepdims=True) * inv_m - mean * mean
    scale = g * jax.lax.rsqrt(var + eps)          # rsqrt -> EUP (free slot)
    return jnp.maximum((x - mean) * scale + b, 0.0)


# ----------------------------------------------------------------------------
# Single fused kernel: conv1+BN1+ReLU -> conv2+BN2+ReLU -> conv3+ReLU
# ----------------------------------------------------------------------------
def _estmator_kernel(x_ref, w1_ref, g1_ref, b1_ref, w2_ref, g2_ref, b2_ref,
                     w3_ref, o_ref, xpad, h1pad, h2pad, *,
                     N, H, W, Cin, C1, C2, eps):
    # ---- zero-pad the input inside VMEM (no HBM pad passes) -----------------
    xpad[...] = jnp.zeros_like(xpad)
    xpad[:, 1:H + 1, 1:W + 1, :] = x_ref[...]

    # ---- conv1 (im2col, one bf16 MXU matmul, f32 acc) + BN1 + ReLU ----------
    p1 = _im2col(xpad, N, H, W, Cin, jnp.bfloat16)                 # (M, 9*Cin)
    y1 = jnp.dot(p1, w1_ref[...], preferred_element_type=jnp.float32)
    h1 = _bn_relu(y1, g1_ref[...], b1_ref[...], eps)               # (M, C1) f32

    h1pad[...] = jnp.zeros_like(h1pad)
    h1pad[:, 1:H + 1, 1:W + 1, :] = h1.reshape(N, H, W, C1)

    # ---- conv2 + BN2 + ReLU --------------------------------------------------
    p2 = _im2col(h1pad, N, H, W, C1, jnp.bfloat16)                 # (M, 9*C1)
    y2 = jnp.dot(p2, w2_ref[...], preferred_element_type=jnp.float32)
    h2 = _bn_relu(y2, g2_ref[...], b2_ref[...], eps)               # (M, C2) f32

    h2pad[...] = jnp.zeros_like(h2pad)
    h2pad[:, 1:H + 1, 1:W + 1, :] = h2.reshape(N, H, W, C2)

    # ---- conv3 (Cout=1) + ReLU, lane-dense (1, N*H*W) output ----------------
    p3 = _im2col(h2pad, N, H, W, C2, jnp.float32)                  # (M, 9*C2) f32
    # contract the 9*C2 axis of both operands -> (1, M): fully lane-dense store
    y3 = jax.lax.dot_general(w3_ref[...], p3,
                             (((1,), (1,)), ((), ())),
                             preferred_element_type=jnp.float32)
    o_ref[...] = jnp.maximum(y3, 0.0)


def estmator_forward(x, params, eps=1e-5):
    """x: (N, H, W, Cin) f32 NHWC.  Returns (N, H, W, 1) f32."""
    N, H, W, Cin = x.shape
    C1 = params["w1"].shape[-1]
    C2 = params["w2"].shape[-1]
    assert params["w3"].shape[-1] == 1

    # Weights reshaped for the im2col matmuls; conv1/conv2 operands in bf16
    # (MXU native rate), conv3 kept in f32 (tiny, final layer).
    w1f = params["w1"].reshape(9 * Cin, C1).astype(jnp.bfloat16)
    w2f = params["w2"].reshape(9 * C1, C2).astype(jnp.bfloat16)
    w3f = params["w3"].reshape(1, 9 * C2).astype(jnp.float32)
    g1 = params["g1"].reshape(1, C1).astype(jnp.float32)
    b1 = params["b1"].reshape(1, C1).astype(jnp.float32)
    g2 = params["g2"].reshape(1, C2).astype(jnp.float32)
    b2 = params["b2"].reshape(1, C2).astype(jnp.float32)

    kernel = functools.partial(_estmator_kernel, N=N, H=H, W=W,
                               Cin=Cin, C1=C1, C2=C2, eps=eps)

    def full(shape):
        return pl.BlockSpec(shape, lambda i, _s=shape: (0,) * len(_s))

    out2d = pl.pallas_call(
        kernel,
        out_shape=jax.ShapeDtypeStruct((1, N * H * W), jnp.float32),
        grid=(1,),
        in_specs=[
            full((N, H, W, Cin)),
            full((9 * Cin, C1)), full((1, C1)), full((1, C1)),
            full((9 * C1, C2)), full((1, C2)), full((1, C2)),
            full((1, 9 * C2)),
        ],
        out_specs=full((1, N * H * W)),
        scratch_shapes=[
            pltpu.VMEM((N, H + 2, W + 2, Cin), jnp.float32),   # padded input
            pltpu.VMEM((N, H + 2, W + 2, C1), jnp.float32),    # padded h1
            pltpu.VMEM((N, H + 2, W + 2, C2), jnp.float32),    # padded h2
        ],
        compiler_params=pltpu.CompilerParams(
            dimension_semantics=("arbitrary",),
            vmem_limit_bytes=32 * 1024 * 1024),
    )(x, w1f, g1, b1, w2f, g2, b2, w3f)

    return out2d.reshape(N, H, W, 1)


# ----------------------------------------------------------------------------
# Pure-JAX f32 reference (module semantics) for correctness check
# ----------------------------------------------------------------------------
def _ref_conv(x, w):
    return jax.lax.conv_general_dilated(
        x, w, window_strides=(1, 1), padding=((1, 1), (1, 1)),
        dimension_numbers=("NHWC", "HWIO", "NHWC"))


def _ref_bn_relu(x, g, b, eps=1e-5):
    mean = x.mean(axis=(0, 1, 2), keepdims=True)
    var = ((x - mean) ** 2).mean(axis=(0, 1, 2), keepdims=True)
    y = (x - mean) * jax.lax.rsqrt(var + eps) * g.reshape(1, 1, 1, -1) \
        + b.reshape(1, 1, 1, -1)
    return jnp.maximum(y, 0.0)


def _ref_forward(x, p):
    h = _ref_conv(x, p["w1"])
    h = _ref_bn_relu(h, p["g1"], p["b1"])
    h = _ref_conv(h, p["w2"])
    h = _ref_bn_relu(h, p["g2"], p["b2"])
    h = _ref_conv(h, p["w3"])
    return jnp.maximum(h, 0.0)


if __name__ == "__main__":
    # Small shapes consistent with Estmator(in_channels=16, out_channels=1)
    N, H, W = 2, 16, 16
    C_IN, C1, C2, C_OUT = 16, 128, 64, 1

    key = jax.random.PRNGKey(0)
    kx, kw1, kw2, kw3, kg1, kb1, kg2, kb2 = jax.random.split(key, 8)

    x = jax.random.normal(kx, (N, H, W, C_IN), dtype=jnp.float32)

    params = {
        "w1": 0.05 * jax.random.normal(kw1, (3, 3, C_IN, C1), dtype=jnp.float32),
        "g1": 1.0 + 0.1 * jax.random.normal(kg1, (C1,), dtype=jnp.float32),
        "b1": 0.1 * jax.random.normal(kb1, (C1,), dtype=jnp.float32),
        "w2": 0.05 * jax.random.normal(kw2, (3, 3, C1, C2), dtype=jnp.float32),
        "g2": 1.0 + 0.1 * jax.random.normal(kg2, (C2,), dtype=jnp.float32),
        "b2": 0.1 * jax.random.normal(kb2, (C2,), dtype=jnp.float32),
        "w3": 0.05 * jax.random.normal(kw3, (3, 3, C2, C_OUT), dtype=jnp.float32),
    }

    out = jax.jit(estmator_forward)(x, params)
    out = jax.block_until_ready(out)

    ref = _ref_forward(x, params)
    assert out.shape == (N, H, W, C_OUT), out.shape

    # conv1/conv2 MXU operands are bf16 (f32 accumulation), so allow a small
    # relative error vs the pure-f32 reference.
    rel = float(jnp.linalg.norm(out - ref) / (jnp.linalg.norm(ref) + 1e-8))
    max_err = float(jnp.max(jnp.abs(out - ref)))
    assert rel < 8e-2 and max_err < 3e-1, (rel, max_err)

    print("KERNEL_OK")
</pallas_src>

<mosaic_0001>
module attributes {stable_mosaic.version = 11 : i64} {
  func.func @_estmator_kernel(%arg0: i32, %arg1: memref<2x16x16x16xf32, #tpu.memory_space<vmem>>, %arg2: memref<144x128xbf16, #tpu.memory_space<vmem>>, %arg3: memref<1x128xf32, #tpu.memory_space<vmem>>, %arg4: memref<1x128xf32, #tpu.memory_space<vmem>>, %arg5: memref<1152x64xbf16, #tpu.memory_space<vmem>>, %arg6: memref<1x64xf32, #tpu.memory_space<vmem>>, %arg7: memref<1x64xf32, #tpu.memory_space<vmem>>, %arg8: memref<1x576xf32, #tpu.memory_space<vmem>>, %arg9: memref<1x512xf32, #tpu.memory_space<vmem>>, %arg10: memref<2x18x18x16xf32, #tpu.memory_space<vmem>>, %arg11: memref<2x18x18x128xf32, #tpu.memory_space<vmem>>, %arg12: memref<2x18x18x64xf32, #tpu.memory_space<vmem>>) attributes {dimension_semantics = [#tpu.dimension_semantics<arbitrary>], iteration_bounds = array<i64: 1>, scalar_prefetch = 0 : i64, scratch_operands = 3 : i64, tpu.core_type = #tpu.core_type<tc>, window_params = [{pipeline_mode = #tpu.pipeline_mode<synchronous>, transform_indices = @transform_0, window_bounds = array<i64: 2, 16, 16, 16>}, {pipeline_mode = #tpu.pipeline_mode<synchronous>, transform_indices = @transform_1, window_bounds = array<i64: 144, 128>}, {pipeline_mode = #tpu.pipeline_mode<synchronous>, transform_indices = @transform_2, window_bounds = array<i64: 1, 128>}, {pipeline_mode = #tpu.pipeline_mode<synchronous>, transform_indices = @transform_3, window_bounds = array<i64: 1, 128>}, {pipeline_mode = #tpu.pipeline_mode<synchronous>, transform_indices = @transform_4, window_bounds = array<i64: 1152, 64>}, {pipeline_mode = #tpu.pipeline_mode<synchronous>, transform_indices = @transform_5, window_bounds = array<i64: 1, 64>}, {pipeline_mode = #tpu.pipeline_mode<synchronous>, transform_indices = @transform_6, window_bounds = array<i64: 1, 64>}, {pipeline_mode = #tpu.pipeline_mode<synchronous>, transform_indices = @transform_7, window_bounds = array<i64: 1, 576>}, {pipeline_mode = #tpu.pipeline_mode<synchronous>, transform_indices = @transform_8, window_bounds = array<i64: 1, 512>}]} {
    %cst = arith.constant 0.000000e+00 : f32
    %0 = vector.broadcast %cst : f32 to vector<2x18x18x16xf32>
    %c0 = arith.constant 0 : index
    %c0_0 = arith.constant 0 : index
    %c0_1 = arith.constant 0 : index
    %c0_2 = arith.constant 0 : index
    %1 = vector.load %arg10[%c0, %c0_0, %c0_1, %c0_2] : memref<2x18x18x16xf32, #tpu.memory_space<vmem>>, vector<2x18x18x16xf32>
    tpu.vector_store %arg10[%c0, %c0_0, %c0_1, %c0_2], %0 {strides = array<i32>} : memref<2x18x18x16xf32, #tpu.memory_space<vmem>>, vector<2x18x18x16xf32>,
    %c0_3 = arith.constant 0 : index
    %c0_4 = arith.constant 0 : index
    %c0_5 = arith.constant 0 : index
    %c0_6 = arith.constant 0 : index
    %2 = vector.load %arg1[%c0_3, %c0_4, %c0_5, %c0_6] : memref<2x16x16x16xf32, #tpu.memory_space<vmem>>, vector<2x16x16x16xf32>
    %c0_7 = arith.constant 0 : index
    %c1 = arith.constant 1 : index
    %c1_8 = arith.constant 1 : index
    %c0_9 = arith.constant 0 : index
    %3 = vector.load %arg10[%c0_7, %c1, %c1_8, %c0_9] : memref<2x18x18x16xf32, #tpu.memory_space<vmem>>, vector<2x16x16x16xf32>
    tpu.vector_store %arg10[%c0_7, %c1, %c1_8, %c0_9], %2 {strides = array<i32>} : memref<2x18x18x16xf32, #tpu.memory_space<vmem>>, vector<2x16x16x16xf32>,
    %c0_10 = arith.constant 0 : index
    %c0_11 = arith.constant 0 : index
    %c0_12 = arith.constant 0 : index
    %c0_13 = arith.constant 0 : index
    %4 = vector.load %arg10[%c0_10, %c0_11, %c0_12, %c0_13] : memref<2x18x18x16xf32, #tpu.memory_space<vmem>>, vector<2x16x16x16xf32>
    %5 = arith.truncf %4 : vector<2x16x16x16xf32> to vector<2x16x16x16xbf16>
    %6 = vector.shape_cast %5 : vector<2x16x16x16xbf16> to vector<512x16xbf16>
    %c0_14 = arith.constant 0 : index
    %c0_15 = arith.constant 0 : index
    %c1_16 = arith.constant 1 : index
    %c0_17 = arith.constant 0 : index
    %7 = vector.load %arg10[%c0_14, %c0_15, %c1_16, %c0_17] : memref<2x18x18x16xf32, #tpu.memory_space<vmem>>, vector<2x16x16x16xf32>
    %8 = arith.truncf %7 : vector<2x16x16x16xf32> to vector<2x16x16x16xbf16>
    %9 = vector.shape_cast %8 : vector<2x16x16x16xbf16> to vector<512x16xbf16>
    %c0_18 = arith.constant 0 : index
    %c0_19 = arith.constant 0 : index
    %c2 = arith.constant 2 : index
    %c0_20 = arith.constant 0 : index
    %10 = vector.load %arg10[%c0_18, %c0_19, %c2, %c0_20] : memref<2x18x18x16xf32, #tpu.memory_space<vmem>>, vector<2x16x16x16xf32>
    %11 = arith.truncf %10 : vector<2x16x16x16xf32> to vector<2x16x16x16xbf16>
    %12 = vector.shape_cast %11 : vector<2x16x16x16xbf16> to vector<512x16xbf16>
    %c0_21 = arith.constant 0 : index
    %c1_22 = arith.constant 1 : index
    %c0_23 = arith.constant 0 : index
    %c0_24 = arith.constant 0 : index
    %13 = vector.load %arg10[%c0_21, %c1_22, %c0_23, %c0_24] : memref<2x18x18x16xf32, #tpu.memory_space<vmem>>, vector<2x16x16x16xf32>
    %14 = arith.truncf %13 : vector<2x16x16x16xf32> to vector<2x16x16x16xbf16>
    %15 = vector.shape_cast %14 : vector<2x16x16x16xbf16> to vector<512x16xbf16>
    %c0_25 = arith.constant 0 : index
    %c1_26 = arith.constant 1 : index
    %c1_27 = arith.constant 1 : index
    %c0_28 = arith.constant 0 : index
    %16 = vector.load %arg10[%c0_25, %c1_26, %c1_27, %c0_28] : memref<2x18x18x16xf32, #tpu.memory_space<vmem>>, vector<2x16x16x16xf32>
    %17 = arith.truncf %16 : vector<2x16x16x16xf32> to vector<2x16x16x16xbf16>
    %18 = vector.shape_cast %17 : vector<2x16x16x16xbf16> to vector<512x16xbf16>
    %c0_29 = arith.constant 0 : index
    %c1_30 = arith.constant 1 : index
    %c2_31 = arith.constant 2 : index
    %c0_32 = arith.constant 0 : index
    %19 = vector.load %arg10[%c0_29, %c1_30, %c2_31, %c0_32] : memref<2x18x18x16xf32, #tpu.memory_space<vmem>>, vector<2x16x16x16xf32>
    %20 = arith.truncf %19 : vector<2x16x16x16xf32> to vector<2x16x16x16xbf16>
    %21 = vector.shape_cast %20 : vector<2x16x16x16xbf16> to vector<512x16xbf16>
    %c0_33 = arith.constant 0 : index
    %c2_34 = arith.constant 2 : index
    %c0_35 = arith.constant 0 : index
    %c0_36 = arith.constant 0 : index
    %22 = vector.load %arg10[%c0_33, %c2_34, %c0_35, %c0_36] : memref<2x18x18x16xf32, #tpu.memory_space<vmem>>, vector<2x16x16x16xf32>
    %23 = arith.truncf %22 : vector<2x16x16x16xf32> to vector<2x16x16x16xbf16>
    %24 = vector.shape_cast %23 : vector<2x16x16x16xbf16> to vector<512x16xbf16>
    %c0_37 = arith.constant 0 : index
    %c2_38 = arith.constant 2 : index
    %c1_39 = arith.constant 1 : index
    %c0_40 = arith.constant 0 : index
    %25 = vector.load %arg10[%c0_37, %c2_38, %c1_39, %c0_40] : memref<2x18x18x16xf32, #tpu.memory_space<vmem>>, vector<2x16x16x16xf32>
    %26 = arith.truncf %25 : vector<2x16x16x16xf32> to vector<2x16x16x16xbf16>
    %27 = vector.shape_cast %26 : vector<2x16x16x16xbf16> to vector<512x16xbf16>
    %c0_41 = arith.constant 0 : index
    %c2_42 = arith.constant 2 : index
    %c2_43 = arith.constant 2 : index
    %c0_44 = arith.constant 0 : index
    %28 = vector.load %arg10[%c0_41, %c2_42, %c2_43, %c0_44] : memref<2x18x18x16xf32, #tpu.memory_space<vmem>>, vector<2x16x16x16xf32>
    %29 = arith.truncf %28 : vector<2x16x16x16xf32> to vector<2x16x16x16xbf16>
    %30 = vector.shape_cast %29 : vector<2x16x16x16xbf16> to vector<512x16xbf16>
    %31 = tpu.concatenate %6, %9, %12, %15, %18, %21, %24, %27, %30 in 1 : vector<512x16xbf16>, vector<512x16xbf16>, vector<512x16xbf16>, vector<512x16xbf16>, vector<512x16xbf16>, vector<512x16xbf16>, vector<512x16xbf16>, vector<512x16xbf16>, vector<512x16xbf16> -> vector<512x144xbf16>
    %c0_45 = arith.constant 0 : index
    %c0_46 = arith.constant 0 : index
    %32 = vector.load %arg2[%c0_45, %c0_46] : memref<144x128xbf16, #tpu.memory_space<vmem>>, vector<144x128xbf16>
    %cst_47 = arith.constant dense<0.000000e+00> : vector<512x128xf32>
    %33 = tpu.matmul %31, %32, %cst_47 {dimension_numbers = #tpu.dot_dimension_numbers<[1], [0], [0], [1], [0, 0, 1, 1], [], []>} : vector<512x144xbf16>, vector<144x128xbf16>, vector<512x128xf32> -> vector<512x128xf32>
    %c0_48 = arith.constant 0 : index
    %c0_49 = arith.constant 0 : index
    %34 = vector.load %arg3[%c0_48, %c0_49] : memref<1x128xf32, #tpu.memory_space<vmem>>, vector<1x128xf32>
    %c0_50 = arith.constant 0 : index
    %c0_51 = arith.constant 0 : index
    %35 = vector.load %arg4[%c0_50, %c0_51] : memref<1x128xf32, #tpu.memory_space<vmem>>, vector<1x128xf32>
    %cst_52 = arith.constant dense<0.000000e+00> : vector<128xf32>
    %36 = vector.multi_reduction <add>, %33, %cst_52 [0] : vector<512x128xf32> to vector<128xf32>
    %37 = vector.shape_cast %36 : vector<128xf32> to vector<1x128xf32>
    %cst_53 = arith.constant 0.001953125 : f32
    %38 = vector.broadcast %cst_53 : f32 to vector<1x128xf32>
    %39 = arith.mulf %37, %38 : vector<1x128xf32>
    %40 = arith.mulf %33, %33 : vector<512x128xf32>
    %cst_54 = arith.constant dense<0.000000e+00> : vector<128xf32>
    %41 = vector.multi_reduction <add>, %40, %cst_54 [0] : vector<512x128xf32> to vector<128xf32>
    %42 = vector.shape_cast %41 : vector<128xf32> to vector<1x128xf32>
    %cst_55 = arith.constant 0.001953125 : f32
    %43 = vector.broadcast %cst_55 : f32 to vector<1x128xf32>
    %44 = arith.mulf %42, %43 : vector<1x128xf32>
    %45 = arith.mulf %39, %39 : vector<1x128xf32>
    %46 = arith.subf %44, %45 : vector<1x128xf32>
    %cst_56 = arith.constant 9.99999974E-6 : f32
    %47 = vector.broadcast %cst_56 : f32 to vector<1x128xf32>
    %48 = arith.addf %46, %47 : vector<1x128xf32>
    %49 = math.rsqrt %48 : vector<1x128xf32>
    %50 = arith.mulf %34, %49 : vector<1x128xf32>
    %51 = vector.broadcast %39 : vector<1x128xf32> to vector<512x128xf32>
    %52 = arith.subf %33, %51 : vector<512x128xf32>
    %53 = vector.broadcast %50 : vector<1x128xf32> to vector<512x128xf32>
    %54 = arith.mulf %52, %53 : vector<512x128xf32>
    %55 = vector.broadcast %35 : vector<1x128xf32> to vector<512x128xf32>
    %56 = arith.addf %54, %55 : vector<512x128xf32>
    %cst_57 = arith.constant 0.000000e+00 : f32
    %57 = vector.broadcast %cst_57 : f32 to vector<512x128xf32>
    %58 = arith.maximumf %56, %57 : vector<512x128xf32>
    %cst_58 = arith.constant 0.000000e+00 : f32
    %59 = vector.broadcast %cst_58 : f32 to vector<2x18x18x128xf32>
    %c0_59 = arith.constant 0 : index
    %c0_60 = arith.constant 0 : index
    %c0_61 = arith.constant 0 : index
    %c0_62 = arith.constant 0 : index
    %60 = vector.load %arg11[%c0_59, %c0_60, %c0_61, %c0_62] : memref<2x18x18x128xf32, #tpu.memory_space<vmem>>, vector<2x18x18x128xf32>
    tpu.vector_store %arg11[%c0_59, %c0_60, %c0_61, %c0_62], %59 {strides = array<i32>} : memref<2x18x18x128xf32, #tpu.memory_space<vmem>>, vector<2x18x18x128xf32>,
    %61 = vector.shape_cast %58 : vector<512x128xf32> to vector<2x16x16x128xf32>
    %c0_63 = arith.constant 0 : index
    %c1_64 = arith.constant 1 : index
    %c1_65 = arith.constant 1 : index
    %c0_66 = arith.constant 0 : index
    %62 = vector.load %arg11[%c0_63, %c1_64, %c1_65, %c0_66] : memref<2x18x18x128xf32, #tpu.memory_space<vmem>>, vector<2x16x16x128xf32>
    tpu.vector_store %arg11[%c0_63, %c1_64, %c1_65, %c0_66], %61 {strides = array<i32>} : memref<2x18x18x128xf32, #tpu.memory_space<vmem>>, vector<2x16x16x128xf32>,
    %c0_67 = arith.constant 0 : index
    %c0_68 = arith.constant 0 : index
    %c0_69 = arith.constant 0 : index
    %c0_70 = arith.constant 0 : index
    %63 = vector.load %arg11[%c0_67, %c0_68, %c0_69, %c0_70] : memref<2x18x18x128xf32, #tpu.memory_space<vmem>>, vector<2x16x16x128xf32>
    %64 = arith.truncf %63 : vector<2x16x16x128xf32> to vector<2x16x16x128xbf16>
    %65 = vector.shape_cast %64 : vector<2x16x16x128xbf16> to vector<512x128xbf16>
    %c0_71 = arith.constant 0 : index
    %c0_72 = arith.constant 0 : index
    %c1_73 = arith.constant 1 : index
    %c0_74 = arith.constant 0 : index
    %66 = vector.load %arg11[%c0_71, %c0_72, %c1_73, %c0_74] : memref<2x18x18x128xf32, #tpu.memory_space<vmem>>, vector<2x16x16x128xf32>
    %67 = arith.truncf %66 : vector<2x16x16x128xf32> to vector<2x16x16x128xbf16>
    %68 = vector.shape_cast %67 : vector<2x16x16x128xbf16> to vector<512x128xbf16>
    %c0_75 = arith.constant 0 : index
    %c0_76 = arith.constant 0 : index
    %c2_77 = arith.constant 2 : index
    %c0_78 = arith.constant 0 : index
    %69 = vector.load %arg11[%c0_75, %c0_76, %c2_77, %c0_78] : memref<2x18x18x128xf32, #tpu.memory_space<vmem>>, vector<2x16x16x128xf32>
    %70 = arith.truncf %69 : vector<2x16x16x128xf32> to vector<2x16x16x128xbf16>
    %71 = vector.shape_cast %70 : vector<2x16x16x128xbf16> to vector<512x128xbf16>
    %c0_79 = arith.constant 0 : index
    %c1_80 = arith.constant 1 : index
    %c0_81 = arith.constant 0 : index
    %c0_82 = arith.constant 0 : index
    %72 = vector.load %arg11[%c0_79, %c1_80, %c0_81, %c0_82] : memref<2x18x18x128xf32, #tpu.memory_space<vmem>>, vector<2x16x16x128xf32>
    %73 = arith.truncf %72 : vector<2x16x16x128xf32> to vector<2x16x16x128xbf16>
    %74 = vector.shape_cast %73 : vector<2x16x16x128xbf16> to vector<512x128xbf16>
    %c0_83 = arith.constant 0 : index
    %c1_84 = arith.constant 1 : index
    %c1_85 = arith.constant 1 : index
    %c0_86 = arith.constant 0 : index
    %75 = vector.load %arg11[%c0_83, %c1_84, %c1_85, %c0_86] : memref<2x18x18x128xf32, #tpu.memory_space<vmem>>, vector<2x16x16x128xf32>
    %76 = arith.truncf %75 : vector<2x16x16x128xf32> to vector<2x16x16x128xbf16>
    %77 = vector.shape_cast %76 : vector<2x16x16x128xbf16> to vector<512x128xbf16>
    %c0_87 = arith.constant 0 : index
    %c1_88 = arith.constant 1 : index
    %c2_89 = arith.constant 2 : index
    %c0_90 = arith.constant 0 : index
    %78 = vector.load %arg11[%c0_87, %c1_88, %c2_89, %c0_90] : memref<2x18x18x128xf32, #tpu.memory_space<vmem>>, vector<2x16x16x128xf32>
    %79 = arith.truncf %78 : vector<2x16x16x128xf32> to vector<2x16x16x128xbf16>
    %80 = vector.shape_cast %79 : vector<2x16x16x128xbf16> to vector<512x128xbf16>
    %c0_91 = arith.constant 0 : index
    %c2_92 = arith.constant 2 : index
    %c0_93 = arith.constant 0 : index
    %c0_94 = arith.constant 0 : index
    %81 = vector.load %arg11[%c0_91, %c2_92, %c0_93, %c0_94] : memref<2x18x18x128xf32, #tpu.memory_space<vmem>>, vector<2x16x16x128xf32>
    %82 = arith.truncf %81 : vector<2x16x16x128xf32> to vector<2x16x16x128xbf16>
    %83 = vector.shape_cast %82 : vector<2x16x16x128xbf16> to vector<512x128xbf16>
    %c0_95 = arith.constant 0 : index
    %c2_96 = arith.constant 2 : index
    %c1_97 = arith.constant 1 : index
    %c0_98 = arith.constant 0 : index
    %84 = vector.load %arg11[%c0_95, %c2_96, %c1_97, %c0_98] : memref<2x18x18x128xf32, #tpu.memory_space<vmem>>, vector<2x16x16x128xf32>
    %85 = arith.truncf %84 : vector<2x16x16x128xf32> to vector<2x16x16x128xbf16>
    %86 = vector.shape_cast %85 : vector<2x16x16x128xbf16> to vector<512x128xbf16>
    %c0_99 = arith.constant 0 : index
    %c2_100 = arith.constant 2 : index
    %c2_101 = arith.constant 2 : index
    %c0_102 = arith.constant 0 : index
    %87 = vector.load %arg11[%c0_99, %c2_100, %c2_101, %c0_102] : memref<2x18x18x128xf32, #tpu.memory_space<vmem>>, vector<2x16x16x128xf32>
    %88 = arith.truncf %87 : vector<2x16x16x128xf32> to vector<2x16x16x128xbf16>
    %89 = vector.shape_cast %88 : vector<2x16x16x128xbf16> to vector<512x128xbf16>
    %90 = tpu.concatenate %65, %68, %71, %74, %77, %80, %83, %86, %89 in 1 : vector<512x128xbf16>, vector<512x128xbf16>, vector<512x128xbf16>, vector<512x128xbf16>, vector<512x128xbf16>, vector<512x128xbf16>, vector<512x128xbf16>, vector<512x128xbf16>, vector<512x128xbf16> -> vector<512x1152xbf16>
    %c0_103 = arith.constant 0 : index
    %c0_104 = arith.constant 0 : index
    %91 = vector.load %arg5[%c0_103, %c0_104] : memref<1152x64xbf16, #tpu.memory_space<vmem>>, vector<1152x64xbf16>
    %cst_105 = arith.constant dense<0.000000e+00> : vector<512x64xf32>
    %92 = tpu.matmul %90, %91, %cst_105 {dimension_numbers = #tpu.dot_dimension_numbers<[1], [0], [0], [1], [0, 0, 1, 1], [], []>} : vector<512x1152xbf16>, vector<1152x64xbf16>, vector<512x64xf32> -> vector<512x64xf32>
    %c0_106 = arith.constant 0 : index
    %c0_107 = arith.constant 0 : index
    %93 = vector.load %arg6[%c0_106, %c0_107] : memref<1x64xf32, #tpu.memory_space<vmem>>, vector<1x64xf32>
    %c0_108 = arith.constant 0 : index
    %c0_109 = arith.constant 0 : index
    %94 = vector.load %arg7[%c0_108, %c0_109] : memref<1x64xf32, #tpu.memory_space<vmem>>, vector<1x64xf32>
    %cst_110 = arith.constant dense<0.000000e+00> : vector<64xf32>
    %95 = vector.multi_reduction <add>, %92, %cst_110 [0] : vector<512x64xf32> to vector<64xf32>
    %96 = vector.shape_cast %95 : vector<64xf32> to vector<1x64xf32>
    %cst_111 = arith.constant 0.001953125 : f32
    %97 = vector.broadcast %cst_111 : f32 to vector<1x64xf32>
    %98 = arith.mulf %96, %97 : vector<1x64xf32>
    %99 = arith.mulf %92, %92 : vector<512x64xf32>
    %cst_112 = arith.constant dense<0.000000e+00> : vector<64xf32>
    %100 = vector.multi_reduction <add>, %99, %cst_112 [0] : vector<512x64xf32> to vector<64xf32>
    %101 = vector.shape_cast %100 : vector<64xf32> to vector<1x64xf32>
    %cst_113 = arith.constant 0.001953125 : f32
    %102 = vector.broadcast %cst_113 : f32 to vector<1x64xf32>
    %103 = arith.mulf %101, %102 : vector<1x64xf32>
    %104 = arith.mulf %98, %98 : vector<1x64xf32>
    %105 = arith.subf %103, %104 : vector<1x64xf32>
    %cst_114 = arith.constant 9.99999974E-6 : f32
    %106 = vector.broadcast %cst_114 : f32 to vector<1x64xf32>
    %107 = arith.addf %105, %106 : vector<1x64xf32>
    %108 = math.rsqrt %107 : vector<1x64xf32>
    %109 = arith.mulf %93, %108 : vector<1x64xf32>
    %110 = vector.broadcast %98 : vector<1x64xf32> to vector<512x64xf32>
    %111 = arith.subf %92, %110 : vector<512x64xf32>
    %112 = vector.broadcast %109 : vector<1x64xf32> to vector<512x64xf32>
    %113 = arith.mulf %111, %112 : vector<512x64xf32>
    %114 = vector.broadcast %94 : vector<1x64xf32> to vector<512x64xf32>
    %115 = arith.addf %113, %114 : vector<512x64xf32>
    %cst_115 = arith.constant 0.000000e+00 : f32
    %116 = vector.broadcast %cst_115 : f32 to vector<512x64xf32>
    %117 = arith.maximumf %115, %116 : vector<512x64xf32>
    %cst_116 = arith.constant 0.000000e+00 : f32
    %118 = vector.broadcast %cst_116 : f32 to vector<2x18x18x64xf32>
    %c0_117 = arith.constant 0 : index
    %c0_118 = arith.constant 0 : index
    %c0_119 = arith.constant 0 : index
    %c0_120 = arith.constant 0 : index
    %119 = vector.load %arg12[%c0_117, %c0_118, %c0_119, %c0_120] : memref<2x18x18x64xf32, #tpu.memory_space<vmem>>, vector<2x18x18x64xf32>
    tpu.vector_store %arg12[%c0_117, %c0_118, %c0_119, %c0_120], %118 {strides = array<i32>} : memref<2x18x18x64xf32, #tpu.memory_space<vmem>>, vector<2x18x18x64xf32>,
    %120 = vector.shape_cast %117 : vector<512x64xf32> to vector<2x16x16x64xf32>
    %c0_121 = arith.constant 0 : index
    %c1_122 = arith.constant 1 : index
    %c1_123 = arith.constant 1 : index
    %c0_124 = arith.constant 0 : index
    %121 = vector.load %arg12[%c0_121, %c1_122, %c1_123, %c0_124] : memref<2x18x18x64xf32, #tpu.memory_space<vmem>>, vector<2x16x16x64xf32>
    tpu.vector_store %arg12[%c0_121, %c1_122, %c1_123, %c0_124], %120 {strides = array<i32>} : memref<2x18x18x64xf32, #tpu.memory_space<vmem>>, vector<2x16x16x64xf32>,
    %c0_125 = arith.constant 0 : index
    %c0_126 = arith.constant 0 : index
    %c0_127 = arith.constant 0 : index
    %c0_128 = arith.constant 0 : index
    %122 = vector.load %arg12[%c0_125, %c0_126, %c0_127, %c0_128] : memref<2x18x18x64xf32, #tpu.memory_space<vmem>>, vector<2x16x16x64xf32>
    %123 = vector.shape_cast %122 : vector<2x16x16x64xf32> to vector<512x64xf32>
    %c0_129 = arith.constant 0 : index
    %c0_130 = arith.constant 0 : index
    %c1_131 = arith.constant 1 : index
    %c0_132 = arith.constant 0 : index
    %124 = vector.load %arg12[%c0_129, %c0_130, %c1_131, %c0_132] : memref<2x18x18x64xf32, #tpu.memory_space<vmem>>, vector<2x16x16x64xf32>
    %125 = vector.shape_cast %124 : vector<2x16x16x64xf32> to vector<512x64xf32>
    %c0_133 = arith.constant 0 : index
    %c0_134 = arith.constant 0 : index
    %c2_135 = arith.constant 2 : index
    %c0_136 = arith.constant 0 : index
    %126 = vector.load %arg12[%c0_133, %c0_134, %c2_135, %c0_136] : memref<2x18x18x64xf32, #tpu.memory_space<vmem>>, vector<2x16x16x64xf32>
    %127 = vector.shape_cast %126 : vector<2x16x16x64xf32> to vector<512x64xf32>
    %c0_137 = arith.constant 0 : index
    %c1_138 = arith.constant 1 : index
    %c0_139 = arith.constant 0 : index
    %c0_140 = arith.constant 0 : index
    %128 = vector.load %arg12[%c0_137, %c1_138, %c0_139, %c0_140] : memref<2x18x18x64xf32, #tpu.memory_space<vmem>>, vector<2x16x16x64xf32>
    %129 = vector.shape_cast %128 : vector<2x16x16x64xf32> to vector<512x64xf32>
    %c0_141 = arith.constant 0 : index
    %c1_142 = arith.constant 1 : index
    %c1_143 = arith.constant 1 : index
    %c0_144 = arith.constant 0 : index
    %130 = vector.load %arg12[%c0_141, %c1_142, %c1_143, %c0_144] : memref<2x18x18x64xf32, #tpu.memory_space<vmem>>, vector<2x16x16x64xf32>
    %131 = vector.shape_cast %130 : vector<2x16x16x64xf32> to vector<512x64xf32>
    %c0_145 = arith.constant 0 : index
    %c1_146 = arith.constant 1 : index
    %c2_147 = arith.constant 2 : index
    %c0_148 = arith.constant 0 : index
    %132 = vector.load %arg12[%c0_145, %c1_146, %c2_147, %c0_148] : memref<2x18x18x64xf32, #tpu.memory_space<vmem>>, vector<2x16x16x64xf32>
    %133 = vector.shape_cast %132 : vector<2x16x16x64xf32> to vector<512x64xf32>
    %c0_149 = arith.constant 0 : index
    %c2_150 = arith.constant 2 : index
    %c0_151 = arith.constant 0 : index
    %c0_152 = arith.constant 0 : index
    %134 = vector.load %arg12[%c0_149, %c2_150, %c0_151, %c0_152] : memref<2x18x18x64xf32, #tpu.memory_space<vmem>>, vector<2x16x16x64xf32>
    %135 = vector.shape_cast %134 : vector<2x16x16x64xf32> to vector<512x64xf32>
    %c0_153 = arith.constant 0 : index
    %c2_154 = arith.constant 2 : index
    %c1_155 = arith.constant 1 : index
    %c0_156 = arith.constant 0 : index
    %136 = vector.load %arg12[%c0_153, %c2_154, %c1_155, %c0_156] : memref<2x18x18x64xf32, #tpu.memory_space<vmem>>, vector<2x16x16x64xf32>
    %137 = vector.shape_cast %136 : vector<2x16x16x64xf32> to vector<512x64xf32>
    %c0_157 = arith.constant 0 : index
    %c2_158 = arith.constant 2 : index
    %c2_159 = arith.constant 2 : index
    %c0_160 = arith.constant 0 : index
    %138 = vector.load %arg12[%c0_157, %c2_158, %c2_159, %c0_160] : memref<2x18x18x64xf32, #tpu.memory_space<vmem>>, vector<2x16x16x64xf32>
    %139 = vector.shape_cast %138 : vector<2x16x16x64xf32> to vector<512x64xf32>
    %140 = tpu.concatenate %123, %125, %127, %129, %131, %133, %135, %137, %139 in 1 : vector<512x64xf32>, vector<512x64xf32>, vector<512x64xf32>, vector<512x64xf32>, vector<512x64xf32>, vector<512x64xf32>, vector<512x64xf32>, vector<512x64xf32>, vector<512x64xf32> -> vector<512x576xf32>
    %c0_161 = arith.constant 0 : index
    %c0_162 = arith.constant 0 : index
    %141 = vector.load %arg8[%c0_161, %c0_162] : memref<1x576xf32, #tpu.memory_space<vmem>>, vector<1x576xf32>
    %cst_163 = arith.constant dense<0.000000e+00> : vector<1x512xf32>
    %142 = tpu.matmul %141, %140, %cst_163 {dimension_numbers = #tpu.dot_dimension_numbers<[1], [1], [0], [0], [0, 0, 1, 0], [], []>} : vector<1x576xf32>, vector<512x576xf32>, vector<1x512xf32> -> vector<1x512xf32>
    %cst_164 = arith.constant 0.000000e+00 : f32
    %143 = vector.broadcast %cst_164 : f32 to vector<1x512xf32>
    %144 = arith.maximumf %142, %143 : vector<1x512xf32>
    %c0_165 = arith.constant 0 : index
    %c0_166 = arith.constant 0 : index
    %145 = vector.load %arg9[%c0_165, %c0_166] : memref<1x512xf32, #tpu.memory_space<vmem>>, vector<1x512xf32>
    tpu.vector_store %arg9[%c0_165, %c0_166], %144 {strides = array<i32>} : memref<1x512xf32, #tpu.memory_space<vmem>>, vector<1x512xf32>,
    return
  }
  func.func @transform_0(%arg0: i32) -> (i32, i32, i32, i32) {
    %c0_i32 = arith.constant 0 : i32
    %c0_i32_0 = arith.constant 0 : i32
    %c0_i32_1 = arith.constant 0 : i32
    %c0_i32_2 = arith.constant 0 : i32
    %c0_i32_3 = arith.constant 0 : i32
    return %c0_i32, %c0_i32_0, %c0_i32_1, %c0_i32_2 : i32, i32, i32, i32
  }
  func.func @transform_1(%arg0: i32) -> (i32, i32) {
    %c0_i32 = arith.constant 0 : i32
    %c0_i32_0 = arith.constant 0 : i32
    %c0_i32_1 = arith.constant 0 : i32
    return %c0_i32, %c0_i32_0 : i32, i32
  }
  func.func @transform_2(%arg0: i32) -> (i32, i32) {
    %c0_i32 = arith.constant 0 : i32
    %c0_i32_0 = arith.constant 0 : i32
    %c0_i32_1 = arith.constant 0 : i32
    return %c0_i32, %c0_i32_0 : i32, i32
  }
  func.func @transform_3(%arg0: i32) -> (i32, i32) {
    %c0_i32 = arith.constant 0 : i32
    %c0_i32_0 = arith.constant 0 : i32
    %c0_i32_1 = arith.constant 0 : i32
    return %c0_i32, %c0_i32_0 : i32, i32
  }
  func.func @transform_4(%arg0: i32) -> (i32, i32) {
    %c0_i32 = arith.constant 0 : i32
    %c0_i32_0 = arith.constant 0 : i32
    %c0_i32_1 = arith.constant 0 : i32
    return %c0_i32, %c0_i32_0 : i32, i32
  }
  func.func @transform_5(%arg0: i32) -> (i32, i32) {
    %c0_i32 = arith.constant 0 : i32
    %c0_i32_0 = arith.constant 0 : i32
    %c0_i32_1 = arith.constant 0 : i32
    return %c0_i32, %c0_i32_0 : i32, i32
  }
  func.func @transform_6(%arg0: i32) -> (i32, i32) {
    %c0_i32 = arith.constant 0 : i32
    %c0_i32_0 = arith.constant 0 : i32
    %c0_i32_1 = arith.constant 0 : i32
    return %c0_i32, %c0_i32_0 : i32, i32
  }
  func.func @transform_7(%arg0: i32) -> (i32, i32) {
    %c0_i32 = arith.constant 0 : i32
    %c0_i32_0 = arith.constant 0 : i32
    %c0_i32_1 = arith.constant 0 : i32
    return %c0_i32, %c0_i32_0 : i32, i32
  }
  func.func @transform_8(%arg0: i32) -> (i32, i32) {
    %c0_i32 = arith.constant 0 : i32
    %c0_i32_0 = arith.constant 0 : i32
    %c0_i32_1 = arith.constant 0 : i32
    return %c0_i32, %c0_i32_0 : i32, i32
  }
}

</mosaic_0001>

<llo_original>
// kernel: estmator_forward.1
$region0: #{estmator_forward.1}
  #allocation0 [shape = 'u32[]', space=smem, size = 0x4, offset = 0x4, fixed_abs, tag = 'smem constant byte address 0x4 - core index']
  #allocation1 [shape = 'u32[144,128]{1,0:T(1,128)}', space=vmem, size = 0x12000, scoped, tag = 'internal scratch']
  #allocation2 [shape = 'f32[2,18,18,16]{3,2,1,0:T(8,128)}', space=vmem, size = 0x6c000, scoped, tag = 'scratch operand']
  #allocation3 [shape = 'f32[2,18,18,128]{3,2,1,0:T(8,128)}', space=vmem, size = 0x6c000, scoped, tag = 'scratch operand']
  #allocation4 [shape = 'f32[2,18,18,64]{3,2,1,0:T(8,128)}', space=vmem, size = 0x6c000, scoped, tag = 'scratch operand']
  %s0 = inlined_call_operand.vmem [shape: f32[2,16,16,16], index: 0, kind: input, shape index: {}]
  %s1 = inlined_call_operand.vmem [shape: bf16[144,128], index: 1, kind: input, shape index: {}]
  %s2 = inlined_call_operand.vmem [shape: f32[1,128], index: 2, kind: input, shape index: {}]
  %s3 = inlined_call_operand.vmem [shape: f32[1,128], index: 3, kind: input, shape index: {}]
  %s4 = inlined_call_operand.vmem [shape: bf16[1152,64], index: 4, kind: input, shape index: {}]
  %s5 = inlined_call_operand.vmem [shape: f32[1,64], index: 5, kind: input, shape index: {}]
  %s6 = inlined_call_operand.vmem [shape: f32[1,64], index: 6, kind: input, shape index: {}]
  %s7 = inlined_call_operand.vmem [shape: f32[1,576], index: 7, kind: input, shape index: {}]
  %s8 = inlined_call_operand.vmem [shape: f32[1,512], index: 8, kind: output, shape index: {}]
  %s9 = sld [smem:[#allocation0]]
  $region42: #{estmator_forward.1} parent=0
    _
  %s11 = ssub.s32 1, %s9
  %s12 = scalar_select 0, %s11, %s9
  // Predicated region
  $region2: #{estmator_forward.1} parent=0 // pred_check
    _
  $region3: #{estmator_forward.1} parent=0 // pred_check_branch
    %14 = sbr.rel (0) target = $region5
  $region4: #{estmator_forward.1} parent=0 // pred_region
    _
  $region5: #{estmator_forward.1} parent=0 // pred_fallthru
    _
  // Predicated region
  $region6: #{estmator_forward.1} parent=0 // pred_check
    _
  $region7: #{estmator_forward.1} parent=0 // pred_check_branch
    %16 = sbr.rel (0) target = $region9
  $region8: #{estmator_forward.1} parent=0 // pred_region
    _
  $region9: #{estmator_forward.1} parent=0 // pred_fallthru
    _
  // Predicated region
  $region10: #{estmator_forward.1} parent=0 // pred_check
    _
  $region11: #{estmator_forward.1} parent=0 // pred_check_branch
    %18 = sbr.rel (0) target = $region13
  $region12: #{estmator_forward.1} parent=0 // pred_region
    _
  $region13: #{estmator_forward.1} parent=0 // pred_fallthru
    _
  // Predicated region
  $region14: #{estmator_forward.1} parent=0 // pred_check
    _
  $region15: #{estmator_forward.1} parent=0 // pred_check_branch
    %20 = sbr.rel (0) target = $region17
  $region16: #{estmator_forward.1} parent=0 // pred_region
    _
  $region17: #{estmator_forward.1} parent=0 // pred_fallthru
    _
  // Predicated region
  $region18: #{estmator_forward.1} parent=0 // pred_check
    _
  $region19: #{estmator_forward.1} parent=0 // pred_check_branch
    %22 = sbr.rel (0) target = $region21
  $region20: #{estmator_forward.1} parent=0 // pred_region
    _
  $region21: #{estmator_forward.1} parent=0 // pred_fallthru
    _
  // Predicated region
  $region22: #{estmator_forward.1} parent=0 // pred_check
    _
  $region23: #{estmator_forward.1} parent=0 // pred_check_branch
    %24 = sbr.rel (0) target = $region25
  $region24: #{estmator_forward.1} parent=0 // pred_region
    _
  $region25: #{estmator_forward.1} parent=0 // pred_fallthru
    _
  // Predicated region
  $region26: #{estmator_forward.1} parent=0 // pred_check
    _
  $region27: #{estmator_forward.1} parent=0 // pred_check_branch
    %26 = sbr.rel (0) target = $region29
  $region28: #{estmator_forward.1} parent=0 // pred_region
    _
  $region29: #{estmator_forward.1} parent=0 // pred_fallthru
    _
  // Predicated region
  $region30: #{estmator_forward.1} parent=0 // pred_check
    _
  $region31: #{estmator_forward.1} parent=0 // pred_check_branch
    %28 = sbr.rel (0) target = $region33
  $region32: #{estmator_forward.1} parent=0 // pred_region
    _
  $region33: #{estmator_forward.1} parent=0 // pred_fallthru
    _
  %vm30 = vcmask 130048
  %31 = vst.msk [vmem:[#allocation2] sm:$0xff] %vm30, 0.0
  %32 = vst.msk [vmem:[#allocation2 + $0x8] sm:$0xff] %vm30, 0.0
  %vm33 = vcmask 123904
  %34 = vst.msk [vmem:[#allocation2 + $0x10] sm:$0x3] %vm33, 0.0
  %35 = vst.msk [vmem:[#allocation2 + $0x18] sm:$0xff] %vm30, 0.0
  %36 = vst.msk [vmem:[#allocation2 + $0x20] sm:$0xff] %vm30, 0.0
  %37 = vst.msk [vmem:[#allocation2 + $0x28] sm:$0x3] %vm33, 0.0
  %38 = vst.msk [vmem:[#allocation2 + $0x30] sm:$0xff] %vm30, 0.0
  %39 = vst.msk [vmem:[#allocation2 + $0x38] sm:$0xff] %vm30, 0.0
  %40 = vst.msk [vmem:[#allocation2 + $0x40] sm:$0x3] %vm33, 0.0
  %41 = vst.msk [vmem:[#allocation2 + $0x48] sm:$0xff] %vm30, 0.0
  %42 = vst.msk [vmem:[#allocation2 + $0x50] sm:$0xff] %vm30, 0.0
  %43 = vst.msk [vmem:[#allocation2 + $0x58] sm:$0x3] %vm33, 0.0
  %44 = vst.msk [vmem:[#allocation2 + $0x60] sm:$0xff] %vm30, 0.0
  %45 = vst.msk [vmem:[#allocation2 + $0x68] sm:$0xff] %vm30, 0.0
  %46 = vst.msk [vmem:[#allocation2 + $0x70] sm:$0x3] %vm33, 0.0
  %47 = vst.msk [vmem:[#allocation2 + $0x78] sm:$0xff] %vm30, 0.0
  %48 = vst.msk [vmem:[#allocation2 + $0x80] sm:$0xff] %vm30, 0.0
  %49 = vst.msk [vmem:[#allocation2 + $0x88] sm:$0x3] %vm33, 0.0
  %50 = vst.msk [vmem:[#allocation2 + $0x90] sm:$0xff] %vm30, 0.0
  %51 = vst.msk [vmem:[#allocation2 + $0x98] sm:$0xff] %vm30, 0.0
  %52 = vst.msk [vmem:[#allocation2 + $0xa0] sm:$0x3] %vm33, 0.0
  %53 = vst.msk [vmem:[#allocation2 + $0xa8] sm:$0xff] %vm30, 0.0
  %54 = vst.msk [vmem:[#allocation2 + $0xb0] sm:$0xff] %vm30, 0.0
  %55 = vst.msk [vmem:[#allocation2 + $0xb8] sm:$0x3] %vm33, 0.0
  %56 = vst.msk [vmem:[#allocation2 + $0xc0] sm:$0xff] %vm30, 0.0
  %57 = vst.msk [vmem:[#allocation2 + $0xc8] sm:$0xff] %vm30, 0.0
  %58 = vst.msk [vmem:[#allocation2 + $0xd0] sm:$0x3] %vm33, 0.0
  %59 = vst.msk [vmem:[#allocation2 + $0xd8] sm:$0xff] %vm30, 0.0
  %60 = vst.msk [vmem:[#allocation2 + $0xe0] sm:$0xff] %vm30, 0.0
  %61 = vst.msk [vmem:[#allocation2 + $0xe8] sm:$0x3] %vm33, 0.0
  %62 = vst.msk [vmem:[#allocation2 + $0xf0] sm:$0xff] %vm30, 0.0
  %63 = vst.msk [vmem:[#allocation2 + $0xf8] sm:$0xff] %vm30, 0.0
  %64 = vst.msk [vmem:[#allocation2 + $0x100] sm:$0x3] %vm33, 0.0
  %65 = vst.msk [vmem:[#allocation2 + $0x108] sm:$0xff] %vm30, 0.0
  %66 = vst.msk [vmem:[#allocation2 + $0x110] sm:$0xff] %vm30, 0.0
  %67 = vst.msk [vmem:[#allocation2 + $0x118] sm:$0x3] %vm33, 0.0
  %68 = vst.msk [vmem:[#allocation2 + $0x120] sm:$0xff] %vm30, 0.0
  %69 = vst.msk [vmem:[#allocation2 + $0x128] sm:$0xff] %vm30, 0.0
  %70 = vst.msk [vmem:[#allocation2 + $0x130] sm:$0x3] %vm33, 0.0
  %71 = vst.msk [vmem:[#allocation2 + $0x138] sm:$0xff] %vm30, 0.0
  %72 = vst.msk [vmem:[#allocation2 + $0x140] sm:$0xff] %vm30, 0.0
  %73 = vst.msk [vmem:[#allocation2 + $0x148] sm:$0x3] %vm33, 0.0
  %74 = vst.msk [vmem:[#allocation2 + $0x150] sm:$0xff] %vm30, 0.0
  %75 = vst.msk [vmem:[#allocation2 + $0x158] sm:$0xff] %vm30, 0.0
  %76 = vst.msk [vmem:[#allocation2 + $0x160] sm:$0x3] %vm33, 0.0
  %77 = vst.msk [vmem:[#allocation2 + $0x168] sm:$0xff] %vm30, 0.0
  %78 = vst.msk [vmem:[#allocation2 + $0x170] sm:$0xff] %vm30, 0.0
  %79 = vst.msk [vmem:[#allocation2 + $0x178] sm:$0x3] %vm33, 0.0
  %80 = vst.msk [vmem:[#allocation2 + $0x180] sm:$0xff] %vm30, 0.0
  %81 = vst.msk [vmem:[#allocation2 + $0x188] sm:$0xff] %vm30, 0.0
  %82 = vst.msk [vmem:[#allocation2 + $0x190] sm:$0x3] %vm33, 0.0
  %83 = vst.msk [vmem:[#allocation2 + $0x198] sm:$0xff] %vm30, 0.0
  %84 = vst.msk [vmem:[#allocation2 + $0x1a0] sm:$0xff] %vm30, 0.0
  %85 = vst.msk [vmem:[#allocation2 + $0x1a8] sm:$0x3] %vm33, 0.0
  %86 = vst.msk [vmem:[#allocation2 + $0x1b0] sm:$0xff] %vm30, 0.0
  %87 = vst.msk [vmem:[#allocation2 + $0x1b8] sm:$0xff] %vm30, 0.0
  %88 = vst.msk [vmem:[#allocation2 + $0x1c0] sm:$0x3] %vm33, 0.0
  %89 = vst.msk [vmem:[#allocation2 + $0x1c8] sm:$0xff] %vm30, 0.0
  %90 = vst.msk [vmem:[#allocation2 + $0x1d0] sm:$0xff] %vm30, 0.0
  %91 = vst.msk [vmem:[#allocation2 + $0x1d8] sm:$0x3] %vm33, 0.0
  %92 = vst.msk [vmem:[#allocation2 + $0x1e0] sm:$0xff] %vm30, 0.0
  %93 = vst.msk [vmem:[#allocation2 + $0x1e8] sm:$0xff] %vm30, 0.0
  %94 = vst.msk [vmem:[#allocation2 + $0x1f0] sm:$0x3] %vm33, 0.0
  %95 = vst.msk [vmem:[#allocation2 + $0x1f8] sm:$0xff] %vm30, 0.0
  %96 = vst.msk [vmem:[#allocation2 + $0x200] sm:$0xff] %vm30, 0.0
  %97 = vst.msk [vmem:[#allocation2 + $0x208] sm:$0x3] %vm33, 0.0
  %98 = vst.msk [vmem:[#allocation2 + $0x210] sm:$0xff] %vm30, 0.0
  %99 = vst.msk [vmem:[#allocation2 + $0x218] sm:$0xff] %vm30, 0.0
  %100 = vst.msk [vmem:[#allocation2 + $0x220] sm:$0x3] %vm33, 0.0
  %101 = vst.msk [vmem:[#allocation2 + $0x228] sm:$0xff] %vm30, 0.0
  %102 = vst.msk [vmem:[#allocation2 + $0x230] sm:$0xff] %vm30, 0.0
  %103 = vst.msk [vmem:[#allocation2 + $0x238] sm:$0x3] %vm33, 0.0
  %104 = vst.msk [vmem:[#allocation2 + $0x240] sm:$0xff] %vm30, 0.0
  %105 = vst.msk [vmem:[#allocation2 + $0x248] sm:$0xff] %vm30, 0.0
  %106 = vst.msk [vmem:[#allocation2 + $0x250] sm:$0x3] %vm33, 0.0
  %107 = vst.msk [vmem:[#allocation2 + $0x258] sm:$0xff] %vm30, 0.0
  %108 = vst.msk [vmem:[#allocation2 + $0x260] sm:$0xff] %vm30, 0.0
  %109 = vst.msk [vmem:[#allocation2 + $0x268] sm:$0x3] %vm33, 0.0
  %110 = vst.msk [vmem:[#allocation2 + $0x270] sm:$0xff] %vm30, 0.0
  %111 = vst.msk [vmem:[#allocation2 + $0x278] sm:$0xff] %vm30, 0.0
  %112 = vst.msk [vmem:[#allocation2 + $0x280] sm:$0x3] %vm33, 0.0
  %113 = vst.msk [vmem:[#allocation2 + $0x288] sm:$0xff] %vm30, 0.0
  %114 = vst.msk [vmem:[#allocation2 + $0x290] sm:$0xff] %vm30, 0.0
  %115 = vst.msk [vmem:[#allocation2 + $0x298] sm:$0x3] %vm33, 0.0
  %116 = vst.msk [vmem:[#allocation2 + $0x2a0] sm:$0xff] %vm30, 0.0
  %117 = vst.msk [vmem:[#allocation2 + $0x2a8] sm:$0xff] %vm30, 0.0
  %118 = vst.msk [vmem:[#allocation2 + $0x2b0] sm:$0x3] %vm33, 0.0
  %119 = vst.msk [vmem:[#allocation2 + $0x2b8] sm:$0xff] %vm30, 0.0
  %120 = vst.msk [vmem:[#allocation2 + $0x2c0] sm:$0xff] %vm30, 0.0
  %121 = vst.msk [vmem:[#allocation2 + $0x2c8] sm:$0x3] %vm33, 0.0
  %122 = vst.msk [vmem:[#allocation2 + $0x2d0] sm:$0xff] %vm30, 0.0
  %123 = vst.msk [vmem:[#allocation2 + $0x2d8] sm:$0xff] %vm30, 0.0
  %124 = vst.msk [vmem:[#allocation2 + $0x2e0] sm:$0x3] %vm33, 0.0
  %125 = vst.msk [vmem:[#allocation2 + $0x2e8] sm:$0xff] %vm30, 0.0
  %126 = vst.msk [vmem:[#allocation2 + $0x2f0] sm:$0xff] %vm30, 0.0
  %127 = vst.msk [vmem:[#allocation2 + $0x2f8] sm:$0x3] %vm33, 0.0
  %128 = vst.msk [vmem:[#allocation2 + $0x300] sm:$0xff] %vm30, 0.0
  %129 = vst.msk [vmem:[#allocation2 + $0x308] sm:$0xff] %vm30, 0.0
  %130 = vst.msk [vmem:[#allocation2 + $0x310] sm:$0x3] %vm33, 0.0
  %131 = vst.msk [vmem:[#allocation2 + $0x318] sm:$0xff] %vm30, 0.0
  %132 = vst.msk [vmem:[#allocation2 + $0x320] sm:$0xff] %vm30, 0.0
  %133 = vst.msk [vmem:[#allocation2 + $0x328] sm:$0x3] %vm33, 0.0
  %134 = vst.msk [vmem:[#allocation2 + $0x330] sm:$0xff] %vm30, 0.0
  %135 = vst.msk [vmem:[#allocation2 + $0x338] sm:$0xff] %vm30, 0.0
  %136 = vst.msk [vmem:[#allocation2 + $0x340] sm:$0x3] %vm33, 0.0
  %137 = vst.msk [vmem:[#allocation2 + $0x348] sm:$0xff] %vm30, 0.0
  %138 = vst.msk [vmem:[#allocation2 + $0x350] sm:$0xff] %vm30, 0.0
  %139 = vst.msk [vmem:[#allocation2 + $0x358] sm:$0x3] %vm33, 0.0
  %v140 = vld [vmem:[%s0] sm:$0xff]
  %v141 = vld [vmem:[%s0 + $0x8] sm:$0xff]
  %v142 = vld [vmem:[%s0 + $0x10] sm:$0xff]
  %v143 = vld [vmem:[%s0 + $0x18] sm:$0xff]
  %v144 = vld [vmem:[%s0 + $0x20] sm:$0xff]
  %v145 = vld [vmem:[%s0 + $0x28] sm:$0xff]
  %v146 = vld [vmem:[%s0 + $0x30] sm:$0xff]
  %v147 = vld [vmem:[%s0 + $0x38] sm:$0xff]
  %v148 = vld [vmem:[%s0 + $0x40] sm:$0xff]
  %v149 = vld [vmem:[%s0 + $0x48] sm:$0xff]
  %v150 = vld [vmem:[%s0 + $0x50] sm:$0xff]
  %v151 = vld [vmem:[%s0 + $0x58] sm:$0xff]
  %v152 = vld [vmem:[%s0 + $0x60] sm:$0xff]
  %v153 = vld [vmem:[%s0 + $0x68] sm:$0xff]
  %v154 = vld [vmem:[%s0 + $0x70] sm:$0xff]
  %v155 = vld [vmem:[%s0 + $0x78] sm:$0xff]
  %v156 = vld [vmem:[%s0 + $0x80] sm:$0xff]
  %v157 = vld [vmem:[%s0 + $0x88] sm:$0xff]
  %v158 = vld [vmem:[%s0 + $0x90] sm:$0xff]
  %v159 = vld [vmem:[%s0 + $0x98] sm:$0xff]
  %v160 = vld [vmem:[%s0 + $0xa0] sm:$0xff]
  %v161 = vld [vmem:[%s0 + $0xa8] sm:$0xff]
  %v162 = vld [vmem:[%s0 + $0xb0] sm:$0xff]
  %v163 = vld [vmem:[%s0 + $0xb8] sm:$0xff]
  %v164 = vld [vmem:[%s0 + $0xc0] sm:$0xff]
  %v165 = vld [vmem:[%s0 + $0xc8] sm:$0xff]
  %v166 = vld [vmem:[%s0 + $0xd0] sm:$0xff]
  %v167 = vld [vmem:[%s0 + $0xd8] sm:$0xff]
  %v168 = vld [vmem:[%s0 + $0xe0] sm:$0xff]
  %v169 = vld [vmem:[%s0 + $0xe8] sm:$0xff]
  %v170 = vld [vmem:[%s0 + $0xf0] sm:$0xff]
  %v171 = vld [vmem:[%s0 + $0xf8] sm:$0xff]
  %v172 = vld [vmem:[%s0 + $0x100] sm:$0xff]
  %v173 = vld [vmem:[%s0 + $0x108] sm:$0xff]
  %v174 = vld [vmem:[%s0 + $0x110] sm:$0xff]
  %v175 = vld [vmem:[%s0 + $0x118] sm:$0xff]
  %v176 = vld [vmem:[%s0 + $0x120] sm:$0xff]
  %v177 = vld [vmem:[%s0 + $0x128] sm:$0xff]
  %v178 = vld [vmem:[%s0 + $0x130] sm:$0xff]
  %v179 = vld [vmem:[%s0 + $0x138] sm:$0xff]
  %v180 = vld [vmem:[%s0 + $0x140] sm:$0xff]
  %v181 = vld [vmem:[%s0 + $0x148] sm:$0xff]
  %v182 = vld [vmem:[%s0 + $0x150] sm:$0xff]
  %v183 = vld [vmem:[%s0 + $0x158] sm:$0xff]
  %v184 = vld [vmem:[%s0 + $0x160] sm:$0xff]
  %v185 = vld [vmem:[%s0 + $0x168] sm:$0xff]
  %v186 = vld [vmem:[%s0 + $0x170] sm:$0xff]
  %v187 = vld [vmem:[%s0 + $0x178] sm:$0xff]
  %v188 = vld [vmem:[%s0 + $0x180] sm:$0xff]
  %v189 = vld [vmem:[%s0 + $0x188] sm:$0xff]
  %v190 = vld [vmem:[%s0 + $0x190] sm:$0xff]
  %v191 = vld [vmem:[%s0 + $0x198] sm:$0xff]
  %v192 = vld [vmem:[%s0 + $0x1a0] sm:$0xff]
  %v193 = vld [vmem:[%s0 + $0x1a8] sm:$0xff]
  %v194 = vld [vmem:[%s0 + $0x1b0] sm:$0xff]
  %v195 = vld [vmem:[%s0 + $0x1b8] sm:$0xff]
  %v196 = vld [vmem:[%s0 + $0x1c0] sm:$0xff]
  %v197 = vld [vmem:[%s0 + $0x1c8] sm:$0xff]
  %v198 = vld [vmem:[%s0 + $0x1d0] sm:$0xff]
  %v199 = vld [vmem:[%s0 + $0x1d8] sm:$0xff]
  %v200 = vld [vmem:[%s0 + $0x1e0] sm:$0xff]
  %v201 = vld [vmem:[%s0 + $0x1e8] sm:$0xff]
  %v202 = vld [vmem:[%s0 + $0x1f0] sm:$0xff]
  %v203 = vld [vmem:[%s0 + $0x1f8] sm:$0xff]
  %s204 = scalar_lea.vmem [#allocation2], 24
  %205 = vst.msk [vmem:[%s204 + $0x1] sm:$0xff] %vm30, %v140
  %206 = vst.msk [vmem:[%s204 + $0x9] sm:$0xff] %vm30, %v141
  %207 = vst.msk [vmem:[%s204 + $0x19] sm:$0xff] %vm30, %v142
  %208 = vst.msk [vmem:[%s204 + $0x21] sm:$0xff] %vm30, %v143
  %209 = vst.msk [vmem:[%s204 + $0x31] sm:$0xff] %vm30, %v144
  %210 = vst.msk [vmem:[%s204 + $0x39] sm:$0xff] %vm30, %v145
  %211 = vst.msk [vmem:[%s204 + $0x49] sm:$0xff] %vm30, %v146
  %212 = vst.msk [vmem:[%s204 + $0x51] sm:$0xff] %vm30, %v147
  %213 = vst.msk [vmem:[%s204 + $0x61] sm:$0xff] %vm30, %v148
  %214 = vst.msk [vmem:[%s204 + $0x69] sm:$0xff] %vm30, %v149
  %215 = vst.msk [vmem:[%s204 + $0x79] sm:$0xff] %vm30, %v150
  %216 = vst.msk [vmem:[%s204 + $0x81] sm:$0xff] %vm30, %v151
  %217 = vst.msk [vmem:[%s204 + $0x91] sm:$0xff] %vm30, %v152
  %218 = vst.msk [vmem:[%s204 + $0x99] sm:$0xff] %vm30, %v153
  %219 = vst.msk [vmem:[%s204 + $0xa9] sm:$0xff] %vm30, %v154
  %220 = vst.msk [vmem:[%s204 + $0xb1] sm:$0xff] %vm30, %v155
  %221 = vst.msk [vmem:[%s204 + $0xc1] sm:$0xff] %vm30, %v156
  %222 = vst.msk [vmem:[%s204 + $0xc9] sm:$0xff] %vm30, %v157
  %223 = vst.msk [vmem:[%s204 + $0xd9] sm:$0xff] %vm30, %v158
  %224 = vst.msk [vmem:[%s204 + $0xe1] sm:$0xff] %vm30, %v159
  %225 = vst.msk [vmem:[%s204 + $0xf1] sm:$0xff] %vm30, %v160
  %226 = vst.msk [vmem:[%s204 + $0xf9] sm:$0xff] %vm30, %v161
  %227 = vst.msk [vmem:[%s204 + $0x109] sm:$0xff] %vm30, %v162
  %228 = vst.msk [vmem:[%s204 + $0x111] sm:$0xff] %vm30, %v163
  %229 = vst.msk [vmem:[%s204 + $0x121] sm:$0xff] %vm30, %v164
  %230 = vst.msk [vmem:[%s204 + $0x129] sm:$0xff] %vm30, %v165
  %231 = vst.msk [vmem:[%s204 + $0x139] sm:$0xff] %vm30, %v166
  %232 = vst.msk [vmem:[%s204 + $0x141] sm:$0xff] %vm30, %v167
  %233 = vst.msk [vmem:[%s204 + $0x151] sm:$0xff] %vm30, %v168
  %234 = vst.msk [vmem:[%s204 + $0x159] sm:$0xff] %vm30, %v169
  %235 = vst.msk [vmem:[%s204 + $0x169] sm:$0xff] %vm30, %v170
  %236 = vst.msk [vmem:[%s204 + $0x171] sm:$0xff] %vm30, %v171
  %237 = vst.msk [vmem:[%s204 + $0x1b1] sm:$0xff] %vm30, %v172
  %238 = vst.msk [vmem:[%s204 + $0x1b9] sm:$0xff] %vm30, %v173
  %239 = vst.msk [vmem:[%s204 + $0x1c9] sm:$0xff] %vm30, %v174
  %240 = vst.msk [vmem:[%s204 + $0x1d1] sm:$0xff] %vm30, %v175
  %241 = vst.msk [vmem:[%s204 + $0x1e1] sm:$0xff] %vm30, %v176
  %242 = vst.msk [vmem:[%s204 + $0x1e9] sm:$0xff] %vm30, %v177
  %243 = vst.msk [vmem:[%s204 + $0x1f9] sm:$0xff] %vm30, %v178
  %244 = vst.msk [vmem:[%s204 + $0x201] sm:$0xff] %vm30, %v179
  %245 = vst.msk [vmem:[%s204 + $0x211] sm:$0xff] %vm30, %v180
  %246 = vst.msk [vmem:[%s204 + $0x219] sm:$0xff] %vm30, %v181
  %247 = vst.msk [vmem:[%s204 + $0x229] sm:$0xff] %vm30, %v182
  %248 = vst.msk [vmem:[%s204 + $0x231] sm:$0xff] %vm30, %v183
  %249 = vst.msk [vmem:[%s204 + $0x241] sm:$0xff] %vm30, %v184
  %250 = vst.msk [vmem:[%s204 + $0x249] sm:$0xff] %vm30, %v185
  %251 = vst.msk [vmem:[%s204 + $0x259] sm:$0xff] %vm30, %v186
  %252 = vst.msk [vmem:[%s204 + $0x261] sm:$0xff] %vm30, %v187
  %253 = vst.msk [vmem:[%s204 + $0x271] sm:$0xff] %vm30, %v188
  %254 = vst.msk [vmem:[%s204 + $0x279] sm:$0xff] %vm30, %v189
  %255 = vst.msk [vmem:[%s204 + $0x289] sm:$0xff] %vm30, %v190
  %256 = vst.msk [vmem:[%s204 + $0x291] sm:$0xff] %vm30, %v191
  %257 = vst.msk [vmem:[%s204 + $0x2a1] sm:$0xff] %vm30, %v192
  %258 = vst.msk [vmem:[%s204 + $0x2a9] sm:$0xff] %vm30, %v193
  %259 = vst.msk [vmem:[%s204 + $0x2b9] sm:$0xff] %vm30, %v194
  %260 = vst.msk [vmem:[%s204 + $0x2c1] sm:$0xff] %vm30, %v195
  %261 = vst.msk [vmem:[%s204 + $0x2d1] sm:$0xff] %vm30, %v196
  %262 = vst.msk [vmem:[%s204 + $0x2d9] sm:$0xff] %vm30, %v197
  %263 = vst.msk [vmem:[%s204 + $0x2e9] sm:$0xff] %vm30, %v198
  %264 = vst.msk [vmem:[%s204 + $0x2f1] sm:$0xff] %vm30, %v199
  %265 = vst.msk [vmem:[%s204 + $0x301] sm:$0xff] %vm30, %v200
  %266 = vst.msk [vmem:[%s204 + $0x309] sm:$0xff] %vm30, %v201
  %267 = vst.msk [vmem:[%s204 + $0x319] sm:$0xff] %vm30, %v202
  %268 = vst.msk [vmem:[%s204 + $0x321] sm:$0xff] %vm30, %v203
  %v269 = vld [vmem:[#allocation2] sm:$0xff]
  %v270 = vld [vmem:[#allocation2 + $0x8] sm:$0xff]
  %v271 = vld [vmem:[#allocation2 + $0x18] sm:$0xff]
  %v272 = vld [vmem:[#allocation2 + $0x20] sm:$0xff]
  %v273 = vld [vmem:[#allocation2 + $0x30] sm:$0xff]
  %v274 = vld [vmem:[#allocation2 + $0x38] sm:$0xff]
  %v275 = vld [vmem:[#allocation2 + $0x48] sm:$0xff]
  %v276 = vld [vmem:[#allocation2 + $0x50] sm:$0xff]
  %v277 = vld [vmem:[#allocation2 + $0x60] sm:$0xff]
  %v278 = vld [vmem:[#allocation2 + $0x68] sm:$0xff]
  %v279 = vld [vmem:[#allocation2 + $0x78] sm:$0xff]
  %v280 = vld [vmem:[#allocation2 + $0x80] sm:$0xff]
  %v281 = vld [vmem:[#allocation2 + $0x90] sm:$0xff]
  %v282 = vld [vmem:[#allocation2 + $0x98] sm:$0xff]
  %v283 = vld [vmem:[#allocation2 + $0xa8] sm:$0xff]
  %v284 = vld [vmem:[#allocation2 + $0xb0] sm:$0xff]
  %v285 = vld [vmem:[#allocation2 + $0xc0] sm:$0xff]
  %v286 = vld [vmem:[#allocation2 + $0xc8] sm:$0xff]
  %v287 = vld [vmem:[#allocation2 + $0xd8] sm:$0xff]
  %v288 = vld [vmem:[#allocation2 + $0xe0] sm:$0xff]
  %v289 = vld [vmem:[#allocation2 + $0xf0] sm:$0xff]
  %v290 = vld [vmem:[#allocation2 + $0xf8] sm:$0xff]
  %v291 = vld [vmem:[#allocation2 + $0x108] sm:$0xff]
  %v292 = vld [vmem:[#allocation2 + $0x110] sm:$0xff]
  %v293 = vld [vmem:[#allocation2 + $0x120] sm:$0xff]
  %v294 = vld [vmem:[#allocation2 + $0x128] sm:$0xff]
  %v295 = vld [vmem:[#allocation2 + $0x138] sm:$0xff]
  %v296 = vld [vmem:[#allocation2 + $0x140] sm:$0xff]
  %v297 = vld [vmem:[#allocation2 + $0x150] sm:$0xff]
  %v298 = vld [vmem:[#allocation2 + $0x158] sm:$0xff]
  %v299 = vld [vmem:[#allocation2 + $0x168] sm:$0xff]
  %v300 = vld [vmem:[#allocation2 + $0x170] sm:$0xff]
  %v301 = vld [vmem:[#allocation2 + $0x1b0] sm:$0xff]
  %v302 = vld [vmem:[#allocation2 + $0x1b8] sm:$0xff]
  %v303 = vld [vmem:[#allocation2 + $0x1c8] sm:$0xff]
  %v304 = vld [vmem:[#allocation2 + $0x1d0] sm:$0xff]
  %v305 = vld [vmem:[#allocation2 + $0x1e0] sm:$0xff]
  %v306 = vld [vmem:[#allocation2 + $0x1e8] sm:$0xff]
  %v307 = vld [vmem:[#allocation2 + $0x1f8] sm:$0xff]
  %v308 = vld [vmem:[#allocation2 + $0x200] sm:$0xff]
  %v309 = vld [vmem:[#allocation2 + $0x210] sm:$0xff]
  %v310 = vld [vmem:[#allocation2 + $0x218] sm:$0xff]
  %v311 = vld [vmem:[#allocation2 + $0x228] sm:$0xff]
  %v312 = vld [vmem:[#allocation2 + $0x230] sm:$0xff]
  %v313 = vld [vmem:[#allocation2 + $0x240] sm:$0xff]
  %v314 = vld [vmem:[#allocation2 + $0x248] sm:$0xff]
  %v315 = vld [vmem:[#allocation2 + $0x258] sm:$0xff]
  %v316 = vld [vmem:[#allocation2 + $0x260] sm:$0xff]
  %v317 = vld [vmem:[#allocation2 + $0x270] sm:$0xff]
  %v318 = vld [vmem:[#allocation2 + $0x278] sm:$0xff]
  %v319 = vld [vmem:[#allocation2 + $0x288] sm:$0xff]
  %v320 = vld [vmem:[#allocation2 + $0x290] sm:$0xff]
  %v321 = vld [vmem:[#allocation2 + $0x2a0] sm:$0xff]
  %v322 = vld [vmem:[#allocation2 + $0x2a8] sm:$0xff]
  %v323 = vld [vmem:[#allocation2 + $0x2b8] sm:$0xff]
  %v324 = vld [vmem:[#allocation2 + $0x2c0] sm:$0xff]
  %v325 = vld [vmem:[#allocation2 + $0x2d0] sm:$0xff]
  %v326 = vld [vmem:[#allocation2 + $0x2d8] sm:$0xff]
  %v327 = vld [vmem:[#allocation2 + $0x2e8] sm:$0xff]
  %v328 = vld [vmem:[#allocation2 + $0x2f0] sm:$0xff]
  %v329 = vld [vmem:[#allocation2 + $0x300] sm:$0xff]
  %v330 = vld [vmem:[#allocation2 + $0x308] sm:$0xff]
  %v331 = vld [vmem:[#allocation2 + $0x318] sm:$0xff]
  %v332 = vld [vmem:[#allocation2 + $0x320] sm:$0xff]
  %v333 = vpack.c.bf16 %v270, %v269
  %v334 = vpack.c.bf16 %v272, %v271
  %v335 = vpack.c.bf16 %v274, %v273
  %v336 = vpack.c.bf16 %v276, %v275
  %v337 = vpack.c.bf16 %v278, %v277
  %v338 = vpack.c.bf16 %v280, %v279
  %v339 = vpack.c.bf16 %v282, %v281
  %v340 = vpack.c.bf16 %v284, %v283
  %v341 = vpack.c.bf16 %v286, %v285
  %v342 = vpack.c.bf16 %v288, %v287
  %v343 = vpack.c.bf16 %v290, %v289
  %v344 = vpack.c.bf16 %v292, %v291
  %v345 = vpack.c.bf16 %v294, %v293
  %v346 = vpack.c.bf16 %v296, %v295
  %v347 = vpack.c.bf16 %v298, %v297
  %v348 = vpack.c.bf16 %v300, %v299
  %v349 = vpack.c.bf16 %v302, %v301
  %v350 = vpack.c.bf16 %v304, %v303
  %v351 = vpack.c.bf16 %v306, %v305
  %v352 = vpack.c.bf16 %v308, %v307
  %v353 = vpack.c.bf16 %v310, %v309
  %v354 = vpack.c.bf16 %v312, %v311
  %v355 = vpack.c.bf16 %v314, %v313
  %v356 = vpack.c.bf16 %v316, %v315
  %v357 = vpack.c.bf16 %v318, %v317
  %v358 = vpack.c.bf16 %v320, %v319
  %v359 = vpack.c.bf16 %v322, %v321
  %v360 = vpack.c.bf16 %v324, %v323
  %v361 = vpack.c.bf16 %v326, %v325
  %v362 = vpack.c.bf16 %v328, %v327
  %v363 = vpack.c.bf16 %v330, %v329
  %v364 = vpack.c.bf16 %v332, %v331
  %v365 = vld [vmem:[#allocation2 + $0x1] sm:$0xff]
  %v366 = vld [vmem:[#allocation2 + $0x9] sm:$0xff]
  %v367 = vld [vmem:[#allocation2 + $0x19] sm:$0xff]
  %v368 = vld [vmem:[#allocation2 + $0x21] sm:$0xff]
  %v369 = vld [vmem:[#allocation2 + $0x31] sm:$0xff]
  %v370 = vld [vmem:[#allocation2 + $0x39] sm:$0xff]
  %v371 = vld [vmem:[#allocation2 + $0x49] sm:$0xff]
  %v372 = vld [vmem:[#allocation2 + $0x51] sm:$0xff]
  %v373 = vld [vmem:[#allocation2 + $0x61] sm:$0xff]
  %v374 = vld [vmem:[#allocation2 + $0x69] sm:$0xff]
  %v375 = vld [vmem:[#allocation2 + $0x79] sm:$0xff]
  %v376 = vld [vmem:[#allocation2 + $0x81] sm:$0xff]
  %v377 = vld [vmem:[#allocation2 + $0x91] sm:$0xff]
  %v378 = vld [vmem:[#allocation2 + $0x99] sm:$0xff]
  %v379 = vld [vmem:[#allocation2 + $0xa9] sm:$0xff]
  %v380 = vld [vmem:[#allocation2 + $0xb1] sm:$0xff]
  %v381 = vld [vmem:[#allocation2 + $0xc1] sm:$0xff]
  %v382 = vld [vmem:[#allocation2 + $0xc9] sm:$0xff]
  %v383 = vld [vmem:[#allocation2 + $0xd9] sm:$0xff]
  %v384 = vld [vmem:[#allocation2 + $0xe1] sm:$0xff]
  %v385 = vld [vmem:[#allocation2 + $0xf1] sm:$0xff]
  %v386 = vld [vmem:[#allocation2 + $0xf9] sm:$0xff]
  %v387 = vld [vmem:[#allocation2 + $0x109] sm:$0xff]
  %v388 = vld [vmem:[#allocation2 + $0x111] sm:$0xff]
  %v389 = vld [vmem:[#allocation2 + $0x121] sm:$0xff]
  %v390 = vld [vmem:[#allocation2 + $0x129] sm:$0xff]
  %v391 = vld [vmem:[#allocation2 + $0x139] sm:$0xff]
  %v392 = vld [vmem:[#allocation2 + $0x141] sm:$0xff]
  %v393 = vld [vmem:[#allocation2 + $0x151] sm:$0xff]
  %v394 = vld [vmem:[#allocation2 + $0x159] sm:$0xff]
  %v395 = vld [vmem:[#allocation2 + $0x169] sm:$0xff]
  %v396 = vld [vmem:[#allocation2 + $0x171] sm:$0xff]
  %v397 = vld [vmem:[#allocation2 + $0x1b1] sm:$0xff]
  %v398 = vld [vmem:[#allocation2 + $0x1b9] sm:$0xff]
  %v399 = vld [vmem:[#allocation2 + $0x1c9] sm:$0xff]
  %v400 = vld [vmem:[#allocation2 + $0x1d1] sm:$0xff]
  %v401 = vld [vmem:[#allocation2 + $0x1e1] sm:$0xff]
  %v402 = vld [vmem:[#allocation2 + $0x1e9] sm:$0xff]
  %v403 = vld [vmem:[#allocation2 + $0x1f9] sm:$0xff]
  %v404 = vld [vmem:[#allocation2 + $0x201] sm:$0xff]
  %v405 = vld [vmem:[#allocation2 + $0x211] sm:$0xff]
  %v406 = vld [vmem:[#allocation2 + $0x219] sm:$0xff]
  %v407 = vld [vmem:[#allocation2 + $0x229] sm:$0xff]
  %v408 = vld [vmem:[#allocation2 + $0x231] sm:$0xff]
  %v409 = vld [vmem:[#allocation2 + $0x241] sm:$0xff]
  %v410 = vld [vmem:[#allocation2 + $0x249] sm:$0xff]
  %v411 = vld [vmem:[#allocation2 + $0x259] sm:$0xff]
  %v412 = vld [vmem:[#allocation2 + $0x261] sm:$0xff]
  %v413 = vld [vmem:[#allocation2 + $0x271] sm:$0xff]
  %v414 = vld [vmem:[#allocation2 + $0x279] sm:$0xff]
  %v415 = vld [vmem:[#allocation2 + $0x289] sm:$0xff]
  %v416 = vld [vmem:[#allocation2 + $0x291] sm:$0xff]
  %v417 = vld [vmem:[#allocation2 + $0x2a1] sm:$0xff]
  %v418 = vld [vmem:[#allocation2 + $0x2a9] sm:$0xff]
  %v419 = vld [vmem:[#allocation2 + $0x2b9] sm:$0xff]
  %v420 = vld [vmem:[#allocation2 + $0x2c1] sm:$0xff]
  %v421 = vld [vmem:[#allocation2 + $0x2d1] sm:$0xff]
  %v422 = vld [vmem:[#allocation2 + $0x2d9] sm:$0xff]
  %v423 = vld [vmem:[#allocation2 + $0x2e9] sm:$0xff]
  %v424 = vld [vmem:[#allocation2 + $0x2f1] sm:$0xff]
  %v425 = vld [vmem:[#allocation2 + $0x301] sm:$0xff]
  %v426 = vld [vmem:[#allocation2 + $0x309] sm:$0xff]
  %v427 = vld [vmem:[#allocation2 + $0x319] sm:$0xff]
  %v428 = vld [vmem:[#allocation2 + $0x321] sm:$0xff]
  %v429 = vpack.c.bf16 %v366, %v365
  %v430 = vpack.c.bf16 %v368, %v367
  %v431 = vpack.c.bf16 %v370, %v369
  %v432 = vpack.c.bf16 %v372, %v371
  %v433 = vpack.c.bf16 %v374, %v373
  %v434 = vpack.c.bf16 %v376, %v375
  %v435 = vpack.c.bf16 %v378, %v377
  %v436 = vpack.c.bf16 %v380, %v379
  %v437 = vpack.c.bf16 %v382, %v381
  %v438 = vpack.c.bf16 %v384, %v383
  %v439 = vpack.c.bf16 %v386, %v385
  %v440 = vpack.c.bf16 %v388, %v387
  %v441 = vpack.c.bf16 %v390, %v389
  %v442 = vpack.c.bf16 %v392, %v391
  %v443 = vpack.c.bf16 %v394, %v393
  %v444 = vpack.c.bf16 %v396, %v395
  %v445 = vpack.c.bf16 %v398, %v397
  %v446 = vpack.c.bf16 %v400, %v399
  %v447 = vpack.c.bf16 %v402, %v401
  %v448 = vpack.c.bf16 %v404, %v403
  %v449 = vpack.c.bf16 %v406, %v405
  %v450 = vpack.c.bf16 %v408, %v407
  %v451 = vpack.c.bf16 %v410, %v409
  %v452 = vpack.c.bf16 %v412, %v411
  %v453 = vpack.c.bf16 %v414, %v413
  %v454 = vpack.c.bf16 %v416, %v415
  %v455 = vpack.c.bf16 %v418, %v417
  %v456 = vpack.c.bf16 %v420, %v419
  %v457 = vpack.c.bf16 %v422, %v421
  %v458 = vpack.c.bf16 %v424, %v423
  %v459 = vpack.c.bf16 %v426, %v425
  %v460 = vpack.c.bf16 %v428, %v427
  %v461 = vld [vmem:[#allocation2 + $0x2] sm:$0xff]
  %v462 = vld [vmem:[#allocation2 + $0xa] sm:$0xff]
  %v463 = vld [vmem:[#allocation2 + $0x1a] sm:$0xff]
  %v464 = vld [vmem:[#allocation2 + $0x22] sm:$0xff]
  %v465 = vld [vmem:[#allocation2 + $0x32] sm:$0xff]
  %v466 = vld [vmem:[#allocation2 + $0x3a] sm:$0xff]
  %v467 = vld [vmem:[#allocation2 + $0x4a] sm:$0xff]
  %v468 = vld [vmem:[#allocation2 + $0x52] sm:$0xff]
  %v469 = vld [vmem:[#allocation2 + $0x62] sm:$0xff]
  %v470 = vld [vmem:[#allocation2 + $0x6a] sm:$0xff]
  %v471 = vld [vmem:[#allocation2 + $0x7a] sm:$0xff]
  %v472 = vld [vmem:[#allocation2 + $0x82] sm:$0xff]
  %v473 = vld [vmem:[#allocation2 + $0x92] sm:$0xff]
  %v474 = vld [vmem:[#allocation2 + $0x9a] sm:$0xff]
  %v475 = vld [vmem:[#allocation2 + $0xaa] sm:$0xff]
  %v476 = vld [vmem:[#allocation2 + $0xb2] sm:$0xff]
  %v477 = vld [vmem:[#allocation2 + $0xc2] sm:$0xff]
  %v478 = vld [vmem:[#allocation2 + $0xca] sm:$0xff]
  %v479 = vld [vmem:[#allocation2 + $0xda] sm:$0xff]
  %v480 = vld [vmem:[#allocation2 + $0xe2] sm:$0xff]
  %v481 = vld [vmem:[#allocation2 + $0xf2] sm:$0xff]
  %v482 = vld [vmem:[#allocation2 + $0xfa] sm:$0xff]
  %v483 = vld [vmem:[#allocation2 + $0x10a] sm:$0xff]
  %v484 = vld [vmem:[#allocation2 + $0x112] sm:$0xff]
  %v485 = vld [vmem:[#allocation2 + $0x122] sm:$0xff]
  %v486 = vld [vmem:[#allocation2 + $0x12a] sm:$0xff]
  %v487 = vld [vmem:[#allocation2 + $0x13a] sm:$0xff]
  %v488 = vld [vmem:[#allocation2 + $0x142] sm:$0xff]
  %v489 = vld [vmem:[#allocation2 + $0x152] sm:$0xff]
  %v490 = vld [vmem:[#allocation2 + $0x15a] sm:$0xff]
  %v491 = vld [vmem:[#allocation2 + $0x16a] sm:$0xff]
  %v492 = vld [vmem:[#allocation2 + $0x172] sm:$0xff]
  %v493 = vld [vmem:[#allocation2 + $0x1b2] sm:$0xff]
  %v494 = vld [vmem:[#allocation2 + $0x1ba] sm:$0xff]
  %v495 = vld [vmem:[#allocation2 + $0x1ca] sm:$0xff]
  %v496 = vld [vmem:[#allocation2 + $0x1d2] sm:$0xff]
  %v497 = vld [vmem:[#allocation2 + $0x1e2] sm:$0xff]
  %v498 = vld [vmem:[#allocation2 + $0x1ea] sm:$0xff]
  %v499 = vld [vmem:[#allocation2 + $0x1fa] sm:$0xff]
  %v500 = vld [vmem:[#allocation2 + $0x202] sm:$0xff]
  %v501 = vld [vmem:[#allocation2 + $0x212] sm:$0xff]
  %v502 = vld [vmem:[#allocation2 + $0x21a] sm:$0xff]
  %v503 = vld [vmem:[#allocation2 + $0x22a] sm:$0xff]
  %v504 = vld [vmem:[#allocation2 + $0x232] sm:$0xff]
  %v505 = vld [vmem:[#allocation2 + $0x242] sm:$0xff]
  %v506 = vld [vmem:[#allocation2 + $0x24a] sm:$0xff]
  %v507 = vld [vmem:[#allocation2 + $0x25a] sm:$0xff]
  %v508 = vld [vmem:[#allocation2 + $0x262] sm:$0xff]
  %v509 = vld [vmem:[#allocation2 + $0x272] sm:$0xff]
  %v510 = vld [vmem:[#allocation2 + $0x27a] sm:$0xff]
  %v511 = vld [vmem:[#allocation2 + $0x28a] sm:$0xff]
  %v512 = vld [vmem:[#allocation2 + $0x292] sm:$0xff]
  %v513 = vld [vmem:[#allocation2 + $0x2a2] sm:$0xff]
  %v514 = vld [vmem:[#allocation2 + $0x2aa] sm:$0xff]
  %v515 = vld [vmem:[#allocation2 + $0x2ba] sm:$0xff]
  %v516 = vld [vmem:[#allocation2 + $0x2c2] sm:$0xff]
  %v517 = vld [vmem:[#allocation2 + $0x2d2] sm:$0xff]
  %v518 = vld [vmem:[#allocation2 + $0x2da] sm:$0xff]
  %v519 = vld [vmem:[#allocation2 + $0x2ea] sm:$0xff]
  %v520 = vld [vmem:[#allocation2 + $0x2f2] sm:$0xff]
  %v521 = vld [vmem:[#allocation2 + $0x302] sm:$0xff]
  %v522 = vld [vmem:[#allocation2 + $0x30a] sm:$0xff]
  %v523 = vld [vmem:[#allocation2 + $0x31a] sm:$0xff]
  %v524 = vld [vmem:[#allocation2 + $0x322] sm:$0xff]
  %v525 = vpack.c.bf16 %v462, %v461
  %v526 = vpack.c.bf16 %v464, %v463
  %v527 = vpack.c.bf16 %v466, %v465
  %v528 = vpack.c.bf16 %v468, %v467
  %v529 = vpack.c.bf16 %v470, %v469
  %v530 = vpack.c.bf16 %v472, %v471
  %v531 = vpack.c.bf16 %v474, %v473
  %v532 = vpack.c.bf16 %v476, %v475
  %v533 = vpack.c.bf16 %v478, %v477
  %v534 = vpack.c.bf16 %v480, %v479
  %v535 = vpack.c.bf16 %v482, %v481
  %v536 = vpack.c.bf16 %v484, %v483
  %v537 = vpack.c.bf16 %v486, %v485
  %v538 = vpack.c.bf16 %v488, %v487
  %v539 = vpack.c.bf16 %v490, %v489
  %v540 = vpack.c.bf16 %v492, %v491
  %v541 = vpack.c.bf16 %v494, %v493
  %v542 = vpack.c.bf16 %v496, %v495
  %v543 = vpack.c.bf16 %v498, %v497
  %v544 = vpack.c.bf16 %v500, %v499
  %v545 = vpack.c.bf16 %v502, %v501
  %v546 = vpack.c.bf16 %v504, %v503
  %v547 = vpack.c.bf16 %v506, %v505
  %v548 = vpack.c.bf16 %v508, %v507
  %v549 = vpack.c.bf16 %v510, %v509
  %v550 = vpack.c.bf16 %v512, %v511
  %v551 = vpack.c.bf16 %v514, %v513
  %v552 = vpack.c.bf16 %v516, %v515
  %v553 = vpack.c.bf16 %v518, %v517
  %v554 = vpack.c.bf16 %v520, %v519
  %v555 = vpack.c.bf16 %v522, %v521
  %v556 = vpack.c.bf16 %v524, %v523
  %v557 = vld [vmem:[%s204] sm:$0xff]
  %v558 = vld [vmem:[%s204 + $0x8] sm:$0xff]
  %v559 = vld [vmem:[%s204 + $0x18] sm:$0xff]
  %v560 = vld [vmem:[%s204 + $0x20] sm:$0xff]
  %v561 = vld [vmem:[%s204 + $0x30] sm:$0xff]
  %v562 = vld [vmem:[%s204 + $0x38] sm:$0xff]
  %v563 = vld [vmem:[%s204 + $0x48] sm:$0xff]
  %v564 = vld [vmem:[%s204 + $0x50] sm:$0xff]
  %v565 = vld [vmem:[%s204 + $0x60] sm:$0xff]
  %v566 = vld [vmem:[%s204 + $0x68] sm:$0xff]
  %v567 = vld [vmem:[%s204 + $0x78] sm:$0xff]
  %v568 = vld [vmem:[%s204 + $0x80] sm:$0xff]
  %v569 = vld [vmem:[%s204 + $0x90] sm:$0xff]
  %v570 = vld [vmem:[%s204 + $0x98] sm:$0xff]
  %v571 = vld [vmem:[%s204 + $0xa8] sm:$0xff]
  %v572 = vld [vmem:[%s204 + $0xb0] sm:$0xff]
  %v573 = vld [vmem:[%s204 + $0xc0] sm:$0xff]
  %v574 = vld [vmem:[%s204 + $0xc8] sm:$0xff]
  %v575 = vld [vmem:[%s204 + $0xd8] sm:$0xff]
  %v576 = vld [vmem:[%s204 + $0xe0] sm:$0xff]
  %v577 = vld [vmem:[%s204 + $0xf0] sm:$0xff]
  %v578 = vld [vmem:[%s204 + $0xf8] sm:$0xff]
  %v579 = vld [vmem:[%s204 + $0x108] sm:$0xff]
  %v580 = vld [vmem:[%s204 + $0x110] sm:$0xff]
  %v581 = vld [vmem:[%s204 + $0x120] sm:$0xff]
  %v582 = vld [vmem:[%s204 + $0x128] sm:$0xff]
  %v583 = vld [vmem:[%s204 + $0x138] sm:$0xff]
  %v584 = vld [vmem:[%s204 + $0x140] sm:$0xff]
  %v585 = vld [vmem:[%s204 + $0x150] sm:$0xff]
  %v586 = vld [vmem:[%s204 + $0x158] sm:$0xff]
  %v587 = vld [vmem:[%s204 + $0x168] sm:$0xff]
  %v588 = vld [vmem:[%s204 + $0x170] sm:$0xff]
  %v589 = vld [vmem:[%s204 + $0x1b0] sm:$0xff]
  %v590 = vld [vmem:[%s204 + $0x1b8] sm:$0xff]
  %v591 = vld [vmem:[%s204 + $0x1c8] sm:$0xff]
  %v592 = vld [vmem:[%s204 + $0x1d0] sm:$0xff]
  %v593 = vld [vmem:[%s204 + $0x1e0] sm:$0xff]
  %v594 = vld [vmem:[%s204 + $0x1e8] sm:$0xff]
  %v595 = vld [vmem:[%s204 + $0x1f8] sm:$0xff]
  %v596 = vld [vmem:[%s204 + $0x200] sm:$0xff]
  %v597 = vld [vmem:[%s204 + $0x210] sm:$0xff]
  %v598 = vld [vmem:[%s204 + $0x218] sm:$0xff]
  %v599 = vld [vmem:[%s204 + $0x228] sm:$0xff]
  %v600 = vld [vmem:[%s204 + $0x230] sm:$0xff]
  %v601 = vld [vmem:[%s204 + $0x240] sm:$0xff]
  %v602 = vld [vmem:[%s204 + $0x248] sm:$0xff]
  %v603 = vld [vmem:[%s204 + $0x258] sm:$0xff]
  %v604 = vld [vmem:[%s204 + $0x260] sm:$0xff]
  %v605 = vld [vmem:[%s204 + $0x270] sm:$0xff]
  %v606 = vld [vmem:[%s204 + $0x278] sm:$0xff]
  %v607 = vld [vmem:[%s204 + $0x288] sm:$0xff]
  %v608 = vld [vmem:[%s204 + $0x290] sm:$0xff]
  %v609 = vld [vmem:[%s204 + $0x2a0] sm:$0xff]
  %v610 = vld [vmem:[%s204 + $0x2a8] sm:$0xff]
  %v611 = vld [vmem:[%s204 + $0x2b8] sm:$0xff]
  %v612 = vld [vmem:[%s204 + $0x2c0] sm:$0xff]
  %v613 = vld [vmem:[%s204 + $0x2d0] sm:$0xff]
  %v614 = vld [vmem:[%s204 + $0x2d8] sm:$0xff]
  %v615 = vld [vmem:[%s204 + $0x2e8] sm:$0xff]
  %v616 = vld [vmem:[%s204 + $0x2f0] sm:$0xff]
  %v617 = vld [vmem:[%s204 + $0x300] sm:$0xff]
  %v618 = vld [vmem:[%s204 + $0x308] sm:$0xff]
  %v619 = vld [vmem:[%s204 + $0x318] sm:$0xff]
  %v620 = vld [vmem:[%s204 + $0x320] sm:$0xff]
  %v621 = vpack.c.bf16 %v558, %v557
  %v622 = vpack.c.bf16 %v560, %v559
  %v623 = vpack.c.bf16 %v562, %v561
  %v624 = vpack.c.bf16 %v564, %v563
  %v625 = vpack.c.bf16 %v566, %v565
  %v626 = vpack.c.bf16 %v568, %v567
  %v627 = vpack.c.bf16 %v570, %v569
  %v628 = vpack.c.bf16 %v572, %v571
  %v629 = vpack.c.bf16 %v574, %v573
  %v630 = vpack.c.bf16 %v576, %v575
  %v631 = vpack.c.bf16 %v578, %v577
  %v632 = vpack.c.bf16 %v580, %v579
  %v633 = vpack.c.bf16 %v582, %v581
  %v634 = vpack.c.bf16 %v584, %v583
  %v635 = vpack.c.bf16 %v586, %v585
  %v636 = vpack.c.bf16 %v588, %v587
  %v637 = vpack.c.bf16 %v590, %v589
  %v638 = vpack.c.bf16 %v592, %v591
  %v639 = vpack.c.bf16 %v594, %v593
  %v640 = vpack.c.bf16 %v596, %v595
  %v641 = vpack.c.bf16 %v598, %v597
  %v642 = vpack.c.bf16 %v600, %v599
  %v643 = vpack.c.bf16 %v602, %v601
  %v644 = vpack.c.bf16 %v604, %v603
  %v645 = vpack.c.bf16 %v606, %v605
  %v646 = vpack.c.bf16 %v608, %v607
  %v647 = vpack.c.bf16 %v610, %v609
  %v648 = vpack.c.bf16 %v612, %v611
  %v649 = vpack.c.bf16 %v614, %v613
  %v650 = vpack.c.bf16 %v616, %v615
  %v651 = vpack.c.bf16 %v618, %v617
  %v652 = vpack.c.bf16 %v620, %v619
  %v653 = vld [vmem:[%s204 + $0x1] sm:$0xff]
  %v654 = vld [vmem:[%s204 + $0x9] sm:$0xff]
  %v655 = vld [vmem:[%s204 + $0x19] sm:$0xff]
  %v656 = vld [vmem:[%s204 + $0x21] sm:$0xff]
  %v657 = vld [vmem:[%s204 + $0x31] sm:$0xff]
  %v658 = vld [vmem:[%s204 + $0x39] sm:$0xff]
  %v659 = vld [vmem:[%s204 + $0x49] sm:$0xff]
  %v660 = vld [vmem:[%s204 + $0x51] sm:$0xff]
  %v661 = vld [vmem:[%s204 + $0x61] sm:$0xff]
  %v662 = vld [vmem:[%s204 + $0x69] sm:$0xff]
  %v663 = vld [vmem:[%s204 + $0x79] sm:$0xff]
  %v664 = vld [vmem:[%s204 + $0x81] sm:$0xff]
  %v665 = vld [vmem:[%s204 + $0x91] sm:$0xff]
  %v666 = vld [vmem:[%s204 + $0x99] sm:$0xff]
  %v667 = vld [vmem:[%s204 + $0xa9] sm:$0xff]
  %v668 = vld [vmem:[%s204 + $0xb1] sm:$0xff]
  %v669 = vld [vmem:[%s204 + $0xc1] sm:$0xff]
  %v670 = vld [vmem:[%s204 + $0xc9] sm:$0xff]
  %v671 = vld [vmem:[%s204 + $0xd9] sm:$0xff]
  %v672 = vld [vmem:[%s204 + $0xe1] sm:$0xff]
  %v673 = vld [vmem:[%s204 + $0xf1] sm:$0xff]
  %v674 = vld [vmem:[%s204 + $0xf9] sm:$0xff]
  %v675 = vld [vmem:[%s204 + $0x109] sm:$0xff]
  %v676 = vld [vmem:[%s204 + $0x111] sm:$0xff]
  %v677 = vld [vmem:[%s204 + $0x121] sm:$0xff]
  %v678 = vld [vmem:[%s204 + $0x129] sm:$0xff]
  %v679 = vld [vmem:[%s204 + $0x139] sm:$0xff]
  %v680 = vld [vmem:[%s204 + $0x141] sm:$0xff]
  %v681 = vld [vmem:[%s204 + $0x151] sm:$0xff]
  %v682 = vld [vmem:[%s204 + $0x159] sm:$0xff]
  %v683 = vld [vmem:[%s204 + $0x169] sm:$0xff]
  %v684 = vld [vmem:[%s204 + $0x171] sm:$0xff]
  %v685 = vld [vmem:[%s204 + $0x1b1] sm:$0xff]
  %v686 = vld [vmem:[%s204 + $0x1b9] sm:$0xff]
  %v687 = vld [vmem:[%s204 + $0x1c9] sm:$0xff]
  %v688 = vld [vmem:[%s204 + $0x1d1] sm:$0xff]
  %v689 = vld [vmem:[%s204 + $0x1e1] sm:$0xff]
  %v690 = vld [vmem:[%s204 + $0x1e9] sm:$0xff]
  %v691 = vld [vmem:[%s204 + $0x1f9] sm:$0xff]
  %v692 = vld [vmem:[%s204 + $0x201] sm:$0xff]
  %v693 = vld [vmem:[%s204 + $0x211] sm:$0xff]
  %v694 = vld [vmem:[%s204 + $0x219] sm:$0xff]
  %v695 = vld [vmem:[%s204 + $0x229] sm:$0xff]
  %v696 = vld [vmem:[%s204 + $0x231] sm:$0xff]
  %v697 = vld [vmem:[%s204 + $0x241] sm:$0xff]
  %v698 = vld [vmem:[%s204 + $0x249] sm:$0xff]
  %v699 = vld [vmem:[%s204 + $0x259] sm:$0xff]
  %v700 = vld [vmem:[%s204 + $0x261] sm:$0xff]
  %v701 = vld [vmem:[%s204 + $0x271] sm:$0xff]
  %v702 = vld [vmem:[%s204 + $0x279] sm:$0xff]
  %v703 = vld [vmem:[%s204 + $0x289] sm:$0xff]
  %v704 = vld [vmem:[%s204 + $0x291] sm:$0xff]
  %v705 = vld [vmem:[%s204 + $0x2a1] sm:$0xff]
  %v706 = vld [vmem:[%s204 + $0x2a9] sm:$0xff]
  %v707 = vld [vmem:[%s204 + $0x2b9] sm:$0xff]
  %v708 = vld [vmem:[%s204 + $0x2c1] sm:$0xff]
  %v709 = vld [vmem:[%s204 + $0x2d1] sm:$0xff]
  %v710 = vld [vmem:[%s204 + $0x2d9] sm:$0xff]
  %v711 = vld [vmem:[%s204 + $0x2e9] sm:$0xff]
  %v712 = vld [vmem:[%s204 + $0x2f1] sm:$0xff]
  %v713 = vld [vmem:[%s204 + $0x301] sm:$0xff]
  %v714 = vld [vmem:[%s204 + $0x309] sm:$0xff]
  %v715 = vld [vmem:[%s204 + $0x319] sm:$0xff]
  %v716 = vld [vmem:[%s204 + $0x321] sm:$0xff]
  %v717 = vpack.c.bf16 %v654, %v653
  %v718 = vpack.c.bf16 %v656, %v655
  %v719 = vpack.c.bf16 %v658, %v657
  %v720 = vpack.c.bf16 %v660, %v659
  %v721 = vpack.c.bf16 %v662, %v661
  %v722 = vpack.c.bf16 %v664, %v663
  %v723 = vpack.c.bf16 %v666, %v665
  %v724 = vpack.c.bf16 %v668, %v667
  %v725 = vpack.c.bf16 %v670, %v669
  %v726 = vpack.c.bf16 %v672, %v671
  %v727 = vpack.c.bf16 %v674, %v673
  %v728 = vpack.c.bf16 %v676, %v675
  %v729 = vpack.c.bf16 %v678, %v677
  %v730 = vpack.c.bf16 %v680, %v679
  %v731 = vpack.c.bf16 %v682, %v681
  %v732 = vpack.c.bf16 %v684, %v683
  %v733 = vpack.c.bf16 %v686, %v685
  %v734 = vpack.c.bf16 %v688, %v687
  %v735 = vpack.c.bf16 %v690, %v689
  %v736 = vpack.c.bf16 %v692, %v691
  %v737 = vpack.c.bf16 %v694, %v693
  %v738 = vpack.c.bf16 %v696, %v695
  %v739 = vpack.c.bf16 %v698, %v697
  %v740 = vpack.c.bf16 %v700, %v699
  %v741 = vpack.c.bf16 %v702, %v701
  %v742 = vpack.c.bf16 %v704, %v703
  %v743 = vpack.c.bf16 %v706, %v705
  %v744 = vpack.c.bf16 %v708, %v707
  %v745 = vpack.c.bf16 %v710, %v709
  %v746 = vpack.c.bf16 %v712, %v711
  %v747 = vpack.c.bf16 %v714, %v713
  %v748 = vpack.c.bf16 %v716, %v715
  %v749 = vld [vmem:[%s204 + $0x2] sm:$0xff]
  %v750 = vld [vmem:[%s204 + $0xa] sm:$0xff]
  %v751 = vld [vmem:[%s204 + $0x1a] sm:$0xff]
  %v752 = vld [vmem:[%s204 + $0x22] sm:$0xff]
  %v753 = vld [vmem:[%s204 + $0x32] sm:$0xff]
  %v754 = vld [vmem:[%s204 + $0x3a] sm:$0xff]
  %v755 = vld [vmem:[%s204 + $0x4a] sm:$0xff]
  %v756 = vld [vmem:[%s204 + $0x52] sm:$0xff]
  %v757 = vld [vmem:[%s204 + $0x62] sm:$0xff]
  %v758 = vld [vmem:[%s204 + $0x6a] sm:$0xff]
  %v759 = vld [vmem:[%s204 + $0x7a] sm:$0xff]
  %v760 = vld [vmem:[%s204 + $0x82] sm:$0xff]
  %v761 = vld [vmem:[%s204 + $0x92] sm:$0xff]
  %v762 = vld [vmem:[%s204 + $0x9a] sm:$0xff]
  %v763 = vld [vmem:[%s204 + $0xaa] sm:$0xff]
  %v764 = vld [vmem:[%s204 + $0xb2] sm:$0xff]
  %v765 = vld [vmem:[%s204 + $0xc2] sm:$0xff]
  %v766 = vld [vmem:[%s204 + $0xca] sm:$0xff]
  %v767 = vld [vmem:[%s204 + $0xda] sm:$0xff]
  %v768 = vld [vmem:[%s204 + $0xe2] sm:$0xff]
  %v769 = vld [vmem:[%s204 + $0xf2] sm:$0xff]
  %v770 = vld [vmem:[%s204 + $0xfa] sm:$0xff]
  %v771 = vld [vmem:[%s204 + $0x10a] sm:$0xff]
  %v772 = vld [vmem:[%s204 + $0x112] sm:$0xff]
  %v773 = vld [vmem:[%s204 + $0x122] sm:$0xff]
  %v774 = vld [vmem:[%s204 + $0x12a] sm:$0xff]
  %v775 = vld [vmem:[%s204 + $0x13a] sm:$0xff]
  %v776 = vld [vmem:[%s204 + $0x142] sm:$0xff]
  %v777 = vld [vmem:[%s204 + $0x152] sm:$0xff]
  %v778 = vld [vmem:[%s204 + $0x15a] sm:$0xff]
  %v779 = vld [vmem:[%s204 + $0x16a] sm:$0xff]
  %v780 = vld [vmem:[%s204 + $0x172] sm:$0xff]
  %v781 = vld [vmem:[%s204 + $0x1b2] sm:$0xff]
  %v782 = vld [vmem:[%s204 + $0x1ba] sm:$0xff]
  %v783 = vld [vmem:[%s204 + $0x1ca] sm:$0xff]
  %v784 = vld [vmem:[%s204 + $0x1d2] sm:$0xff]
  %v785 = vld [vmem:[%s204 + $0x1e2] sm:$0xff]
  %v786 = vld [vmem:[%s204 + $0x1ea] sm:$0xff]
  %v787 = vld [vmem:[%s204 + $0x1fa] sm:$0xff]
  %v788 = vld [vmem:[%s204 + $0x202] sm:$0xff]
  %v789 = vld [vmem:[%s204 + $0x212] sm:$0xff]
  %v790 = vld [vmem:[%s204 + $0x21a] sm:$0xff]
  %v791 = vld [vmem:[%s204 + $0x22a] sm:$0xff]
  %v792 = vld [vmem:[%s204 + $0x232] sm:$0xff]
  %v793 = vld [vmem:[%s204 + $0x242] sm:$0xff]
  %v794 = vld [vmem:[%s204 + $0x24a] sm:$0xff]
  %v795 = vld [vmem:[%s204 + $0x25a] sm:$0xff]
  %v796 = vld [vmem:[%s204 + $0x262] sm:$0xff]
  %v797 = vld [vmem:[%s204 + $0x272] sm:$0xff]
  %v798 = vld [vmem:[%s204 + $0x27a] sm:$0xff]
  %v799 = vld [vmem:[%s204 + $0x28a] sm:$0xff]
  %v800 = vld [vmem:[%s204 + $0x292] sm:$0xff]
  %v801 = vld [vmem:[%s204 + $0x2a2] sm:$0xff]
  %v802 = vld [vmem:[%s204 + $0x2aa] sm:$0xff]
  %v803 = vld [vmem:[%s204 + $0x2ba] sm:$0xff]
  %v804 = vld [vmem:[%s204 + $0x2c2] sm:$0xff]
  %v805 = vld [vmem:[%s204 + $0x2d2] sm:$0xff]
  %v806 = vld [vmem:[%s204 + $0x2da] sm:$0xff]
  %v807 = vld [vmem:[%s204 + $0x2ea] sm:$0xff]
  %v808 = vld [vmem:[%s204 + $0x2f2] sm:$0xff]
  %v809 = vld [vmem:[%s204 + $0x302] sm:$0xff]
  %v810 = vld [vmem:[%s204 + $0x30a] sm:$0xff]
  %v811 = vld [vmem:[%s204 + $0x31a] sm:$0xff]
  %v812 = vld [vmem:[%s204 + $0x322] sm:$0xff]
  %v813 = vpack.c.bf16 %v750, %v749
  %v814 = vpack.c.bf16 %v752, %v751
  %v815 = vpack.c.bf16 %v754, %v753
  %v816 = vpack.c.bf16 %v756, %v755
  %v817 = vpack.c.bf16 %v758, %v757
  %v818 = vpack.c.bf16 %v760, %v759
  %v819 = vpack.c.bf16 %v762, %v761
  %v820 = vpack.c.bf16 %v764, %v763
  %v821 = vpack.c.bf16 %v766, %v765
  %v822 = vpack.c.bf16 %v768, %v767
  %v823 = vpack.c.bf16 %v770, %v769
  %v824 = vpack.c.bf16 %v772, %v771
  %v825 = vpack.c.bf16 %v774, %v773
  %v826 = vpack.c.bf16 %v776, %v775
  %v827 = vpack.c.bf16 %v778, %v777
  %v828 = vpack.c.bf16 %v780, %v779
  %v829 = vpack.c.bf16 %v782, %v781
  %v830 = vpack.c.bf16 %v784, %v783
  %v831 = vpack.c.bf16 %v786, %v785
  %v832 = vpack.c.bf16 %v788, %v787
  %v833 = vpack.c.bf16 %v790, %v789
  %v834 = vpack.c.bf16 %v792, %v791
  %v835 = vpack.c.bf16 %v794, %v793
  %v836 = vpack.c.bf16 %v796, %v795
  %v837 = vpack.c.bf16 %v798, %v797
  %v838 = vpack.c.bf16 %v800, %v799
  %v839 = vpack.c.bf16 %v802, %v801
  %v840 = vpack.c.bf16 %v804, %v803
  %v841 = vpack.c.bf16 %v806, %v805
  %v842 = vpack.c.bf16 %v808, %v807
  %v843 = vpack.c.bf16 %v810, %v809
  %v844 = vpack.c.bf16 %v812, %v811
  %s845 = scalar_lea.vmem [#allocation2], 48
  %v846 = vld [vmem:[%s845] sm:$0xff]
  %v847 = vld [vmem:[%s845 + $0x8] sm:$0xff]
  %v848 = vld [vmem:[%s845 + $0x18] sm:$0xff]
  %v849 = vld [vmem:[%s845 + $0x20] sm:$0xff]
  %v850 = vld [vmem:[%s845 + $0x30] sm:$0xff]
  %v851 = vld [vmem:[%s845 + $0x38] sm:$0xff]
  %v852 = vld [vmem:[%s845 + $0x48] sm:$0xff]
  %v853 = vld [vmem:[%s845 + $0x50] sm:$0xff]
  %v854 = vld [vmem:[%s845 + $0x60] sm:$0xff]
  %v855 = vld [vmem:[%s845 + $0x68] sm:$0xff]
  %v856 = vld [vmem:[%s845 + $0x78] sm:$0xff]
  %v857 = vld [vmem:[%s845 + $0x80] sm:$0xff]
  %v858 = vld [vmem:[%s845 + $0x90] sm:$0xff]
  %v859 = vld [vmem:[%s845 + $0x98] sm:$0xff]
  %v860 = vld [vmem:[%s845 + $0xa8] sm:$0xff]
  %v861 = vld [vmem:[%s845 + $0xb0] sm:$0xff]
  %v862 = vld [vmem:[%s845 + $0xc0] sm:$0xff]
  %v863 = vld [vmem:[%s845 + $0xc8] sm:$0xff]
  %v864 = vld [vmem:[%s845 + $0xd8] sm:$0xff]
  %v865 = vld [vmem:[%s845 + $0xe0] sm:$0xff]
  %v866 = vld [vmem:[%s845 + $0xf0] sm:$0xff]
  %v867 = vld [vmem:[%s845 + $0xf8] sm:$0xff]
  %v868 = vld [vmem:[%s845 + $0x108] sm:$0xff]
  %v869 = vld [vmem:[%s845 + $0x110] sm:$0xff]
  %v870 = vld [vmem:[%s845 + $0x120] sm:$0xff]
  %v871 = vld [vmem:[%s845 + $0x128] sm:$0xff]
  %v872 = vld [vmem:[%s845 + $0x138] sm:$0xff]
  %v873 = vld [vmem:[%s845 + $0x140] sm:$0xff]
  %v874 = vld [vmem:[%s845 + $0x150] sm:$0xff]
  %v875 = vld [vmem:[%s845 + $0x158] sm:$0xff]
  %v876 = vld [vmem:[%s845 + $0x168] sm:$0xff]
  %v877 = vld [vmem:[%s845 + $0x170] sm:$0xff]
  %v878 = vld [vmem:[%s845 + $0x1b0] sm:$0xff]
  %v879 = vld [vmem:[%s845 + $0x1b8] sm:$0xff]
  %v880 = vld [vmem:[%s845 + $0x1c8] sm:$0xff]
  %v881 = vld [vmem:[%s845 + $0x1d0] sm:$0xff]
  %v882 = vld [vmem:[%s845 + $0x1e0] sm:$0xff]
  %v883 = vld [vmem:[%s845 + $0x1e8] sm:$0xff]
  %v884 = vld [vmem:[%s845 + $0x1f8] sm:$0xff]
  %v885 = vld [vmem:[%s845 + $0x200] sm:$0xff]
  %v886 = vld [vmem:[%s845 + $0x210] sm:$0xff]
  %v887 = vld [vmem:[%s845 + $0x218] sm:$0xff]
  %v888 = vld [vmem:[%s845 + $0x228] sm:$0xff]
  %v889 = vld [vmem:[%s845 + $0x230] sm:$0xff]
  %v890 = vld [vmem:[%s845 + $0x240] sm:$0xff]
  %v891 = vld [vmem:[%s845 + $0x248] sm:$0xff]
  %v892 = vld [vmem:[%s845 + $0x258] sm:$0xff]
  %v893 = vld [vmem:[%s845 + $0x260] sm:$0xff]
  %v894 = vld [vmem:[%s845 + $0x270] sm:$0xff]
  %v895 = vld [vmem:[%s845 + $0x278] sm:$0xff]
  %v896 = vld [vmem:[%s845 + $0x288] sm:$0xff]
  %v897 = vld [vmem:[%s845 + $0x290] sm:$0xff]
  %v898 = vld [vmem:[%s845 + $0x2a0] sm:$0xff]
  %v899 = vld [vmem:[%s845 + $0x2a8] sm:$0xff]
  %v900 = vld [vmem:[%s845 + $0x2b8] sm:$0xff]
  %v901 = vld [vmem:[%s845 + $0x2c0] sm:$0xff]
  %v902 = vld [vmem:[%s845 + $0x2d0] sm:$0xff]
  %v903 = vld [vmem:[%s845 + $0x2d8] sm:$0xff]
  %v904 = vld [vmem:[%s845 + $0x2e8] sm:$0xff]
  %v905 = vld [vmem:[%s845 + $0x2f0] sm:$0xff]
  %v906 = vld [vmem:[%s845 + $0x300] sm:$0xff]
  %v907 = vld [vmem:[%s845 + $0x308] sm:$0xff]
  %v908 = vld [vmem:[%s845 + $0x318] sm:$0xff]
  %v909 = vld [vmem:[%s845 + $0x320] sm:$0xff]
  %v910 = vpack.c.bf16 %v847, %v846
  %v911 = vpack.c.bf16 %v849, %v848
  %v912 = vpack.c.bf16 %v851, %v850
  %v913 = vpack.c.bf16 %v853, %v852
  %v914 = vpack.c.bf16 %v855, %v854
  %v915 = vpack.c.bf16 %v857, %v856
  %v916 = vpack.c.bf16 %v859, %v858
  %v917 = vpack.c.bf16 %v861, %v860
  %v918 = vpack.c.bf16 %v863, %v862
  %v919 = vpack.c.bf16 %v865, %v864
  %v920 = vpack.c.bf16 %v867, %v866
  %v921 = vpack.c.bf16 %v869, %v868
  %v922 = vpack.c.bf16 %v871, %v870
  %v923 = vpack.c.bf16 %v873, %v872
  %v924 = vpack.c.bf16 %v875, %v874
  %v925 = vpack.c.bf16 %v877, %v876
  %v926 = vpack.c.bf16 %v879, %v878
  %v927 = vpack.c.bf16 %v881, %v880
  %v928 = vpack.c.bf16 %v883, %v882
  %v929 = vpack.c.bf16 %v885, %v884
  %v930 = vpack.c.bf16 %v887, %v886
  %v931 = vpack.c.bf16 %v889, %v888
  %v932 = vpack.c.bf16 %v891, %v890
  %v933 = vpack.c.bf16 %v893, %v892
  %v934 = vpack.c.bf16 %v895, %v894
  %v935 = vpack.c.bf16 %v897, %v896
  %v936 = vpack.c.bf16 %v899, %v898
  %v937 = vpack.c.bf16 %v901, %v900
  %v938 = vpack.c.bf16 %v903, %v902
  %v939 = vpack.c.bf16 %v905, %v904
  %v940 = vpack.c.bf16 %v907, %v906
  %v941 = vpack.c.bf16 %v909, %v908
  %v942 = vld [vmem:[%s845 + $0x1] sm:$0xff]
  %v943 = vld [vmem:[%s845 + $0x9] sm:$0xff]
  %v944 = vld [vmem:[%s845 + $0x19] sm:$0xff]
  %v945 = vld [vmem:[%s845 + $0x21] sm:$0xff]
  %v946 = vld [vmem:[%s845 + $0x31] sm:$0xff]
  %v947 = vld [vmem:[%s845 + $0x39] sm:$0xff]
  %v948 = vld [vmem:[%s845 + $0x49] sm:$0xff]
  %v949 = vld [vmem:[%s845 + $0x51] sm:$0xff]
  %v950 = vld [vmem:[%s845 + $0x61] sm:$0xff]
  %v951 = vld [vmem:[%s845 + $0x69] sm:$0xff]
  %v952 = vld [vmem:[%s845 + $0x79] sm:$0xff]
  %v953 = vld [vmem:[%s845 + $0x81] sm:$0xff]
  %v954 = vld [vmem:[%s845 + $0x91] sm:$0xff]
  %v955 = vld [vmem:[%s845 + $0x99] sm:$0xff]
  %v956 = vld [vmem:[%s845 + $0xa9] sm:$0xff]
  %v957 = vld [vmem:[%s845 + $0xb1] sm:$0xff]
  %v958 = vld [vmem:[%s845 + $0xc1] sm:$0xff]
  %v959 = vld [vmem:[%s845 + $0xc9] sm:$0xff]
  %v960 = vld [vmem:[%s845 + $0xd9] sm:$0xff]
  %v961 = vld [vmem:[%s845 + $0xe1] sm:$0xff]
  %v962 = vld [vmem:[%s845 + $0xf1] sm:$0xff]
  %v963 = vld [vmem:[%s845 + $0xf9] sm:$0xff]
  %v964 = vld [vmem:[%s845 + $0x109] sm:$0xff]
  %v965 = vld [vmem:[%s845 + $0x111] sm:$0xff]
  %v966 = vld [vmem:[%s845 + $0x121] sm:$0xff]
  %v967 = vld [vmem:[%s845 + $0x129] sm:$0xff]
  %v968 = vld [vmem:[%s845 + $0x139] sm:$0xff]
  %v969 = vld [vmem:[%s845 + $0x141] sm:$0xff]
  %v970 = vld [vmem:[%s845 + $0x151] sm:$0xff]
  %v971 = vld [vmem:[%s845 + $0x159] sm:$0xff]
  %v972 = vld [vmem:[%s845 + $0x169] sm:$0xff]
  %v973 = vld [vmem:[%s845 + $0x171] sm:$0xff]
  %v974 = vld [vmem:[%s845 + $0x1b1] sm:$0xff]
  %v975 = vld [vmem:[%s845 + $0x1b9] sm:$0xff]
  %v976 = vld [vmem:[%s845 + $0x1c9] sm:$0xff]
  %v977 = vld [vmem:[%s845 + $0x1d1] sm:$0xff]
  %v978 = vld [vmem:[%s845 + $0x1e1] sm:$0xff]
  %v979 = vld [vmem:[%s845 + $0x1e9] sm:$0xff]
  %v980 = vld [vmem:[%s845 + $0x1f9] sm:$0xff]
  %v981 = vld [vmem:[%s845 + $0x201] sm:$0xff]
  %v982 = vld [vmem:[%s845 + $0x211] sm:$0xff]
  %v983 = vld [vmem:[%s845 + $0x219] sm:$0xff]
  %v984 = vld [vmem:[%s845 + $0x229] sm:$0xff]
  %v985 = vld [vmem:[%s845 + $0x231] sm:$0xff]
  %v986 = vld [vmem:[%s845 + $0x241] sm:$0xff]
  %v987 = vld [vmem:[%s845 + $0x249] sm:$0xff]
  %v988 = vld [vmem:[%s845 + $0x259] sm:$0xff]
  %v989 = vld [vmem:[%s845 + $0x261] sm:$0xff]
  %v990 = vld [vmem:[%s845 + $0x271] sm:$0xff]
  %v991 = vld [vmem:[%s845 + $0x279] sm:$0xff]
  %v992 = vld [vmem:[%s845 + $0x289] sm:$0xff]
  %v993 = vld [vmem:[%s845 + $0x291] sm:$0xff]
  %v994 = vld [vmem:[%s845 + $0x2a1] sm:$0xff]
  %v995 = vld [vmem:[%s845 + $0x2a9] sm:$0xff]
  %v996 = vld [vmem:[%s845 + $0x2b9] sm:$0xff]
  %v997 = vld [vmem:[%s845 + $0x2c1] sm:$0xff]
  %v998 = vld [vmem:[%s845 + $0x2d1] sm:$0xff]
  %v999 = vld [vmem:[%s845 + $0x2d9] sm:$0xff]
  %v1000 = vld [vmem:[%s845 + $0x2e9] sm:$0xff]
  %v1001 = vld [vmem:[%s845 + $0x2f1] sm:$0xff]
  %v1002 = vld [vmem:[%s845 + $0x301] sm:$0xff]
  %v1003 = vld [vmem:[%s845 + $0x309] sm:$0xff]
  %v1004 = vld [vmem:[%s845 + $0x319] sm:$0xff]
  %v1005 = vld [vmem:[%s845 + $0x321] sm:$0xff]
  %v1006 = vpack.c.bf16 %v943, %v942
  %v1007 = vpack.c.bf16 %v945, %v944
  %v1008 = vpack.c.bf16 %v947, %v946
  %v1009 = vpack.c.bf16 %v949, %v948
  %v1010 = vpack.c.bf16 %v951, %v950
  %v1011 = vpack.c.bf16 %v953, %v952
  %v1012 = vpack.c.bf16 %v955, %v954
  %v1013 = vpack.c.bf16 %v957, %v956
  %v1014 = vpack.c.bf16 %v959, %v958
  %v1015 = vpack.c.bf16 %v961, %v960
  %v1016 = vpack.c.bf16 %v963, %v962
  %v1017 = vpack.c.bf16 %v965, %v964
  %v1018 = vpack.c.bf16 %v967, %v966
  %v1019 = vpack.c.bf16 %v969, %v968
  %v1020 = vpack.c.bf16 %v971, %v970
  %v1021 = vpack.c.bf16 %v973, %v972
  %v1022 = vpack.c.bf16 %v975, %v974
  %v1023 = vpack.c.bf16 %v977, %v976
  %v1024 = vpack.c.bf16 %v979, %v978
  %v1025 = vpack.c.bf16 %v981, %v980
  %v1026 = vpack.c.bf16 %v983, %v982
  %v1027 = vpack.c.bf16 %v985, %v984
  %v1028 = vpack.c.bf16 %v987, %v986
  %v1029 = vpack.c.bf16 %v989, %v988
  %v1030 = vpack.c.bf16 %v991, %v990
  %v1031 = vpack.c.bf16 %v993, %v992
  %v1032 = vpack.c.bf16 %v995, %v994
  %v1033 = vpack.c.bf16 %v997, %v996
  %v1034 = vpack.c.bf16 %v999, %v998
  %v1035 = vpack.c.bf16 %v1001, %v1000
  %v1036 = vpack.c.bf16 %v1003, %v1002
  %v1037 = vpack.c.bf16 %v1005, %v1004
  %v1038 = vld [vmem:[%s845 + $0x2] sm:$0xff]
  %v1039 = vld [vmem:[%s845 + $0xa] sm:$0xff]
  %v1040 = vld [vmem:[%s845 + $0x1a] sm:$0xff]
  %v1041 = vld [vmem:[%s845 + $0x22] sm:$0xff]
  %v1042 = vld [vmem:[%s845 + $0x32] sm:$0xff]
  %v1043 = vld [vmem:[%s845 + $0x3a] sm:$0xff]
  %v1044 = vld [vmem:[%s845 + $0x4a] sm:$0xff]
  %v1045 = vld [vmem:[%s845 + $0x52] sm:$0xff]
  %v1046 = vld [vmem:[%s845 + $0x62] sm:$0xff]
  %v1047 = vld [vmem:[%s845 + $0x6a] sm:$0xff]
  %v1048 = vld [vmem:[%s845 + $0x7a] sm:$0xff]
  %v1049 = vld [vmem:[%s845 + $0x82] sm:$0xff]
  %v1050 = vld [vmem:[%s845 + $0x92] sm:$0xff]
  %v1051 = vld [vmem:[%s845 + $0x9a] sm:$0xff]
  %v1052 = vld [vmem:[%s845 + $0xaa] sm:$0xff]
  %v1053 = vld [vmem:[%s845 + $0xb2] sm:$0xff]
  %v1054 = vld [vmem:[%s845 + $0xc2] sm:$0xff]
  %v1055 = vld [vmem:[%s845 + $0xca] sm:$0xff]
  %v1056 = vld [vmem:[%s845 + $0xda] sm:$0xff]
  %v1057 = vld [vmem:[%s845 + $0xe2] sm:$0xff]
  %v1058 = vld [vmem:[%s845 + $0xf2] sm:$0xff]
  %v1059 = vld [vmem:[%s845 + $0xfa] sm:$0xff]
  %v1060 = vld [vmem:[%s845 + $0x10a] sm:$0xff]
  %v1061 = vld [vmem:[%s845 + $0x112] sm:$0xff]
  %v1062 = vld [vmem:[%s845 + $0x122] sm:$0xff]
  %v1063 = vld [vmem:[%s845 + $0x12a] sm:$0xff]
  %v1064 = vld [vmem:[%s845 + $0x13a] sm:$0xff]
  %v1065 = vld [vmem:[%s845 + $0x142] sm:$0xff]
  %v1066 = vld [vmem:[%s845 + $0x152] sm:$0xff]
  %v1067 = vld [vmem:[%s845 + $0x15a] sm:$0xff]
  %v1068 = vld [vmem:[%s845 + $0x16a] sm:$0xff]
  %v1069 = vld [vmem:[%s845 + $0x172] sm:$0xff]
  %v1070 = vld [vmem:[%s845 + $0x1b2] sm:$0xff]
  %v1071 = vld [vmem:[%s845 + $0x1ba] sm:$0xff]
  %v1072 = vld [vmem:[%s845 + $0x1ca] sm:$0xff]
  %v1073 = vld [vmem:[%s845 + $0x1d2] sm:$0xff]
  %v1074 = vld [vmem:[%s845 + $0x1e2] sm:$0xff]
  %v1075 = vld [vmem:[%s845 + $0x1ea] sm:$0xff]
  %v1076 = vld [vmem:[%s845 + $0x1fa] sm:$0xff]
  %v1077 = vld [vmem:[%s845 + $0x202] sm:$0xff]
  %v1078 = vld [vmem:[%s845 + $0x212] sm:$0xff]
  %v1079 = vld [vmem:[%s845 + $0x21a] sm:$0xff]
  %v1080 = vld [vmem:[%s845 + $0x22a] sm:$0xff]
  %v1081 = vld [vmem:[%s845 + $0x232] sm:$0xff]
  %v1082 = vld [vmem:[%s845 + $0x242] sm:$0xff]
  %v1083 = vld [vmem:[%s845 + $0x24a] sm:$0xff]
  %v1084 = vld [vmem:[%s845 + $0x25a] sm:$0xff]
  %v1085 = vld [vmem:[%s845 + $0x262] sm:$0xff]
  %v1086 = vld [vmem:[%s845 + $0x272] sm:$0xff]
  %v1087 = vld [vmem:[%s845 + $0x27a] sm:$0xff]
  %v1088 = vld [vmem:[%s845 + $0x28a] sm:$0xff]
  %v1089 = vld [vmem:[%s845 + $0x292] sm:$0xff]
  %v1090 = vld [vmem:[%s845 + $0x2a2] sm:$0xff]
  %v1091 = vld [vmem:[%s845 + $0x2aa] sm:$0xff]
  %v1092 = vld [vmem:[%s845 + $0x2ba] sm:$0xff]
  %v1093 = vld [vmem:[%s845 + $0x2c2] sm:$0xff]
  %v1094 = vld [vmem:[%s845 + $0x2d2] sm:$0xff]
  %v1095 = vld [vmem:[%s845 + $0x2da] sm:$0xff]
  %v1096 = vld [vmem:[%s845 + $0x2ea] sm:$0xff]
  %v1097 = vld [vmem:[%s845 + $0x2f2] sm:$0xff]
  %v1098 = vld [vmem:[%s845 + $0x302] sm:$0xff]
  %v1099 = vld [vmem:[%s845 + $0x30a] sm:$0xff]
  %v1100 = vld [vmem:[%s845 + $0x31a] sm:$0xff]
  %v1101 = vld [vmem:[%s845 + $0x322] sm:$0xff]
  %v1102 = vpack.c.bf16 %v1039, %v1038
  %v1103 = vpack.c.bf16 %v1041, %v1040
  %v1104 = vpack.c.bf16 %v1043, %v1042
  %v1105 = vpack.c.bf16 %v1045, %v1044
  %v1106 = vpack.c.bf16 %v1047, %v1046
  %v1107 = vpack.c.bf16 %v1049, %v1048
  %v1108 = vpack.c.bf16 %v1051, %v1050
  %v1109 = vpack.c.bf16 %v1053, %v1052
  %v1110 = vpack.c.bf16 %v1055, %v1054
  %v1111 = vpack.c.bf16 %v1057, %v1056
  %v1112 = vpack.c.bf16 %v1059, %v1058
  %v1113 = vpack.c.bf16 %v1061, %v1060
  %v1114 = vpack.c.bf16 %v1063, %v1062
  %v1115 = vpack.c.bf16 %v1065, %v1064
  %v1116 = vpack.c.bf16 %v1067, %v1066
  %v1117 = vpack.c.bf16 %v1069, %v1068
  %v1118 = vpack.c.bf16 %v1071, %v1070
  %v1119 = vpack.c.bf16 %v1073, %v1072
  %v1120 = vpack.c.bf16 %v1075, %v1074
  %v1121 = vpack.c.bf16 %v1077, %v1076
  %v1122 = vpack.c.bf16 %v1079, %v1078
  %v1123 = vpack.c.bf16 %v1081, %v1080
  %v1124 = vpack.c.bf16 %v1083, %v1082
  %v1125 = vpack.c.bf16 %v1085, %v1084
  %v1126 = vpack.c.bf16 %v1087, %v1086
  %v1127 = vpack.c.bf16 %v1089, %v1088
  %v1128 = vpack.c.bf16 %v1091, %v1090
  %v1129 = vpack.c.bf16 %v1093, %v1092
  %v1130 = vpack.c.bf16 %v1095, %v1094
  %v1131 = vpack.c.bf16 %v1097, %v1096
  %v1132 = vpack.c.bf16 %v1099, %v1098
  %v1133 = vpack.c.bf16 %v1101, %v1100
  %1166 = vrot.lane.b32.xlu0 %v429, 16
  %v1167 = vpop.permute.xlu0 %1166
  %1168 = vrot.lane.b32.xlu0 %v430, 16
  %v1169 = vpop.permute.xlu0 %1168
  %1170 = vrot.lane.b32.xlu0 %v431, 16
  %v1171 = vpop.permute.xlu0 %1170
  %1172 = vrot.lane.b32.xlu0 %v432, 16
  %v1173 = vpop.permute.xlu0 %1172
  %1174 = vrot.lane.b32.xlu0 %v433, 16
  %v1175 = vpop.permute.xlu0 %1174
  %1176 = vrot.lane.b32.xlu0 %v434, 16
  %v1177 = vpop.permute.xlu0 %1176
  %1178 = vrot.lane.b32.xlu0 %v435, 16
  %v1179 = vpop.permute.xlu0 %1178
  %1180 = vrot.lane.b32.xlu0 %v436, 16
  %v1181 = vpop.permute.xlu0 %1180
  %1182 = vrot.lane.b32.xlu0 %v437, 16
  %v1183 = vpop.permute.xlu0 %1182
  %1184 = vrot.lane.b32.xlu0 %v438, 16
  %v1185 = vpop.permute.xlu0 %1184
  %1186 = vrot.lane.b32.xlu0 %v439, 16
  %v1187 = vpop.permute.xlu0 %1186
  %1188 = vrot.lane.b32.xlu0 %v440, 16
  %v1189 = vpop.permute.xlu0 %1188
  %1190 = vrot.lane.b32.xlu0 %v441, 16
  %v1191 = vpop.permute.xlu0 %1190
  %1192 = vrot.lane.b32.xlu0 %v442, 16
  %v1193 = vpop.permute.xlu0 %1192
  %1194 = vrot.lane.b32.xlu0 %v443, 16
  %v1195 = vpop.permute.xlu0 %1194
  %1196 = vrot.lane.b32.xlu0 %v444, 16
  %v1197 = vpop.permute.xlu0 %1196
  %1198 = vrot.lane.b32.xlu0 %v445, 16
  %v1199 = vpop.permute.xlu0 %1198
  %1200 = vrot.lane.b32.xlu0 %v446, 16
  %v1201 = vpop.permute.xlu0 %1200
  %1202 = vrot.lane.b32.xlu0 %v447, 16
  %v1203 = vpop.permute.xlu0 %1202
  %1204 = vrot.lane.b32.xlu0 %v448, 16
  %v1205 = vpop.permute.xlu0 %1204
  %1206 = vrot.lane.b32.xlu0 %v449, 16
  %v1207 = vpop.permute.xlu0 %1206
  %1208 = vrot.lane.b32.xlu0 %v450, 16
  %v1209 = vpop.permute.xlu0 %1208
  %1210 = vrot.lane.b32.xlu0 %v451, 16
  %v1211 = vpop.permute.xlu0 %1210
  %1212 = vrot.lane.b32.xlu0 %v452, 16
  %v1213 = vpop.permute.xlu0 %1212
  %1214 = vrot.lane.b32.xlu0 %v453, 16
  %v1215 = vpop.permute.xlu0 %1214
  %1216 = vrot.lane.b32.xlu0 %v454, 16
  %v1217 = vpop.permute.xlu0 %1216
  %1218 = vrot.lane.b32.xlu0 %v455, 16
  %v1219 = vpop.permute.xlu0 %1218
  %1220 = vrot.lane.b32.xlu0 %v456, 16
  %v1221 = vpop.permute.xlu0 %1220
  %1222 = vrot.lane.b32.xlu0 %v457, 16
  %v1223 = vpop.permute.xlu0 %1222
  %1224 = vrot.lane.b32.xlu0 %v458, 16
  %v1225 = vpop.permute.xlu0 %1224
  %1226 = vrot.lane.b32.xlu0 %v459, 16
  %v1227 = vpop.permute.xlu0 %1226
  %1228 = vrot.lane.b32.xlu0 %v460, 16
  %v1229 = vpop.permute.xlu0 %1228
  %1262 = vrot.lane.b32.xlu0 %v525, 32
  %v1263 = vpop.permute.xlu0 %1262
  %1264 = vrot.lane.b32.xlu0 %v526, 32
  %v1265 = vpop.permute.xlu0 %1264
  %1266 = vrot.lane.b32.xlu0 %v527, 32
  %v1267 = vpop.permute.xlu0 %1266
  %1268 = vrot.lane.b32.xlu0 %v528, 32
  %v1269 = vpop.permute.xlu0 %1268
  %1270 = vrot.lane.b32.xlu0 %v529, 32
  %v1271 = vpop.permute.xlu0 %1270
  %1272 = vrot.lane.b32.xlu0 %v530, 32
  %v1273 = vpop.permute.xlu0 %1272
  %1274 = vrot.lane.b32.xlu0 %v531, 32
  %v1275 = vpop.permute.xlu0 %1274
  %1276 = vrot.lane.b32.xlu0 %v532, 32
  %v1277 = vpop.permute.xlu0 %1276
  %1278 = vrot.lane.b32.xlu0 %v533, 32
  %v1279 = vpop.permute.xlu0 %1278
  %1280 = vrot.lane.b32.xlu0 %v534, 32
  %v1281 = vpop.permute.xlu0 %1280
  %1282 = vrot.lane.b32.xlu0 %v535, 32
  %v1283 = vpop.permute.xlu0 %1282
  %1284 = vrot.lane.b32.xlu0 %v536, 32
  %v1285 = vpop.permute.xlu0 %1284
  %1286 = vrot.lane.b32.xlu0 %v537, 32
  %v1287 = vpop.permute.xlu0 %1286
  %1288 = vrot.lane.b32.xlu0 %v538, 32
  %v1289 = vpop.permute.xlu0 %1288
  %1290 = vrot.lane.b32.xlu0 %v539, 32
  %v1291 = vpop.permute.xlu0 %1290
  %1292 = vrot.lane.b32.xlu0 %v540, 32
  %v1293 = vpop.permute.xlu0 %1292
  %1294 = vrot.lane.b32.xlu0 %v541, 32
  %v1295 = vpop.permute.xlu0 %1294
  %1296 = vrot.lane.b32.xlu0 %v542, 32
  %v1297 = vpop.permute.xlu0 %1296
  %1298 = vrot.lane.b32.xlu0 %v543, 32
  %v1299 = vpop.permute.xlu0 %1298
  %1300 = vrot.lane.b32.xlu0 %v544, 32
  %v1301 = vpop.permute.xlu0 %1300
  %1302 = vrot.lane.b32.xlu0 %v545, 32
  %v1303 = vpop.permute.xlu0 %1302
  %1304 = vrot.lane.b32.xlu0 %v546, 32
  %v1305 = vpop.permute.xlu0 %1304
  %1306 = vrot.lane.b32.xlu0 %v547, 32
  %v1307 = vpop.permute.xlu0 %1306
  %1308 = vrot.lane.b32.xlu0 %v548, 32
  %v1309 = vpop.permute.xlu0 %1308
  %1310 = vrot.lane.b32.xlu0 %v549, 32
  %v1311 = vpop.permute.xlu0 %1310
  %1312 = vrot.lane.b32.xlu0 %v550, 32
  %v1313 = vpop.permute.xlu0 %1312
  %1314 = vrot.lane.b32.xlu0 %v551, 32
  %v1315 = vpop.permute.xlu0 %1314
  %1316 = vrot.lane.b32.xlu0 %v552, 32
  %v1317 = vpop.permute.xlu0 %1316
  %1318 = vrot.lane.b32.xlu0 %v553, 32
  %v1319 = vpop.permute.xlu0 %1318
  %1320 = vrot.lane.b32.xlu0 %v554, 32
  %v1321 = vpop.permute.xlu0 %1320
  %1322 = vrot.lane.b32.xlu0 %v555, 32
  %v1323 = vpop.permute.xlu0 %1322
  %1324 = vrot.lane.b32.xlu0 %v556, 32
  %v1325 = vpop.permute.xlu0 %1324
  %1358 = vrot.lane.b32.xlu0 %v621, 48
  %v1359 = vpop.permute.xlu0 %1358
  %1360 = vrot.lane.b32.xlu0 %v622, 48
  %v1361 = vpop.permute.xlu0 %1360
  %1362 = vrot.lane.b32.xlu0 %v623, 48
  %v1363 = vpop.permute.xlu0 %1362
  %1364 = vrot.lane.b32.xlu0 %v624, 48
  %v1365 = vpop.permute.xlu0 %1364
  %1366 = vrot.lane.b32.xlu0 %v625, 48
  %v1367 = vpop.permute.xlu0 %1366
  %1368 = vrot.lane.b32.xlu0 %v626, 48
  %v1369 = vpop.permute.xlu0 %1368
  %1370 = vrot.lane.b32.xlu0 %v627, 48
  %v1371 = vpop.permute.xlu0 %1370
  %1372 = vrot.lane.b32.xlu0 %v628, 48
  %v1373 = vpop.permute.xlu0 %1372
  %1374 = vrot.lane.b32.xlu0 %v629, 48
  %v1375 = vpop.permute.xlu0 %1374
  %1376 = vrot.lane.b32.xlu0 %v630, 48
  %v1377 = vpop.permute.xlu0 %1376
  %1378 = vrot.lane.b32.xlu0 %v631, 48
  %v1379 = vpop.permute.xlu0 %1378
  %1380 = vrot.lane.b32.xlu0 %v632, 48
  %v1381 = vpop.permute.xlu0 %1380
  %1382 = vrot.lane.b32.xlu0 %v633, 48
  %v1383 = vpop.permute.xlu0 %1382
  %1384 = vrot.lane.b32.xlu0 %v634, 48
  %v1385 = vpop.permute.xlu0 %1384
  %1386 = vrot.lane.b32.xlu0 %v635, 48
  %v1387 = vpop.permute.xlu0 %1386
  %1388 = vrot.lane.b32.xlu0 %v636, 48
  %v1389 = vpop.permute.xlu0 %1388
  %1390 = vrot.lane.b32.xlu0 %v637, 48
  %v1391 = vpop.permute.xlu0 %1390
  %1392 = vrot.lane.b32.xlu0 %v638, 48
  %v1393 = vpop.permute.xlu0 %1392
  %1394 = vrot.lane.b32.xlu0 %v639, 48
  %v1395 = vpop.permute.xlu0 %1394
  %1396 = vrot.lane.b32.xlu0 %v640, 48
  %v1397 = vpop.permute.xlu0 %1396
  %1398 = vrot.lane.b32.xlu0 %v641, 48
  %v1399 = vpop.permute.xlu0 %1398
  %1400 = vrot.lane.b32.xlu0 %v642, 48
  %v1401 = vpop.permute.xlu0 %1400
  %1402 = vrot.lane.b32.xlu0 %v643, 48
  %v1403 = vpop.permute.xlu0 %1402
  %1404 = vrot.lane.b32.xlu0 %v644, 48
  %v1405 = vpop.permute.xlu0 %1404
  %1406 = vrot.lane.b32.xlu0 %v645, 48
  %v1407 = vpop.permute.xlu0 %1406
  %1408 = vrot.lane.b32.xlu0 %v646, 48
  %v1409 = vpop.permute.xlu0 %1408
  %1410 = vrot.lane.b32.xlu0 %v647, 48
  %v1411 = vpop.permute.xlu0 %1410
  %1412 = vrot.lane.b32.xlu0 %v648, 48
  %v1413 = vpop.permute.xlu0 %1412
  %1414 = vrot.lane.b32.xlu0 %v649, 48
  %v1415 = vpop.permute.xlu0 %1414
  %1416 = vrot.lane.b32.xlu0 %v650, 48
  %v1417 = vpop.permute.xlu0 %1416
  %1418 = vrot.lane.b32.xlu0 %v651, 48
  %v1419 = vpop.permute.xlu0 %1418
  %1420 = vrot.lane.b32.xlu0 %v652, 48
  %v1421 = vpop.permute.xlu0 %1420
  %1454 = vrot.lane.b32.xlu0 %v717, 64
  %v1455 = vpop.permute.xlu0 %1454
  %1456 = vrot.lane.b32.xlu0 %v718, 64
  %v1457 = vpop.permute.xlu0 %1456
  %1458 = vrot.lane.b32.xlu0 %v719, 64
  %v1459 = vpop.permute.xlu0 %1458
  %1460 = vrot.lane.b32.xlu0 %v720, 64
  %v1461 = vpop.permute.xlu0 %1460
  %1462 = vrot.lane.b32.xlu0 %v721, 64
  %v1463 = vpop.permute.xlu0 %1462
  %1464 = vrot.lane.b32.xlu0 %v722, 64
  %v1465 = vpop.permute.xlu0 %1464
  %1466 = vrot.lane.b32.xlu0 %v723, 64
  %v1467 = vpop.permute.xlu0 %1466
  %1468 = vrot.lane.b32.xlu0 %v724, 64
  %v1469 = vpop.permute.xlu0 %1468
  %1470 = vrot.lane.b32.xlu0 %v725, 64
  %v1471 = vpop.permute.xlu0 %1470
  %1472 = vrot.lane.b32.xlu0 %v726, 64
  %v1473 = vpop.permute.xlu0 %1472
  %1474 = vrot.lane.b32.xlu0 %v727, 64
  %v1475 = vpop.permute.xlu0 %1474
  %1476 = vrot.lane.b32.xlu0 %v728, 64
  %v1477 = vpop.permute.xlu0 %1476
  %1478 = vrot.lane.b32.xlu0 %v729, 64
  %v1479 = vpop.permute.xlu0 %1478
  %1480 = vrot.lane.b32.xlu0 %v730, 64
  %v1481 = vpop.permute.xlu0 %1480
  %1482 = vrot.lane.b32.xlu0 %v731, 64
  %v1483 = vpop.permute.xlu0 %1482
  %1484 = vrot.lane.b32.xlu0 %v732, 64
  %v1485 = vpop.permute.xlu0 %1484
  %1486 = vrot.lane.b32.xlu0 %v733, 64
  %v1487 = vpop.permute.xlu0 %1486
  %1488 = vrot.lane.b32.xlu0 %v734, 64
  %v1489 = vpop.permute.xlu0 %1488
  %1490 = vrot.lane.b32.xlu0 %v735, 64
  %v1491 = vpop.permute.xlu0 %1490
  %1492 = vrot.lane.b32.xlu0 %v736, 64
  %v1493 = vpop.permute.xlu0 %1492
  %1494 = vrot.lane.b32.xlu0 %v737, 64
  %v1495 = vpop.permute.xlu0 %1494
  %1496 = vrot.lane.b32.xlu0 %v738, 64
  %v1497 = vpop.permute.xlu0 %1496
  %1498 = vrot.lane.b32.xlu0 %v739, 64
  %v1499 = vpop.permute.xlu0 %1498
  %1500 = vrot.lane.b32.xlu0 %v740, 64
  %v1501 = vpop.permute.xlu0 %1500
  %1502 = vrot.lane.b32.xlu0 %v741, 64
  %v1503 = vpop.permute.xlu0 %1502
  %1504 = vrot.lane.b32.xlu0 %v742, 64
  %v1505 = vpop.permute.xlu0 %1504
  %1506 = vrot.lane.b32.xlu0 %v743, 64
  %v1507 = vpop.permute.xlu0 %1506
  %1508 = vrot.lane.b32.xlu0 %v744, 64
  %v1509 = vpop.permute.xlu0 %1508
  %1510 = vrot.lane.b32.xlu0 %v745, 64
  %v1511 = vpop.permute.xlu0 %1510
  %1512 = vrot.lane.b32.xlu0 %v746, 64
  %v1513 = vpop.permute.xlu0 %1512
  %1514 = vrot.lane.b32.xlu0 %v747, 64
  %v1515 = vpop.permute.xlu0 %1514
  %1516 = vrot.lane.b32.xlu0 %v748, 64
  %v1517 = vpop.permute.xlu0 %1516
  %1550 = vrot.lane.b32.xlu0 %v813, 80
  %v1551 = vpop.permute.xlu0 %1550
  %1552 = vrot.lane.b32.xlu0 %v814, 80
  %v1553 = vpop.permute.xlu0 %1552
  %1554 = vrot.lane.b32.xlu0 %v815, 80
  %v1555 = vpop.permute.xlu0 %1554
  %1556 = vrot.lane.b32.xlu0 %v816, 80
  %v1557 = vpop.permute.xlu0 %1556
  %1558 = vrot.lane.b32.xlu0 %v817, 80
  %v1559 = vpop.permute.xlu0 %1558
  %1560 = vrot.lane.b32.xlu0 %v818, 80
  %v1561 = vpop.permute.xlu0 %1560
  %1562 = vrot.lane.b32.xlu0 %v819, 80
  %v1563 = vpop.permute.xlu0 %1562
  %1564 = vrot.lane.b32.xlu0 %v820, 80
  %v1565 = vpop.permute.xlu0 %1564
  %1566 = vrot.lane.b32.xlu0 %v821, 80
  %v1567 = vpop.permute.xlu0 %1566
  %1568 = vrot.lane.b32.xlu0 %v822, 80
  %v1569 = vpop.permute.xlu0 %1568
  %1570 = vrot.lane.b32.xlu0 %v823, 80
  %v1571 = vpop.permute.xlu0 %1570
  %1572 = vrot.lane.b32.xlu0 %v824, 80
  %v1573 = vpop.permute.xlu0 %1572
  %1574 = vrot.lane.b32.xlu0 %v825, 80
  %v1575 = vpop.permute.xlu0 %1574
  %1576 = vrot.lane.b32.xlu0 %v826, 80
  %v1577 = vpop.permute.xlu0 %1576
  %1578 = vrot.lane.b32.xlu0 %v827, 80
  %v1579 = vpop.permute.xlu0 %1578
  %1580 = vrot.lane.b32.xlu0 %v828, 80
  %v1581 = vpop.permute.xlu0 %1580
  %1582 = vrot.lane.b32.xlu0 %v829, 80
  %v1583 = vpop.permute.xlu0 %1582
  %1584 = vrot.lane.b32.xlu0 %v830, 80
  %v1585 = vpop.permute.xlu0 %1584
  %1586 = vrot.lane.b32.xlu0 %v831, 80
  %v1587 = vpop.permute.xlu0 %1586
  %1588 = vrot.lane.b32.xlu0 %v832, 80
  %v1589 = vpop.permute.xlu0 %1588
  %1590 = vrot.lane.b32.xlu0 %v833, 80
  %v1591 = vpop.permute.xlu0 %1590
  %1592 = vrot.lane.b32.xlu0 %v834, 80
  %v1593 = vpop.permute.xlu0 %1592
  %1594 = vrot.lane.b32.xlu0 %v835, 80
  %v1595 = vpop.permute.xlu0 %1594
  %1596 = vrot.lane.b32.xlu0 %v836, 80
  %v1597 = vpop.permute.xlu0 %1596
  %1598 = vrot.lane.b32.xlu0 %v837, 80
  %v1599 = vpop.permute.xlu0 %1598
  %1600 = vrot.lane.b32.xlu0 %v838, 80
  %v1601 = vpop.permute.xlu0 %1600
  %1602 = vrot.lane.b32.xlu0 %v839, 80
  %v1603 = vpop.permute.xlu0 %1602
  %1604 = vrot.lane.b32.xlu0 %v840, 80
  %v1605 = vpop.permute.xlu0 %1604
  %1606 = vrot.lane.b32.xlu0 %v841, 80
  %v1607 = vpop.permute.xlu0 %1606
  %1608 = vrot.lane.b32.xlu0 %v842, 80
  %v1609 = vpop.permute.xlu0 %1608
  %1610 = vrot.lane.b32.xlu0 %v843, 80
  %v1611 = vpop.permute.xlu0 %1610
  %1612 = vrot.lane.b32.xlu0 %v844, 80
  %v1613 = vpop.permute.xlu0 %1612
  %1646 = vrot.lane.b32.xlu0 %v910, 96
  %v1647 = vpop.permute.xlu0 %1646
  %1648 = vrot.lane.b32.xlu0 %v911, 96
  %v1649 = vpop.permute.xlu0 %1648
  %1650 = vrot.lane.b32.xlu0 %v912, 96
  %v1651 = vpop.permute.xlu0 %1650
  %1652 = vrot.lane.b32.xlu0 %v913, 96
  %v1653 = vpop.permute.xlu0 %1652
  %1654 = vrot.lane.b32.xlu0 %v914, 96
  %v1655 = vpop.permute.xlu0 %1654
  %1656 = vrot.lane.b32.xlu0 %v915, 96
  %v1657 = vpop.permute.xlu0 %1656
  %1658 = vrot.lane.b32.xlu0 %v916, 96
  %v1659 = vpop.permute.xlu0 %1658
  %1660 = vrot.lane.b32.xlu0 %v917, 96
  %v1661 = vpop.permute.xlu0 %1660
  %1662 = vrot.lane.b32.xlu0 %v918, 96
  %v1663 = vpop.permute.xlu0 %1662
  %1664 = vrot.lane.b32.xlu0 %v919, 96
  %v1665 = vpop.permute.xlu0 %1664
  %1666 = vrot.lane.b32.xlu0 %v920, 96
  %v1667 = vpop.permute.xlu0 %1666
  %1668 = vrot.lane.b32.xlu0 %v921, 96
  %v1669 = vpop.permute.xlu0 %1668
  %1670 = vrot.lane.b32.xlu0 %v922, 96
  %v1671 = vpop.permute.xlu0 %1670
  %1672 = vrot.lane.b32.xlu0 %v923, 96
  %v1673 = vpop.permute.xlu0 %1672
  %1674 = vrot.lane.b32.xlu0 %v924, 96
  %v1675 = vpop.permute.xlu0 %1674
  %1676 = vrot.lane.b32.xlu0 %v925, 96
  %v1677 = vpop.permute.xlu0 %1676
  %1678 = vrot.lane.b32.xlu0 %v926, 96
  %v1679 = vpop.permute.xlu0 %1678
  %1680 = vrot.lane.b32.xlu0 %v927, 96
  %v1681 = vpop.permute.xlu0 %1680
  %1682 = vrot.lane.b32.xlu0 %v928, 96
  %v1683 = vpop.permute.xlu0 %1682
  %1684 = vrot.lane.b32.xlu0 %v929, 96
  %v1685 = vpop.permute.xlu0 %1684
  %1686 = vrot.lane.b32.xlu0 %v930, 96
  %v1687 = vpop.permute.xlu0 %1686
  %1688 = vrot.lane.b32.xlu0 %v931, 96
  %v1689 = vpop.permute.xlu0 %1688
  %1690 = vrot.lane.b32.xlu0 %v932, 96
  %v1691 = vpop.permute.xlu0 %1690
  %1692 = vrot.lane.b32.xlu0 %v933, 96
  %v1693 = vpop.permute.xlu0 %1692
  %1694 = vrot.lane.b32.xlu0 %v934, 96
  %v1695 = vpop.permute.xlu0 %1694
  %1696 = vrot.lane.b32.xlu0 %v935, 96
  %v1697 = vpop.permute.xlu0 %1696
  %1698 = vrot.lane.b32.xlu0 %v936, 96
  %v1699 = vpop.permute.xlu0 %1698
  %1700 = vrot.lane.b32.xlu0 %v937, 96
  %v1701 = vpop.permute.xlu0 %1700
  %1702 = vrot.lane.b32.xlu0 %v938, 96
  %v1703 = vpop.permute.xlu0 %1702
  %1704 = vrot.lane.b32.xlu0 %v939, 96
  %v1705 = vpop.permute.xlu0 %1704
  %1706 = vrot.lane.b32.xlu0 %v940, 96
  %v1707 = vpop.permute.xlu0 %1706
  %1708 = vrot.lane.b32.xlu0 %v941, 96
  %v1709 = vpop.permute.xlu0 %1708
  %1742 = vrot.lane.b32.xlu0 %v1006, 112
  %v1743 = vpop.permute.xlu0 %1742
  %1744 = vrot.lane.b32.xlu0 %v1007, 112
  %v1745 = vpop.permute.xlu0 %1744
  %1746 = vrot.lane.b32.xlu0 %v1008, 112
  %v1747 = vpop.permute.xlu0 %1746
  %1748 = vrot.lane.b32.xlu0 %v1009, 112
  %v1749 = vpop.permute.xlu0 %1748
  %1750 = vrot.lane.b32.xlu0 %v1010, 112
  %v1751 = vpop.permute.xlu0 %1750
  %1752 = vrot.lane.b32.xlu0 %v1011, 112
  %v1753 = vpop.permute.xlu0 %1752
  %1754 = vrot.lane.b32.xlu0 %v1012, 112
  %v1755 = vpop.permute.xlu0 %1754
  %1756 = vrot.lane.b32.xlu0 %v1013, 112
  %v1757 = vpop.permute.xlu0 %1756
  %1758 = vrot.lane.b32.xlu0 %v1014, 112
  %v1759 = vpop.permute.xlu0 %1758
  %1760 = vrot.lane.b32.xlu0 %v1015, 112
  %v1761 = vpop.permute.xlu0 %1760
  %1762 = vrot.lane.b32.xlu0 %v1016, 112
  %v1763 = vpop.permute.xlu0 %1762
  %1764 = vrot.lane.b32.xlu0 %v1017, 112
  %v1765 = vpop.permute.xlu0 %1764
  %1766 = vrot.lane.b32.xlu0 %v1018, 112
  %v1767 = vpop.permute.xlu0 %1766
  %1768 = vrot.lane.b32.xlu0 %v1019, 112
  %v1769 = vpop.permute.xlu0 %1768
  %1770 = vrot.lane.b32.xlu0 %v1020, 112
  %v1771 = vpop.permute.xlu0 %1770
  %1772 = vrot.lane.b32.xlu0 %v1021, 112
  %v1773 = vpop.permute.xlu0 %1772
  %1774 = vrot.lane.b32.xlu0 %v1022, 112
  %v1775 = vpop.permute.xlu0 %1774
  %1776 = vrot.lane.b32.xlu0 %v1023, 112
  %v1777 = vpop.permute.xlu0 %1776
  %1778 = vrot.lane.b32.xlu0 %v1024, 112
  %v1779 = vpop.permute.xlu0 %1778
  %1780 = vrot.lane.b32.xlu0 %v1025, 112
  %v1781 = vpop.permute.xlu0 %1780
  %1782 = vrot.lane.b32.xlu0 %v1026, 112
  %v1783 = vpop.permute.xlu0 %1782
  %1784 = vrot.lane.b32.xlu0 %v1027, 112
  %v1785 = vpop.permute.xlu0 %1784
  %1786 = vrot.lane.b32.xlu0 %v1028, 112
  %v1787 = vpop.permute.xlu0 %1786
  %1788 = vrot.lane.b32.xlu0 %v1029, 112
  %v1789 = vpop.permute.xlu0 %1788
  %1790 = vrot.lane.b32.xlu0 %v1030, 112
  %v1791 = vpop.permute.xlu0 %1790
  %1792 = vrot.lane.b32.xlu0 %v1031, 112
  %v1793 = vpop.permute.xlu0 %1792
  %1794 = vrot.lane.b32.xlu0 %v1032, 112
  %v1795 = vpop.permute.xlu0 %1794
  %1796 = vrot.lane.b32.xlu0 %v1033, 112
  %v1797 = vpop.permute.xlu0 %1796
  %1798 = vrot.lane.b32.xlu0 %v1034, 112
  %v1799 = vpop.permute.xlu0 %1798
  %1800 = vrot.lane.b32.xlu0 %v1035, 112
  %v1801 = vpop.permute.xlu0 %1800
  %1802 = vrot.lane.b32.xlu0 %v1036, 112
  %v1803 = vpop.permute.xlu0 %1802
  %1804 = vrot.lane.b32.xlu0 %v1037, 112
  %v1805 = vpop.permute.xlu0 %1804
  %v1808 = vsel %vm30, %v333, %v1167
  %v1811 = vsel %vm30, %v334, %v1169
  %v1814 = vsel %vm30, %v335, %v1171
  %v1817 = vsel %vm30, %v336, %v1173
  %v1820 = vsel %vm30, %v337, %v1175
  %v1823 = vsel %vm30, %v338, %v1177
  %v1826 = vsel %vm30, %v339, %v1179
  %v1829 = vsel %vm30, %v340, %v1181
  %v1832 = vsel %vm30, %v341, %v1183
  %v1835 = vsel %vm30, %v342, %v1185
  %v1838 = vsel %vm30, %v343, %v1187
  %v1841 = vsel %vm30, %v344, %v1189
  %v1844 = vsel %vm30, %v345, %v1191
  %v1847 = vsel %vm30, %v346, %v1193
  %v1850 = vsel %vm30, %v347, %v1195
  %v1853 = vsel %vm30, %v348, %v1197
  %v1856 = vsel %vm30, %v349, %v1199
  %v1859 = vsel %vm30, %v350, %v1201
  %v1862 = vsel %vm30, %v351, %v1203
  %v1865 = vsel %vm30, %v352, %v1205
  %v1868 = vsel %vm30, %v353, %v1207
  %v1871 = vsel %vm30, %v354, %v1209
  %v1874 = vsel %vm30, %v355, %v1211
  %v1877 = vsel %vm30, %v356, %v1213
  %v1880 = vsel %vm30, %v357, %v1215
  %v1883 = vsel %vm30, %v358, %v1217
  %v1886 = vsel %vm30, %v359, %v1219
  %v1889 = vsel %vm30, %v360, %v1221
  %v1892 = vsel %vm30, %v361, %v1223
  %v1895 = vsel %vm30, %v362, %v1225
  %v1898 = vsel %vm30, %v363, %v1227
  %v1901 = vsel %vm30, %v364, %v1229
  %vm1902 = vcmask 261120
  %v1904 = vsel %vm1902, %v1808, %v1263
  %v1906 = vsel %vm1902, %v1811, %v1265
  %v1908 = vsel %vm1902, %v1814, %v1267
  %v1910 = vsel %vm1902, %v1817, %v1269
  %v1912 = vsel %vm1902, %v1820, %v1271
  %v1914 = vsel %vm1902, %v1823, %v1273
  %v1916 = vsel %vm1902, %v1826, %v1275
  %v1918 = vsel %vm1902, %v1829, %v1277
  %v1920 = vsel %vm1902, %v1832, %v1279
  %v1922 = vsel %vm1902, %v1835, %v1281
  %v1924 = vsel %vm1902, %v1838, %v1283
  %v1926 = vsel %vm1902, %v1841, %v1285
  %v1928 = vsel %vm1902, %v1844, %v1287
  %v1930 = vsel %vm1902, %v1847, %v1289
  %v1932 = vsel %vm1902, %v1850, %v1291
  %v1934 = vsel %vm1902, %v1853, %v1293
  %v1936 = vsel %vm1902, %v1856, %v1295
  %v1938 = vsel %vm1902, %v1859, %v1297
  %v1940 = vsel %vm1902, %v1862, %v1299
  %v1942 = vsel %vm1902, %v1865, %v1301
  %v1944 = vsel %vm1902, %v1868, %v1303
  %v1946 = vsel %vm1902, %v1871, %v1305
  %v1948 = vsel %vm1902, %v1874, %v1307
  %v1950 = vsel %vm1902, %v1877, %v1309
  %v1952 = vsel %vm1902, %v1880, %v1311
  %v1954 = vsel %vm1902, %v1883, %v1313
  %v1956 = vsel %vm1902, %v1886, %v1315
  %v1958 = vsel %vm1902, %v1889, %v1317
  %v1960 = vsel %vm1902, %v1892, %v1319
  %v1962 = vsel %vm1902, %v1895, %v1321
  %v1964 = vsel %vm1902, %v1898, %v1323
  %v1966 = vsel %vm1902, %v1901, %v1325
  %vm1967 = vcmask 392192
  %v1969 = vsel %vm1967, %v1904, %v1359
  %v1971 = vsel %vm1967, %v1906, %v1361
  %v1973 = vsel %vm1967, %v1908, %v1363
  %v1975 = vsel %vm1967, %v1910, %v1365
  %v1977 = vsel %vm1967, %v1912, %v1367
  %v1979 = vsel %vm1967, %v1914, %v1369
  %v1981 = vsel %vm1967, %v1916, %v1371
  %v1983 = vsel %vm1967, %v1918, %v1373
  %v1985 = vsel %vm1967, %v1920, %v1375
  %v1987 = vsel %vm1967, %v1922, %v1377
  %v1989 = vsel %vm1967, %v1924, %v1379
  %v1991 = vsel %vm1967, %v1926, %v1381
  %v1993 = vsel %vm1967, %v1928, %v1383
  %v1995 = vsel %vm1967, %v1930, %v1385
  %v1997 = vsel %vm1967, %v1932, %v1387
  %v1999 = vsel %vm1967, %v1934, %v1389
  %v2001 = vsel %vm1967, %v1936, %v1391
  %v2003 = vsel %vm1967, %v1938, %v1393
  %v2005 = vsel %vm1967, %v1940, %v1395
  %v2007 = vsel %vm1967, %v1942, %v1397
  %v2009 = vsel %vm1967, %v1944, %v1399
  %v2011 = vsel %vm1967, %v1946, %v1401
  %v2013 = vsel %vm1967, %v1948, %v1403
  %v2015 = vsel %vm1967, %v1950, %v1405
  %v2017 = vsel %vm1967, %v1952, %v1407
  %v2019 = vsel %vm1967, %v1954, %v1409
  %v2021 = vsel %vm1967, %v1956, %v1411
  %v2023 = vsel %vm1967, %v1958, %v1413
  %v2025 = vsel %vm1967, %v1960, %v1415
  %v2027 = vsel %vm1967, %v1962, %v1417
  %v2029 = vsel %vm1967, %v1964, %v1419
  %v2031 = vsel %vm1967, %v1966, %v1421
  %vm2032 = vcmask 523264
  %v2034 = vsel %vm2032, %v1969, %v1455
  %v2036 = vsel %vm2032, %v1971, %v1457
  %v2038 = vsel %vm2032, %v1973, %v1459
  %v2040 = vsel %vm2032, %v1975, %v1461
  %v2042 = vsel %vm2032, %v1977, %v1463
  %v2044 = vsel %vm2032, %v1979, %v1465
  %v2046 = vsel %vm2032, %v1981, %v1467
  %v2048 = vsel %vm2032, %v1983, %v1469
  %v2050 = vsel %vm2032, %v1985, %v1471
  %v2052 = vsel %vm2032, %v1987, %v1473
  %v2054 = vsel %vm2032, %v1989, %v1475
  %v2056 = vsel %vm2032, %v1991, %v1477
  %v2058 = vsel %vm2032, %v1993, %v1479
  %v2060 = vsel %vm2032, %v1995, %v1481
  %v2062 = vsel %vm2032, %v1997, %v1483
  %v2064 = vsel %vm2032, %v1999, %v1485
  %v2066 = vsel %vm2032, %v2001, %v1487
  %v2068 = vsel %vm2032, %v2003, %v1489
  %v2070 = vsel %vm2032, %v2005, %v1491
  %v2072 = vsel %vm2032, %v2007, %v1493
  %v2074 = vsel %vm2032, %v2009, %v1495
  %v2076 = vsel %vm2032, %v2011, %v1497
  %v2078 = vsel %vm2032, %v2013, %v1499
  %v2080 = vsel %vm2032, %v2015, %v1501
  %v2082 = vsel %vm2032, %v2017, %v1503
  %v2084 = vsel %vm2032, %v2019, %v1505
  %v2086 = vsel %vm2032, %v2021, %v1507
  %v2088 = vsel %vm2032, %v2023, %v1509
  %v2090 = vsel %vm2032, %v2025, %v1511
  %v2092 = vsel %vm2032, %v2027, %v1513
  %v2094 = vsel %vm2032, %v2029, %v1515
  %v2096 = vsel %vm2032, %v2031, %v1517
  %vm2097 = vcmask 654336
  %v2099 = vsel %vm2097, %v2034, %v1551
  %v2101 = vsel %vm2097, %v2036, %v1553
  %v2103 = vsel %vm2097, %v2038, %v1555
  %v2105 = vsel %vm2097, %v2040, %v1557
  %v2107 = vsel %vm2097, %v2042, %v1559
  %v2109 = vsel %vm2097, %v2044, %v1561
  %v2111 = vsel %vm2097, %v2046, %v1563
  %v2113 = vsel %vm2097, %v2048, %v1565
  %v2115 = vsel %vm2097, %v2050, %v1567
  %v2117 = vsel %vm2097, %v2052, %v1569
  %v2119 = vsel %vm2097, %v2054, %v1571
  %v2121 = vsel %vm2097, %v2056, %v1573
  %v2123 = vsel %vm2097, %v2058, %v1575
  %v2125 = vsel %vm2097, %v2060, %v1577
  %v2127 = vsel %vm2097, %v2062, %v1579
  %v2129 = vsel %vm2097, %v2064, %v1581
  %v2131 = vsel %vm2097, %v2066, %v1583
  %v2133 = vsel %vm2097, %v2068, %v1585
  %v2135 = vsel %vm2097, %v2070, %v1587
  %v2137 = vsel %vm2097, %v2072, %v1589
  %v2139 = vsel %vm2097, %v2074, %v1591
  %v2141 = vsel %vm2097, %v2076, %v1593
  %v2143 = vsel %vm2097, %v2078, %v1595
  %v2145 = vsel %vm2097, %v2080, %v1597
  %v2147 = vsel %vm2097, %v2082, %v1599
  %v2149 = vsel %vm2097, %v2084, %v1601
  %v2151 = vsel %vm2097, %v2086, %v1603
  %v2153 = vsel %vm2097, %v2088, %v1605
  %v2155 = vsel %vm2097, %v2090, %v1607
  %v2157 = vsel %vm2097, %v2092, %v1609
  %v2159 = vsel %vm2097, %v2094, %v1611
  %v2161 = vsel %vm2097, %v2096, %v1613
  %vm2162 = vcmask 785408
  %v2164 = vsel %vm2162, %v2099, %v1647
  %v2166 = vsel %vm2162, %v2101, %v1649
  %v2168 = vsel %vm2162, %v2103, %v1651
  %v2170 = vsel %vm2162, %v2105, %v1653
  %v2172 = vsel %vm2162, %v2107, %v1655
  %v2174 = vsel %vm2162, %v2109, %v1657
  %v2176 = vsel %vm2162, %v2111, %v1659
  %v2178 = vsel %vm2162, %v2113, %v1661
  %v2180 = vsel %vm2162, %v2115, %v1663
  %v2182 = vsel %vm2162, %v2117, %v1665
  %v2184 = vsel %vm2162, %v2119, %v1667
  %v2186 = vsel %vm2162, %v2121, %v1669
  %v2188 = vsel %vm2162, %v2123, %v1671
  %v2190 = vsel %vm2162, %v2125, %v1673
  %v2192 = vsel %vm2162, %v2127, %v1675
  %v2194 = vsel %vm2162, %v2129, %v1677
  %v2196 = vsel %vm2162, %v2131, %v1679
  %v2198 = vsel %vm2162, %v2133, %v1681
  %v2200 = vsel %vm2162, %v2135, %v1683
  %v2202 = vsel %vm2162, %v2137, %v1685
  %v2204 = vsel %vm2162, %v2139, %v1687
  %v2206 = vsel %vm2162, %v2141, %v1689
  %v2208 = vsel %vm2162, %v2143, %v1691
  %v2210 = vsel %vm2162, %v2145, %v1693
  %v2212 = vsel %vm2162, %v2147, %v1695
  %v2214 = vsel %vm2162, %v2149, %v1697
  %v2216 = vsel %vm2162, %v2151, %v1699
  %v2218 = vsel %vm2162, %v2153, %v1701
  %v2220 = vsel %vm2162, %v2155, %v1703
  %v2222 = vsel %vm2162, %v2157, %v1705
  %v2224 = vsel %vm2162, %v2159, %v1707
  %v2226 = vsel %vm2162, %v2161, %v1709
  %vm2227 = vcmask 916480
  %v2229 = vsel %vm2227, %v2164, %v1743
  %v2232 = vsel %vm2227, %v2166, %v1745
  %v2235 = vsel %vm2227, %v2168, %v1747
  %v2238 = vsel %vm2227, %v2170, %v1749
  %v2241 = vsel %vm2227, %v2172, %v1751
  %v2244 = vsel %vm2227, %v2174, %v1753
  %v2247 = vsel %vm2227, %v2176, %v1755
  %v2250 = vsel %vm2227, %v2178, %v1757
  %v2253 = vsel %vm2227, %v2180, %v1759
  %v2256 = vsel %vm2227, %v2182, %v1761
  %v2259 = vsel %vm2227, %v2184, %v1763
  %v2262 = vsel %vm2227, %v2186, %v1765
  %v2265 = vsel %vm2227, %v2188, %v1767
  %v2268 = vsel %vm2227, %v2190, %v1769
  %v2271 = vsel %vm2227, %v2192, %v1771
  %v2274 = vsel %vm2227, %v2194, %v1773
  %v2277 = vsel %vm2227, %v2196, %v1775
  %v2280 = vsel %vm2227, %v2198, %v1777
  %v2283 = vsel %vm2227, %v2200, %v1779
  %v2286 = vsel %vm2227, %v2202, %v1781
  %v2289 = vsel %vm2227, %v2204, %v1783
  %v2292 = vsel %vm2227, %v2206, %v1785
  %v2295 = vsel %vm2227, %v2208, %v1787
  %v2298 = vsel %vm2227, %v2210, %v1789
  %v2301 = vsel %vm2227, %v2212, %v1791
  %v2304 = vsel %vm2227, %v2214, %v1793
  %v2307 = vsel %vm2227, %v2216, %v1795
  %v2310 = vsel %vm2227, %v2218, %v1797
  %v2313 = vsel %vm2227, %v2220, %v1799
  %v2316 = vsel %vm2227, %v2222, %v1801
  %v2319 = vsel %vm2227, %v2224, %v1803
  %v2322 = vsel %vm2227, %v2226, %v1805
  %v2324 = vld [vmem:[%s1] sm:$0xf]
  %v2325 = vld [vmem:[%s1 + $0x4] sm:$0xf]
  %v2326 = vld [vmem:[%s1 + $0x8] sm:$0xf]
  %v2327 = vld [vmem:[%s1 + $0xc] sm:$0xf]
  %v2328 = vld [vmem:[%s1 + $0x10] sm:$0xf]
  %v2329 = vld [vmem:[%s1 + $0x14] sm:$0xf]
  %v2330 = vld [vmem:[%s1 + $0x18] sm:$0xf]
  %v2331 = vld [vmem:[%s1 + $0x1c] sm:$0xf]
  %v2332 = vld [vmem:[%s1 + $0x20] sm:$0xf]
  %v2333 = vld [vmem:[%s1 + $0x24] sm:$0xf]
  %v2334 = vld [vmem:[%s1 + $0x28] sm:$0xf]
  %v2335 = vld [vmem:[%s1 + $0x2c] sm:$0xf]
  %v2336 = vld [vmem:[%s1 + $0x30] sm:$0xf]
  %v2337 = vld [vmem:[%s1 + $0x34] sm:$0xf]
  %v2338 = vld [vmem:[%s1 + $0x38] sm:$0xf]
  %v2339 = vld [vmem:[%s1 + $0x3c] sm:$0xf]
  %v2340 = vld [vmem:[%s1 + $0x40] sm:$0xf]
  %v2341 = vld [vmem:[%s1 + $0x44] sm:$0xf]
  %v2360 = vunpack.c.l.b16 %v2324
  %v2361 = vunpack.c.l.b16 %v2325
  %v2362 = vunpack.c.l.b16 %v2326
  %v2363 = vunpack.c.l.b16 %v2327
  %v2364 = vunpack.c.l.b16 %v2328
  %v2365 = vunpack.c.l.b16 %v2329
  %v2366 = vunpack.c.l.b16 %v2330
  %v2367 = vunpack.c.l.b16 %v2331
  %v2368 = vunpack.c.l.b16 %v2332
  %v2369 = vunpack.c.l.b16 %v2333
  %v2370 = vunpack.c.l.b16 %v2334
  %v2371 = vunpack.c.l.b16 %v2335
  %v2372 = vunpack.c.l.b16 %v2336
  %v2373 = vunpack.c.l.b16 %v2337
  %v2374 = vunpack.c.l.b16 %v2338
  %v2375 = vunpack.c.l.b16 %v2339
  %v2376 = vunpack.c.l.b16 %v2340
  %v2377 = vunpack.c.l.b16 %v2341
  %v2378 = vpack.c.b16 %v2361, %v2360
  %v2379 = vpack.c.b16 %v2363, %v2362
  %v2380 = vpack.c.b16 %v2365, %v2364
  %v2381 = vpack.c.b16 %v2367, %v2366
  %v2382 = vpack.c.b16 %v2369, %v2368
  %v2383 = vpack.c.b16 %v2371, %v2370
  %v2384 = vpack.c.b16 %v2373, %v2372
  %v2385 = vpack.c.b16 %v2375, %v2374
  %v2386 = vpack.c.b16 %v2377, %v2376
  %v2397 = vsel %vm30, %v1102, 0
  %v2400 = vsel %vm30, %v1103, 0
  %v2403 = vsel %vm30, %v1104, 0
  %v2406 = vsel %vm30, %v1105, 0
  %v2409 = vsel %vm30, %v1106, 0
  %v2412 = vsel %vm30, %v1107, 0
  %v2415 = vsel %vm30, %v1108, 0
  %v2418 = vsel %vm30, %v1109, 0
  %v2421 = vsel %vm30, %v1110, 0
  %v2424 = vsel %vm30, %v1111, 0
  %v2427 = vsel %vm30, %v1112, 0
  %v2430 = vsel %vm30, %v1113, 0
  %v2433 = vsel %vm30, %v1114, 0
  %v2436 = vsel %vm30, %v1115, 0
  %v2439 = vsel %vm30, %v1116, 0
  %v2442 = vsel %vm30, %v1117, 0
  %v2445 = vsel %vm30, %v1118, 0
  %v2448 = vsel %vm30, %v1119, 0
  %v2451 = vsel %vm30, %v1120, 0
  %v2454 = vsel %vm30, %v1121, 0
  %v2457 = vsel %vm30, %v1122, 0
  %v2460 = vsel %vm30, %v1123, 0
  %v2463 = vsel %vm30, %v1124, 0
  %v2466 = vsel %vm30, %v1125, 0
  %v2469 = vsel %vm30, %v1126, 0
  %v2472 = vsel %vm30, %v1127, 0
  %v2475 = vsel %vm30, %v1128, 0
  %v2478 = vsel %vm30, %v1129, 0
  %v2481 = vsel %vm30, %v1130, 0
  %v2484 = vsel %vm30, %v1131, 0
  %v2487 = vsel %vm30, %v1132, 0
  %v2490 = vsel %vm30, %v1133, 0
  %2492 = vmatprep.subr.bf16.mxu0 0
  %2493 = vmatpush1.bf16.msra.mxu0 %v2385
  %2494 = vmatprep.subr.bf16.mxu0 0
  %2495 = vmatpush1.bf16.msra.mxu0 %v2384
  %2496 = vmatprep.subr.bf16.mxu0 0
  %2497 = vmatpush1.bf16.msra.mxu0 %v2383
  %2498 = vmatprep.subr.bf16.mxu0 0
  %2499 = vmatpush1.bf16.msra.mxu0 %v2382
  %2500 = vmatprep.subr.bf16.mxu0 0
  %2501 = vmatpush1.bf16.msra.mxu0 %v2381
  %2502 = vmatprep.subr.bf16.mxu0 0
  %2503 = vmatpush1.bf16.msra.mxu0 %v2380
  %2504 = vmatprep.subr.bf16.mxu0 0
  %2505 = vmatpush1.bf16.msra.mxu0 %v2379
  %2506 = vmatprep.subr.bf16.mxu0 0
  %2507 = vmatpush1.bf16.msra.mxu0 %v2378
  %2508 = vmatprep.subr.bf16.mxu0 0
  %2509 = vmatpush2.bf16.msra.mxu0 0
  %2510 = vmatprep.subr.bf16.mxu0 0
  %2511 = vmatpush2.bf16.msra.mxu0 0
  %2512 = vmatprep.subr.bf16.mxu0 0
  %2513 = vmatpush2.bf16.msra.mxu0 0
  %2514 = vmatprep.subr.bf16.mxu0 0
  %2515 = vmatpush2.bf16.msra.mxu0 0
  %2516 = vmatprep.subr.bf16.mxu0 0
  %2517 = vmatpush2.bf16.msra.mxu0 0
  %2518 = vmatprep.subr.bf16.mxu0 0
  %2519 = vmatpush2.bf16.msra.mxu0 0
  %2520 = vmatprep.subr.bf16.mxu0 0
  %2521 = vmatpush2.bf16.msra.mxu0 0
  %2522 = vmatprep.subr.bf16.mxu0 0
  %2523 = vmatpush2.bf16.msra.mxu0 %v2386
  %2524 = vmatprep.mubr.bf16.mxu0 %v2397
  %2525 = vmatmul.mubr.bf16.gmra.mxu0 %v2229
  %v2526 = vpop.f32.mrf.mxu0
  %v2527 = vadd.f32 0.0, %v2526
  %v2528 = vpop.f32.mrf.mxu0
  %v2529 = vpop.f32.mrf.mxu0
  %v2530 = vadd.f32 0.0, %v2529
  %v2531 = vpop.f32.mrf.mxu0
  %2532 = vmatprep.mubr.bf16.mxu0 %v2400
  %2533 = vmatmul.mubr.bf16.gmra.mxu0 %v2232
  %v2534 = vpop.f32.mrf.mxu0
  %v2535 = vadd.f32 0.0, %v2534
  %v2536 = vpop.f32.mrf.mxu0
  %v2537 = vpop.f32.mrf.mxu0
  %v2538 = vadd.f32 0.0, %v2537
  %v2539 = vpop.f32.mrf.mxu0
  %2540 = vmatprep.mubr.bf16.mxu0 %v2403
  %2541 = vmatmul.mubr.bf16.gmra.mxu0 %v2235
  %v2542 = vpop.f32.mrf.mxu0
  %v2543 = vadd.f32 0.0, %v2542
  %v2544 = vpop.f32.mrf.mxu0
  %v2545 = vpop.f32.mrf.mxu0
  %v2546 = vadd.f32 0.0, %v2545
  %v2547 = vpop.f32.mrf.mxu0
  %2548 = vmatprep.mubr.bf16.mxu0 %v2406
  %2549 = vmatmul.mubr.bf16.gmra.mxu0 %v2238
  %v2550 = vpop.f32.mrf.mxu0
  %v2551 = vadd.f32 0.0, %v2550
  %v2552 = vpop.f32.mrf.mxu0
  %v2553 = vpop.f32.mrf.mxu0
  %v2554 = vadd.f32 0.0, %v2553
  %v2555 = vpop.f32.mrf.mxu0
  %2556 = vmatprep.mubr.bf16.mxu0 %v2409
  %2557 = vmatmul.mubr.bf16.gmra.mxu0 %v2241
  %v2558 = vpop.f32.mrf.mxu0
  %v2559 = vadd.f32 0.0, %v2558
  %v2560 = vpop.f32.mrf.mxu0
  %v2561 = vpop.f32.mrf.mxu0
  %v2562 = vadd.f32 0.0, %v2561
  %v2563 = vpop.f32.mrf.mxu0
  %2564 = vmatprep.mubr.bf16.mxu0 %v2412
  %2565 = vmatmul.mubr.bf16.gmra.mxu0 %v2244
  %v2566 = vpop.f32.mrf.mxu0
  %v2567 = vadd.f32 0.0, %v2566
  %v2568 = vpop.f32.mrf.mxu0
  %v2569 = vpop.f32.mrf.mxu0
  %v2570 = vadd.f32 0.0, %v2569
  %v2571 = vpop.f32.mrf.mxu0
  %2572 = vmatprep.mubr.bf16.mxu0 %v2415
  %2573 = vmatmul.mubr.bf16.gmra.mxu0 %v2247
  %v2574 = vpop.f32.mrf.mxu0
  %v2575 = vadd.f32 0.0, %v2574
  %v2576 = vpop.f32.mrf.mxu0
  %v2577 = vpop.f32.mrf.mxu0
  %v2578 = vadd.f32 0.0, %v2577
  %v2579 = vpop.f32.mrf.mxu0
  %2580 = vmatprep.mubr.bf16.mxu0 %v2418
  %2581 = vmatmul.mubr.bf16.gmra.mxu0 %v2250
  %v2582 = vpop.f32.mrf.mxu0
  %v2583 = vadd.f32 0.0, %v2582
  %v2584 = vpop.f32.mrf.mxu0
  %v2585 = vpop.f32.mrf.mxu0
  %v2586 = vadd.f32 0.0, %v2585
  %v2587 = vpop.f32.mrf.mxu0
  %2588 = vmatprep.mubr.bf16.mxu0 %v2421
  %2589 = vmatmul.mubr.bf16.gmra.mxu0 %v2253
  %v2590 = vpop.f32.mrf.mxu0
  %v2591 = vadd.f32 0.0, %v2590
  %v2592 = vpop.f32.mrf.mxu0
  %v2593 = vpop.f32.mrf.mxu0
  %v2594 = vadd.f32 0.0, %v2593
  %v2595 = vpop.f32.mrf.mxu0
  %2596 = vmatprep.mubr.bf16.mxu0 %v2424
  %2597 = vmatmul.mubr.bf16.gmra.mxu0 %v2256
  %v2598 = vpop.f32.mrf.mxu0
  %v2599 = vadd.f32 0.0, %v2598
  %v2600 = vpop.f32.mrf.mxu0
  %v2601 = vpop.f32.mrf.mxu0
  %v2602 = vadd.f32 0.0, %v2601
  %v2603 = vpop.f32.mrf.mxu0
  %2604 = vmatprep.mubr.bf16.mxu0 %v2427
  %2605 = vmatmul.mubr.bf16.gmra.mxu0 %v2259
  %v2606 = vpop.f32.mrf.mxu0
  %v2607 = vadd.f32 0.0, %v2606
  %v2608 = vpop.f32.mrf.mxu0
  %v2609 = vpop.f32.mrf.mxu0
  %v2610 = vadd.f32 0.0, %v2609
  %v2611 = vpop.f32.mrf.mxu0
  %2612 = vmatprep.mubr.bf16.mxu0 %v2430
  %2613 = vmatmul.mubr.bf16.gmra.mxu0 %v2262
  %v2614 = vpop.f32.mrf.mxu0
  %v2615 = vadd.f32 0.0, %v2614
  %v2616 = vpop.f32.mrf.mxu0
  %v2617 = vpop.f32.mrf.mxu0
  %v2618 = vadd.f32 0.0, %v2617
  %v2619 = vpop.f32.mrf.mxu0
  %2620 = vmatprep.mubr.bf16.mxu0 %v2433
  %2621 = vmatmul.mubr.bf16.gmra.mxu0 %v2265
  %v2622 = vpop.f32.mrf.mxu0
  %v2623 = vadd.f32 0.0, %v2622
  %v2624 = vpop.f32.mrf.mxu0
  %v2625 = vpop.f32.mrf.mxu0
  %v2626 = vadd.f32 0.0, %v2625
  %v2627 = vpop.f32.mrf.mxu0
  %2628 = vmatprep.mubr.bf16.mxu0 %v2436
  %2629 = vmatmul.mubr.bf16.gmra.mxu0 %v2268
  %v2630 = vpop.f32.mrf.mxu0
  %v2631 = vadd.f32 0.0, %v2630
  %v2632 = vpop.f32.mrf.mxu0
  %v2633 = vpop.f32.mrf.mxu0
  %v2634 = vadd.f32 0.0, %v2633
  %v2635 = vpop.f32.mrf.mxu0
  %2636 = vmatprep.mubr.bf16.mxu0 %v2439
  %2637 = vmatmul.mubr.bf16.gmra.mxu0 %v2271
  %v2638 = vpop.f32.mrf.mxu0
  %v2639 = vadd.f32 0.0, %v2638
  %v2640 = vpop.f32.mrf.mxu0
  %v2641 = vpop.f32.mrf.mxu0
  %v2642 = vadd.f32 0.0, %v2641
  %v2643 = vpop.f32.mrf.mxu0
  %2644 = vmatprep.mubr.bf16.mxu0 %v2442
  %2645 = vmatmul.mubr.bf16.gmra.mxu0 %v2274
  %v2646 = vpop.f32.mrf.mxu0
  %v2647 = vadd.f32 0.0, %v2646
  %v2648 = vpop.f32.mrf.mxu0
  %v2649 = vpop.f32.mrf.mxu0
  %v2650 = vadd.f32 0.0, %v2649
  %v2651 = vpop.f32.mrf.mxu0
  %2652 = vmatprep.mubr.bf16.mxu0 %v2445
  %2653 = vmatmul.mubr.bf16.gmra.mxu0 %v2277
  %v2654 = vpop.f32.mrf.mxu0
  %v2655 = vadd.f32 0.0, %v2654
  %v2656 = vpop.f32.mrf.mxu0
  %v2657 = vpop.f32.mrf.mxu0
  %v2658 = vadd.f32 0.0, %v2657
  %v2659 = vpop.f32.mrf.mxu0
  %2660 = vmatprep.mubr.bf16.mxu0 %v2448
  %2661 = vmatmul.mubr.bf16.gmra.mxu0 %v2280
  %v2662 = vpop.f32.mrf.mxu0
  %v2663 = vadd.f32 0.0, %v2662
  %v2664 = vpop.f32.mrf.mxu0
  %v2665 = vpop.f32.mrf.mxu0
  %v2666 = vadd.f32 0.0, %v2665
  %v2667 = vpop.f32.mrf.mxu0
  %2668 = vmatprep.mubr.bf16.mxu0 %v2451
  %2669 = vmatmul.mubr.bf16.gmra.mxu0 %v2283
  %v2670 = vpop.f32.mrf.mxu0
  %v2671 = vadd.f32 0.0, %v2670
  %v2672 = vpop.f32.mrf.mxu0
  %v2673 = vpop.f32.mrf.mxu0
  %v2674 = vadd.f32 0.0, %v2673
  %v2675 = vpop.f32.mrf.mxu0
  %2676 = vmatprep.mubr.bf16.mxu0 %v2454
  %2677 = vmatmul.mubr.bf16.gmra.mxu0 %v2286
  %v2678 = vpop.f32.mrf.mxu0
  %v2679 = vadd.f32 0.0, %v2678
  %v2680 = vpop.f32.mrf.mxu0
  %v2681 = vpop.f32.mrf.mxu0
  %v2682 = vadd.f32 0.0, %v2681
  %v2683 = vpop.f32.mrf.mxu0
  %2684 = vmatprep.mubr.bf16.mxu0 %v2457
  %2685 = vmatmul.mubr.bf16.gmra.mxu0 %v2289
  %v2686 = vpop.f32.mrf.mxu0
  %v2687 = vadd.f32 0.0, %v2686
  %v2688 = vpop.f32.mrf.mxu0
  %v2689 = vpop.f32.mrf.mxu0
  %v2690 = vadd.f32 0.0, %v2689
  %v2691 = vpop.f32.mrf.mxu0
  %2692 = vmatprep.mubr.bf16.mxu0 %v2460
  %2693 = vmatmul.mubr.bf16.gmra.mxu0 %v2292
  %v2694 = vpop.f32.mrf.mxu0
  %v2695 = vadd.f32 0.0, %v2694
  %v2696 = vpop.f32.mrf.mxu0
  %v2697 = vpop.f32.mrf.mxu0
  %v2698 = vadd.f32 0.0, %v2697
  %v2699 = vpop.f32.mrf.mxu0
  %2700 = vmatprep.mubr.bf16.mxu0 %v2463
  %2701 = vmatmul.mubr.bf16.gmra.mxu0 %v2295
  %v2702 = vpop.f32.mrf.mxu0
  %v2703 = vadd.f32 0.0, %v2702
  %v2704 = vpop.f32.mrf.mxu0
  %v2705 = vpop.f32.mrf.mxu0
  %v2706 = vadd.f32 0.0, %v2705
  %v2707 = vpop.f32.mrf.mxu0
  %2708 = vmatprep.mubr.bf16.mxu0 %v2466
  %2709 = vmatmul.mubr.bf16.gmra.mxu0 %v2298
  %v2710 = vpop.f32.mrf.mxu0
  %v2711 = vadd.f32 0.0, %v2710
  %v2712 = vpop.f32.mrf.mxu0
  %v2713 = vpop.f32.mrf.mxu0
  %v2714 = vadd.f32 0.0, %v2713
  %v2715 = vpop.f32.mrf.mxu0
  %2716 = vmatprep.mubr.bf16.mxu0 %v2469
  %2717 = vmatmul.mubr.bf16.gmra.mxu0 %v2301
  %v2718 = vpop.f32.mrf.mxu0
  %v2719 = vadd.f32 0.0, %v2718
  %v2720 = vpop.f32.mrf.mxu0
  %v2721 = vpop.f32.mrf.mxu0
  %v2722 = vadd.f32 0.0, %v2721
  %v2723 = vpop.f32.mrf.mxu0
  %2724 = vmatprep.mubr.bf16.mxu0 %v2472
  %2725 = vmatmul.mubr.bf16.gmra.mxu0 %v2304
  %v2726 = vpop.f32.mrf.mxu0
  %v2727 = vadd.f32 0.0, %v2726
  %v2728 = vpop.f32.mrf.mxu0
  %v2729 = vpop.f32.mrf.mxu0
  %v2730 = vadd.f32 0.0, %v2729
  %v2731 = vpop.f32.mrf.mxu0
  %2732 = vmatprep.mubr.bf16.mxu0 %v2475
  %2733 = vmatmul.mubr.bf16.gmra.mxu0 %v2307
  %v2734 = vpop.f32.mrf.mxu0
  %v2735 = vadd.f32 0.0, %v2734
  %v2736 = vpop.f32.mrf.mxu0
  %v2737 = vpop.f32.mrf.mxu0
  %v2738 = vadd.f32 0.0, %v2737
  %v2739 = vpop.f32.mrf.mxu0
  %2740 = vmatprep.mubr.bf16.mxu0 %v2478
  %2741 = vmatmul.mubr.bf16.gmra.mxu0 %v2310
  %v2742 = vpop.f32.mrf.mxu0
  %v2743 = vadd.f32 0.0, %v2742
  %v2744 = vpop.f32.mrf.mxu0
  %v2745 = vpop.f32.mrf.mxu0
  %v2746 = vadd.f32 0.0, %v2745
  %v2747 = vpop.f32.mrf.mxu0
  %2748 = vmatprep.mubr.bf16.mxu0 %v2481
  %2749 = vmatmul.mubr.bf16.gmra.mxu0 %v2313
  %v2750 = vpop.f32.mrf.mxu0
  %v2751 = vadd.f32 0.0, %v2750
  %v2752 = vpop.f32.mrf.mxu0
  %v2753 = vpop.f32.mrf.mxu0
  %v2754 = vadd.f32 0.0, %v2753
  %v2755 = vpop.f32.mrf.mxu0
  %2756 = vmatprep.mubr.bf16.mxu0 %v2484
  %2757 = vmatmul.mubr.bf16.gmra.mxu0 %v2316
  %v2758 = vpop.f32.mrf.mxu0
  %v2759 = vadd.f32 0.0, %v2758
  %v2760 = vpop.f32.mrf.mxu0
  %v2761 = vpop.f32.mrf.mxu0
  %v2762 = vadd.f32 0.0, %v2761
  %v2763 = vpop.f32.mrf.mxu0
  %2764 = vmatprep.mubr.bf16.mxu0 %v2487
  %2765 = vmatmul.mubr.bf16.gmra.mxu0 %v2319
  %v2766 = vpop.f32.mrf.mxu0
  %v2767 = vadd.f32 0.0, %v2766
  %v2768 = vpop.f32.mrf.mxu0
  %v2769 = vpop.f32.mrf.mxu0
  %v2770 = vadd.f32 0.0, %v2769
  %v2771 = vpop.f32.mrf.mxu0
  %2772 = vmatprep.mubr.bf16.mxu0 %v2490
  %2773 = vmatmul.mubr.bf16.gmra.mxu0 %v2322
  %v2774 = vpop.f32.mrf.mxu0
  %v2775 = vadd.f32 0.0, %v2774
  %v2776 = vpop.f32.mrf.mxu0
  %v2777 = vpop.f32.mrf.mxu0
  %v2778 = vadd.f32 0.0, %v2777
  %v2779 = vpop.f32.mrf.mxu0
  %2780 = vdwg.mxu0
  %v2781 = vld [vmem:[%s2] sm:$0x1]
  %v2782 = vld [vmem:[%s3] sm:$0x1]
  %v2783 = vadd.f32 %v2527, %v2530
  %v2784 = vadd.f32 %v2783, %v2535
  %v2785 = vadd.f32 %v2784, %v2538
  %v2786 = vadd.f32 %v2785, %v2543
  %v2787 = vadd.f32 %v2786, %v2546
  %v2788 = vadd.f32 %v2787, %v2551
  %v2789 = vadd.f32 %v2788, %v2554
  %v2790 = vadd.f32 %v2789, %v2559
  %v2791 = vadd.f32 %v2790, %v2562
  %v2792 = vadd.f32 %v2791, %v2567
  %v2793 = vadd.f32 %v2792, %v2570
  %v2794 = vadd.f32 %v2793, %v2575
  %v2795 = vadd.f32 %v2794, %v2578
  %v2796 = vadd.f32 %v2795, %v2583
  %v2797 = vadd.f32 %v2796, %v2586
  %v2798 = vadd.f32 %v2797, %v2591
  %v2799 = vadd.f32 %v2798, %v2594
  %v2800 = vadd.f32 %v2799, %v2599
  %v2801 = vadd.f32 %v2800, %v2602
  %v2802 = vadd.f32 %v2801, %v2607
  %v2803 = vadd.f32 %v2802, %v2610
  %v2804 = vadd.f32 %v2803, %v2615
  %v2805 = vadd.f32 %v2804, %v2618
  %v2806 = vadd.f32 %v2805, %v2623
  %v2807 = vadd.f32 %v2806, %v2626
  %v2808 = vadd.f32 %v2807, %v2631
  %v2809 = vadd.f32 %v2808, %v2634
  %v2810 = vadd.f32 %v2809, %v2639
  %v2811 = vadd.f32 %v2810, %v2642
  %v2812 = vadd.f32 %v2811, %v2647
  %v2813 = vadd.f32 %v2812, %v2650
  %v2814 = vadd.f32 %v2813, %v2655
  %v2815 = vadd.f32 %v2814, %v2658
  %v2816 = vadd.f32 %v2815, %v2663
  %v2817 = vadd.f32 %v2816, %v2666
  %v2818 = vadd.f32 %v2817, %v2671
  %v2819 = vadd.f32 %v2818, %v2674
  %v2820 = vadd.f32 %v2819, %v2679
  %v2821 = vadd.f32 %v2820, %v2682
  %v2822 = vadd.f32 %v2821, %v2687
  %v2823 = vadd.f32 %v2822, %v2690
  %v2824 = vadd.f32 %v2823, %v2695
  %v2825 = vadd.f32 %v2824, %v2698
  %v2826 = vadd.f32 %v2825, %v2703
  %v2827 = vadd.f32 %v2826, %v2706
  %v2828 = vadd.f32 %v2827, %v2711
  %v2829 = vadd.f32 %v2828, %v2714
  %v2830 = vadd.f32 %v2829, %v2719
  %v2831 = vadd.f32 %v2830, %v2722
  %v2832 = vadd.f32 %v2831, %v2727
  %v2833 = vadd.f32 %v2832, %v2730
  %v2834 = vadd.f32 %v2833, %v2735
  %v2835 = vadd.f32 %v2834, %v2738
  %v2836 = vadd.f32 %v2835, %v2743
  %v2837 = vadd.f32 %v2836, %v2746
  %v2838 = vadd.f32 %v2837, %v2751
  %v2839 = vadd.f32 %v2838, %v2754
  %v2840 = vadd.f32 %v2839, %v2759
  %v2841 = vadd.f32 %v2840, %v2762
  %v2842 = vadd.f32 %v2841, %v2767
  %v2843 = vadd.f32 %v2842, %v2770
  %v2844 = vadd.f32 %v2843, %v2775
  %v2845 = vadd.f32 %v2844, %v2778
  %v2846 = vrot.slane %v2845, 4
  %v2847 = vadd.f32 %v2845, %v2846
  %v2848 = vrot.slane %v2847, 2
  %v2849 = vadd.f32 %v2847, %v2848
  %v2850 = vrot.slane %v2849, 1
  %v2851 = vadd.f32 %v2849, %v2850
  %v2852 = vmul.f32 %v2851, 0.001953125
  %v2853 = vmul.f32 %v2527, %v2527
  %v2854 = vmul.f32 %v2530, %v2530
  %v2855 = vmul.f32 %v2535, %v2535
  %v2856 = vmul.f32 %v2538, %v2538
  %v2857 = vmul.f32 %v2543, %v2543
  %v2858 = vmul.f32 %v2546, %v2546
  %v2859 = vmul.f32 %v2551, %v2551
  %v2860 = vmul.f32 %v2554, %v2554
  %v2861 = vmul.f32 %v2559, %v2559
  %v2862 = vmul.f32 %v2562, %v2562
  %v2863 = vmul.f32 %v2567, %v2567
  %v2864 = vmul.f32 %v2570, %v2570
  %v2865 = vmul.f32 %v2575, %v2575
  %v2866 = vmul.f32 %v2578, %v2578
  %v2867 = vmul.f32 %v2583, %v2583
  %v2868 = vmul.f32 %v2586, %v2586
  %v2869 = vmul.f32 %v2591, %v2591
  %v2870 = vmul.f32 %v2594, %v2594
  %v2871 = vmul.f32 %v2599, %v2599
  %v2872 = vmul.f32 %v2602, %v2602
  %v2873 = vmul.f32 %v2607, %v2607
  %v2874 = vmul.f32 %v2610, %v2610
  %v2875 = vmul.f32 %v2615, %v2615
  %v2876 = vmul.f32 %v2618, %v2618
  %v2877 = vmul.f32 %v2623, %v2623
  %v2878 = vmul.f32 %v2626, %v2626
  %v2879 = vmul.f32 %v2631, %v2631
  %v2880 = vmul.f32 %v2634, %v2634
  %v2881 = vmul.f32 %v2639, %v2639
  %v2882 = vmul.f32 %v2642, %v2642
  %v2883 = vmul.f32 %v2647, %v2647
  %v2884 = vmul.f32 %v2650, %v2650
  %v2885 = vmul.f32 %v2655, %v2655
  %v2886 = vmul.f32 %v2658, %v2658
  %v2887 = vmul.f32 %v2663, %v2663
  %v2888 = vmul.f32 %v2666, %v2666
  %v2889 = vmul.f32 %v2671, %v2671
  %v2890 = vmul.f32 %v2674, %v2674
  %v2891 = vmul.f32 %v2679, %v2679
  %v2892 = vmul.f32 %v2682, %v2682
  %v2893 = vmul.f32 %v2687, %v2687
  %v2894 = vmul.f32 %v2690, %v2690
  %v2895 = vmul.f32 %v2695, %v2695
  %v2896 = vmul.f32 %v2698, %v2698
  %v2897 = vmul.f32 %v2703, %v2703
  %v2898 = vmul.f32 %v2706, %v2706
  %v2899 = vmul.f32 %v2711, %v2711
  %v2900 = vmul.f32 %v2714, %v2714
  %v2901 = vmul.f32 %v2719, %v2719
  %v2902 = vmul.f32 %v2722, %v2722
  %v2903 = vmul.f32 %v2727, %v2727
  %v2904 = vmul.f32 %v2730, %v2730
  %v2905 = vmul.f32 %v2735, %v2735
  %v2906 = vmul.f32 %v2738, %v2738
  %v2907 = vmul.f32 %v2743, %v2743
  %v2908 = vmul.f32 %v2746, %v2746
  %v2909 = vmul.f32 %v2751, %v2751
  %v2910 = vmul.f32 %v2754, %v2754
  %v2911 = vmul.f32 %v2759, %v2759
  %v2912 = vmul.f32 %v2762, %v2762
  %v2913 = vmul.f32 %v2767, %v2767
  %v2914 = vmul.f32 %v2770, %v2770
  %v2915 = vmul.f32 %v2775, %v2775
  %v2916 = vmul.f32 %v2778, %v2778
  %v2917 = vadd.f32 %v2853, %v2854
  %v2918 = vadd.f32 %v2917, %v2855
  %v2919 = vadd.f32 %v2918, %v2856
  %v2920 = vadd.f32 %v2919, %v2857
  %v2921 = vadd.f32 %v2920, %v2858
  %v2922 = vadd.f32 %v2921, %v2859
  %v2923 = vadd.f32 %v2922, %v2860
  %v2924 = vadd.f32 %v2923, %v2861
  %v2925 = vadd.f32 %v2924, %v2862
  %v2926 = vadd.f32 %v2925, %v2863
  %v2927 = vadd.f32 %v2926, %v2864
  %v2928 = vadd.f32 %v2927, %v2865
  %v2929 = vadd.f32 %v2928, %v2866
  %v2930 = vadd.f32 %v2929, %v2867
  %v2931 = vadd.f32 %v2930, %v2868
  %v2932 = vadd.f32 %v2931, %v2869
  %v2933 = vadd.f32 %v2932, %v2870
  %v2934 = vadd.f32 %v2933, %v2871
  %v2935 = vadd.f32 %v2934, %v2872
  %v2936 = vadd.f32 %v2935, %v2873
  %v2937 = vadd.f32 %v2936, %v2874
  %v2938 = vadd.f32 %v2937, %v2875
  %v2939 = vadd.f32 %v2938, %v2876
  %v2940 = vadd.f32 %v2939, %v2877
  %v2941 = vadd.f32 %v2940, %v2878
  %v2942 = vadd.f32 %v2941, %v2879
  %v2943 = vadd.f32 %v2942, %v2880
  %v2944 = vadd.f32 %v2943, %v2881
  %v2945 = vadd.f32 %v2944, %v2882
  %v2946 = vadd.f32 %v2945, %v2883
  %v2947 = vadd.f32 %v2946, %v2884
  %v2948 = vadd.f32 %v2947, %v2885
  %v2949 = vadd.f32 %v2948, %v2886
  %v2950 = vadd.f32 %v2949, %v2887
  %v2951 = vadd.f32 %v2950, %v2888
  %v2952 = vadd.f32 %v2951, %v2889
  %v2953 = vadd.f32 %v2952, %v2890
  %v2954 = vadd.f32 %v2953, %v2891
  %v2955 = vadd.f32 %v2954, %v2892
  %v2956 = vadd.f32 %v2955, %v2893
  %v2957 = vadd.f32 %v2956, %v2894
  %v2958 = vadd.f32 %v2957, %v2895
  %v2959 = vadd.f32 %v2958, %v2896
  %v2960 = vadd.f32 %v2959, %v2897
  %v2961 = vadd.f32 %v2960, %v2898
  %v2962 = vadd.f32 %v2961, %v2899
  %v2963 = vadd.f32 %v2962, %v2900
  %v2964 = vadd.f32 %v2963, %v2901
  %v2965 = vadd.f32 %v2964, %v2902
  %v2966 = vadd.f32 %v2965, %v2903
  %v2967 = vadd.f32 %v2966, %v2904
  %v2968 = vadd.f32 %v2967, %v2905
  %v2969 = vadd.f32 %v2968, %v2906
  %v2970 = vadd.f32 %v2969, %v2907
  %v2971 = vadd.f32 %v2970, %v2908
  %v2972 = vadd.f32 %v2971, %v2909
  %v2973 = vadd.f32 %v2972, %v2910
  %v2974 = vadd.f32 %v2973, %v2911
  %v2975 = vadd.f32 %v2974, %v2912
  %v2976 = vadd.f32 %v2975, %v2913
  %v2977 = vadd.f32 %v2976, %v2914
  %v2978 = vadd.f32 %v2977, %v2915
  %v2979 = vadd.f32 %v2978, %v2916
  %v2980 = vrot.slane %v2979, 4
  %v2981 = vadd.f32 %v2979, %v2980
  %v2982 = vrot.slane %v2981, 2
  %v2983 = vadd.f32 %v2981, %v2982
  %v2984 = vrot.slane %v2983, 1
  %v2985 = vadd.f32 %v2983, %v2984
  %v2986 = vmul.f32 %v2985, 0.001953125
  %v2987 = vmul.f32 %v2852, %v2852
  %v2988 = vsub.f32 %v2986, %v2987
  %v2989 = vadd.f32 %v2988, 1e-05
  %v2990 = vrsqrt.pop %v2989
  %v2991 = vmul.f32 %v2781, %v2990
  %v2992 = vsub.f32 %v2527, %v2852
  %v2993 = vsub.f32 %v2530, %v2852
  %v2994 = vsub.f32 %v2535, %v2852
  %v2995 = vsub.f32 %v2538, %v2852
  %v2996 = vsub.f32 %v2543, %v2852
  %v2997 = vsub.f32 %v2546, %v2852
  %v2998 = vsub.f32 %v2551, %v2852
  %v2999 = vsub.f32 %v2554, %v2852
  %v3000 = vsub.f32 %v2559, %v2852
  %v3001 = vsub.f32 %v2562, %v2852
  %v3002 = vsub.f32 %v2567, %v2852
  %v3003 = vsub.f32 %v2570, %v2852
  %v3004 = vsub.f32 %v2575, %v2852
  %v3005 = vsub.f32 %v2578, %v2852
  %v3006 = vsub.f32 %v2583, %v2852
  %v3007 = vsub.f32 %v2586, %v2852
  %v3008 = vsub.f32 %v2591, %v2852
  %v3009 = vsub.f32 %v2594, %v2852
  %v3010 = vsub.f32 %v2599, %v2852
  %v3011 = vsub.f32 %v2602, %v2852
  %v3012 = vsub.f32 %v2607, %v2852
  %v3013 = vsub.f32 %v2610, %v2852
  %v3014 = vsub.f32 %v2615, %v2852
  %v3015 = vsub.f32 %v2618, %v2852
  %v3016 = vsub.f32 %v2623, %v2852
  %v3017 = vsub.f32 %v2626, %v2852
  %v3018 = vsub.f32 %v2631, %v2852
  %v3019 = vsub.f32 %v2634, %v2852
  %v3020 = vsub.f32 %v2639, %v2852
  %v3021 = vsub.f32 %v2642, %v2852
  %v3022 = vsub.f32 %v2647, %v2852
  %v3023 = vsub.f32 %v2650, %v2852
  %v3024 = vsub.f32 %v2655, %v2852
  %v3025 = vsub.f32 %v2658, %v2852
  %v3026 = vsub.f32 %v2663, %v2852
  %v3027 = vsub.f32 %v2666, %v2852
  %v3028 = vsub.f32 %v2671, %v2852
  %v3029 = vsub.f32 %v2674, %v2852
  %v3030 = vsub.f32 %v2679, %v2852
  %v3031 = vsub.f32 %v2682, %v2852
  %v3032 = vsub.f32 %v2687, %v2852
  %v3033 = vsub.f32 %v2690, %v2852
  %v3034 = vsub.f32 %v2695, %v2852
  %v3035 = vsub.f32 %v2698, %v2852
  %v3036 = vsub.f32 %v2703, %v2852
  %v3037 = vsub.f32 %v2706, %v2852
  %v3038 = vsub.f32 %v2711, %v2852
  %v3039 = vsub.f32 %v2714, %v2852
  %v3040 = vsub.f32 %v2719, %v2852
  %v3041 = vsub.f32 %v2722, %v2852
  %v3042 = vsub.f32 %v2727, %v2852
  %v3043 = vsub.f32 %v2730, %v2852
  %v3044 = vsub.f32 %v2735, %v2852
  %v3045 = vsub.f32 %v2738, %v2852
  %v3046 = vsub.f32 %v2743, %v2852
  %v3047 = vsub.f32 %v2746, %v2852
  %v3048 = vsub.f32 %v2751, %v2852
  %v3049 = vsub.f32 %v2754, %v2852
  %v3050 = vsub.f32 %v2759, %v2852
  %v3051 = vsub.f32 %v2762, %v2852
  %v3052 = vsub.f32 %v2767, %v2852
  %v3053 = vsub.f32 %v2770, %v2852
  %v3054 = vsub.f32 %v2775, %v2852
  %v3055 = vsub.f32 %v2778, %v2852
  %v3057 = vlaneseq
  %v3058 = vshrl.u32 %v3057, 7
  %v3059 = vsub.s32 0, %v3058
  %v3060 = vrot.slane %v2991, %v3059
  %v3062 = vmul.f32 %v2992, %v3060
  %v3063 = vmul.f32 %v2993, %v3060
  %v3064 = vmul.f32 %v2994, %v3060
  %v3065 = vmul.f32 %v2995, %v3060
  %v3066 = vmul.f32 %v2996, %v3060
  %v3067 = vmul.f32 %v2997, %v3060
  %v3068 = vmul.f32 %v2998, %v3060
  %v3069 = vmul.f32 %v2999, %v3060
  %v3070 = vmul.f32 %v3000, %v3060
  %v3071 = vmul.f32 %v3001, %v3060
  %v3072 = vmul.f32 %v3002, %v3060
  %v3073 = vmul.f32 %v3003, %v3060
  %v3074 = vmul.f32 %v3004, %v3060
  %v3075 = vmul.f32 %v3005, %v3060
  %v3076 = vmul.f32 %v3006, %v3060
  %v3077 = vmul.f32 %v3007, %v3060
  %v3078 = vmul.f32 %v3008, %v3060
  %v3079 = vmul.f32 %v3009, %v3060
  %v3080 = vmul.f32 %v3010, %v3060
  %v3081 = vmul.f32 %v3011, %v3060
  %v3082 = vmul.f32 %v3012, %v3060
  %v3083 = vmul.f32 %v3013, %v3060
  %v3084 = vmul.f32 %v3014, %v3060
  %v3085 = vmul.f32 %v3015, %v3060
  %v3086 = vmul.f32 %v3016, %v3060
  %v3087 = vmul.f32 %v3017, %v3060
  %v3088 = vmul.f32 %v3018, %v3060
  %v3089 = vmul.f32 %v3019, %v3060
  %v3090 = vmul.f32 %v3020, %v3060
  %v3091 = vmul.f32 %v3021, %v3060
  %v3092 = vmul.f32 %v3022, %v3060
  %v3093 = vmul.f32 %v3023, %v3060
  %v3094 = vmul.f32 %v3024, %v3060
  %v3095 = vmul.f32 %v3025, %v3060
  %v3096 = vmul.f32 %v3026, %v3060
  %v3097 = vmul.f32 %v3027, %v3060
  %v3098 = vmul.f32 %v3028, %v3060
  %v3099 = vmul.f32 %v3029, %v3060
  %v3100 = vmul.f32 %v3030, %v3060
  %v3101 = vmul.f32 %v3031, %v3060
  %v3102 = vmul.f32 %v3032, %v3060
  %v3103 = vmul.f32 %v3033, %v3060
  %v3104 = vmul.f32 %v3034, %v3060
  %v3105 = vmul.f32 %v3035, %v3060
  %v3106 = vmul.f32 %v3036, %v3060
  %v3107 = vmul.f32 %v3037, %v3060
  %v3108 = vmul.f32 %v3038, %v3060
  %v3109 = vmul.f32 %v3039, %v3060
  %v3110 = vmul.f32 %v3040, %v3060
  %v3111 = vmul.f32 %v3041, %v3060
  %v3112 = vmul.f32 %v3042, %v3060
  %v3113 = vmul.f32 %v3043, %v3060
  %v3114 = vmul.f32 %v3044, %v3060
  %v3115 = vmul.f32 %v3045, %v3060
  %v3116 = vmul.f32 %v3046, %v3060
  %v3117 = vmul.f32 %v3047, %v3060
  %v3118 = vmul.f32 %v3048, %v3060
  %v3119 = vmul.f32 %v3049, %v3060
  %v3120 = vmul.f32 %v3050, %v3060
  %v3121 = vmul.f32 %v3051, %v3060
  %v3122 = vmul.f32 %v3052, %v3060
  %v3123 = vmul.f32 %v3053, %v3060
  %v3124 = vmul.f32 %v3054, %v3060
  %v3125 = vmul.f32 %v3055, %v3060
  %v3127 = vlaneseq
  %v3128 = vshrl.u32 %v3127, 7
  %v3129 = vsub.s32 0, %v3128
  %v3130 = vrot.slane %v2782, %v3129
  %v3132 = vadd.f32 %v3062, %v3130
  %v3133 = vadd.f32 %v3063, %v3130
  %v3134 = vadd.f32 %v3064, %v3130
  %v3135 = vadd.f32 %v3065, %v3130
  %v3136 = vadd.f32 %v3066, %v3130
  %v3137 = vadd.f32 %v3067, %v3130
  %v3138 = vadd.f32 %v3068, %v3130
  %v3139 = vadd.f32 %v3069, %v3130
  %v3140 = vadd.f32 %v3070, %v3130
  %v3141 = vadd.f32 %v3071, %v3130
  %v3142 = vadd.f32 %v3072, %v3130
  %v3143 = vadd.f32 %v3073, %v3130
  %v3144 = vadd.f32 %v3074, %v3130
  %v3145 = vadd.f32 %v3075, %v3130
  %v3146 = vadd.f32 %v3076, %v3130
  %v3147 = vadd.f32 %v3077, %v3130
  %v3148 = vadd.f32 %v3078, %v3130
  %v3149 = vadd.f32 %v3079, %v3130
  %v3150 = vadd.f32 %v3080, %v3130
  %v3151 = vadd.f32 %v3081, %v3130
  %v3152 = vadd.f32 %v3082, %v3130
  %v3153 = vadd.f32 %v3083, %v3130
  %v3154 = vadd.f32 %v3084, %v3130
  %v3155 = vadd.f32 %v3085, %v3130
  %v3156 = vadd.f32 %v3086, %v3130
  %v3157 = vadd.f32 %v3087, %v3130
  %v3158 = vadd.f32 %v3088, %v3130
  %v3159 = vadd.f32 %v3089, %v3130
  %v3160 = vadd.f32 %v3090, %v3130
  %v3161 = vadd.f32 %v3091, %v3130
  %v3162 = vadd.f32 %v3092, %v3130
  %v3163 = vadd.f32 %v3093, %v3130
  %v3164 = vadd.f32 %v3094, %v3130
  %v3165 = vadd.f32 %v3095, %v3130
  %v3166 = vadd.f32 %v3096, %v3130
  %v3167 = vadd.f32 %v3097, %v3130
  %v3168 = vadd.f32 %v3098, %v3130
  %v3169 = vadd.f32 %v3099, %v3130
  %v3170 = vadd.f32 %v3100, %v3130
  %v3171 = vadd.f32 %v3101, %v3130
  %v3172 = vadd.f32 %v3102, %v3130
  %v3173 = vadd.f32 %v3103, %v3130
  %v3174 = vadd.f32 %v3104, %v3130
  %v3175 = vadd.f32 %v3105, %v3130
  %v3176 = vadd.f32 %v3106, %v3130
  %v3177 = vadd.f32 %v3107, %v3130
  %v3178 = vadd.f32 %v3108, %v3130
  %v3179 = vadd.f32 %v3109, %v3130
  %v3180 = vadd.f32 %v3110, %v3130
  %v3181 = vadd.f32 %v3111, %v3130
  %v3182 = vadd.f32 %v3112, %v3130
  %v3183 = vadd.f32 %v3113, %v3130
  %v3184 = vadd.f32 %v3114, %v3130
  %v3185 = vadd.f32 %v3115, %v3130
  %v3186 = vadd.f32 %v3116, %v3130
  %v3187 = vadd.f32 %v3117, %v3130
  %v3188 = vadd.f32 %v3118, %v3130
  %v3189 = vadd.f32 %v3119, %v3130
  %v3190 = vadd.f32 %v3120, %v3130
  %v3191 = vadd.f32 %v3121, %v3130
  %v3192 = vadd.f32 %v3122, %v3130
  %v3193 = vadd.f32 %v3123, %v3130
  %v3194 = vadd.f32 %v3124, %v3130
  %v3195 = vadd.f32 %v3125, %v3130
  %v3196 = vmax.f32 %v3132, 0.0
  %v3197 = vmax.f32 %v3133, 0.0
  %v3198 = vmax.f32 %v3134, 0.0
  %v3199 = vmax.f32 %v3135, 0.0
  %v3200 = vmax.f32 %v3136, 0.0
  %v3201 = vmax.f32 %v3137, 0.0
  %v3202 = vmax.f32 %v3138, 0.0
  %v3203 = vmax.f32 %v3139, 0.0
  %v3204 = vmax.f32 %v3140, 0.0
  %v3205 = vmax.f32 %v3141, 0.0
  %v3206 = vmax.f32 %v3142, 0.0
  %v3207 = vmax.f32 %v3143, 0.0
  %v3208 = vmax.f32 %v3144, 0.0
  %v3209 = vmax.f32 %v3145, 0.0
  %v3210 = vmax.f32 %v3146, 0.0
  %v3211 = vmax.f32 %v3147, 0.0
  %v3212 = vmax.f32 %v3148, 0.0
  %v3213 = vmax.f32 %v3149, 0.0
  %v3214 = vmax.f32 %v3150, 0.0
  %v3215 = vmax.f32 %v3151, 0.0
  %v3216 = vmax.f32 %v3152, 0.0
  %v3217 = vmax.f32 %v3153, 0.0
  %v3218 = vmax.f32 %v3154, 0.0
  %v3219 = vmax.f32 %v3155, 0.0
  %v3220 = vmax.f32 %v3156, 0.0
  %v3221 = vmax.f32 %v3157, 0.0
  %v3222 = vmax.f32 %v3158, 0.0
  %v3223 = vmax.f32 %v3159, 0.0
  %v3224 = vmax.f32 %v3160, 0.0
  %v3225 = vmax.f32 %v3161, 0.0
  %v3226 = vmax.f32 %v3162, 0.0
  %v3227 = vmax.f32 %v3163, 0.0
  %v3228 = vmax.f32 %v3164, 0.0
  %v3229 = vmax.f32 %v3165, 0.0
  %v3230 = vmax.f32 %v3166, 0.0
  %v3231 = vmax.f32 %v3167, 0.0
  %v3232 = vmax.f32 %v3168, 0.0
  %v3233 = vmax.f32 %v3169, 0.0
  %v3234 = vmax.f32 %v3170, 0.0
  %v3235 = vmax.f32 %v3171, 0.0
  %v3236 = vmax.f32 %v3172, 0.0
  %v3237 = vmax.f32 %v3173, 0.0
  %v3238 = vmax.f32 %v3174, 0.0
  %v3239 = vmax.f32 %v3175, 0.0
  %v3240 = vmax.f32 %v3176, 0.0
  %v3241 = vmax.f32 %v3177, 0.0
  %v3242 = vmax.f32 %v3178, 0.0
  %v3243 = vmax.f32 %v3179, 0.0
  %v3244 = vmax.f32 %v3180, 0.0
  %v3245 = vmax.f32 %v3181, 0.0
  %v3246 = vmax.f32 %v3182, 0.0
  %v3247 = vmax.f32 %v3183, 0.0
  %v3248 = vmax.f32 %v3184, 0.0
  %v3249 = vmax.f32 %v3185, 0.0
  %v3250 = vmax.f32 %v3186, 0.0
  %v3251 = vmax.f32 %v3187, 0.0
  %v3252 = vmax.f32 %v3188, 0.0
  %v3253 = vmax.f32 %v3189, 0.0
  %v3254 = vmax.f32 %v3190, 0.0
  %v3255 = vmax.f32 %v3191, 0.0
  %v3256 = vmax.f32 %v3192, 0.0
  %v3257 = vmax.f32 %v3193, 0.0
  %v3258 = vmax.f32 %v3194, 0.0
  %v3259 = vmax.f32 %v3195, 0.0
  %3260 = vst [vmem:[#allocation3] sm:$0xff] 0.0
  %3261 = vst [vmem:[#allocation3 + $0x8] sm:$0xff] 0.0
  %3262 = vst [vmem:[#allocation3 + $0x10] sm:$0x3] 0.0
  %3263 = vst [vmem:[#allocation3 + $0x18] sm:$0xff] 0.0
  %3264 = vst [vmem:[#allocation3 + $0x20] sm:$0xff] 0.0
  %3265 = vst [vmem:[#allocation3 + $0x28] sm:$0x3] 0.0
  %3266 = vst [vmem:[#allocation3 + $0x30] sm:$0xff] 0.0
  %3267 = vst [vmem:[#allocation3 + $0x38] sm:$0xff] 0.0
  %3268 = vst [vmem:[#allocation3 + $0x40] sm:$0x3] 0.0
  %3269 = vst [vmem:[#allocation3 + $0x48] sm:$0xff] 0.0
  %3270 = vst [vmem:[#allocation3 + $0x50] sm:$0xff] 0.0
  %3271 = vst [vmem:[#allocation3 + $0x58] sm:$0x3] 0.0
  %3272 = vst [vmem:[#allocation3 + $0x60] sm:$0xff] 0.0
  %3273 = vst [vmem:[#allocation3 + $0x68] sm:$0xff] 0.0
  %3274 = vst [vmem:[#allocation3 + $0x70] sm:$0x3] 0.0
  %3275 = vst [vmem:[#allocation3 + $0x78] sm:$0xff] 0.0
  %3276 = vst [vmem:[#allocation3 + $0x80] sm:$0xff] 0.0
  %3277 = vst [vmem:[#allocation3 + $0x88] sm:$0x3] 0.0
  %3278 = vst [vmem:[#allocation3 + $0x90] sm:$0xff] 0.0
  %3279 = vst [vmem:[#allocation3 + $0x98] sm:$0xff] 0.0
  %3280 = vst [vmem:[#allocation3 + $0xa0] sm:$0x3] 0.0
  %3281 = vst [vmem:[#allocation3 + $0xa8] sm:$0xff] 0.0
  %3282 = vst [vmem:[#allocation3 + $0xb0] sm:$0xff] 0.0
  %3283 = vst [vmem:[#allocation3 + $0xb8] sm:$0x3] 0.0
  %3284 = vst [vmem:[#allocation3 + $0xc0] sm:$0xff] 0.0
  %3285 = vst [vmem:[#allocation3 + $0xc8] sm:$0xff] 0.0
  %3286 = vst [vmem:[#allocation3 + $0xd0] sm:$0x3] 0.0
  %3287 = vst [vmem:[#allocation3 + $0xd8] sm:$0xff] 0.0
  %3288 = vst [vmem:[#allocation3 + $0xe0] sm:$0xff] 0.0
  %3289 = vst [vmem:[#allocation3 + $0xe8] sm:$0x3] 0.0
  %3290 = vst [vmem:[#allocation3 + $0xf0] sm:$0xff] 0.0
  %3291 = vst [vmem:[#allocation3 + $0xf8] sm:$0xff] 0.0
  %3292 = vst [vmem:[#allocation3 + $0x100] sm:$0x3] 0.0
  %3293 = vst [vmem:[#allocation3 + $0x108] sm:$0xff] 0.0
  %3294 = vst [vmem:[#allocation3 + $0x110] sm:$0xff] 0.0
  %3295 = vst [vmem:[#allocation3 + $0x118] sm:$0x3] 0.0
  %3296 = vst [vmem:[#allocation3 + $0x120] sm:$0xff] 0.0
  %3297 = vst [vmem:[#allocation3 + $0x128] sm:$0xff] 0.0
  %3298 = vst [vmem:[#allocation3 + $0x130] sm:$0x3] 0.0
  %3299 = vst [vmem:[#allocation3 + $0x138] sm:$0xff] 0.0
  %3300 = vst [vmem:[#allocation3 + $0x140] sm:$0xff] 0.0
  %3301 = vst [vmem:[#allocation3 + $0x148] sm:$0x3] 0.0
  %3302 = vst [vmem:[#allocation3 + $0x150] sm:$0xff] 0.0
  %3303 = vst [vmem:[#allocation3 + $0x158] sm:$0xff] 0.0
  %3304 = vst [vmem:[#allocation3 + $0x160] sm:$0x3] 0.0
  %3305 = vst [vmem:[#allocation3 + $0x168] sm:$0xff] 0.0
  %3306 = vst [vmem:[#allocation3 + $0x170] sm:$0xff] 0.0
  %3307 = vst [vmem:[#allocation3 + $0x178] sm:$0x3] 0.0
  %3308 = vst [vmem:[#allocation3 + $0x180] sm:$0xff] 0.0
  %3309 = vst [vmem:[#allocation3 + $0x188] sm:$0xff] 0.0
  %3310 = vst [vmem:[#allocation3 + $0x190] sm:$0x3] 0.0
  %3311 = vst [vmem:[#allocation3 + $0x198] sm:$0xff] 0.0
  %3312 = vst [vmem:[#allocation3 + $0x1a0] sm:$0xff] 0.0
  %3313 = vst [vmem:[#allocation3 + $0x1a8] sm:$0x3] 0.0
  %3314 = vst [vmem:[#allocation3 + $0x1b0] sm:$0xff] 0.0
  %3315 = vst [vmem:[#allocation3 + $0x1b8] sm:$0xff] 0.0
  %3316 = vst [vmem:[#allocation3 + $0x1c0] sm:$0x3] 0.0
  %3317 = vst [vmem:[#allocation3 + $0x1c8] sm:$0xff] 0.0
  %3318 = vst [vmem:[#allocation3 + $0x1d0] sm:$0xff] 0.0
  %3319 = vst [vmem:[#allocation3 + $0x1d8] sm:$0x3] 0.0
  %3320 = vst [vmem:[#allocation3 + $0x1e0] sm:$0xff] 0.0
  %3321 = vst [vmem:[#allocation3 + $0x1e8] sm:$0xff] 0.0
  %3322 = vst [vmem:[#allocation3 + $0x1f0] sm:$0x3] 0.0
  %3323 = vst [vmem:[#allocation3 + $0x1f8] sm:$0xff] 0.0
  %3324 = vst [vmem:[#allocation3 + $0x200] sm:$0xff] 0.0
  %3325 = vst [vmem:[#allocation3 + $0x208] sm:$0x3] 0.0
  %3326 = vst [vmem:[#allocation3 + $0x210] sm:$0xff] 0.0
  %3327 = vst [vmem:[#allocation3 + $0x218] sm:$0xff] 0.0
  %3328 = vst [vmem:[#allocation3 + $0x220] sm:$0x3] 0.0
  %3329 = vst [vmem:[#allocation3 + $0x228] sm:$0xff] 0.0
  %3330 = vst [vmem:[#allocation3 + $0x230] sm:$0xff] 0.0
  %3331 = vst [vmem:[#allocation3 + $0x238] sm:$0x3] 0.0
  %3332 = vst [vmem:[#allocation3 + $0x240] sm:$0xff] 0.0
  %3333 = vst [vmem:[#allocation3 + $0x248] sm:$0xff] 0.0
  %3334 = vst [vmem:[#allocation3 + $0x250] sm:$0x3] 0.0
  %3335 = vst [vmem:[#allocation3 + $0x258] sm:$0xff] 0.0
  %3336 = vst [vmem:[#allocation3 + $0x260] sm:$0xff] 0.0
  %3337 = vst [vmem:[#allocation3 + $0x268] sm:$0x3] 0.0
  %3338 = vst [vmem:[#allocation3 + $0x270] sm:$0xff] 0.0
  %3339 = vst [vmem:[#allocation3 + $0x278] sm:$0xff] 0.0
  %3340 = vst [vmem:[#allocation3 + $0x280] sm:$0x3] 0.0
  %3341 = vst [vmem:[#allocation3 + $0x288] sm:$0xff] 0.0
  %3342 = vst [vmem:[#allocation3 + $0x290] sm:$0xff] 0.0
  %3343 = vst [vmem:[#allocation3 + $0x298] sm:$0x3] 0.0
  %3344 = vst [vmem:[#allocation3 + $0x2a0] sm:$0xff] 0.0
  %3345 = vst [vmem:[#allocation3 + $0x2a8] sm:$0xff] 0.0
  %3346 = vst [vmem:[#allocation3 + $0x2b0] sm:$0x3] 0.0
  %3347 = vst [vmem:[#allocation3 + $0x2b8] sm:$0xff] 0.0
  %3348 = vst [vmem:[#allocation3 + $0x2c0] sm:$0xff] 0.0
  %3349 = vst [vmem:[#allocation3 + $0x2c8] sm:$0x3] 0.0
  %3350 = vst [vmem:[#allocation3 + $0x2d0] sm:$0xff] 0.0
  %3351 = vst [vmem:[#allocation3 + $0x2d8] sm:$0xff] 0.0
  %3352 = vst [vmem:[#allocation3 + $0x2e0] sm:$0x3] 0.0
  %3353 = vst [vmem:[#allocation3 + $0x2e8] sm:$0xff] 0.0
  %3354 = vst [vmem:[#allocation3 + $0x2f0] sm:$0xff] 0.0
  %3355 = vst [vmem:[#allocation3 + $0x2f8] sm:$0x3] 0.0
  %3356 = vst [vmem:[#allocation3 + $0x300] sm:$0xff] 0.0
  %3357 = vst [vmem:[#allocation3 + $0x308] sm:$0xff] 0.0
  %3358 = vst [vmem:[#allocation3 + $0x310] sm:$0x3] 0.0
  %3359 = vst [vmem:[#allocation3 + $0x318] sm:$0xff] 0.0
  %3360 = vst [vmem:[#allocation3 + $0x320] sm:$0xff] 0.0
  %3361 = vst [vmem:[#allocation3 + $0x328] sm:$0x3] 0.0
  %3362 = vst [vmem:[#allocation3 + $0x330] sm:$0xff] 0.0
  %3363 = vst [vmem:[#allocation3 + $0x338] sm:$0xff] 0.0
  %3364 = vst [vmem:[#allocation3 + $0x340] sm:$0x3] 0.0
  %3365 = vst [vmem:[#allocation3 + $0x348] sm:$0xff] 0.0
  %3366 = vst [vmem:[#allocation3 + $0x350] sm:$0xff] 0.0
  %3367 = vst [vmem:[#allocation3 + $0x358] sm:$0x3] 0.0
  %s3368 = scalar_lea.vmem [#allocation3], 24
  %3369 = vst [vmem:[%s3368 + $0x1] sm:$0xff] %v3196
  %3370 = vst [vmem:[%s3368 + $0x9] sm:$0xff] %v3197
  %3371 = vst [vmem:[%s3368 + $0x19] sm:$0xff] %v3198
  %3372 = vst [vmem:[%s3368 + $0x21] sm:$0xff] %v3199
  %3373 = vst [vmem:[%s3368 + $0x31] sm:$0xff] %v3200
  %3374 = vst [vmem:[%s3368 + $0x39] sm:$0xff] %v3201
  %3375 = vst [vmem:[%s3368 + $0x49] sm:$0xff] %v3202
  %3376 = vst [vmem:[%s3368 + $0x51] sm:$0xff] %v3203
  %3377 = vst [vmem:[%s3368 + $0x61] sm:$0xff] %v3204
  %3378 = vst [vmem:[%s3368 + $0x69] sm:$0xff] %v3205
  %3379 = vst [vmem:[%s3368 + $0x79] sm:$0xff] %v3206
  %3380 = vst [vmem:[%s3368 + $0x81] sm:$0xff] %v3207
  %3381 = vst [vmem:[%s3368 + $0x91] sm:$0xff] %v3208
  %3382 = vst [vmem:[%s3368 + $0x99] sm:$0xff] %v3209
  %3383 = vst [vmem:[%s3368 + $0xa9] sm:$0xff] %v3210
  %3384 = vst [vmem:[%s3368 + $0xb1] sm:$0xff] %v3211
  %3385 = vst [vmem:[%s3368 + $0xc1] sm:$0xff] %v3212
  %3386 = vst [vmem:[%s3368 + $0xc9] sm:$0xff] %v3213
  %3387 = vst [vmem:[%s3368 + $0xd9] sm:$0xff] %v3214
  %3388 = vst [vmem:[%s3368 + $0xe1] sm:$0xff] %v3215
  %3389 = vst [vmem:[%s3368 + $0xf1] sm:$0xff] %v3216
  %3390 = vst [vmem:[%s3368 + $0xf9] sm:$0xff] %v3217
  %3391 = vst [vmem:[%s3368 + $0x109] sm:$0xff] %v3218
  %3392 = vst [vmem:[%s3368 + $0x111] sm:$0xff] %v3219
  %3393 = vst [vmem:[%s3368 + $0x121] sm:$0xff] %v3220
  %3394 = vst [vmem:[%s3368 + $0x129] sm:$0xff] %v3221
  %3395 = vst [vmem:[%s3368 + $0x139] sm:$0xff] %v3222
  %3396 = vst [vmem:[%s3368 + $0x141] sm:$0xff] %v3223
  %3397 = vst [vmem:[%s3368 + $0x151] sm:$0xff] %v3224
  %3398 = vst [vmem:[%s3368 + $0x159] sm:$0xff] %v3225
  %3399 = vst [vmem:[%s3368 + $0x169] sm:$0xff] %v3226
  %3400 = vst [vmem:[%s3368 + $0x171] sm:$0xff] %v3227
  %3401 = vst [vmem:[%s3368 + $0x1b1] sm:$0xff] %v3228
  %3402 = vst [vmem:[%s3368 + $0x1b9] sm:$0xff] %v3229
  %3403 = vst [vmem:[%s3368 + $0x1c9] sm:$0xff] %v3230
  %3404 = vst [vmem:[%s3368 + $0x1d1] sm:$0xff] %v3231
  %3405 = vst [vmem:[%s3368 + $0x1e1] sm:$0xff] %v3232
  %3406 = vst [vmem:[%s3368 + $0x1e9] sm:$0xff] %v3233
  %3407 = vst [vmem:[%s3368 + $0x1f9] sm:$0xff] %v3234
  %3408 = vst [vmem:[%s3368 + $0x201] sm:$0xff] %v3235
  %3409 = vst [vmem:[%s3368 + $0x211] sm:$0xff] %v3236
  %3410 = vst [vmem:[%s3368 + $0x219] sm:$0xff] %v3237
  %3411 = vst [vmem:[%s3368 + $0x229] sm:$0xff] %v3238
  %3412 = vst [vmem:[%s3368 + $0x231] sm:$0xff] %v3239
  %3413 = vst [vmem:[%s3368 + $0x241] sm:$0xff] %v3240
  %3414 = vst [vmem:[%s3368 + $0x249] sm:$0xff] %v3241
  %3415 = vst [vmem:[%s3368 + $0x259] sm:$0xff] %v3242
  %3416 = vst [vmem:[%s3368 + $0x261] sm:$0xff] %v3243
  %3417 = vst [vmem:[%s3368 + $0x271] sm:$0xff] %v3244
  %3418 = vst [vmem:[%s3368 + $0x279] sm:$0xff] %v3245
  %3419 = vst [vmem:[%s3368 + $0x289] sm:$0xff] %v3246
  %3420 = vst [vmem:[%s3368 + $0x291] sm:$0xff] %v3247
  %3421 = vst [vmem:[%s3368 + $0x2a1] sm:$0xff] %v3248
  %3422 = vst [vmem:[%s3368 + $0x2a9] sm:$0xff] %v3249
  %3423 = vst [vmem:[%s3368 + $0x2b9] sm:$0xff] %v3250
  %3424 = vst [vmem:[%s3368 + $0x2c1] sm:$0xff] %v3251
  %3425 = vst [vmem:[%s3368 + $0x2d1] sm:$0xff] %v3252
  %3426 = vst [vmem:[%s3368 + $0x2d9] sm:$0xff] %v3253
  %3427 = vst [vmem:[%s3368 + $0x2e9] sm:$0xff] %v3254
  %3428 = vst [vmem:[%s3368 + $0x2f1] sm:$0xff] %v3255
  %3429 = vst [vmem:[%s3368 + $0x301] sm:$0xff] %v3256
  %3430 = vst [vmem:[%s3368 + $0x309] sm:$0xff] %v3257
  %3431 = vst [vmem:[%s3368 + $0x319] sm:$0xff] %v3258
  %3432 = vst [vmem:[%s3368 + $0x321] sm:$0xff] %v3259
  %v3433 = vld [vmem:[#allocation3] sm:$0xff]
  %v3434 = vld [vmem:[#allocation3 + $0x8] sm:$0xff]
  %v3435 = vld [vmem:[#allocation3 + $0x18] sm:$0xff]
  %v3436 = vld [vmem:[#allocation3 + $0x20] sm:$0xff]
  %v3437 = vld [vmem:[#allocation3 + $0x30] sm:$0xff]
  %v3438 = vld [vmem:[#allocation3 + $0x38] sm:$0xff]
  %v3439 = vld [vmem:[#allocation3 + $0x48] sm:$0xff]
  %v3440 = vld [vmem:[#allocation3 + $0x50] sm:$0xff]
  %v3441 = vld [vmem:[#allocation3 + $0x60] sm:$0xff]
  %v3442 = vld [vmem:[#allocation3 + $0x68] sm:$0xff]
  %v3443 = vld [vmem:[#allocation3 + $0x78] sm:$0xff]
  %v3444 = vld [vmem:[#allocation3 + $0x80] sm:$0xff]
  %v3445 = vld [vmem:[#allocation3 + $0x90] sm:$0xff]
  %v3446 = vld [vmem:[#allocation3 + $0x98] sm:$0xff]
  %v3447 = vld [vmem:[#allocation3 + $0xa8] sm:$0xff]
  %v3448 = vld [vmem:[#allocation3 + $0xb0] sm:$0xff]
  %v3449 = vld [vmem:[#allocation3 + $0xc0] sm:$0xff]
  %v3450 = vld [vmem:[#allocation3 + $0xc8] sm:$0xff]
  %v3451 = vld [vmem:[#allocation3 + $0xd8] sm:$0xff]
  %v3452 = vld [vmem:[#allocation3 + $0xe0] sm:$0xff]
  %v3453 = vld [vmem:[#allocation3 + $0xf0] sm:$0xff]
  %v3454 = vld [vmem:[#allocation3 + $0xf8] sm:$0xff]
  %v3455 = vld [vmem:[#allocation3 + $0x108] sm:$0xff]
  %v3456 = vld [vmem:[#allocation3 + $0x110] sm:$0xff]
  %v3457 = vld [vmem:[#allocation3 + $0x120] sm:$0xff]
  %v3458 = vld [vmem:[#allocation3 + $0x128] sm:$0xff]
  %v3459 = vld [vmem:[#allocation3 + $0x138] sm:$0xff]
  %v3460 = vld [vmem:[#allocation3 + $0x140] sm:$0xff]
  %v3461 = vld [vmem:[#allocation3 + $0x150] sm:$0xff]
  %v3462 = vld [vmem:[#allocation3 + $0x158] sm:$0xff]
  %v3463 = vld [vmem:[#allocation3 + $0x168] sm:$0xff]
  %v3464 = vld [vmem:[#allocation3 + $0x170] sm:$0xff]
  %v3465 = vld [vmem:[#allocation3 + $0x1b0] sm:$0xff]
  %v3466 = vld [vmem:[#allocation3 + $0x1b8] sm:$0xff]
  %v3467 = vld [vmem:[#allocation3 + $0x1c8] sm:$0xff]
  %v3468 = vld [vmem:[#allocation3 + $0x1d0] sm:$0xff]
  %v3469 = vld [vmem:[#allocation3 + $0x1e0] sm:$0xff]
  %v3470 = vld [vmem:[#allocation3 + $0x1e8] sm:$0xff]
  %v3471 = vld [vmem:[#allocation3 + $0x1f8] sm:$0xff]
  %v3472 = vld [vmem:[#allocation3 + $0x200] sm:$0xff]
  %v3473 = vld [vmem:[#allocation3 + $0x210] sm:$0xff]
  %v3474 = vld [vmem:[#allocation3 + $0x218] sm:$0xff]
  %v3475 = vld [vmem:[#allocation3 + $0x228] sm:$0xff]
  %v3476 = vld [vmem:[#allocation3 + $0x230] sm:$0xff]
  %v3477 = vld [vmem:[#allocation3 + $0x240] sm:$0xff]
  %v3478 = vld [vmem:[#allocation3 + $0x248] sm:$0xff]
  %v3479 = vld [vmem:[#allocation3 + $0x258] sm:$0xff]
  %v3480 = vld [vmem:[#allocation3 + $0x260] sm:$0xff]
  %v3481 = vld [vmem:[#allocation3 + $0x270] sm:$0xff]
  %v3482 = vld [vmem:[#allocation3 + $0x278] sm:$0xff]
  %v3483 = vld [vmem:[#allocation3 + $0x288] sm:$0xff]
  %v3484 = vld [vmem:[#allocation3 + $0x290] sm:$0xff]
  %v3485 = vld [vmem:[#allocation3 + $0x2a0] sm:$0xff]
  %v3486 = vld [vmem:[#allocation3 + $0x2a8] sm:$0xff]
  %v3487 = vld [vmem:[#allocation3 + $0x2b8] sm:$0xff]
  %v3488 = vld [vmem:[#allocation3 + $0x2c0] sm:$0xff]
  %v3489 = vld [vmem:[#allocation3 + $0x2d0] sm:$0xff]
  %v3490 = vld [vmem:[#allocation3 + $0x2d8] sm:$0xff]
  %v3491 = vld [vmem:[#allocation3 + $0x2e8] sm:$0xff]
  %v3492 = vld [vmem:[#allocation3 + $0x2f0] sm:$0xff]
  %v3493 = vld [vmem:[#allocation3 + $0x300] sm:$0xff]
  %v3494 = vld [vmem:[#allocation3 + $0x308] sm:$0xff]
  %v3495 = vld [vmem:[#allocation3 + $0x318] sm:$0xff]
  %v3496 = vld [vmem:[#allocation3 + $0x320] sm:$0xff]
  %v3497 = vpack.c.bf16 %v3434, %v3433
  %v3498 = vpack.c.bf16 %v3436, %v3435
  %v3499 = vpack.c.bf16 %v3438, %v3437
  %v3500 = vpack.c.bf16 %v3440, %v3439
  %v3501 = vpack.c.bf16 %v3442, %v3441
  %v3502 = vpack.c.bf16 %v3444, %v3443
  %v3503 = vpack.c.bf16 %v3446, %v3445
  %v3504 = vpack.c.bf16 %v3448, %v3447
  %v3505 = vpack.c.bf16 %v3450, %v3449
  %v3506 = vpack.c.bf16 %v3452, %v3451
  %v3507 = vpack.c.bf16 %v3454, %v3453
  %v3508 = vpack.c.bf16 %v3456, %v3455
  %v3509 = vpack.c.bf16 %v3458, %v3457
  %v3510 = vpack.c.bf16 %v3460, %v3459
  %v3511 = vpack.c.bf16 %v3462, %v3461
  %v3512 = vpack.c.bf16 %v3464, %v3463
  %v3513 = vpack.c.bf16 %v3466, %v3465
  %v3514 = vpack.c.bf16 %v3468, %v3467
  %v3515 = vpack.c.bf16 %v3470, %v3469
  %v3516 = vpack.c.bf16 %v3472, %v3471
  %v3517 = vpack.c.bf16 %v3474, %v3473
  %v3518 = vpack.c.bf16 %v3476, %v3475
  %v3519 = vpack.c.bf16 %v3478, %v3477
  %v3520 = vpack.c.bf16 %v3480, %v3479
  %v3521 = vpack.c.bf16 %v3482, %v3481
  %v3522 = vpack.c.bf16 %v3484, %v3483
  %v3523 = vpack.c.bf16 %v3486, %v3485
  %v3524 = vpack.c.bf16 %v3488, %v3487
  %v3525 = vpack.c.bf16 %v3490, %v3489
  %v3526 = vpack.c.bf16 %v3492, %v3491
  %v3527 = vpack.c.bf16 %v3494, %v3493
  %v3528 = vpack.c.bf16 %v3496, %v3495
  %v3529 = vld [vmem:[#allocation3 + $0x1] sm:$0xff]
  %v3530 = vld [vmem:[#allocation3 + $0x9] sm:$0xff]
  %v3531 = vld [vmem:[#allocation3 + $0x19] sm:$0xff]
  %v3532 = vld [vmem:[#allocation3 + $0x21] sm:$0xff]
  %v3533 = vld [vmem:[#allocation3 + $0x31] sm:$0xff]
  %v3534 = vld [vmem:[#allocation3 + $0x39] sm:$0xff]
  %v3535 = vld [vmem:[#allocation3 + $0x49] sm:$0xff]
  %v3536 = vld [vmem:[#allocation3 + $0x51] sm:$0xff]
  %v3537 = vld [vmem:[#allocation3 + $0x61] sm:$0xff]
  %v3538 = vld [vmem:[#allocation3 + $0x69] sm:$0xff]
  %v3539 = vld [vmem:[#allocation3 + $0x79] sm:$0xff]
  %v3540 = vld [vmem:[#allocation3 + $0x81] sm:$0xff]
  %v3541 = vld [vmem:[#allocation3 + $0x91] sm:$0xff]
  %v3542 = vld [vmem:[#allocation3 + $0x99] sm:$0xff]
  %v3543 = vld [vmem:[#allocation3 + $0xa9] sm:$0xff]
  %v3544 = vld [vmem:[#allocation3 + $0xb1] sm:$0xff]
  %v3545 = vld [vmem:[#allocation3 + $0xc1] sm:$0xff]
  %v3546 = vld [vmem:[#allocation3 + $0xc9] sm:$0xff]
  %v3547 = vld [vmem:[#allocation3 + $0xd9] sm:$0xff]
  %v3548 = vld [vmem:[#allocation3 + $0xe1] sm:$0xff]
  %v3549 = vld [vmem:[#allocation3 + $0xf1] sm:$0xff]
  %v3550 = vld [vmem:[#allocation3 + $0xf9] sm:$0xff]
  %v3551 = vld [vmem:[#allocation3 + $0x109] sm:$0xff]
  %v3552 = vld [vmem:[#allocation3 + $0x111] sm:$0xff]
  %v3553 = vld [vmem:[#allocation3 + $0x121] sm:$0xff]
  %v3554 = vld [vmem:[#allocation3 + $0x129] sm:$0xff]
  %v3555 = vld [vmem:[#allocation3 + $0x139] sm:$0xff]
  %v3556 = vld [vmem:[#allocation3 + $0x141] sm:$0xff]
  %v3557 = vld [vmem:[#allocation3 + $0x151] sm:$0xff]
  %v3558 = vld [vmem:[#allocation3 + $0x159] sm:$0xff]
  %v3559 = vld [vmem:[#allocation3 + $0x169] sm:$0xff]
  %v3560 = vld [vmem:[#allocation3 + $0x171] sm:$0xff]
  %v3561 = vld [vmem:[#allocation3 + $0x1b1] sm:$0xff]
  %v3562 = vld [vmem:[#allocation3 + $0x1b9] sm:$0xff]
  %v3563 = vld [vmem:[#allocation3 + $0x1c9] sm:$0xff]
  %v3564 = vld [vmem:[#allocation3 + $0x1d1] sm:$0xff]
  %v3565 = vld [vmem:[#allocation3 + $0x1e1] sm:$0xff]
  %v3566 = vld [vmem:[#allocation3 + $0x1e9] sm:$0xff]
  %v3567 = vld [vmem:[#allocation3 + $0x1f9] sm:$0xff]
  %v3568 = vld [vmem:[#allocation3 + $0x201] sm:$0xff]
  %v3569 = vld [vmem:[#allocation3 + $0x211] sm:$0xff]
  %v3570 = vld [vmem:[#allocation3 + $0x219] sm:$0xff]
  %v3571 = vld [vmem:[#allocation3 + $0x229] sm:$0xff]
  %v3572 = vld [vmem:[#allocation3 + $0x231] sm:$0xff]
  %v3573 = vld [vmem:[#allocation3 + $0x241] sm:$0xff]
  %v3574 = vld [vmem:[#allocation3 + $0x249] sm:$0xff]
  %v3575 = vld [vmem:[#allocation3 + $0x259] sm:$0xff]
  %v3576 = vld [vmem:[#allocation3 + $0x261] sm:$0xff]
  %v3577 = vld [vmem:[#allocation3 + $0x271] sm:$0xff]
  %v3578 = vld [vmem:[#allocation3 + $0x279] sm:$0xff]
  %v3579 = vld [vmem:[#allocation3 + $0x289] sm:$0xff]
  %v3580 = vld [vmem:[#allocation3 + $0x291] sm:$0xff]
  %v3581 = vld [vmem:[#allocation3 + $0x2a1] sm:$0xff]
  %v3582 = vld [vmem:[#allocation3 + $0x2a9] sm:$0xff]
  %v3583 = vld [vmem:[#allocation3 + $0x2b9] sm:$0xff]
  %v3584 = vld [vmem:[#allocation3 + $0x2c1] sm:$0xff]
  %v3585 = vld [vmem:[#allocation3 + $0x2d1] sm:$0xff]
  %v3586 = vld [vmem:[#allocation3 + $0x2d9] sm:$0xff]
  %v3587 = vld [vmem:[#allocation3 + $0x2e9] sm:$0xff]
  %v3588 = vld [vmem:[#allocation3 + $0x2f1] sm:$0xff]
  %v3589 = vld [vmem:[#allocation3 + $0x301] sm:$0xff]
  %v3590 = vld [vmem:[#allocation3 + $0x309] sm:$0xff]
  %v3591 = vld [vmem:[#allocation3 + $0x319] sm:$0xff]
  %v3592 = vld [vmem:[#allocation3 + $0x321] sm:$0xff]
  %v3593 = vpack.c.bf16 %v3530, %v3529
  %v3594 = vpack.c.bf16 %v3532, %v3531
  %v3595 = vpack.c.bf16 %v3534, %v3533
  %v3596 = vpack.c.bf16 %v3536, %v3535
  %v3597 = vpack.c.bf16 %v3538, %v3537
  %v3598 = vpack.c.bf16 %v3540, %v3539
  %v3599 = vpack.c.bf16 %v3542, %v3541
  %v3600 = vpack.c.bf16 %v3544, %v3543
  %v3601 = vpack.c.bf16 %v3546, %v3545
  %v3602 = vpack.c.bf16 %v3548, %v3547
  %v3603 = vpack.c.bf16 %v3550, %v3549
  %v3604 = vpack.c.bf16 %v3552, %v3551
  %v3605 = vpack.c.bf16 %v3554, %v3553
  %v3606 = vpack.c.bf16 %v3556, %v3555
  %v3607 = vpack.c.bf16 %v3558, %v3557
  %v3608 = vpack.c.bf16 %v3560, %v3559
  %v3609 = vpack.c.bf16 %v3562, %v3561
  %v3610 = vpack.c.bf16 %v3564, %v3563
  %v3611 = vpack.c.bf16 %v3566, %v3565
  %v3612 = vpack.c.bf16 %v3568, %v3567
  %v3613 = vpack.c.bf16 %v3570, %v3569
  %v3614 = vpack.c.bf16 %v3572, %v3571
  %v3615 = vpack.c.bf16 %v3574, %v3573
  %v3616 = vpack.c.bf16 %v3576, %v3575
  %v3617 = vpack.c.bf16 %v3578, %v3577
  %v3618 = vpack.c.bf16 %v3580, %v3579
  %v3619 = vpack.c.bf16 %v3582, %v3581
  %v3620 = vpack.c.bf16 %v3584, %v3583
  %v3621 = vpack.c.bf16 %v3586, %v3585
  %v3622 = vpack.c.bf16 %v3588, %v3587
  %v3623 = vpack.c.bf16 %v3590, %v3589
  %v3624 = vpack.c.bf16 %v3592, %v3591
  %v3625 = vld [vmem:[#allocation3 + $0x2] sm:$0xff]
  %v3626 = vld [vmem:[#allocation3 + $0xa] sm:$0xff]
  %v3627 = vld [vmem:[#allocation3 + $0x1a] sm:$0xff]
  %v3628 = vld [vmem:[#allocation3 + $0x22] sm:$0xff]
  %v3629 = vld [vmem:[#allocation3 + $0x32] sm:$0xff]
  %v3630 = vld [vmem:[#allocation3 + $0x3a] sm:$0xff]
  %v3631 = vld [vmem:[#allocation3 + $0x4a] sm:$0xff]
  %v3632 = vld [vmem:[#allocation3 + $0x52] sm:$0xff]
  %v3633 = vld [vmem:[#allocation3 + $0x62] sm:$0xff]
  %v3634 = vld [vmem:[#allocation3 + $0x6a] sm:$0xff]
  %v3635 = vld [vmem:[#allocation3 + $0x7a] sm:$0xff]
  %v3636 = vld [vmem:[#allocation3 + $0x82] sm:$0xff]
  %v3637 = vld [vmem:[#allocation3 + $0x92] sm:$0xff]
  %v3638 = vld [vmem:[#allocation3 + $0x9a] sm:$0xff]
  %v3639 = vld [vmem:[#allocation3 + $0xaa] sm:$0xff]
  %v3640 = vld [vmem:[#allocation3 + $0xb2] sm:$0xff]
  %v3641 = vld [vmem:[#allocation3 + $0xc2] sm:$0xff]
  %v3642 = vld [vmem:[#allocation3 + $0xca] sm:$0xff]
  %v3643 = vld [vmem:[#allocation3 + $0xda] sm:$0xff]
  %v3644 = vld [vmem:[#allocation3 + $0xe2] sm:$0xff]
  %v3645 = vld [vmem:[#allocation3 + $0xf2] sm:$0xff]
  %v3646 = vld [vmem:[#allocation3 + $0xfa] sm:$0xff]
  %v3647 = vld [vmem:[#allocation3 + $0x10a] sm:$0xff]
  %v3648 = vld [vmem:[#allocation3 + $0x112] sm:$0xff]
  %v3649 = vld [vmem:[#allocation3 + $0x122] sm:$0xff]
  %v3650 = vld [vmem:[#allocation3 + $0x12a] sm:$0xff]
  %v3651 = vld [vmem:[#allocation3 + $0x13a] sm:$0xff]
  %v3652 = vld [vmem:[#allocation3 + $0x142] sm:$0xff]
  %v3653 = vld [vmem:[#allocation3 + $0x152] sm:$0xff]
  %v3654 = vld [vmem:[#allocation3 + $0x15a] sm:$0xff]
  %v3655 = vld [vmem:[#allocation3 + $0x16a] sm:$0xff]
  %v3656 = vld [vmem:[#allocation3 + $0x172] sm:$0xff]
  %v3657 = vld [vmem:[#allocation3 + $0x1b2] sm:$0xff]
  %v3658 = vld [vmem:[#allocation3 + $0x1ba] sm:$0xff]
  %v3659 = vld [vmem:[#allocation3 + $0x1ca] sm:$0xff]
  %v3660 = vld [vmem:[#allocation3 + $0x1d2] sm:$0xff]
  %v3661 = vld [vmem:[#allocation3 + $0x1e2] sm:$0xff]
  %v3662 = vld [vmem:[#allocation3 + $0x1ea] sm:$0xff]
  %v3663 = vld [vmem:[#allocation3 + $0x1fa] sm:$0xff]
  %v3664 = vld [vmem:[#allocation3 + $0x202] sm:$0xff]
  %v3665 = vld [vmem:[#allocation3 + $0x212] sm:$0xff]
  %v3666 = vld [vmem:[#allocation3 + $0x21a] sm:$0xff]
  %v3667 = vld [vmem:[#allocation3 + $0x22a] sm:$0xff]
  %v3668 = vld [vmem:[#allocation3 + $0x232] sm:$0xff]
  %v3669 = vld [vmem:[#allocation3 + $0x242] sm:$0xff]
  %v3670 = vld [vmem:[#allocation3 + $0x24a] sm:$0xff]
  %v3671 = vld [vmem:[#allocation3 + $0x25a] sm:$0xff]
  %v3672 = vld [vmem:[#allocation3 + $0x262] sm:$0xff]
  %v3673 = vld [vmem:[#allocation3 + $0x272] sm:$0xff]
  %v3674 = vld [vmem:[#allocation3 + $0x27a] sm:$0xff]
  %v3675 = vld [vmem:[#allocation3 + $0x28a] sm:$0xff]
  %v3676 = vld [vmem:[#allocation3 + $0x292] sm:$0xff]
  %v3677 = vld [vmem:[#allocation3 + $0x2a2] sm:$0xff]
  %v3678 = vld [vmem:[#allocation3 + $0x2aa] sm:$0xff]
  %v3679 = vld [vmem:[#allocation3 + $0x2ba] sm:$0xff]
  %v3680 = vld [vmem:[#allocation3 + $0x2c2] sm:$0xff]
  %v3681 = vld [vmem:[#allocation3 + $0x2d2] sm:$0xff]
  %v3682 = vld [vmem:[#allocation3 + $0x2da] sm:$0xff]
  %v3683 = vld [vmem:[#allocation3 + $0x2ea] sm:$0xff]
  %v3684 = vld [vmem:[#allocation3 + $0x2f2] sm:$0xff]
  %v3685 = vld [vmem:[#allocation3 + $0x302] sm:$0xff]
  %v3686 = vld [vmem:[#allocation3 + $0x30a] sm:$0xff]
  %v3687 = vld [vmem:[#allocation3 + $0x31a] sm:$0xff]
  %v3688 = vld [vmem:[#allocation3 + $0x322] sm:$0xff]
  %v3689 = vpack.c.bf16 %v3626, %v3625
  %v3690 = vpack.c.bf16 %v3628, %v3627
  %v3691 = vpack.c.bf16 %v3630, %v3629
  %v3692 = vpack.c.bf16 %v3632, %v3631
  %v3693 = vpack.c.bf16 %v3634, %v3633
  %v3694 = vpack.c.bf16 %v3636, %v3635
  %v3695 = vpack.c.bf16 %v3638, %v3637
  %v3696 = vpack.c.bf16 %v3640, %v3639
  %v3697 = vpack.c.bf16 %v3642, %v3641
  %v3698 = vpack.c.bf16 %v3644, %v3643
  %v3699 = vpack.c.bf16 %v3646, %v3645
  %v3700 = vpack.c.bf16 %v3648, %v3647
  %v3701 = vpack.c.bf16 %v3650, %v3649
  %v3702 = vpack.c.bf16 %v3652, %v3651
  %v3703 = vpack.c.bf16 %v3654, %v3653
  %v3704 = vpack.c.bf16 %v3656, %v3655
  %v3705 = vpack.c.bf16 %v3658, %v3657
  %v3706 = vpack.c.bf16 %v3660, %v3659
  %v3707 = vpack.c.bf16 %v3662, %v3661
  %v3708 = vpack.c.bf16 %v3664, %v3663
  %v3709 = vpack.c.bf16 %v3666, %v3665
  %v3710 = vpack.c.bf16 %v3668, %v3667
  %v3711 = vpack.c.bf16 %v3670, %v3669
  %v3712 = vpack.c.bf16 %v3672, %v3671
  %v3713 = vpack.c.bf16 %v3674, %v3673
  %v3714 = vpack.c.bf16 %v3676, %v3675
  %v3715 = vpack.c.bf16 %v3678, %v3677
  %v3716 = vpack.c.bf16 %v3680, %v3679
  %v3717 = vpack.c.bf16 %v3682, %v3681
  %v3718 = vpack.c.bf16 %v3684, %v3683
  %v3719 = vpack.c.bf16 %v3686, %v3685
  %v3720 = vpack.c.bf16 %v3688, %v3687
  %v3721 = vld [vmem:[%s3368] sm:$0xff]
  %v3722 = vld [vmem:[%s3368 + $0x8] sm:$0xff]
  %v3723 = vld [vmem:[%s3368 + $0x18] sm:$0xff]
  %v3724 = vld [vmem:[%s3368 + $0x20] sm:$0xff]
  %v3725 = vld [vmem:[%s3368 + $0x30] sm:$0xff]
  %v3726 = vld [vmem:[%s3368 + $0x38] sm:$0xff]
  %v3727 = vld [vmem:[%s3368 + $0x48] sm:$0xff]
  %v3728 = vld [vmem:[%s3368 + $0x50] sm:$0xff]
  %v3729 = vld [vmem:[%s3368 + $0x60] sm:$0xff]
  %v3730 = vld [vmem:[%s3368 + $0x68] sm:$0xff]
  %v3731 = vld [vmem:[%s3368 + $0x78] sm:$0xff]
  %v3732 = vld [vmem:[%s3368 + $0x80] sm:$0xff]
  %v3733 = vld [vmem:[%s3368 + $0x90] sm:$0xff]
  %v3734 = vld [vmem:[%s3368 + $0x98] sm:$0xff]
  %v3735 = vld [vmem:[%s3368 + $0xa8] sm:$0xff]
  %v3736 = vld [vmem:[%s3368 + $0xb0] sm:$0xff]
  %v3737 = vld [vmem:[%s3368 + $0xc0] sm:$0xff]
  %v3738 = vld [vmem:[%s3368 + $0xc8] sm:$0xff]
  %v3739 = vld [vmem:[%s3368 + $0xd8] sm:$0xff]
  %v3740 = vld [vmem:[%s3368 + $0xe0] sm:$0xff]
  %v3741 = vld [vmem:[%s3368 + $0xf0] sm:$0xff]
  %v3742 = vld [vmem:[%s3368 + $0xf8] sm:$0xff]
  %v3743 = vld [vmem:[%s3368 + $0x108] sm:$0xff]
  %v3744 = vld [vmem:[%s3368 + $0x110] sm:$0xff]
  %v3745 = vld [vmem:[%s3368 + $0x120] sm:$0xff]
  %v3746 = vld [vmem:[%s3368 + $0x128] sm:$0xff]
  %v3747 = vld [vmem:[%s3368 + $0x138] sm:$0xff]
  %v3748 = vld [vmem:[%s3368 + $0x140] sm:$0xff]
  %v3749 = vld [vmem:[%s3368 + $0x150] sm:$0xff]
  %v3750 = vld [vmem:[%s3368 + $0x158] sm:$0xff]
  %v3751 = vld [vmem:[%s3368 + $0x168] sm:$0xff]
  %v3752 = vld [vmem:[%s3368 + $0x170] sm:$0xff]
  %v3753 = vld [vmem:[%s3368 + $0x1b0] sm:$0xff]
  %v3754 = vld [vmem:[%s3368 + $0x1b8] sm:$0xff]
  %v3755 = vld [vmem:[%s3368 + $0x1c8] sm:$0xff]
  %v3756 = vld [vmem:[%s3368 + $0x1d0] sm:$0xff]
  %v3757 = vld [vmem:[%s3368 + $0x1e0] sm:$0xff]
  %v3758 = vld [vmem:[%s3368 + $0x1e8] sm:$0xff]
  %v3759 = vld [vmem:[%s3368 + $0x1f8] sm:$0xff]
  %v3760 = vld [vmem:[%s3368 + $0x200] sm:$0xff]
  %v3761 = vld [vmem:[%s3368 + $0x210] sm:$0xff]
  %v3762 = vld [vmem:[%s3368 + $0x218] sm:$0xff]
  %v3763 = vld [vmem:[%s3368 + $0x228] sm:$0xff]
  %v3764 = vld [vmem:[%s3368 + $0x230] sm:$0xff]
  %v3765 = vld [vmem:[%s3368 + $0x240] sm:$0xff]
  %v3766 = vld [vmem:[%s3368 + $0x248] sm:$0xff]
  %v3767 = vld [vmem:[%s3368 + $0x258] sm:$0xff]
  %v3768 = vld [vmem:[%s3368 + $0x260] sm:$0xff]
  %v3769 = vld [vmem:[%s3368 + $0x270] sm:$0xff]
  %v3770 = vld [vmem:[%s3368 + $0x278] sm:$0xff]
  %v3771 = vld [vmem:[%s3368 + $0x288] sm:$0xff]
  %v3772 = vld [vmem:[%s3368 + $0x290] sm:$0xff]
  %v3773 = vld [vmem:[%s3368 + $0x2a0] sm:$0xff]
  %v3774 = vld [vmem:[%s3368 + $0x2a8] sm:$0xff]
  %v3775 = vld [vmem:[%s3368 + $0x2b8] sm:$0xff]
  %v3776 = vld [vmem:[%s3368 + $0x2c0] sm:$0xff]
  %v3777 = vld [vmem:[%s3368 + $0x2d0] sm:$0xff]
  %v3778 = vld [vmem:[%s3368 + $0x2d8] sm:$0xff]
  %v3779 = vld [vmem:[%s3368 + $0x2e8] sm:$0xff]
  %v3780 = vld [vmem:[%s3368 + $0x2f0] sm:$0xff]
  %v3781 = vld [vmem:[%s3368 + $0x300] sm:$0xff]
  %v3782 = vld [vmem:[%s3368 + $0x308] sm:$0xff]
  %v3783 = vld [vmem:[%s3368 + $0x318] sm:$0xff]
  %v3784 = vld [vmem:[%s3368 + $0x320] sm:$0xff]
  %v3785 = vpack.c.bf16 %v3722, %v3721
  %v3786 = vpack.c.bf16 %v3724, %v3723
  %v3787 = vpack.c.bf16 %v3726, %v3725
  %v3788 = vpack.c.bf16 %v3728, %v3727
  %v3789 = vpack.c.bf16 %v3730, %v3729
  %v3790 = vpack.c.bf16 %v3732, %v3731
  %v3791 = vpack.c.bf16 %v3734, %v3733
  %v3792 = vpack.c.bf16 %v3736, %v3735
  %v3793 = vpack.c.bf16 %v3738, %v3737
  %v3794 = vpack.c.bf16 %v3740, %v3739
  %v3795 = vpack.c.bf16 %v3742, %v3741
  %v3796 = vpack.c.bf16 %v3744, %v3743
  %v3797 = vpack.c.bf16 %v3746, %v3745
  %v3798 = vpack.c.bf16 %v3748, %v3747
  %v3799 = vpack.c.bf16 %v3750, %v3749
  %v3800 = vpack.c.bf16 %v3752, %v3751
  %v3801 = vpack.c.bf16 %v3754, %v3753
  %v3802 = vpack.c.bf16 %v3756, %v3755
  %v3803 = vpack.c.bf16 %v3758, %v3757
  %v3804 = vpack.c.bf16 %v3760, %v3759
  %v3805 = vpack.c.bf16 %v3762, %v3761
  %v3806 = vpack.c.bf16 %v3764, %v3763
  %v3807 = vpack.c.bf16 %v3766, %v3765
  %v3808 = vpack.c.bf16 %v3768, %v3767
  %v3809 = vpack.c.bf16 %v3770, %v3769
  %v3810 = vpack.c.bf16 %v3772, %v3771
  %v3811 = vpack.c.bf16 %v3774, %v3773
  %v3812 = vpack.c.bf16 %v3776, %v3775
  %v3813 = vpack.c.bf16 %v3778, %v3777
  %v3814 = vpack.c.bf16 %v3780, %v3779
  %v3815 = vpack.c.bf16 %v3782, %v3781
  %v3816 = vpack.c.bf16 %v3784, %v3783
  %v3817 = vld [vmem:[%s3368 + $0x1] sm:$0xff]
  %v3818 = vld [vmem:[%s3368 + $0x9] sm:$0xff]
  %v3819 = vld [vmem:[%s3368 + $0x19] sm:$0xff]
  %v3820 = vld [vmem:[%s3368 + $0x21] sm:$0xff]
  %v3821 = vld [vmem:[%s3368 + $0x31] sm:$0xff]
  %v3822 = vld [vmem:[%s3368 + $0x39] sm:$0xff]
  %v3823 = vld [vmem:[%s3368 + $0x49] sm:$0xff]
  %v3824 = vld [vmem:[%s3368 + $0x51] sm:$0xff]
  %v3825 = vld [vmem:[%s3368 + $0x61] sm:$0xff]
  %v3826 = vld [vmem:[%s3368 + $0x69] sm:$0xff]
  %v3827 = vld [vmem:[%s3368 + $0x79] sm:$0xff]
  %v3828 = vld [vmem:[%s3368 + $0x81] sm:$0xff]
  %v3829 = vld [vmem:[%s3368 + $0x91] sm:$0xff]
  %v3830 = vld [vmem:[%s3368 + $0x99] sm:$0xff]
  %v3831 = vld [vmem:[%s3368 + $0xa9] sm:$0xff]
  %v3832 = vld [vmem:[%s3368 + $0xb1] sm:$0xff]
  %v3833 = vld [vmem:[%s3368 + $0xc1] sm:$0xff]
  %v3834 = vld [vmem:[%s3368 + $0xc9] sm:$0xff]
  %v3835 = vld [vmem:[%s3368 + $0xd9] sm:$0xff]
  %v3836 = vld [vmem:[%s3368 + $0xe1] sm:$0xff]
  %v3837 = vld [vmem:[%s3368 + $0xf1] sm:$0xff]
  %v3838 = vld [vmem:[%s3368 + $0xf9] sm:$0xff]
  %v3839 = vld [vmem:[%s3368 + $0x109] sm:$0xff]
  %v3840 = vld [vmem:[%s3368 + $0x111] sm:$0xff]
  %v3841 = vld [vmem:[%s3368 + $0x121] sm:$0xff]
  %v3842 = vld [vmem:[%s3368 + $0x129] sm:$0xff]
  %v3843 = vld [vmem:[%s3368 + $0x139] sm:$0xff]
  %v3844 = vld [vmem:[%s3368 + $0x141] sm:$0xff]
  %v3845 = vld [vmem:[%s3368 + $0x151] sm:$0xff]
  %v3846 = vld [vmem:[%s3368 + $0x159] sm:$0xff]
  %v3847 = vld [vmem:[%s3368 + $0x169] sm:$0xff]
  %v3848 = vld [vmem:[%s3368 + $0x171] sm:$0xff]
  %v3849 = vld [vmem:[%s3368 + $0x1b1] sm:$0xff]
  %v3850 = vld [vmem:[%s3368 + $0x1b9] sm:$0xff]
  %v3851 = vld [vmem:[%s3368 + $0x1c9] sm:$0xff]
  %v3852 = vld [vmem:[%s3368 + $0x1d1] sm:$0xff]
  %v3853 = vld [vmem:[%s3368 + $0x1e1] sm:$0xff]
  %v3854 = vld [vmem:[%s3368 + $0x1e9] sm:$0xff]
  %v3855 = vld [vmem:[%s3368 + $0x1f9] sm:$0xff]
  %v3856 = vld [vmem:[%s3368 + $0x201] sm:$0xff]
  %v3857 = vld [vmem:[%s3368 + $0x211] sm:$0xff]
  %v3858 = vld [vmem:[%s3368 + $0x219] sm:$0xff]
  %v3859 = vld [vmem:[%s3368 + $0x229] sm:$0xff]
  %v3860 = vld [vmem:[%s3368 + $0x231] sm:$0xff]
  %v3861 = vld [vmem:[%s3368 + $0x241] sm:$0xff]
  %v3862 = vld [vmem:[%s3368 + $0x249] sm:$0xff]
  %v3863 = vld [vmem:[%s3368 + $0x259] sm:$0xff]
  %v3864 = vld [vmem:[%s3368 + $0x261] sm:$0xff]
  %v3865 = vld [vmem:[%s3368 + $0x271] sm:$0xff]
  %v3866 = vld [vmem:[%s3368 + $0x279] sm:$0xff]
  %v3867 = vld [vmem:[%s3368 + $0x289] sm:$0xff]
  %v3868 = vld [vmem:[%s3368 + $0x291] sm:$0xff]
  %v3869 = vld [vmem:[%s3368 + $0x2a1] sm:$0xff]
  %v3870 = vld [vmem:[%s3368 + $0x2a9] sm:$0xff]
  %v3871 = vld [vmem:[%s3368 + $0x2b9] sm:$0xff]
  %v3872 = vld [vmem:[%s3368 + $0x2c1] sm:$0xff]
  %v3873 = vld [vmem:[%s3368 + $0x2d1] sm:$0xff]
  %v3874 = vld [vmem:[%s3368 + $0x2d9] sm:$0xff]
  %v3875 = vld [vmem:[%s3368 + $0x2e9] sm:$0xff]
  %v3876 = vld [vmem:[%s3368 + $0x2f1] sm:$0xff]
  %v3877 = vld [vmem:[%s3368 + $0x301] sm:$0xff]
  %v3878 = vld [vmem:[%s3368 + $0x309] sm:$0xff]
  %v3879 = vld [vmem:[%s3368 + $0x319] sm:$0xff]
  %v3880 = vld [vmem:[%s3368 + $0x321] sm:$0xff]
  %v3881 = vpack.c.bf16 %v3818, %v3817
  %v3882 = vpack.c.bf16 %v3820, %v3819
  %v3883 = vpack.c.bf16 %v3822, %v3821
  %v3884 = vpack.c.bf16 %v3824, %v3823
  %v3885 = vpack.c.bf16 %v3826, %v3825
  %v3886 = vpack.c.bf16 %v3828, %v3827
  %v3887 = vpack.c.bf16 %v3830, %v3829
  %v3888 = vpack.c.bf16 %v3832, %v3831
  %v3889 = vpack.c.bf16 %v3834, %v3833
  %v3890 = vpack.c.bf16 %v3836, %v3835
  %v3891 = vpack.c.bf16 %v3838, %v3837
  %v3892 = vpack.c.bf16 %v3840, %v3839
  %v3893 = vpack.c.bf16 %v3842, %v3841
  %v3894 = vpack.c.bf16 %v3844, %v3843
  %v3895 = vpack.c.bf16 %v3846, %v3845
  %v3896 = vpack.c.bf16 %v3848, %v3847
  %v3897 = vpack.c.bf16 %v3850, %v3849
  %v3898 = vpack.c.bf16 %v3852, %v3851
  %v3899 = vpack.c.bf16 %v3854, %v3853
  %v3900 = vpack.c.bf16 %v3856, %v3855
  %v3901 = vpack.c.bf16 %v3858, %v3857
  %v3902 = vpack.c.bf16 %v3860, %v3859
  %v3903 = vpack.c.bf16 %v3862, %v3861
  %v3904 = vpack.c.bf16 %v3864, %v3863
  %v3905 = vpack.c.bf16 %v3866, %v3865
  %v3906 = vpack.c.bf16 %v3868, %v3867
  %v3907 = vpack.c.bf16 %v3870, %v3869
  %v3908 = vpack.c.bf16 %v3872, %v3871
  %v3909 = vpack.c.bf16 %v3874, %v3873
  %v3910 = vpack.c.bf16 %v3876, %v3875
  %v3911 = vpack.c.bf16 %v3878, %v3877
  %v3912 = vpack.c.bf16 %v3880, %v3879
  %v3913 = vld [vmem:[%s3368 + $0x2] sm:$0xff]
  %v3914 = vld [vmem:[%s3368 + $0xa] sm:$0xff]
  %v3915 = vld [vmem:[%s3368 + $0x1a] sm:$0xff]
  %v3916 = vld [vmem:[%s3368 + $0x22] sm:$0xff]
  %v3917 = vld [vmem:[%s3368 + $0x32] sm:$0xff]
  %v3918 = vld [vmem:[%s3368 + $0x3a] sm:$0xff]
  %v3919 = vld [vmem:[%s3368 + $0x4a] sm:$0xff]
  %v3920 = vld [vmem:[%s3368 + $0x52] sm:$0xff]
  %v3921 = vld [vmem:[%s3368 + $0x62] sm:$0xff]
  %v3922 = vld [vmem:[%s3368 + $0x6a] sm:$0xff]
  %v3923 = vld [vmem:[%s3368 + $0x7a] sm:$0xff]
  %v3924 = vld [vmem:[%s3368 + $0x82] sm:$0xff]
  %v3925 = vld [vmem:[%s3368 + $0x92] sm:$0xff]
  %v3926 = vld [vmem:[%s3368 + $0x9a] sm:$0xff]
  %v3927 = vld [vmem:[%s3368 + $0xaa] sm:$0xff]
  %v3928 = vld [vmem:[%s3368 + $0xb2] sm:$0xff]
  %v3929 = vld [vmem:[%s3368 + $0xc2] sm:$0xff]
  %v3930 = vld [vmem:[%s3368 + $0xca] sm:$0xff]
  %v3931 = vld [vmem:[%s3368 + $0xda] sm:$0xff]
  %v3932 = vld [vmem:[%s3368 + $0xe2] sm:$0xff]
  %v3933 = vld [vmem:[%s3368 + $0xf2] sm:$0xff]
  %v3934 = vld [vmem:[%s3368 + $0xfa] sm:$0xff]
  %v3935 = vld [vmem:[%s3368 + $0x10a] sm:$0xff]
  %v3936 = vld [vmem:[%s3368 + $0x112] sm:$0xff]
  %v3937 = vld [vmem:[%s3368 + $0x122] sm:$0xff]
  %v3938 = vld [vmem:[%s3368 + $0x12a] sm:$0xff]
  %v3939 = vld [vmem:[%s3368 + $0x13a] sm:$0xff]
  %v3940 = vld [vmem:[%s3368 + $0x142] sm:$0xff]
  %v3941 = vld [vmem:[%s3368 + $0x152] sm:$0xff]
  %v3942 = vld [vmem:[%s3368 + $0x15a] sm:$0xff]
  %v3943 = vld [vmem:[%s3368 + $0x16a] sm:$0xff]
  %v3944 = vld [vmem:[%s3368 + $0x172] sm:$0xff]
  %v3945 = vld [vmem:[%s3368 + $0x1b2] sm:$0xff]
  %v3946 = vld [vmem:[%s3368 + $0x1ba] sm:$0xff]
  %v3947 = vld [vmem:[%s3368 + $0x1ca] sm:$0xff]
  %v3948 = vld [vmem:[%s3368 + $0x1d2] sm:$0xff]
  %v3949 = vld [vmem:[%s3368 + $0x1e2] sm:$0xff]
  %v3950 = vld [vmem:[%s3368 + $0x1ea] sm:$0xff]
  %v3951 = vld [vmem:[%s3368 + $0x1fa] sm:$0xff]
  %v3952 = vld [vmem:[%s3368 + $0x202] sm:$0xff]
  %v3953 = vld [vmem:[%s3368 + $0x212] sm:$0xff]
  %v3954 = vld [vmem:[%s3368 + $0x21a] sm:$0xff]
  %v3955 = vld [vmem:[%s3368 + $0x22a] sm:$0xff]
  %v3956 = vld [vmem:[%s3368 + $0x232] sm:$0xff]
  %v3957 = vld [vmem:[%s3368 + $0x242] sm:$0xff]
  %v3958 = vld [vmem:[%s3368 + $0x24a] sm:$0xff]
  %v3959 = vld [vmem:[%s3368 + $0x25a] sm:$0xff]
  %v3960 = vld [vmem:[%s3368 + $0x262] sm:$0xff]
  %v3961 = vld [vmem:[%s3368 + $0x272] sm:$0xff]
  %v3962 = vld [vmem:[%s3368 + $0x27a] sm:$0xff]
  %v3963 = vld [vmem:[%s3368 + $0x28a] sm:$0xff]
  %v3964 = vld [vmem:[%s3368 + $0x292] sm:$0xff]
  %v3965 = vld [vmem:[%s3368 + $0x2a2] sm:$0xff]
  %v3966 = vld [vmem:[%s3368 + $0x2aa] sm:$0xff]
  %v3967 = vld [vmem:[%s3368 + $0x2ba] sm:$0xff]
  %v3968 = vld [vmem:[%s3368 + $0x2c2] sm:$0xff]
  %v3969 = vld [vmem:[%s3368 + $0x2d2] sm:$0xff]
  %v3970 = vld [vmem:[%s3368 + $0x2da] sm:$0xff]
  %v3971 = vld [vmem:[%s3368 + $0x2ea] sm:$0xff]
  %v3972 = vld [vmem:[%s3368 + $0x2f2] sm:$0xff]
  %v3973 = vld [vmem:[%s3368 + $0x302] sm:$0xff]
  %v3974 = vld [vmem:[%s3368 + $0x30a] sm:$0xff]
  %v3975 = vld [vmem:[%s3368 + $0x31a] sm:$0xff]
  %v3976 = vld [vmem:[%s3368 + $0x322] sm:$0xff]
  %v3977 = vpack.c.bf16 %v3914, %v3913
  %v3978 = vpack.c.bf16 %v3916, %v3915
  %v3979 = vpack.c.bf16 %v3918, %v3917
  %v3980 = vpack.c.bf16 %v3920, %v3919
  %v3981 = vpack.c.bf16 %v3922, %v3921
  %v3982 = vpack.c.bf16 %v3924, %v3923
  %v3983 = vpack.c.bf16 %v3926, %v3925
  %v3984 = vpack.c.bf16 %v3928, %v3927
  %v3985 = vpack.c.bf16 %v3930, %v3929
  %v3986 = vpack.c.bf16 %v3932, %v3931
  %v3987 = vpack.c.bf16 %v3934, %v3933
  %v3988 = vpack.c.bf16 %v3936, %v3935
  %v3989 = vpack.c.bf16 %v3938, %v3937
  %v3990 = vpack.c.bf16 %v3940, %v3939
  %v3991 = vpack.c.bf16 %v3942, %v3941
  %v3992 = vpack.c.bf16 %v3944, %v3943
  %v3993 = vpack.c.bf16 %v3946, %v3945
  %v3994 = vpack.c.bf16 %v3948, %v3947
  %v3995 = vpack.c.bf16 %v3950, %v3949
  %v3996 = vpack.c.bf16 %v3952, %v3951
  %v3997 = vpack.c.bf16 %v3954, %v3953
  %v3998 = vpack.c.bf16 %v3956, %v3955
  %v3999 = vpack.c.bf16 %v3958, %v3957
  %v4000 = vpack.c.bf16 %v3960, %v3959
  %v4001 = vpack.c.bf16 %v3962, %v3961
  %v4002 = vpack.c.bf16 %v3964, %v3963
  %v4003 = vpack.c.bf16 %v3966, %v3965
  %v4004 = vpack.c.bf16 %v3968, %v3967
  %v4005 = vpack.c.bf16 %v3970, %v3969
  %v4006 = vpack.c.bf16 %v3972, %v3971
  %v4007 = vpack.c.bf16 %v3974, %v3973
  %v4008 = vpack.c.bf16 %v3976, %v3975
  %s4009 = scalar_lea.vmem [#allocation3], 48
  %v4010 = vld [vmem:[%s4009] sm:$0xff]
  %v4011 = vld [vmem:[%s4009 + $0x8] sm:$0xff]
  %v4012 = vld [vmem:[%s4009 + $0x18] sm:$0xff]
  %v4013 = vld [vmem:[%s4009 + $0x20] sm:$0xff]
  %v4014 = vld [vmem:[%s4009 + $0x30] sm:$0xff]
  %v4015 = vld [vmem:[%s4009 + $0x38] sm:$0xff]
  %v4016 = vld [vmem:[%s4009 + $0x48] sm:$0xff]
  %v4017 = vld [vmem:[%s4009 + $0x50] sm:$0xff]
  %v4018 = vld [vmem:[%s4009 + $0x60] sm:$0xff]
  %v4019 = vld [vmem:[%s4009 + $0x68] sm:$0xff]
  %v4020 = vld [vmem:[%s4009 + $0x78] sm:$0xff]
  %v4021 = vld [vmem:[%s4009 + $0x80] sm:$0xff]
  %v4022 = vld [vmem:[%s4009 + $0x90] sm:$0xff]
  %v4023 = vld [vmem:[%s4009 + $0x98] sm:$0xff]
  %v4024 = vld [vmem:[%s4009 + $0xa8] sm:$0xff]
  %v4025 = vld [vmem:[%s4009 + $0xb0] sm:$0xff]
  %v4026 = vld [vmem:[%s4009 + $0xc0] sm:$0xff]
  %v4027 = vld [vmem:[%s4009 + $0xc8] sm:$0xff]
  %v4028 = vld [vmem:[%s4009 + $0xd8] sm:$0xff]
  %v4029 = vld [vmem:[%s4009 + $0xe0] sm:$0xff]
  %v4030 = vld [vmem:[%s4009 + $0xf0] sm:$0xff]
  %v4031 = vld [vmem:[%s4009 + $0xf8] sm:$0xff]
  %v4032 = vld [vmem:[%s4009 + $0x108] sm:$0xff]
  %v4033 = vld [vmem:[%s4009 + $0x110] sm:$0xff]
  %v4034 = vld [vmem:[%s4009 + $0x120] sm:$0xff]
  %v4035 = vld [vmem:[%s4009 + $0x128] sm:$0xff]
  %v4036 = vld [vmem:[%s4009 + $0x138] sm:$0xff]
  %v4037 = vld [vmem:[%s4009 + $0x140] sm:$0xff]
  %v4038 = vld [vmem:[%s4009 + $0x150] sm:$0xff]
  %v4039 = vld [vmem:[%s4009 + $0x158] sm:$0xff]
  %v4040 = vld [vmem:[%s4009 + $0x168] sm:$0xff]
  %v4041 = vld [vmem:[%s4009 + $0x170] sm:$0xff]
  %v4042 = vld [vmem:[%s4009 + $0x1b0] sm:$0xff]
  %v4043 = vld [vmem:[%s4009 + $0x1b8] sm:$0xff]
  %v4044 = vld [vmem:[%s4009 + $0x1c8] sm:$0xff]
  %v4045 = vld [vmem:[%s4009 + $0x1d0] sm:$0xff]
  %v4046 = vld [vmem:[%s4009 + $0x1e0] sm:$0xff]
  %v4047 = vld [vmem:[%s4009 + $0x1e8] sm:$0xff]
  %v4048 = vld [vmem:[%s4009 + $0x1f8] sm:$0xff]
  %v4049 = vld [vmem:[%s4009 + $0x200] sm:$0xff]
  %v4050 = vld [vmem:[%s4009 + $0x210] sm:$0xff]
  %v4051 = vld [vmem:[%s4009 + $0x218] sm:$0xff]
  %v4052 = vld [vmem:[%s4009 + $0x228] sm:$0xff]
  %v4053 = vld [vmem:[%s4009 + $0x230] sm:$0xff]
  %v4054 = vld [vmem:[%s4009 + $0x240] sm:$0xff]
  %v4055 = vld [vmem:[%s4009 + $0x248] sm:$0xff]
  %v4056 = vld [vmem:[%s4009 + $0x258] sm:$0xff]
  %v4057 = vld [vmem:[%s4009 + $0x260] sm:$0xff]
  %v4058 = vld [vmem:[%s4009 + $0x270] sm:$0xff]
  %v4059 = vld [vmem:[%s4009 + $0x278] sm:$0xff]
  %v4060 = vld [vmem:[%s4009 + $0x288] sm:$0xff]
  %v4061 = vld [vmem:[%s4009 + $0x290] sm:$0xff]
  %v4062 = vld [vmem:[%s4009 + $0x2a0] sm:$0xff]
  %v4063 = vld [vmem:[%s4009 + $0x2a8] sm:$0xff]
  %v4064 = vld [vmem:[%s4009 + $0x2b8] sm:$0xff]
  %v4065 = vld [vmem:[%s4009 + $0x2c0] sm:$0xff]
  %v4066 = vld [vmem:[%s4009 + $0x2d0] sm:$0xff]
  %v4067 = vld [vmem:[%s4009 + $0x2d8] sm:$0xff]
  %v4068 = vld [vmem:[%s4009 + $0x2e8] sm:$0xff]
  %v4069 = vld [vmem:[%s4009 + $0x2f0] sm:$0xff]
  %v4070 = vld [vmem:[%s4009 + $0x300] sm:$0xff]
  %v4071 = vld [vmem:[%s4009 + $0x308] sm:$0xff]
  %v4072 = vld [vmem:[%s4009 + $0x318] sm:$0xff]
  %v4073 = vld [vmem:[%s4009 + $0x320] sm:$0xff]
  %v4074 = vpack.c.bf16 %v4011, %v4010
  %v4075 = vpack.c.bf16 %v4013, %v4012
  %v4076 = vpack.c.bf16 %v4015, %v4014
  %v4077 = vpack.c.bf16 %v4017, %v4016
  %v4078 = vpack.c.bf16 %v4019, %v4018
  %v4079 = vpack.c.bf16 %v4021, %v4020
  %v4080 = vpack.c.bf16 %v4023, %v4022
  %v4081 = vpack.c.bf16 %v4025, %v4024
  %v4082 = vpack.c.bf16 %v4027, %v4026
  %v4083 = vpack.c.bf16 %v4029, %v4028
  %v4084 = vpack.c.bf16 %v4031, %v4030
  %v4085 = vpack.c.bf16 %v4033, %v4032
  %v4086 = vpack.c.bf16 %v4035, %v4034
  %v4087 = vpack.c.bf16 %v4037, %v4036
  %v4088 = vpack.c.bf16 %v4039, %v4038
  %v4089 = vpack.c.bf16 %v4041, %v4040
  %v4090 = vpack.c.bf16 %v4043, %v4042
  %v4091 = vpack.c.bf16 %v4045, %v4044
  %v4092 = vpack.c.bf16 %v4047, %v4046
  %v4093 = vpack.c.bf16 %v4049, %v4048
  %v4094 = vpack.c.bf16 %v4051, %v4050
  %v4095 = vpack.c.bf16 %v4053, %v4052
  %v4096 = vpack.c.bf16 %v4055, %v4054
  %v4097 = vpack.c.bf16 %v4057, %v4056
  %v4098 = vpack.c.bf16 %v4059, %v4058
  %v4099 = vpack.c.bf16 %v4061, %v4060
  %v4100 = vpack.c.bf16 %v4063, %v4062
  %v4101 = vpack.c.bf16 %v4065, %v4064
  %v4102 = vpack.c.bf16 %v4067, %v4066
  %v4103 = vpack.c.bf16 %v4069, %v4068
  %v4104 = vpack.c.bf16 %v4071, %v4070
  %v4105 = vpack.c.bf16 %v4073, %v4072
  %v4106 = vld [vmem:[%s4009 + $0x1] sm:$0xff]
  %v4107 = vld [vmem:[%s4009 + $0x9] sm:$0xff]
  %v4108 = vld [vmem:[%s4009 + $0x19] sm:$0xff]
  %v4109 = vld [vmem:[%s4009 + $0x21] sm:$0xff]
  %v4110 = vld [vmem:[%s4009 + $0x31] sm:$0xff]
  %v4111 = vld [vmem:[%s4009 + $0x39] sm:$0xff]
  %v4112 = vld [vmem:[%s4009 + $0x49] sm:$0xff]
  %v4113 = vld [vmem:[%s4009 + $0x51] sm:$0xff]
  %v4114 = vld [vmem:[%s4009 + $0x61] sm:$0xff]
  %v4115 = vld [vmem:[%s4009 + $0x69] sm:$0xff]
  %v4116 = vld [vmem:[%s4009 + $0x79] sm:$0xff]
  %v4117 = vld [vmem:[%s4009 + $0x81] sm:$0xff]
  %v4118 = vld [vmem:[%s4009 + $0x91] sm:$0xff]
  %v4119 = vld [vmem:[%s4009 + $0x99] sm:$0xff]
  %v4120 = vld [vmem:[%s4009 + $0xa9] sm:$0xff]
  %v4121 = vld [vmem:[%s4009 + $0xb1] sm:$0xff]
  %v4122 = vld [vmem:[%s4009 + $0xc1] sm:$0xff]
  %v4123 = vld [vmem:[%s4009 + $0xc9] sm:$0xff]
  %v4124 = vld [vmem:[%s4009 + $0xd9] sm:$0xff]
  %v4125 = vld [vmem:[%s4009 + $0xe1] sm:$0xff]
  %v4126 = vld [vmem:[%s4009 + $0xf1] sm:$0xff]
  %v4127 = vld [vmem:[%s4009 + $0xf9] sm:$0xff]
  %v4128 = vld [vmem:[%s4009 + $0x109] sm:$0xff]
  %v4129 = vld [vmem:[%s4009 + $0x111] sm:$0xff]
  %v4130 = vld [vmem:[%s4009 + $0x121] sm:$0xff]
  %v4131 = vld [vmem:[%s4009 + $0x129] sm:$0xff]
  %v4132 = vld [vmem:[%s4009 + $0x139] sm:$0xff]
  %v4133 = vld [vmem:[%s4009 + $0x141] sm:$0xff]
  %v4134 = vld [vmem:[%s4009 + $0x151] sm:$0xff]
  %v4135 = vld [vmem:[%s4009 + $0x159] sm:$0xff]
  %v4136 = vld [vmem:[%s4009 + $0x169] sm:$0xff]
  %v4137 = vld [vmem:[%s4009 + $0x171] sm:$0xff]
  %v4138 = vld [vmem:[%s4009 + $0x1b1] sm:$0xff]
  %v4139 = vld [vmem:[%s4009 + $0x1b9] sm:$0xff]
  %v4140 = vld [vmem:[%s4009 + $0x1c9] sm:$0xff]
  %v4141 = vld [vmem:[%s4009 + $0x1d1] sm:$0xff]
  %v4142 = vld [vmem:[%s4009 + $0x1e1] sm:$0xff]
  %v4143 = vld [vmem:[%s4009 + $0x1e9] sm:$0xff]
  %v4144 = vld [vmem:[%s4009 + $0x1f9] sm:$0xff]
  %v4145 = vld [vmem:[%s4009 + $0x201] sm:$0xff]
  %v4146 = vld [vmem:[%s4009 + $0x211] sm:$0xff]
  %v4147 = vld [vmem:[%s4009 + $0x219] sm:$0xff]
  %v4148 = vld [vmem:[%s4009 + $0x229] sm:$0xff]
  %v4149 = vld [vmem:[%s4009 + $0x231] sm:$0xff]
  %v4150 = vld [vmem:[%s4009 + $0x241] sm:$0xff]
  %v4151 = vld [vmem:[%s4009 + $0x249] sm:$0xff]
  %v4152 = vld [vmem:[%s4009 + $0x259] sm:$0xff]
  %v4153 = vld [vmem:[%s4009 + $0x261] sm:$0xff]
  %v4154 = vld [vmem:[%s4009 + $0x271] sm:$0xff]
  %v4155 = vld [vmem:[%s4009 + $0x279] sm:$0xff]
  %v4156 = vld [vmem:[%s4009 + $0x289] sm:$0xff]
  %v4157 = vld [vmem:[%s4009 + $0x291] sm:$0xff]
  %v4158 = vld [vmem:[%s4009 + $0x2a1] sm:$0xff]
  %v4159 = vld [vmem:[%s4009 + $0x2a9] sm:$0xff]
  %v4160 = vld [vmem:[%s4009 + $0x2b9] sm:$0xff]
  %v4161 = vld [vmem:[%s4009 + $0x2c1] sm:$0xff]
  %v4162 = vld [vmem:[%s4009 + $0x2d1] sm:$0xff]
  %v4163 = vld [vmem:[%s4009 + $0x2d9] sm:$0xff]
  %v4164 = vld [vmem:[%s4009 + $0x2e9] sm:$0xff]
  %v4165 = vld [vmem:[%s4009 + $0x2f1] sm:$0xff]
  %v4166 = vld [vmem:[%s4009 + $0x301] sm:$0xff]
  %v4167 = vld [vmem:[%s4009 + $0x309] sm:$0xff]
  %v4168 = vld [vmem:[%s4009 + $0x319] sm:$0xff]
  %v4169 = vld [vmem:[%s4009 + $0x321] sm:$0xff]
  %v4170 = vpack.c.bf16 %v4107, %v4106
  %v4171 = vpack.c.bf16 %v4109, %v4108
  %v4172 = vpack.c.bf16 %v4111, %v4110
  %v4173 = vpack.c.bf16 %v4113, %v4112
  %v4174 = vpack.c.bf16 %v4115, %v4114
  %v4175 = vpack.c.bf16 %v4117, %v4116
  %v4176 = vpack.c.bf16 %v4119, %v4118
  %v4177 = vpack.c.bf16 %v4121, %v4120
  %v4178 = vpack.c.bf16 %v4123, %v4122
  %v4179 = vpack.c.bf16 %v4125, %v4124
  %v4180 = vpack.c.bf16 %v4127, %v4126
  %v4181 = vpack.c.bf16 %v4129, %v4128
  %v4182 = vpack.c.bf16 %v4131, %v4130
  %v4183 = vpack.c.bf16 %v4133, %v4132
  %v4184 = vpack.c.bf16 %v4135, %v4134
  %v4185 = vpack.c.bf16 %v4137, %v4136
  %v4186 = vpack.c.bf16 %v4139, %v4138
  %v4187 = vpack.c.bf16 %v4141, %v4140
  %v4188 = vpack.c.bf16 %v4143, %v4142
  %v4189 = vpack.c.bf16 %v4145, %v4144
  %v4190 = vpack.c.bf16 %v4147, %v4146
  %v4191 = vpack.c.bf16 %v4149, %v4148
  %v4192 = vpack.c.bf16 %v4151, %v4150
  %v4193 = vpack.c.bf16 %v4153, %v4152
  %v4194 = vpack.c.bf16 %v4155, %v4154
  %v4195 = vpack.c.bf16 %v4157, %v4156
  %v4196 = vpack.c.bf16 %v4159, %v4158
  %v4197 = vpack.c.bf16 %v4161, %v4160
  %v4198 = vpack.c.bf16 %v4163, %v4162
  %v4199 = vpack.c.bf16 %v4165, %v4164
  %v4200 = vpack.c.bf16 %v4167, %v4166
  %v4201 = vpack.c.bf16 %v4169, %v4168
  %v4202 = vld [vmem:[%s4009 + $0x2] sm:$0xff]
  %v4203 = vld [vmem:[%s4009 + $0xa] sm:$0xff]
  %v4204 = vld [vmem:[%s4009 + $0x1a] sm:$0xff]
  %v4205 = vld [vmem:[%s4009 + $0x22] sm:$0xff]
  %v4206 = vld [vmem:[%s4009 + $0x32] sm:$0xff]
  %v4207 = vld [vmem:[%s4009 + $0x3a] sm:$0xff]
  %v4208 = vld [vmem:[%s4009 + $0x4a] sm:$0xff]
  %v4209 = vld [vmem:[%s4009 + $0x52] sm:$0xff]
  %v4210 = vld [vmem:[%s4009 + $0x62] sm:$0xff]
  %v4211 = vld [vmem:[%s4009 + $0x6a] sm:$0xff]
  %v4212 = vld [vmem:[%s4009 + $0x7a] sm:$0xff]
  %v4213 = vld [vmem:[%s4009 + $0x82] sm:$0xff]
  %v4214 = vld [vmem:[%s4009 + $0x92] sm:$0xff]
  %v4215 = vld [vmem:[%s4009 + $0x9a] sm:$0xff]
  %v4216 = vld [vmem:[%s4009 + $0xaa] sm:$0xff]
  %v4217 = vld [vmem:[%s4009 + $0xb2] sm:$0xff]
  %v4218 = vld [vmem:[%s4009 + $0xc2] sm:$0xff]
  %v4219 = vld [vmem:[%s4009 + $0xca] sm:$0xff]
  %v4220 = vld [vmem:[%s4009 + $0xda] sm:$0xff]
  %v4221 = vld [vmem:[%s4009 + $0xe2] sm:$0xff]
  %v4222 = vld [vmem:[%s4009 + $0xf2] sm:$0xff]
  %v4223 = vld [vmem:[%s4009 + $0xfa] sm:$0xff]
  %v4224 = vld [vmem:[%s4009 + $0x10a] sm:$0xff]
  %v4225 = vld [vmem:[%s4009 + $0x112] sm:$0xff]
  %v4226 = vld [vmem:[%s4009 + $0x122] sm:$0xff]
  %v4227 = vld [vmem:[%s4009 + $0x12a] sm:$0xff]
  %v4228 = vld [vmem:[%s4009 + $0x13a] sm:$0xff]
  %v4229 = vld [vmem:[%s4009 + $0x142] sm:$0xff]
  %v4230 = vld [vmem:[%s4009 + $0x152] sm:$0xff]
  %v4231 = vld [vmem:[%s4009 + $0x15a] sm:$0xff]
  %v4232 = vld [vmem:[%s4009 + $0x16a] sm:$0xff]
  %v4233 = vld [vmem:[%s4009 + $0x172] sm:$0xff]
  %v4234 = vld [vmem:[%s4009 + $0x1b2] sm:$0xff]
  %v4235 = vld [vmem:[%s4009 + $0x1ba] sm:$0xff]
  %v4236 = vld [vmem:[%s4009 + $0x1ca] sm:$0xff]
  %v4237 = vld [vmem:[%s4009 + $0x1d2] sm:$0xff]
  %v4238 = vld [vmem:[%s4009 + $0x1e2] sm:$0xff]
  %v4239 = vld [vmem:[%s4009 + $0x1ea] sm:$0xff]
  %v4240 = vld [vmem:[%s4009 + $0x1fa] sm:$0xff]
  %v4241 = vld [vmem:[%s4009 + $0x202] sm:$0xff]
  %v4242 = vld [vmem:[%s4009 + $0x212] sm:$0xff]
  %v4243 = vld [vmem:[%s4009 + $0x21a] sm:$0xff]
  %v4244 = vld [vmem:[%s4009 + $0x22a] sm:$0xff]
  %v4245 = vld [vmem:[%s4009 + $0x232] sm:$0xff]
  %v4246 = vld [vmem:[%s4009 + $0x242] sm:$0xff]
  %v4247 = vld [vmem:[%s4009 + $0x24a] sm:$0xff]
  %v4248 = vld [vmem:[%s4009 + $0x25a] sm:$0xff]
  %v4249 = vld [vmem:[%s4009 + $0x262] sm:$0xff]
  %v4250 = vld [vmem:[%s4009 + $0x272] sm:$0xff]
  %v4251 = vld [vmem:[%s4009 + $0x27a] sm:$0xff]
  %v4252 = vld [vmem:[%s4009 + $0x28a] sm:$0xff]
  %v4253 = vld [vmem:[%s4009 + $0x292] sm:$0xff]
  %v4254 = vld [vmem:[%s4009 + $0x2a2] sm:$0xff]
  %v4255 = vld [vmem:[%s4009 + $0x2aa] sm:$0xff]
  %v4256 = vld [vmem:[%s4009 + $0x2ba] sm:$0xff]
  %v4257 = vld [vmem:[%s4009 + $0x2c2] sm:$0xff]
  %v4258 = vld [vmem:[%s4009 + $0x2d2] sm:$0xff]
  %v4259 = vld [vmem:[%s4009 + $0x2da] sm:$0xff]
  %v4260 = vld [vmem:[%s4009 + $0x2ea] sm:$0xff]
  %v4261 = vld [vmem:[%s4009 + $0x2f2] sm:$0xff]
  %v4262 = vld [vmem:[%s4009 + $0x302] sm:$0xff]
  %v4263 = vld [vmem:[%s4009 + $0x30a] sm:$0xff]
  %v4264 = vld [vmem:[%s4009 + $0x31a] sm:$0xff]
  %v4265 = vld [vmem:[%s4009 + $0x322] sm:$0xff]
  %v4266 = vpack.c.bf16 %v4203, %v4202
  %v4267 = vpack.c.bf16 %v4205, %v4204
  %v4268 = vpack.c.bf16 %v4207, %v4206
  %v4269 = vpack.c.bf16 %v4209, %v4208
  %v4270 = vpack.c.bf16 %v4211, %v4210
  %v4271 = vpack.c.bf16 %v4213, %v4212
  %v4272 = vpack.c.bf16 %v4215, %v4214
  %v4273 = vpack.c.bf16 %v4217, %v4216
  %v4274 = vpack.c.bf16 %v4219, %v4218
  %v4275 = vpack.c.bf16 %v4221, %v4220
  %v4276 = vpack.c.bf16 %v4223, %v4222
  %v4277 = vpack.c.bf16 %v4225, %v4224
  %v4278 = vpack.c.bf16 %v4227, %v4226
  %v4279 = vpack.c.bf16 %v4229, %v4228
  %v4280 = vpack.c.bf16 %v4231, %v4230
  %v4281 = vpack.c.bf16 %v4233, %v4232
  %v4282 = vpack.c.bf16 %v4235, %v4234
  %v4283 = vpack.c.bf16 %v4237, %v4236
  %v4284 = vpack.c.bf16 %v4239, %v4238
  %v4285 = vpack.c.bf16 %v4241, %v4240
  %v4286 = vpack.c.bf16 %v4243, %v4242
  %v4287 = vpack.c.bf16 %v4245, %v4244
  %v4288 = vpack.c.bf16 %v4247, %v4246
  %v4289 = vpack.c.bf16 %v4249, %v4248
  %v4290 = vpack.c.bf16 %v4251, %v4250
  %v4291 = vpack.c.bf16 %v4253, %v4252
  %v4292 = vpack.c.bf16 %v4255, %v4254
  %v4293 = vpack.c.bf16 %v4257, %v4256
  %v4294 = vpack.c.bf16 %v4259, %v4258
  %v4295 = vpack.c.bf16 %v4261, %v4260
  %v4296 = vpack.c.bf16 %v4263, %v4262
  %v4297 = vpack.c.bf16 %v4265, %v4264
  %v4298 = vld [vmem:[%s4] sm:$0xf]
  %v4299 = vld [vmem:[%s4 + $0x4] sm:$0xf]
  %v4300 = vld [vmem:[%s4 + $0x8] sm:$0xf]
  %v4301 = vld [vmem:[%s4 + $0xc] sm:$0xf]
  %v4302 = vld [vmem:[%s4 + $0x10] sm:$0xf]
  %v4303 = vld [vmem:[%s4 + $0x14] sm:$0xf]
  %v4304 = vld [vmem:[%s4 + $0x18] sm:$0xf]
  %v4305 = vld [vmem:[%s4 + $0x1c] sm:$0xf]
  %v4306 = vld [vmem:[%s4 + $0x20] sm:$0xf]
  %v4307 = vld [vmem:[%s4 + $0x24] sm:$0xf]
  %v4308 = vld [vmem:[%s4 + $0x28] sm:$0xf]
  %v4309 = vld [vmem:[%s4 + $0x2c] sm:$0xf]
  %v4310 = vld [vmem:[%s4 + $0x30] sm:$0xf]
  %v4311 = vld [vmem:[%s4 + $0x34] sm:$0xf]
  %v4312 = vld [vmem:[%s4 + $0x38] sm:$0xf]
  %v4313 = vld [vmem:[%s4 + $0x3c] sm:$0xf]
  %v4314 = vld [vmem:[%s4 + $0x40] sm:$0xf]
  %v4315 = vld [vmem:[%s4 + $0x44] sm:$0xf]
  %v4316 = vld [vmem:[%s4 + $0x48] sm:$0xf]
  %v4317 = vld [vmem:[%s4 + $0x4c] sm:$0xf]
  %v4318 = vld [vmem:[%s4 + $0x50] sm:$0xf]
  %v4319 = vld [vmem:[%s4 + $0x54] sm:$0xf]
  %v4320 = vld [vmem:[%s4 + $0x58] sm:$0xf]
  %v4321 = vld [vmem:[%s4 + $0x5c] sm:$0xf]
  %v4322 = vld [vmem:[%s4 + $0x60] sm:$0xf]
  %v4323 = vld [vmem:[%s4 + $0x64] sm:$0xf]
  %v4324 = vld [vmem:[%s4 + $0x68] sm:$0xf]
  %v4325 = vld [vmem:[%s4 + $0x6c] sm:$0xf]
  %v4326 = vld [vmem:[%s4 + $0x70] sm:$0xf]
  %v4327 = vld [vmem:[%s4 + $0x74] sm:$0xf]
  %v4328 = vld [vmem:[%s4 + $0x78] sm:$0xf]
  %v4329 = vld [vmem:[%s4 + $0x7c] sm:$0xf]
  %v4330 = vld [vmem:[%s4 + $0x80] sm:$0xf]
  %v4331 = vld [vmem:[%s4 + $0x84] sm:$0xf]
  %v4332 = vld [vmem:[%s4 + $0x88] sm:$0xf]
  %v4333 = vld [vmem:[%s4 + $0x8c] sm:$0xf]
  %v4334 = vld [vmem:[%s4 + $0x90] sm:$0xf]
  %v4335 = vld [vmem:[%s4 + $0x94] sm:$0xf]
  %v4336 = vld [vmem:[%s4 + $0x98] sm:$0xf]
  %v4337 = vld [vmem:[%s4 + $0x9c] sm:$0xf]
  %v4338 = vld [vmem:[%s4 + $0xa0] sm:$0xf]
  %v4339 = vld [vmem:[%s4 + $0xa4] sm:$0xf]
  %v4340 = vld [vmem:[%s4 + $0xa8] sm:$0xf]
  %v4341 = vld [vmem:[%s4 + $0xac] sm:$0xf]
  %v4342 = vld [vmem:[%s4 + $0xb0] sm:$0xf]
  %v4343 = vld [vmem:[%s4 + $0xb4] sm:$0xf]
  %v4344 = vld [vmem:[%s4 + $0xb8] sm:$0xf]
  %v4345 = vld [vmem:[%s4 + $0xbc] sm:$0xf]
  %v4346 = vld [vmem:[%s4 + $0xc0] sm:$0xf]
  %v4347 = vld [vmem:[%s4 + $0xc4] sm:$0xf]
  %v4348 = vld [vmem:[%s4 + $0xc8] sm:$0xf]
  %v4349 = vld [vmem:[%s4 + $0xcc] sm:$0xf]
  %v4350 = vld [vmem:[%s4 + $0xd0] sm:$0xf]
  %v4351 = vld [vmem:[%s4 + $0xd4] sm:$0xf]
  %v4352 = vld [vmem:[%s4 + $0xd8] sm:$0xf]
  %v4353 = vld [vmem:[%s4 + $0xdc] sm:$0xf]
  %v4354 = vld [vmem:[%s4 + $0xe0] sm:$0xf]
  %v4355 = vld [vmem:[%s4 + $0xe4] sm:$0xf]
  %v4356 = vld [vmem:[%s4 + $0xe8] sm:$0xf]
  %v4357 = vld [vmem:[%s4 + $0xec] sm:$0xf]
  %v4358 = vld [vmem:[%s4 + $0xf0] sm:$0xf]
  %v4359 = vld [vmem:[%s4 + $0xf4] sm:$0xf]
  %v4360 = vld [vmem:[%s4 + $0xf8] sm:$0xf]
  %v4361 = vld [vmem:[%s4 + $0xfc] sm:$0xf]
  %v4362 = vld [vmem:[%s4 + $0x100] sm:$0xf]
  %v4363 = vld [vmem:[%s4 + $0x104] sm:$0xf]
  %v4364 = vld [vmem:[%s4 + $0x108] sm:$0xf]
  %v4365 = vld [vmem:[%s4 + $0x10c] sm:$0xf]
  %v4366 = vld [vmem:[%s4 + $0x110] sm:$0xf]
  %v4367 = vld [vmem:[%s4 + $0x114] sm:$0xf]
  %v4368 = vld [vmem:[%s4 + $0x118] sm:$0xf]
  %v4369 = vld [vmem:[%s4 + $0x11c] sm:$0xf]
  %v4370 = vld [vmem:[%s4 + $0x120] sm:$0xf]
  %v4371 = vld [vmem:[%s4 + $0x124] sm:$0xf]
  %v4372 = vld [vmem:[%s4 + $0x128] sm:$0xf]
  %v4373 = vld [vmem:[%s4 + $0x12c] sm:$0xf]
  %v4374 = vld [vmem:[%s4 + $0x130] sm:$0xf]
  %v4375 = vld [vmem:[%s4 + $0x134] sm:$0xf]
  %v4376 = vld [vmem:[%s4 + $0x138] sm:$0xf]
  %v4377 = vld [vmem:[%s4 + $0x13c] sm:$0xf]
  %v4378 = vld [vmem:[%s4 + $0x140] sm:$0xf]
  %v4379 = vld [vmem:[%s4 + $0x144] sm:$0xf]
  %v4380 = vld [vmem:[%s4 + $0x148] sm:$0xf]
  %v4381 = vld [vmem:[%s4 + $0x14c] sm:$0xf]
  %v4382 = vld [vmem:[%s4 + $0x150] sm:$0xf]
  %v4383 = vld [vmem:[%s4 + $0x154] sm:$0xf]
  %v4384 = vld [vmem:[%s4 + $0x158] sm:$0xf]
  %v4385 = vld [vmem:[%s4 + $0x15c] sm:$0xf]
  %v4386 = vld [vmem:[%s4 + $0x160] sm:$0xf]
  %v4387 = vld [vmem:[%s4 + $0x164] sm:$0xf]
  %v4388 = vld [vmem:[%s4 + $0x168] sm:$0xf]
  %v4389 = vld [vmem:[%s4 + $0x16c] sm:$0xf]
  %v4390 = vld [vmem:[%s4 + $0x170] sm:$0xf]
  %v4391 = vld [vmem:[%s4 + $0x174] sm:$0xf]
  %v4392 = vld [vmem:[%s4 + $0x178] sm:$0xf]
  %v4393 = vld [vmem:[%s4 + $0x17c] sm:$0xf]
  %v4394 = vld [vmem:[%s4 + $0x180] sm:$0xf]
  %v4395 = vld [vmem:[%s4 + $0x184] sm:$0xf]
  %v4396 = vld [vmem:[%s4 + $0x188] sm:$0xf]
  %v4397 = vld [vmem:[%s4 + $0x18c] sm:$0xf]
  %v4398 = vld [vmem:[%s4 + $0x190] sm:$0xf]
  %v4399 = vld [vmem:[%s4 + $0x194] sm:$0xf]
  %v4400 = vld [vmem:[%s4 + $0x198] sm:$0xf]
  %v4401 = vld [vmem:[%s4 + $0x19c] sm:$0xf]
  %v4402 = vld [vmem:[%s4 + $0x1a0] sm:$0xf]
  %v4403 = vld [vmem:[%s4 + $0x1a4] sm:$0xf]
  %v4404 = vld [vmem:[%s4 + $0x1a8] sm:$0xf]
  %v4405 = vld [vmem:[%s4 + $0x1ac] sm:$0xf]
  %v4406 = vld [vmem:[%s4 + $0x1b0] sm:$0xf]
  %v4407 = vld [vmem:[%s4 + $0x1b4] sm:$0xf]
  %v4408 = vld [vmem:[%s4 + $0x1b8] sm:$0xf]
  %v4409 = vld [vmem:[%s4 + $0x1bc] sm:$0xf]
  %v4410 = vld [vmem:[%s4 + $0x1c0] sm:$0xf]
  %v4411 = vld [vmem:[%s4 + $0x1c4] sm:$0xf]
  %v4412 = vld [vmem:[%s4 + $0x1c8] sm:$0xf]
  %v4413 = vld [vmem:[%s4 + $0x1cc] sm:$0xf]
  %v4414 = vld [vmem:[%s4 + $0x1d0] sm:$0xf]
  %v4415 = vld [vmem:[%s4 + $0x1d4] sm:$0xf]
  %v4416 = vld [vmem:[%s4 + $0x1d8] sm:$0xf]
  %v4417 = vld [vmem:[%s4 + $0x1dc] sm:$0xf]
  %v4418 = vld [vmem:[%s4 + $0x1e0] sm:$0xf]
  %v4419 = vld [vmem:[%s4 + $0x1e4] sm:$0xf]
  %v4420 = vld [vmem:[%s4 + $0x1e8] sm:$0xf]
  %v4421 = vld [vmem:[%s4 + $0x1ec] sm:$0xf]
  %v4422 = vld [vmem:[%s4 + $0x1f0] sm:$0xf]
  %v4423 = vld [vmem:[%s4 + $0x1f4] sm:$0xf]
  %v4424 = vld [vmem:[%s4 + $0x1f8] sm:$0xf]
  %v4425 = vld [vmem:[%s4 + $0x1fc] sm:$0xf]
  %v4426 = vld [vmem:[%s4 + $0x200] sm:$0xf]
  %v4427 = vld [vmem:[%s4 + $0x204] sm:$0xf]
  %v4428 = vld [vmem:[%s4 + $0x208] sm:$0xf]
  %v4429 = vld [vmem:[%s4 + $0x20c] sm:$0xf]
  %v4430 = vld [vmem:[%s4 + $0x210] sm:$0xf]
  %v4431 = vld [vmem:[%s4 + $0x214] sm:$0xf]
  %v4432 = vld [vmem:[%s4 + $0x218] sm:$0xf]
  %v4433 = vld [vmem:[%s4 + $0x21c] sm:$0xf]
  %v4434 = vld [vmem:[%s4 + $0x220] sm:$0xf]
  %v4435 = vld [vmem:[%s4 + $0x224] sm:$0xf]
  %v4436 = vld [vmem:[%s4 + $0x228] sm:$0xf]
  %v4437 = vld [vmem:[%s4 + $0x22c] sm:$0xf]
  %v4438 = vld [vmem:[%s4 + $0x230] sm:$0xf]
  %v4439 = vld [vmem:[%s4 + $0x234] sm:$0xf]
  %v4440 = vld [vmem:[%s4 + $0x238] sm:$0xf]
  %v4441 = vld [vmem:[%s4 + $0x23c] sm:$0xf]
  %v4586 = vunpack.c.l.b16 %v4298
  %v4587 = vunpack.c.l.b16 %v4299
  %v4588 = vunpack.c.l.b16 %v4300
  %v4589 = vunpack.c.l.b16 %v4301
  %v4590 = vunpack.c.l.b16 %v4302
  %v4591 = vunpack.c.l.b16 %v4303
  %v4592 = vunpack.c.l.b16 %v4304
  %v4593 = vunpack.c.l.b16 %v4305
  %v4594 = vunpack.c.l.b16 %v4306
  %v4595 = vunpack.c.l.b16 %v4307
  %v4596 = vunpack.c.l.b16 %v4308
  %v4597 = vunpack.c.l.b16 %v4309
  %v4598 = vunpack.c.l.b16 %v4310
  %v4599 = vunpack.c.l.b16 %v4311
  %v4600 = vunpack.c.l.b16 %v4312
  %v4601 = vunpack.c.l.b16 %v4313
  %v4602 = vunpack.c.l.b16 %v4314
  %v4603 = vunpack.c.l.b16 %v4315
  %v4604 = vunpack.c.l.b16 %v4316
  %v4605 = vunpack.c.l.b16 %v4317
  %v4606 = vunpack.c.l.b16 %v4318
  %v4607 = vunpack.c.l.b16 %v4319
  %v4608 = vunpack.c.l.b16 %v4320
  %v4609 = vunpack.c.l.b16 %v4321
  %v4610 = vunpack.c.l.b16 %v4322
  %v4611 = vunpack.c.l.b16 %v4323
  %v4612 = vunpack.c.l.b16 %v4324
  %v4613 = vunpack.c.l.b16 %v4325
  %v4614 = vunpack.c.l.b16 %v4326
  %v4615 = vunpack.c.l.b16 %v4327
  %v4616 = vunpack.c.l.b16 %v4328
  %v4617 = vunpack.c.l.b16 %v4329
  %v4618 = vunpack.c.l.b16 %v4330
  %v4619 = vunpack.c.l.b16 %v4331
  %v4620 = vunpack.c.l.b16 %v4332
  %v4621 = vunpack.c.l.b16 %v4333
  %v4622 = vunpack.c.l.b16 %v4334
  %v4623 = vunpack.c.l.b16 %v4335
  %v4624 = vunpack.c.l.b16 %v4336
  %v4625 = vunpack.c.l.b16 %v4337
  %v4626 = vunpack.c.l.b16 %v4338
  %v4627 = vunpack.c.l.b16 %v4339
  %v4628 = vunpack.c.l.b16 %v4340
  %v4629 = vunpack.c.l.b16 %v4341
  %v4630 = vunpack.c.l.b16 %v4342
  %v4631 = vunpack.c.l.b16 %v4343
  %v4632 = vunpack.c.l.b16 %v4344
  %v4633 = vunpack.c.l.b16 %v4345
  %v4634 = vunpack.c.l.b16 %v4346
  %v4635 = vunpack.c.l.b16 %v4347
  %v4636 = vunpack.c.l.b16 %v4348
  %v4637 = vunpack.c.l.b16 %v4349
  %v4638 = vunpack.c.l.b16 %v4350
  %v4639 = vunpack.c.l.b16 %v4351
  %v4640 = vunpack.c.l.b16 %v4352
  %v4641 = vunpack.c.l.b16 %v4353
  %v4642 = vunpack.c.l.b16 %v4354
  %v4643 = vunpack.c.l.b16 %v4355
  %v4644 = vunpack.c.l.b16 %v4356
  %v4645 = vunpack.c.l.b16 %v4357
  %v4646 = vunpack.c.l.b16 %v4358
  %v4647 = vunpack.c.l.b16 %v4359
  %v4648 = vunpack.c.l.b16 %v4360
  %v4649 = vunpack.c.l.b16 %v4361
  %v4650 = vunpack.c.l.b16 %v4362
  %v4651 = vunpack.c.l.b16 %v4363
  %v4652 = vunpack.c.l.b16 %v4364
  %v4653 = vunpack.c.l.b16 %v4365
  %v4654 = vunpack.c.l.b16 %v4366
  %v4655 = vunpack.c.l.b16 %v4367
  %v4656 = vunpack.c.l.b16 %v4368
  %v4657 = vunpack.c.l.b16 %v4369
  %v4658 = vunpack.c.l.b16 %v4370
  %v4659 = vunpack.c.l.b16 %v4371
  %v4660 = vunpack.c.l.b16 %v4372
  %v4661 = vunpack.c.l.b16 %v4373
  %v4662 = vunpack.c.l.b16 %v4374
  %v4663 = vunpack.c.l.b16 %v4375
  %v4664 = vunpack.c.l.b16 %v4376
  %v4665 = vunpack.c.l.b16 %v4377
  %v4666 = vunpack.c.l.b16 %v4378
  %v4667 = vunpack.c.l.b16 %v4379
  %v4668 = vunpack.c.l.b16 %v4380
  %v4669 = vunpack.c.l.b16 %v4381
  %v4670 = vunpack.c.l.b16 %v4382
  %v4671 = vunpack.c.l.b16 %v4383
  %v4672 = vunpack.c.l.b16 %v4384
  %v4673 = vunpack.c.l.b16 %v4385
  %v4674 = vunpack.c.l.b16 %v4386
  %v4675 = vunpack.c.l.b16 %v4387
  %v4676 = vunpack.c.l.b16 %v4388
  %v4677 = vunpack.c.l.b16 %v4389
  %v4678 = vunpack.c.l.b16 %v4390
  %v4679 = vunpack.c.l.b16 %v4391
  %v4680 = vunpack.c.l.b16 %v4392
  %v4681 = vunpack.c.l.b16 %v4393
  %v4682 = vunpack.c.l.b16 %v4394
  %v4683 = vunpack.c.l.b16 %v4395
  %v4684 = vunpack.c.l.b16 %v4396
  %v4685 = vunpack.c.l.b16 %v4397
  %v4686 = vunpack.c.l.b16 %v4398
  %v4687 = vunpack.c.l.b16 %v4399
  %v4688 = vunpack.c.l.b16 %v4400
  %v4689 = vunpack.c.l.b16 %v4401
  %v4690 = vunpack.c.l.b16 %v4402
  %v4691 = vunpack.c.l.b16 %v4403
  %v4692 = vunpack.c.l.b16 %v4404
  %v4693 = vunpack.c.l.b16 %v4405
  %v4694 = vunpack.c.l.b16 %v4406
  %v4695 = vunpack.c.l.b16 %v4407
  %v4696 = vunpack.c.l.b16 %v4408
  %v4697 = vunpack.c.l.b16 %v4409
  %v4698 = vunpack.c.l.b16 %v4410
  %v4699 = vunpack.c.l.b16 %v4411
  %v4700 = vunpack.c.l.b16 %v4412
  %v4701 = vunpack.c.l.b16 %v4413
  %v4702 = vunpack.c.l.b16 %v4414
  %v4703 = vunpack.c.l.b16 %v4415
  %v4704 = vunpack.c.l.b16 %v4416
  %v4705 = vunpack.c.l.b16 %v4417
  %v4706 = vunpack.c.l.b16 %v4418
  %v4707 = vunpack.c.l.b16 %v4419
  %v4708 = vunpack.c.l.b16 %v4420
  %v4709 = vunpack.c.l.b16 %v4421
  %v4710 = vunpack.c.l.b16 %v4422
  %v4711 = vunpack.c.l.b16 %v4423
  %v4712 = vunpack.c.l.b16 %v4424
  %v4713 = vunpack.c.l.b16 %v4425
  %v4714 = vunpack.c.l.b16 %v4426
  %v4715 = vunpack.c.l.b16 %v4427
  %v4716 = vunpack.c.l.b16 %v4428
  %v4717 = vunpack.c.l.b16 %v4429
  %v4718 = vunpack.c.l.b16 %v4430
  %v4719 = vunpack.c.l.b16 %v4431
  %v4720 = vunpack.c.l.b16 %v4432
  %v4721 = vunpack.c.l.b16 %v4433
  %v4722 = vunpack.c.l.b16 %v4434
  %v4723 = vunpack.c.l.b16 %v4435
  %v4724 = vunpack.c.l.b16 %v4436
  %v4725 = vunpack.c.l.b16 %v4437
  %v4726 = vunpack.c.l.b16 %v4438
  %v4727 = vunpack.c.l.b16 %v4439
  %v4728 = vunpack.c.l.b16 %v4440
  %v4729 = vunpack.c.l.b16 %v4441
  %v4730 = vpack.c.b16 %v4587, %v4586
  %v4731 = vpack.c.b16 %v4589, %v4588
  %v4732 = vpack.c.b16 %v4591, %v4590
  %v4733 = vpack.c.b16 %v4593, %v4592
  %v4734 = vpack.c.b16 %v4595, %v4594
  %v4735 = vpack.c.b16 %v4597, %v4596
  %v4736 = vpack.c.b16 %v4599, %v4598
  %v4737 = vpack.c.b16 %v4601, %v4600
  %v4738 = vpack.c.b16 %v4603, %v4602
  %v4739 = vpack.c.b16 %v4605, %v4604
  %v4740 = vpack.c.b16 %v4607, %v4606
  %v4741 = vpack.c.b16 %v4609, %v4608
  %v4742 = vpack.c.b16 %v4611, %v4610
  %v4743 = vpack.c.b16 %v4613, %v4612
  %v4744 = vpack.c.b16 %v4615, %v4614
  %v4745 = vpack.c.b16 %v4617, %v4616
  %v4746 = vpack.c.b16 %v4619, %v4618
  %v4747 = vpack.c.b16 %v4621, %v4620
  %v4748 = vpack.c.b16 %v4623, %v4622
  %v4749 = vpack.c.b16 %v4625, %v4624
  %v4750 = vpack.c.b16 %v4627, %v4626
  %v4751 = vpack.c.b16 %v4629, %v4628
  %v4752 = vpack.c.b16 %v4631, %v4630
  %v4753 = vpack.c.b16 %v4633, %v4632
  %v4754 = vpack.c.b16 %v4635, %v4634
  %v4755 = vpack.c.b16 %v4637, %v4636
  %v4756 = vpack.c.b16 %v4639, %v4638
  %v4757 = vpack.c.b16 %v4641, %v4640
  %v4758 = vpack.c.b16 %v4643, %v4642
  %v4759 = vpack.c.b16 %v4645, %v4644
  %v4760 = vpack.c.b16 %v4647, %v4646
  %v4761 = vpack.c.b16 %v4649, %v4648
  %v4762 = vpack.c.b16 %v4651, %v4650
  %v4763 = vpack.c.b16 %v4653, %v4652
  %v4764 = vpack.c.b16 %v4655, %v4654
  %v4765 = vpack.c.b16 %v4657, %v4656
  %v4766 = vpack.c.b16 %v4659, %v4658
  %v4767 = vpack.c.b16 %v4661, %v4660
  %v4768 = vpack.c.b16 %v4663, %v4662
  %v4769 = vpack.c.b16 %v4665, %v4664
  %v4770 = vpack.c.b16 %v4667, %v4666
  %v4771 = vpack.c.b16 %v4669, %v4668
  %v4772 = vpack.c.b16 %v4671, %v4670
  %v4773 = vpack.c.b16 %v4673, %v4672
  %v4774 = vpack.c.b16 %v4675, %v4674
  %v4775 = vpack.c.b16 %v4677, %v4676
  %v4776 = vpack.c.b16 %v4679, %v4678
  %v4777 = vpack.c.b16 %v4681, %v4680
  %v4778 = vpack.c.b16 %v4683, %v4682
  %v4779 = vpack.c.b16 %v4685, %v4684
  %v4780 = vpack.c.b16 %v4687, %v4686
  %v4781 = vpack.c.b16 %v4689, %v4688
  %v4782 = vpack.c.b16 %v4691, %v4690
  %v4783 = vpack.c.b16 %v4693, %v4692
  %v4784 = vpack.c.b16 %v4695, %v4694
  %v4785 = vpack.c.b16 %v4697, %v4696
  %v4786 = vpack.c.b16 %v4699, %v4698
  %v4787 = vpack.c.b16 %v4701, %v4700
  %v4788 = vpack.c.b16 %v4703, %v4702
  %v4789 = vpack.c.b16 %v4705, %v4704
  %v4790 = vpack.c.b16 %v4707, %v4706
  %v4791 = vpack.c.b16 %v4709, %v4708
  %v4792 = vpack.c.b16 %v4711, %v4710
  %v4793 = vpack.c.b16 %v4713, %v4712
  %v4794 = vpack.c.b16 %v4715, %v4714
  %v4795 = vpack.c.b16 %v4717, %v4716
  %v4796 = vpack.c.b16 %v4719, %v4718
  %v4797 = vpack.c.b16 %v4721, %v4720
  %v4798 = vpack.c.b16 %v4723, %v4722
  %v4799 = vpack.c.b16 %v4725, %v4724
  %v4800 = vpack.c.b16 %v4727, %v4726
  %v4801 = vpack.c.b16 %v4729, %v4728
  %4874 = vmatprep.subr.bf16.mxu0 0
  %4875 = vmatpush1.bf16.msra.mxu0 %v4737
  %4876 = vmatprep.subr.bf16.mxu0 0
  %4877 = vmatpush1.bf16.msra.mxu0 %v4736
  %4878 = vmatprep.subr.bf16.mxu0 0
  %4879 = vmatpush1.bf16.msra.mxu0 %v4735
  %4880 = vmatprep.subr.bf16.mxu0 0
  %4881 = vmatpush1.bf16.msra.mxu0 %v4734
  %4882 = vmatprep.subr.bf16.mxu0 0
  %4883 = vmatpush1.bf16.msra.mxu0 %v4733
  %4884 = vmatprep.subr.bf16.mxu0 0
  %4885 = vmatpush1.bf16.msra.mxu0 %v4732
  %4886 = vmatprep.subr.bf16.mxu0 0
  %4887 = vmatpush1.bf16.msra.mxu0 %v4731
  %4888 = vmatprep.subr.bf16.mxu0 0
  %4889 = vmatpush1.bf16.msra.mxu0 %v4730
  %4890 = vmatprep.subr.bf16.mxu0 0
  %4891 = vmatpush2.bf16.msra.mxu0 %v4745
  %4892 = vmatprep.subr.bf16.mxu0 0
  %4893 = vmatpush2.bf16.msra.mxu0 %v4744
  %4894 = vmatprep.subr.bf16.mxu0 0
  %4895 = vmatpush2.bf16.msra.mxu0 %v4743
  %4896 = vmatprep.subr.bf16.mxu0 0
  %4897 = vmatpush2.bf16.msra.mxu0 %v4742
  %4898 = vmatprep.subr.bf16.mxu0 0
  %4899 = vmatpush2.bf16.msra.mxu0 %v4741
  %4900 = vmatprep.subr.bf16.mxu0 0
  %4901 = vmatpush2.bf16.msra.mxu0 %v4740
  %4902 = vmatprep.subr.bf16.mxu0 0
  %4903 = vmatpush2.bf16.msra.mxu0 %v4739
  %4904 = vmatprep.subr.bf16.mxu0 0
  %4905 = vmatpush2.bf16.msra.mxu0 %v4738
  %4906 = vmatprep.mubr.bf16.mxu0 %v3593
  %4907 = vmatmul.mubr.bf16.gmra.mxu0 %v3497
  %v4908 = vpop.f32.mrf.mxu0
  %v4909 = vadd.f32 0.0, %v4908
  %v4910 = vpop.f32.mrf.mxu0
  %v4911 = vpop.f32.mrf.mxu0
  %v4912 = vadd.f32 0.0, %v4911
  %v4913 = vpop.f32.mrf.mxu0
  %4914 = vmatprep.mubr.bf16.mxu0 %v3594
  %4915 = vmatmul.mubr.bf16.gmra.mxu0 %v3498
  %v4916 = vpop.f32.mrf.mxu0
  %v4917 = vadd.f32 0.0, %v4916
  %v4918 = vpop.f32.mrf.mxu0
  %v4919 = vpop.f32.mrf.mxu0
  %v4920 = vadd.f32 0.0, %v4919
  %v4921 = vpop.f32.mrf.mxu0
  %4922 = vmatprep.mubr.bf16.mxu0 %v3595
  %4923 = vmatmul.mubr.bf16.gmra.mxu0 %v3499
  %v4924 = vpop.f32.mrf.mxu0
  %v4925 = vadd.f32 0.0, %v4924
  %v4926 = vpop.f32.mrf.mxu0
  %v4927 = vpop.f32.mrf.mxu0
  %v4928 = vadd.f32 0.0, %v4927
  %v4929 = vpop.f32.mrf.mxu0
  %4930 = vmatprep.mubr.bf16.mxu0 %v3596
  %4931 = vmatmul.mubr.bf16.gmra.mxu0 %v3500
  %v4932 = vpop.f32.mrf.mxu0
  %v4933 = vadd.f32 0.0, %v4932
  %v4934 = vpop.f32.mrf.mxu0
  %v4935 = vpop.f32.mrf.mxu0
  %v4936 = vadd.f32 0.0, %v4935
  %v4937 = vpop.f32.mrf.mxu0
  %4938 = vmatprep.mubr.bf16.mxu0 %v3597
  %4939 = vmatmul.mubr.bf16.gmra.mxu0 %v3501
  %v4940 = vpop.f32.mrf.mxu0
  %v4941 = vadd.f32 0.0, %v4940
  %v4942 = vpop.f32.mrf.mxu0
  %v4943 = vpop.f32.mrf.mxu0
  %v4944 = vadd.f32 0.0, %v4943
  %v4945 = vpop.f32.mrf.mxu0
  %4946 = vmatprep.mubr.bf16.mxu0 %v3598
  %4947 = vmatmul.mubr.bf16.gmra.mxu0 %v3502
  %v4948 = vpop.f32.mrf.mxu0
  %v4949 = vadd.f32 0.0, %v4948
  %v4950 = vpop.f32.mrf.mxu0
  %v4951 = vpop.f32.mrf.mxu0
  %v4952 = vadd.f32 0.0, %v4951
  %v4953 = vpop.f32.mrf.mxu0
  %4954 = vmatprep.mubr.bf16.mxu0 %v3599
  %4955 = vmatmul.mubr.bf16.gmra.mxu0 %v3503
  %v4956 = vpop.f32.mrf.mxu0
  %v4957 = vadd.f32 0.0, %v4956
  %v4958 = vpop.f32.mrf.mxu0
  %v4959 = vpop.f32.mrf.mxu0
  %v4960 = vadd.f32 0.0, %v4959
  %v4961 = vpop.f32.mrf.mxu0
  %4962 = vmatprep.mubr.bf16.mxu0 %v3600
  %4963 = vmatmul.mubr.bf16.gmra.mxu0 %v3504
  %v4964 = vpop.f32.mrf.mxu0
  %v4965 = vadd.f32 0.0, %v4964
  %v4966 = vpop.f32.mrf.mxu0
  %v4967 = vpop.f32.mrf.mxu0
  %v4968 = vadd.f32 0.0, %v4967
  %v4969 = vpop.f32.mrf.mxu0
  %4970 = vmatprep.mubr.bf16.mxu0 %v3601
  %4971 = vmatmul.mubr.bf16.gmra.mxu0 %v3505
  %v4972 = vpop.f32.mrf.mxu0
  %v4973 = vadd.f32 0.0, %v4972
  %v4974 = vpop.f32.mrf.mxu0
  %v4975 = vpop.f32.mrf.mxu0
  %v4976 = vadd.f32 0.0, %v4975
  %v4977 = vpop.f32.mrf.mxu0
  %4978 = vmatprep.mubr.bf16.mxu0 %v3602
  %4979 = vmatmul.mubr.bf16.gmra.mxu0 %v3506
  %v4980 = vpop.f32.mrf.mxu0
  %v4981 = vadd.f32 0.0, %v4980
  %v4982 = vpop.f32.mrf.mxu0
  %v4983 = vpop.f32.mrf.mxu0
  %v4984 = vadd.f32 0.0, %v4983
  %v4985 = vpop.f32.mrf.mxu0
  %4986 = vmatprep.mubr.bf16.mxu0 %v3603
  %4987 = vmatmul.mubr.bf16.gmra.mxu0 %v3507
  %v4988 = vpop.f32.mrf.mxu0
  %v4989 = vadd.f32 0.0, %v4988
  %v4990 = vpop.f32.mrf.mxu0
  %v4991 = vpop.f32.mrf.mxu0
  %v4992 = vadd.f32 0.0, %v4991
  %v4993 = vpop.f32.mrf.mxu0
  %4994 = vmatprep.mubr.bf16.mxu0 %v3604
  %4995 = vmatmul.mubr.bf16.gmra.mxu0 %v3508
  %v4996 = vpop.f32.mrf.mxu0
  %v4997 = vadd.f32 0.0, %v4996
  %v4998 = vpop.f32.mrf.mxu0
  %v4999 = vpop.f32.mrf.mxu0
  %v5000 = vadd.f32 0.0, %v4999
  %v5001 = vpop.f32.mrf.mxu0
  %5002 = vmatprep.mubr.bf16.mxu0 %v3605
  %5003 = vmatmul.mubr.bf16.gmra.mxu0 %v3509
  %v5004 = vpop.f32.mrf.mxu0
  %v5005 = vadd.f32 0.0, %v5004
  %v5006 = vpop.f32.mrf.mxu0
  %v5007 = vpop.f32.mrf.mxu0
  %v5008 = vadd.f32 0.0, %v5007
  %v5009 = vpop.f32.mrf.mxu0
  %5010 = vmatprep.mubr.bf16.mxu0 %v3606
  %5011 = vmatmul.mubr.bf16.gmra.mxu0 %v3510
  %v5012 = vpop.f32.mrf.mxu0
  %v5013 = vadd.f32 0.0, %v5012
  %v5014 = vpop.f32.mrf.mxu0
  %v5015 = vpop.f32.mrf.mxu0
  %v5016 = vadd.f32 0.0, %v5015
  %v5017 = vpop.f32.mrf.mxu0
  %5018 = vmatprep.mubr.bf16.mxu0 %v3607
  %5019 = vmatmul.mubr.bf16.gmra.mxu0 %v3511
  %v5020 = vpop.f32.mrf.mxu0
  %v5021 = vadd.f32 0.0, %v5020
  %v5022 = vpop.f32.mrf.mxu0
  %v5023 = vpop.f32.mrf.mxu0
  %v5024 = vadd.f32 0.0, %v5023
  %v5025 = vpop.f32.mrf.mxu0
  %5026 = vmatprep.mubr.bf16.mxu0 %v3608
  %5027 = vmatmul.mubr.bf16.gmra.mxu0 %v3512
  %v5028 = vpop.f32.mrf.mxu0
  %v5029 = vadd.f32 0.0, %v5028
  %v5030 = vpop.f32.mrf.mxu0
  %v5031 = vpop.f32.mrf.mxu0
  %v5032 = vadd.f32 0.0, %v5031
  %v5033 = vpop.f32.mrf.mxu0
  %5034 = vmatprep.mubr.bf16.mxu0 %v3609
  %5035 = vmatmul.mubr.bf16.gmra.mxu0 %v3513
  %v5036 = vpop.f32.mrf.mxu0
  %v5037 = vadd.f32 0.0, %v5036
  %v5038 = vpop.f32.mrf.mxu0
  %v5039 = vpop.f32.mrf.mxu0
  %v5040 = vadd.f32 0.0, %v5039
  %v5041 = vpop.f32.mrf.mxu0
  %5042 = vmatprep.mubr.bf16.mxu0 %v3610
  %5043 = vmatmul.mubr.bf16.gmra.mxu0 %v3514
  %v5044 = vpop.f32.mrf.mxu0
  %v5045 = vadd.f32 0.0, %v5044
  %v5046 = vpop.f32.mrf.mxu0
  %v5047 = vpop.f32.mrf.mxu0
  %v5048 = vadd.f32 0.0, %v5047
  %v5049 = vpop.f32.mrf.mxu0
  %5050 = vmatprep.mubr.bf16.mxu0 %v3611
  %5051 = vmatmul.mubr.bf16.gmra.mxu0 %v3515
  %v5052 = vpop.f32.mrf.mxu0
  %v5053 = vadd.f32 0.0, %v5052
  %v5054 = vpop.f32.mrf.mxu0
  %v5055 = vpop.f32.mrf.mxu0
  %v5056 = vadd.f32 0.0, %v5055
  %v5057 = vpop.f32.mrf.mxu0
  %5058 = vmatprep.mubr.bf16.mxu0 %v3612
  %5059 = vmatmul.mubr.bf16.gmra.mxu0 %v3516
  %v5060 = vpop.f32.mrf.mxu0
  %v5061 = vadd.f32 0.0, %v5060
  %v5062 = vpop.f32.mrf.mxu0
  %v5063 = vpop.f32.mrf.mxu0
  %v5064 = vadd.f32 0.0, %v5063
  %v5065 = vpop.f32.mrf.mxu0
  %5066 = vmatprep.mubr.bf16.mxu0 %v3613
  %5067 = vmatmul.mubr.bf16.gmra.mxu0 %v3517
  %v5068 = vpop.f32.mrf.mxu0
  %v5069 = vadd.f32 0.0, %v5068
  %v5070 = vpop.f32.mrf.mxu0
  %v5071 = vpop.f32.mrf.mxu0
  %v5072 = vadd.f32 0.0, %v5071
  %v5073 = vpop.f32.mrf.mxu0
  %5074 = vmatprep.mubr.bf16.mxu0 %v3614
  %5075 = vmatmul.mubr.bf16.gmra.mxu0 %v3518
  %v5076 = vpop.f32.mrf.mxu0
  %v5077 = vadd.f32 0.0, %v5076
  %v5078 = vpop.f32.mrf.mxu0
  %v5079 = vpop.f32.mrf.mxu0
  %v5080 = vadd.f32 0.0, %v5079
  %v5081 = vpop.f32.mrf.mxu0
  %5082 = vmatprep.mubr.bf16.mxu0 %v3615
  %5083 = vmatmul.mubr.bf16.gmra.mxu0 %v3519
  %v5084 = vpop.f32.mrf.mxu0
  %v5085 = vadd.f32 0.0, %v5084
  %v5086 = vpop.f32.mrf.mxu0
  %v5087 = vpop.f32.mrf.mxu0
  %v5088 = vadd.f32 0.0, %v5087
  %v5089 = vpop.f32.mrf.mxu0
  %5090 = vmatprep.mubr.bf16.mxu0 %v3616
  %5091 = vmatmul.mubr.bf16.gmra.mxu0 %v3520
  %v5092 = vpop.f32.mrf.mxu0
  %v5093 = vadd.f32 0.0, %v5092
  %v5094 = vpop.f32.mrf.mxu0
  %v5095 = vpop.f32.mrf.mxu0
  %v5096 = vadd.f32 0.0, %v5095
  %v5097 = vpop.f32.mrf.mxu0
  %5098 = vmatprep.mubr.bf16.mxu0 %v3617
  %5099 = vmatmul.mubr.bf16.gmra.mxu0 %v3521
  %v5100 = vpop.f32.mrf.mxu0
  %v5101 = vadd.f32 0.0, %v5100
  %v5102 = vpop.f32.mrf.mxu0
  %v5103 = vpop.f32.mrf.mxu0
  %v5104 = vadd.f32 0.0, %v5103
  %v5105 = vpop.f32.mrf.mxu0
  %5106 = vmatprep.mubr.bf16.mxu0 %v3618
  %5107 = vmatmul.mubr.bf16.gmra.mxu0 %v3522
  %v5108 = vpop.f32.mrf.mxu0
  %v5109 = vadd.f32 0.0, %v5108
  %v5110 = vpop.f32.mrf.mxu0
  %v5111 = vpop.f32.mrf.mxu0
  %v5112 = vadd.f32 0.0, %v5111
  %v5113 = vpop.f32.mrf.mxu0
  %5114 = vmatprep.mubr.bf16.mxu0 %v3619
  %5115 = vmatmul.mubr.bf16.gmra.mxu0 %v3523
  %v5116 = vpop.f32.mrf.mxu0
  %v5117 = vadd.f32 0.0, %v5116
  %v5118 = vpop.f32.mrf.mxu0
  %v5119 = vpop.f32.mrf.mxu0
  %v5120 = vadd.f32 0.0, %v5119
  %v5121 = vpop.f32.mrf.mxu0
  %5122 = vmatprep.mubr.bf16.mxu0 %v3620
  %5123 = vmatmul.mubr.bf16.gmra.mxu0 %v3524
  %v5124 = vpop.f32.mrf.mxu0
  %v5125 = vadd.f32 0.0, %v5124
  %v5126 = vpop.f32.mrf.mxu0
  %v5127 = vpop.f32.mrf.mxu0
  %v5128 = vadd.f32 0.0, %v5127
  %v5129 = vpop.f32.mrf.mxu0
  %5130 = vmatprep.mubr.bf16.mxu0 %v3621
  %5131 = vmatmul.mubr.bf16.gmra.mxu0 %v3525
  %v5132 = vpop.f32.mrf.mxu0
  %v5133 = vadd.f32 0.0, %v5132
  %v5134 = vpop.f32.mrf.mxu0
  %v5135 = vpop.f32.mrf.mxu0
  %v5136 = vadd.f32 0.0, %v5135
  %v5137 = vpop.f32.mrf.mxu0
  %5138 = vmatprep.mubr.bf16.mxu0 %v3622
  %5139 = vmatmul.mubr.bf16.gmra.mxu0 %v3526
  %v5140 = vpop.f32.mrf.mxu0
  %v5141 = vadd.f32 0.0, %v5140
  %v5142 = vpop.f32.mrf.mxu0
  %v5143 = vpop.f32.mrf.mxu0
  %v5144 = vadd.f32 0.0, %v5143
  %v5145 = vpop.f32.mrf.mxu0
  %5146 = vmatprep.mubr.bf16.mxu0 %v3623
  %5147 = vmatmul.mubr.bf16.gmra.mxu0 %v3527
  %v5148 = vpop.f32.mrf.mxu0
  %v5149 = vadd.f32 0.0, %v5148
  %v5150 = vpop.f32.mrf.mxu0
  %v5151 = vpop.f32.mrf.mxu0
  %v5152 = vadd.f32 0.0, %v5151
  %v5153 = vpop.f32.mrf.mxu0
  %5154 = vmatprep.mubr.bf16.mxu0 %v3624
  %5155 = vmatmul.mubr.bf16.gmra.mxu0 %v3528
  %v5156 = vpop.f32.mrf.mxu0
  %v5157 = vadd.f32 0.0, %v5156
  %v5158 = vpop.f32.mrf.mxu0
  %v5159 = vpop.f32.mrf.mxu0
  %v5160 = vadd.f32 0.0, %v5159
  %v5161 = vpop.f32.mrf.mxu0
  %5162 = vdwg.mxu0
  %5163 = vmatprep.subr.bf16.mxu0 0
  %5164 = vmatpush1.bf16.msra.mxu0 %v4753
  %5165 = vmatprep.subr.bf16.mxu0 0
  %5166 = vmatpush1.bf16.msra.mxu0 %v4752
  %5167 = vmatprep.subr.bf16.mxu0 0
  %5168 = vmatpush1.bf16.msra.mxu0 %v4751
  %5169 = vmatprep.subr.bf16.mxu0 0
  %5170 = vmatpush1.bf16.msra.mxu0 %v4750
  %5171 = vmatprep.subr.bf16.mxu0 0
  %5172 = vmatpush1.bf16.msra.mxu0 %v4749
  %5173 = vmatprep.subr.bf16.mxu0 0
  %5174 = vmatpush1.bf16.msra.mxu0 %v4748
  %5175 = vmatprep.subr.bf16.mxu0 0
  %5176 = vmatpush1.bf16.msra.mxu0 %v4747
  %5177 = vmatprep.subr.bf16.mxu0 0
  %5178 = vmatpush1.bf16.msra.mxu0 %v4746
  %5179 = vmatprep.subr.bf16.mxu0 0
  %5180 = vmatpush2.bf16.msra.mxu0 %v4761
  %5181 = vmatprep.subr.bf16.mxu0 0
  %5182 = vmatpush2.bf16.msra.mxu0 %v4760
  %5183 = vmatprep.subr.bf16.mxu0 0
  %5184 = vmatpush2.bf16.msra.mxu0 %v4759
  %5185 = vmatprep.subr.bf16.mxu0 0
  %5186 = vmatpush2.bf16.msra.mxu0 %v4758
  %5187 = vmatprep.subr.bf16.mxu0 0
  %5188 = vmatpush2.bf16.msra.mxu0 %v4757
  %5189 = vmatprep.subr.bf16.mxu0 0
  %5190 = vmatpush2.bf16.msra.mxu0 %v4756
  %5191 = vmatprep.subr.bf16.mxu0 0
  %5192 = vmatpush2.bf16.msra.mxu0 %v4755
  %5193 = vmatprep.subr.bf16.mxu0 0
  %5194 = vmatpush2.bf16.msra.mxu0 %v4754
  %5195 = vmatprep.mubr.bf16.mxu0 %v3785
  %5196 = vmatmul.mubr.bf16.gmra.mxu0 %v3689
  %v5197 = vpop.f32.mrf.mxu0
  %v5198 = vadd.f32 %v4909, %v5197
  %v5199 = vpop.f32.mrf.mxu0
  %v5200 = vpop.f32.mrf.mxu0
  %v5201 = vadd.f32 %v4912, %v5200
  %v5202 = vpop.f32.mrf.mxu0
  %5203 = vmatprep.mubr.bf16.mxu0 %v3786
  %5204 = vmatmul.mubr.bf16.gmra.mxu0 %v3690
  %v5205 = vpop.f32.mrf.mxu0
  %v5206 = vadd.f32 %v4917, %v5205
  %v5207 = vpop.f32.mrf.mxu0
  %v5208 = vpop.f32.mrf.mxu0
  %v5209 = vadd.f32 %v4920, %v5208
  %v5210 = vpop.f32.mrf.mxu0
  %5211 = vmatprep.mubr.bf16.mxu0 %v3787
  %5212 = vmatmul.mubr.bf16.gmra.mxu0 %v3691
  %v5213 = vpop.f32.mrf.mxu0
  %v5214 = vadd.f32 %v4925, %v5213
  %v5215 = vpop.f32.mrf.mxu0
  %v5216 = vpop.f32.mrf.mxu0
  %v5217 = vadd.f32 %v4928, %v5216
  %v5218 = vpop.f32.mrf.mxu0
  %5219 = vmatprep.mubr.bf16.mxu0 %v3788
  %5220 = vmatmul.mubr.bf16.gmra.mxu0 %v3692
  %v5221 = vpop.f32.mrf.mxu0
  %v5222 = vadd.f32 %v4933, %v5221
  %v5223 = vpop.f32.mrf.mxu0
  %v5224 = vpop.f32.mrf.mxu0
  %v5225 = vadd.f32 %v4936, %v5224
  %v5226 = vpop.f32.mrf.mxu0
  %5227 = vmatprep.mubr.bf16.mxu0 %v3789
  %5228 = vmatmul.mubr.bf16.gmra.mxu0 %v3693
  %v5229 = vpop.f32.mrf.mxu0
  %v5230 = vadd.f32 %v4941, %v5229
  %v5231 = vpop.f32.mrf.mxu0
  %v5232 = vpop.f32.mrf.mxu0
  %v5233 = vadd.f32 %v4944, %v5232
  %v5234 = vpop.f32.mrf.mxu0
  %5235 = vmatprep.mubr.bf16.mxu0 %v3790
  %5236 = vmatmul.mubr.bf16.gmra.mxu0 %v3694
  %v5237 = vpop.f32.mrf.mxu0
  %v5238 = vadd.f32 %v4949, %v5237
  %v5239 = vpop.f32.mrf.mxu0
  %v5240 = vpop.f32.mrf.mxu0
  %v5241 = vadd.f32 %v4952, %v5240
  %v5242 = vpop.f32.mrf.mxu0
  %5243 = vmatprep.mubr.bf16.mxu0 %v3791
  %5244 = vmatmul.mubr.bf16.gmra.mxu0 %v3695
  %v5245 = vpop.f32.mrf.mxu0
  %v5246 = vadd.f32 %v4957, %v5245
  %v5247 = vpop.f32.mrf.mxu0
  %v5248 = vpop.f32.mrf.mxu0
  %v5249 = vadd.f32 %v4960, %v5248
  %v5250 = vpop.f32.mrf.mxu0
  %5251 = vmatprep.mubr.bf16.mxu0 %v3792
  %5252 = vmatmul.mubr.bf16.gmra.mxu0 %v3696
  %v5253 = vpop.f32.mrf.mxu0
  %v5254 = vadd.f32 %v4965, %v5253
  %v5255 = vpop.f32.mrf.mxu0
  %v5256 = vpop.f32.mrf.mxu0
  %v5257 = vadd.f32 %v4968, %v5256
  %v5258 = vpop.f32.mrf.mxu0
  %5259 = vmatprep.mubr.bf16.mxu0 %v3793
  %5260 = vmatmul.mubr.bf16.gmra.mxu0 %v3697
  %v5261 = vpop.f32.mrf.mxu0
  %v5262 = vadd.f32 %v4973, %v5261
  %v5263 = vpop.f32.mrf.mxu0
  %v5264 = vpop.f32.mrf.mxu0
  %v5265 = vadd.f32 %v4976, %v5264
  %v5266 = vpop.f32.mrf.mxu0
  %5267 = vmatprep.mubr.bf16.mxu0 %v3794
  %5268 = vmatmul.mubr.bf16.gmra.mxu0 %v3698
  %v5269 = vpop.f32.mrf.mxu0
  %v5270 = vadd.f32 %v4981, %v5269
  %v5271 = vpop.f32.mrf.mxu0
  %v5272 = vpop.f32.mrf.mxu0
  %v5273 = vadd.f32 %v4984, %v5272
  %v5274 = vpop.f32.mrf.mxu0
  %5275 = vmatprep.mubr.bf16.mxu0 %v3795
  %5276 = vmatmul.mubr.bf16.gmra.mxu0 %v3699
  %v5277 = vpop.f32.mrf.mxu0
  %v5278 = vadd.f32 %v4989, %v5277
  %v5279 = vpop.f32.mrf.mxu0
  %v5280 = vpop.f32.mrf.mxu0
  %v5281 = vadd.f32 %v4992, %v5280
  %v5282 = vpop.f32.mrf.mxu0
  %5283 = vmatprep.mubr.bf16.mxu0 %v3796
  %5284 = vmatmul.mubr.bf16.gmra.mxu0 %v3700
  %v5285 = vpop.f32.mrf.mxu0
  %v5286 = vadd.f32 %v4997, %v5285
  %v5287 = vpop.f32.mrf.mxu0
  %v5288 = vpop.f32.mrf.mxu0
  %v5289 = vadd.f32 %v5000, %v5288
  %v5290 = vpop.f32.mrf.mxu0
  %5291 = vmatprep.mubr.bf16.mxu0 %v3797
  %5292 = vmatmul.mubr.bf16.gmra.mxu0 %v3701
  %v5293 = vpop.f32.mrf.mxu0
  %v5294 = vadd.f32 %v5005, %v5293
  %v5295 = vpop.f32.mrf.mxu0
  %v5296 = vpop.f32.mrf.mxu0
  %v5297 = vadd.f32 %v5008, %v5296
  %v5298 = vpop.f32.mrf.mxu0
  %5299 = vmatprep.mubr.bf16.mxu0 %v3798
  %5300 = vmatmul.mubr.bf16.gmra.mxu0 %v3702
  %v5301 = vpop.f32.mrf.mxu0
  %v5302 = vadd.f32 %v5013, %v5301
  %v5303 = vpop.f32.mrf.mxu0
  %v5304 = vpop.f32.mrf.mxu0
  %v5305 = vadd.f32 %v5016, %v5304
  %v5306 = vpop.f32.mrf.mxu0
  %5307 = vmatprep.mubr.bf16.mxu0 %v3799
  %5308 = vmatmul.mubr.bf16.gmra.mxu0 %v3703
  %v5309 = vpop.f32.mrf.mxu0
  %v5310 = vadd.f32 %v5021, %v5309
  %v5311 = vpop.f32.mrf.mxu0
  %v5312 = vpop.f32.mrf.mxu0
  %v5313 = vadd.f32 %v5024, %v5312
  %v5314 = vpop.f32.mrf.mxu0
  %5315 = vmatprep.mubr.bf16.mxu0 %v3800
  %5316 = vmatmul.mubr.bf16.gmra.mxu0 %v3704
  %v5317 = vpop.f32.mrf.mxu0
  %v5318 = vadd.f32 %v5029, %v5317
  %v5319 = vpop.f32.mrf.mxu0
  %v5320 = vpop.f32.mrf.mxu0
  %v5321 = vadd.f32 %v5032, %v5320
  %v5322 = vpop.f32.mrf.mxu0
  %5323 = vmatprep.mubr.bf16.mxu0 %v3801
  %5324 = vmatmul.mubr.bf16.gmra.mxu0 %v3705
  %v5325 = vpop.f32.mrf.mxu0
  %v5326 = vadd.f32 %v5037, %v5325
  %v5327 = vpop.f32.mrf.mxu0
  %v5328 = vpop.f32.mrf.mxu0
  %v5329 = vadd.f32 %v5040, %v5328
  %v5330 = vpop.f32.mrf.mxu0
  %5331 = vmatprep.mubr.bf16.mxu0 %v3802
  %5332 = vmatmul.mubr.bf16.gmra.mxu0 %v3706
  %v5333 = vpop.f32.mrf.mxu0
  %v5334 = vadd.f32 %v5045, %v5333
  %v5335 = vpop.f32.mrf.mxu0
  %v5336 = vpop.f32.mrf.mxu0
  %v5337 = vadd.f32 %v5048, %v5336
  %v5338 = vpop.f32.mrf.mxu0
  %5339 = vmatprep.mubr.bf16.mxu0 %v3803
  %5340 = vmatmul.mubr.bf16.gmra.mxu0 %v3707
  %v5341 = vpop.f32.mrf.mxu0
  %v5342 = vadd.f32 %v5053, %v5341
  %v5343 = vpop.f32.mrf.mxu0
  %v5344 = vpop.f32.mrf.mxu0
  %v5345 = vadd.f32 %v5056, %v5344
  %v5346 = vpop.f32.mrf.mxu0
  %5347 = vmatprep.mubr.bf16.mxu0 %v3804
  %5348 = vmatmul.mubr.bf16.gmra.mxu0 %v3708
  %v5349 = vpop.f32.mrf.mxu0
  %v5350 = vadd.f32 %v5061, %v5349
  %v5351 = vpop.f32.mrf.mxu0
  %v5352 = vpop.f32.mrf.mxu0
  %v5353 = vadd.f32 %v5064, %v5352
  %v5354 = vpop.f32.mrf.mxu0
  %5355 = vmatprep.mubr.bf16.mxu0 %v3805
  %5356 = vmatmul.mubr.bf16.gmra.mxu0 %v3709
  %v5357 = vpop.f32.mrf.mxu0
  %v5358 = vadd.f32 %v5069, %v5357
  %v5359 = vpop.f32.mrf.mxu0
  %v5360 = vpop.f32.mrf.mxu0
  %v5361 = vadd.f32 %v5072, %v5360
  %v5362 = vpop.f32.mrf.mxu0
  %5363 = vmatprep.mubr.bf16.mxu0 %v3806
  %5364 = vmatmul.mubr.bf16.gmra.mxu0 %v3710
  %v5365 = vpop.f32.mrf.mxu0
  %v5366 = vadd.f32 %v5077, %v5365
  %v5367 = vpop.f32.mrf.mxu0
  %v5368 = vpop.f32.mrf.mxu0
  %v5369 = vadd.f32 %v5080, %v5368
  %v5370 = vpop.f32.mrf.mxu0
  %5371 = vmatprep.mubr.bf16.mxu0 %v3807
  %5372 = vmatmul.mubr.bf16.gmra.mxu0 %v3711
  %v5373 = vpop.f32.mrf.mxu0
  %v5374 = vadd.f32 %v5085, %v5373
  %v5375 = vpop.f32.mrf.mxu0
  %v5376 = vpop.f32.mrf.mxu0
  %v5377 = vadd.f32 %v5088, %v5376
  %v5378 = vpop.f32.mrf.mxu0
  %5379 = vmatprep.mubr.bf16.mxu0 %v3808
  %5380 = vmatmul.mubr.bf16.gmra.mxu0 %v3712
  %v5381 = vpop.f32.mrf.mxu0
  %v5382 = vadd.f32 %v5093, %v5381
  %v5383 = vpop.f32.mrf.mxu0
  %v5384 = vpop.f32.mrf.mxu0
  %v5385 = vadd.f32 %v5096, %v5384
  %v5386 = vpop.f32.mrf.mxu0
  %5387 = vmatprep.mubr.bf16.mxu0 %v3809
  %5388 = vmatmul.mubr.bf16.gmra.mxu0 %v3713
  %v5389 = vpop.f32.mrf.mxu0
  %v5390 = vadd.f32 %v5101, %v5389
  %v5391 = vpop.f32.mrf.mxu0
  %v5392 = vpop.f32.mrf.mxu0
  %v5393 = vadd.f32 %v5104, %v5392
  %v5394 = vpop.f32.mrf.mxu0
  %5395 = vmatprep.mubr.bf16.mxu0 %v3810
  %5396 = vmatmul.mubr.bf16.gmra.mxu0 %v3714
  %v5397 = vpop.f32.mrf.mxu0
  %v5398 = vadd.f32 %v5109, %v5397
  %v5399 = vpop.f32.mrf.mxu0
  %v5400 = vpop.f32.mrf.mxu0
  %v5401 = vadd.f32 %v5112, %v5400
  %v5402 = vpop.f32.mrf.mxu0
  %5403 = vmatprep.mubr.bf16.mxu0 %v3811
  %5404 = vmatmul.mubr.bf16.gmra.mxu0 %v3715
  %v5405 = vpop.f32.mrf.mxu0
  %v5406 = vadd.f32 %v5117, %v5405
  %v5407 = vpop.f32.mrf.mxu0
  %v5408 = vpop.f32.mrf.mxu0
  %v5409 = vadd.f32 %v5120, %v5408
  %v5410 = vpop.f32.mrf.mxu0
  %5411 = vmatprep.mubr.bf16.mxu0 %v3812
  %5412 = vmatmul.mubr.bf16.gmra.mxu0 %v3716
  %v5413 = vpop.f32.mrf.mxu0
  %v5414 = vadd.f32 %v5125, %v5413
  %v5415 = vpop.f32.mrf.mxu0
  %v5416 = vpop.f32.mrf.mxu0
  %v5417 = vadd.f32 %v5128, %v5416
  %v5418 = vpop.f32.mrf.mxu0
  %5419 = vmatprep.mubr.bf16.mxu0 %v3813
  %5420 = vmatmul.mubr.bf16.gmra.mxu0 %v3717
  %v5421 = vpop.f32.mrf.mxu0
  %v5422 = vadd.f32 %v5133, %v5421
  %v5423 = vpop.f32.mrf.mxu0
  %v5424 = vpop.f32.mrf.mxu0
  %v5425 = vadd.f32 %v5136, %v5424
  %v5426 = vpop.f32.mrf.mxu0
  %5427 = vmatprep.mubr.bf16.mxu0 %v3814
  %5428 = vmatmul.mubr.bf16.gmra.mxu0 %v3718
  %v5429 = vpop.f32.mrf.mxu0
  %v5430 = vadd.f32 %v5141, %v5429
  %v5431 = vpop.f32.mrf.mxu0
  %v5432 = vpop.f32.mrf.mxu0
  %v5433 = vadd.f32 %v5144, %v5432
  %v5434 = vpop.f32.mrf.mxu0
  %5435 = vmatprep.mubr.bf16.mxu0 %v3815
  %5436 = vmatmul.mubr.bf16.gmra.mxu0 %v3719
  %v5437 = vpop.f32.mrf.mxu0
  %v5438 = vadd.f32 %v5149, %v5437
  %v5439 = vpop.f32.mrf.mxu0
  %v5440 = vpop.f32.mrf.mxu0
  %v5441 = vadd.f32 %v5152, %v5440
  %v5442 = vpop.f32.mrf.mxu0
  %5443 = vmatprep.mubr.bf16.mxu0 %v3816
  %5444 = vmatmul.mubr.bf16.gmra.mxu0 %v3720
  %v5445 = vpop.f32.mrf.mxu0
  %v5446 = vadd.f32 %v5157, %v5445
  %v5447 = vpop.f32.mrf.mxu0
  %v5448 = vpop.f32.mrf.mxu0
  %v5449 = vadd.f32 %v5160, %v5448
  %v5450 = vpop.f32.mrf.mxu0
  %5451 = vdwg.mxu0
  %5452 = vmatprep.subr.bf16.mxu0 0
  %5453 = vmatpush1.bf16.msra.mxu0 %v4769
  %5454 = vmatprep.subr.bf16.mxu0 0
  %5455 = vmatpush1.bf16.msra.mxu0 %v4768
  %5456 = vmatprep.subr.bf16.mxu0 0
  %5457 = vmatpush1.bf16.msra.mxu0 %v4767
  %5458 = vmatprep.subr.bf16.mxu0 0
  %5459 = vmatpush1.bf16.msra.mxu0 %v4766
  %5460 = vmatprep.subr.bf16.mxu0 0
  %5461 = vmatpush1.bf16.msra.mxu0 %v4765
  %5462 = vmatprep.subr.bf16.mxu0 0
  %5463 = vmatpush1.bf16.msra.mxu0 %v4764
  %5464 = vmatprep.subr.bf16.mxu0 0
  %5465 = vmatpush1.bf16.msra.mxu0 %v4763
  %5466 = vmatprep.subr.bf16.mxu0 0
  %5467 = vmatpush1.bf16.msra.mxu0 %v4762
  %5468 = vmatprep.subr.bf16.mxu0 0
  %5469 = vmatpush2.bf16.msra.mxu0 %v4777
  %5470 = vmatprep.subr.bf16.mxu0 0
  %5471 = vmatpush2.bf16.msra.mxu0 %v4776
  %5472 = vmatprep.subr.bf16.mxu0 0
  %5473 = vmatpush2.bf16.msra.mxu0 %v4775
  %5474 = vmatprep.subr.bf16.mxu0 0
  %5475 = vmatpush2.bf16.msra.mxu0 %v4774
  %5476 = vmatprep.subr.bf16.mxu0 0
  %5477 = vmatpush2.bf16.msra.mxu0 %v4773
  %5478 = vmatprep.subr.bf16.mxu0 0
  %5479 = vmatpush2.bf16.msra.mxu0 %v4772
  %5480 = vmatprep.subr.bf16.mxu0 0
  %5481 = vmatpush2.bf16.msra.mxu0 %v4771
  %5482 = vmatprep.subr.bf16.mxu0 0
  %5483 = vmatpush2.bf16.msra.mxu0 %v4770
  %5484 = vmatprep.mubr.bf16.mxu0 %v3977
  %5485 = vmatmul.mubr.bf16.gmra.mxu0 %v3881
  %v5486 = vpop.f32.mrf.mxu0
  %v5487 = vadd.f32 %v5198, %v5486
  %v5488 = vpop.f32.mrf.mxu0
  %v5489 = vpop.f32.mrf.mxu0
  %v5490 = vadd.f32 %v5201, %v5489
  %v5491 = vpop.f32.mrf.mxu0
  %5492 = vmatprep.mubr.bf16.mxu0 %v3978
  %5493 = vmatmul.mubr.bf16.gmra.mxu0 %v3882
  %v5494 = vpop.f32.mrf.mxu0
  %v5495 = vadd.f32 %v5206, %v5494
  %v5496 = vpop.f32.mrf.mxu0
  %v5497 = vpop.f32.mrf.mxu0
  %v5498 = vadd.f32 %v5209, %v5497
  %v5499 = vpop.f32.mrf.mxu0
  %5500 = vmatprep.mubr.bf16.mxu0 %v3979
  %5501 = vmatmul.mubr.bf16.gmra.mxu0 %v3883
  %v5502 = vpop.f32.mrf.mxu0
  %v5503 = vadd.f32 %v5214, %v5502
  %v5504 = vpop.f32.mrf.mxu0
  %v5505 = vpop.f32.mrf.mxu0
  %v5506 = vadd.f32 %v5217, %v5505
  %v5507 = vpop.f32.mrf.mxu0
  %5508 = vmatprep.mubr.bf16.mxu0 %v3980
  %5509 = vmatmul.mubr.bf16.gmra.mxu0 %v3884
  %v5510 = vpop.f32.mrf.mxu0
  %v5511 = vadd.f32 %v5222, %v5510
  %v5512 = vpop.f32.mrf.mxu0
  %v5513 = vpop.f32.mrf.mxu0
  %v5514 = vadd.f32 %v5225, %v5513
  %v5515 = vpop.f32.mrf.mxu0
  %5516 = vmatprep.mubr.bf16.mxu0 %v3981
  %5517 = vmatmul.mubr.bf16.gmra.mxu0 %v3885
  %v5518 = vpop.f32.mrf.mxu0
  %v5519 = vadd.f32 %v5230, %v5518
  %v5520 = vpop.f32.mrf.mxu0
  %v5521 = vpop.f32.mrf.mxu0
  %v5522 = vadd.f32 %v5233, %v5521
  %v5523 = vpop.f32.mrf.mxu0
  %5524 = vmatprep.mubr.bf16.mxu0 %v3982
  %5525 = vmatmul.mubr.bf16.gmra.mxu0 %v3886
  %v5526 = vpop.f32.mrf.mxu0
  %v5527 = vadd.f32 %v5238, %v5526
  %v5528 = vpop.f32.mrf.mxu0
  %v5529 = vpop.f32.mrf.mxu0
  %v5530 = vadd.f32 %v5241, %v5529
  %v5531 = vpop.f32.mrf.mxu0
  %5532 = vmatprep.mubr.bf16.mxu0 %v3983
  %5533 = vmatmul.mubr.bf16.gmra.mxu0 %v3887
  %v5534 = vpop.f32.mrf.mxu0
  %v5535 = vadd.f32 %v5246, %v5534
  %v5536 = vpop.f32.mrf.mxu0
  %v5537 = vpop.f32.mrf.mxu0
  %v5538 = vadd.f32 %v5249, %v5537
  %v5539 = vpop.f32.mrf.mxu0
  %5540 = vmatprep.mubr.bf16.mxu0 %v3984
  %5541 = vmatmul.mubr.bf16.gmra.mxu0 %v3888
  %v5542 = vpop.f32.mrf.mxu0
  %v5543 = vadd.f32 %v5254, %v5542
  %v5544 = vpop.f32.mrf.mxu0
  %v5545 = vpop.f32.mrf.mxu0
  %v5546 = vadd.f32 %v5257, %v5545
  %v5547 = vpop.f32.mrf.mxu0
  %5548 = vmatprep.mubr.bf16.mxu0 %v3985
  %5549 = vmatmul.mubr.bf16.gmra.mxu0 %v3889
  %v5550 = vpop.f32.mrf.mxu0
  %v5551 = vadd.f32 %v5262, %v5550
  %v5552 = vpop.f32.mrf.mxu0
  %v5553 = vpop.f32.mrf.mxu0
  %v5554 = vadd.f32 %v5265, %v5553
  %v5555 = vpop.f32.mrf.mxu0
  %5556 = vmatprep.mubr.bf16.mxu0 %v3986
  %5557 = vmatmul.mubr.bf16.gmra.mxu0 %v3890
  %v5558 = vpop.f32.mrf.mxu0
  %v5559 = vadd.f32 %v5270, %v5558
  %v5560 = vpop.f32.mrf.mxu0
  %v5561 = vpop.f32.mrf.mxu0
  %v5562 = vadd.f32 %v5273, %v5561
  %v5563 = vpop.f32.mrf.mxu0
  %5564 = vmatprep.mubr.bf16.mxu0 %v3987
  %5565 = vmatmul.mubr.bf16.gmra.mxu0 %v3891
  %v5566 = vpop.f32.mrf.mxu0
  %v5567 = vadd.f32 %v5278, %v5566
  %v5568 = vpop.f32.mrf.mxu0
  %v5569 = vpop.f32.mrf.mxu0
  %v5570 = vadd.f32 %v5281, %v5569
  %v5571 = vpop.f32.mrf.mxu0
  %5572 = vmatprep.mubr.bf16.mxu0 %v3988
  %5573 = vmatmul.mubr.bf16.gmra.mxu0 %v3892
  %v5574 = vpop.f32.mrf.mxu0
  %v5575 = vadd.f32 %v5286, %v5574
  %v5576 = vpop.f32.mrf.mxu0
  %v5577 = vpop.f32.mrf.mxu0
  %v5578 = vadd.f32 %v5289, %v5577
  %v5579 = vpop.f32.mrf.mxu0
  %5580 = vmatprep.mubr.bf16.mxu0 %v3989
  %5581 = vmatmul.mubr.bf16.gmra.mxu0 %v3893
  %v5582 = vpop.f32.mrf.mxu0
  %v5583 = vadd.f32 %v5294, %v5582
  %v5584 = vpop.f32.mrf.mxu0
  %v5585 = vpop.f32.mrf.mxu0
  %v5586 = vadd.f32 %v5297, %v5585
  %v5587 = vpop.f32.mrf.mxu0
  %5588 = vmatprep.mubr.bf16.mxu0 %v3990
  %5589 = vmatmul.mubr.bf16.gmra.mxu0 %v3894
  %v5590 = vpop.f32.mrf.mxu0
  %v5591 = vadd.f32 %v5302, %v5590
  %v5592 = vpop.f32.mrf.mxu0
  %v5593 = vpop.f32.mrf.mxu0
  %v5594 = vadd.f32 %v5305, %v5593
  %v5595 = vpop.f32.mrf.mxu0
  %5596 = vmatprep.mubr.bf16.mxu0 %v3991
  %5597 = vmatmul.mubr.bf16.gmra.mxu0 %v3895
  %v5598 = vpop.f32.mrf.mxu0
  %v5599 = vadd.f32 %v5310, %v5598
  %v5600 = vpop.f32.mrf.mxu0
  %v5601 = vpop.f32.mrf.mxu0
  %v5602 = vadd.f32 %v5313, %v5601
  %v5603 = vpop.f32.mrf.mxu0
  %5604 = vmatprep.mubr.bf16.mxu0 %v3992
  %5605 = vmatmul.mubr.bf16.gmra.mxu0 %v3896
  %v5606 = vpop.f32.mrf.mxu0
  %v5607 = vadd.f32 %v5318, %v5606
  %v5608 = vpop.f32.mrf.mxu0
  %v5609 = vpop.f32.mrf.mxu0
  %v5610 = vadd.f32 %v5321, %v5609
  %v5611 = vpop.f32.mrf.mxu0
  %5612 = vmatprep.mubr.bf16.mxu0 %v3993
  %5613 = vmatmul.mubr.bf16.gmra.mxu0 %v3897
  %v5614 = vpop.f32.mrf.mxu0
  %v5615 = vadd.f32 %v5326, %v5614
  %v5616 = vpop.f32.mrf.mxu0
  %v5617 = vpop.f32.mrf.mxu0
  %v5618 = vadd.f32 %v5329, %v5617
  %v5619 = vpop.f32.mrf.mxu0
  %5620 = vmatprep.mubr.bf16.mxu0 %v3994
  %5621 = vmatmul.mubr.bf16.gmra.mxu0 %v3898
  %v5622 = vpop.f32.mrf.mxu0
  %v5623 = vadd.f32 %v5334, %v5622
  %v5624 = vpop.f32.mrf.mxu0
  %v5625 = vpop.f32.mrf.mxu0
  %v5626 = vadd.f32 %v5337, %v5625
  %v5627 = vpop.f32.mrf.mxu0
  %5628 = vmatprep.mubr.bf16.mxu0 %v3995
  %5629 = vmatmul.mubr.bf16.gmra.mxu0 %v3899
  %v5630 = vpop.f32.mrf.mxu0
  %v5631 = vadd.f32 %v5342, %v5630
  %v5632 = vpop.f32.mrf.mxu0
  %v5633 = vpop.f32.mrf.mxu0
  %v5634 = vadd.f32 %v5345, %v5633
  %v5635 = vpop.f32.mrf.mxu0
  %5636 = vmatprep.mubr.bf16.mxu0 %v3996
  %5637 = vmatmul.mubr.bf16.gmra.mxu0 %v3900
  %v5638 = vpop.f32.mrf.mxu0
  %v5639 = vadd.f32 %v5350, %v5638
  %v5640 = vpop.f32.mrf.mxu0
  %v5641 = vpop.f32.mrf.mxu0
  %v5642 = vadd.f32 %v5353, %v5641
  %v5643 = vpop.f32.mrf.mxu0
  %5644 = vmatprep.mubr.bf16.mxu0 %v3997
  %5645 = vmatmul.mubr.bf16.gmra.mxu0 %v3901
  %v5646 = vpop.f32.mrf.mxu0
  %v5647 = vadd.f32 %v5358, %v5646
  %v5648 = vpop.f32.mrf.mxu0
  %v5649 = vpop.f32.mrf.mxu0
  %v5650 = vadd.f32 %v5361, %v5649
  %v5651 = vpop.f32.mrf.mxu0
  %5652 = vmatprep.mubr.bf16.mxu0 %v3998
  %5653 = vmatmul.mubr.bf16.gmra.mxu0 %v3902
  %v5654 = vpop.f32.mrf.mxu0
  %v5655 = vadd.f32 %v5366, %v5654
  %v5656 = vpop.f32.mrf.mxu0
  %v5657 = vpop.f32.mrf.mxu0
  %v5658 = vadd.f32 %v5369, %v5657
  %v5659 = vpop.f32.mrf.mxu0
  %5660 = vmatprep.mubr.bf16.mxu0 %v3999
  %5661 = vmatmul.mubr.bf16.gmra.mxu0 %v3903
  %v5662 = vpop.f32.mrf.mxu0
  %v5663 = vadd.f32 %v5374, %v5662
  %v5664 = vpop.f32.mrf.mxu0
  %v5665 = vpop.f32.mrf.mxu0
  %v5666 = vadd.f32 %v5377, %v5665
  %v5667 = vpop.f32.mrf.mxu0
  %5668 = vmatprep.mubr.bf16.mxu0 %v4000
  %5669 = vmatmul.mubr.bf16.gmra.mxu0 %v3904
  %v5670 = vpop.f32.mrf.mxu0
  %v5671 = vadd.f32 %v5382, %v5670
  %v5672 = vpop.f32.mrf.mxu0
  %v5673 = vpop.f32.mrf.mxu0
  %v5674 = vadd.f32 %v5385, %v5673
  %v5675 = vpop.f32.mrf.mxu0
  %5676 = vmatprep.mubr.bf16.mxu0 %v4001
  %5677 = vmatmul.mubr.bf16.gmra.mxu0 %v3905
  %v5678 = vpop.f32.mrf.mxu0
  %v5679 = vadd.f32 %v5390, %v5678
  %v5680 = vpop.f32.mrf.mxu0
  %v5681 = vpop.f32.mrf.mxu0
  %v5682 = vadd.f32 %v5393, %v5681
  %v5683 = vpop.f32.mrf.mxu0
  %5684 = vmatprep.mubr.bf16.mxu0 %v4002
  %5685 = vmatmul.mubr.bf16.gmra.mxu0 %v3906
  %v5686 = vpop.f32.mrf.mxu0
  %v5687 = vadd.f32 %v5398, %v5686
  %v5688 = vpop.f32.mrf.mxu0
  %v5689 = vpop.f32.mrf.mxu0
  %v5690 = vadd.f32 %v5401, %v5689
  %v5691 = vpop.f32.mrf.mxu0
  %5692 = vmatprep.mubr.bf16.mxu0 %v4003
  %5693 = vmatmul.mubr.bf16.gmra.mxu0 %v3907
  %v5694 = vpop.f32.mrf.mxu0
  %v5695 = vadd.f32 %v5406, %v5694
  %v5696 = vpop.f32.mrf.mxu0
  %v5697 = vpop.f32.mrf.mxu0
  %v5698 = vadd.f32 %v5409, %v5697
  %v5699 = vpop.f32.mrf.mxu0
  %5700 = vmatprep.mubr.bf16.mxu0 %v4004
  %5701 = vmatmul.mubr.bf16.gmra.mxu0 %v3908
  %v5702 = vpop.f32.mrf.mxu0
  %v5703 = vadd.f32 %v5414, %v5702
  %v5704 = vpop.f32.mrf.mxu0
  %v5705 = vpop.f32.mrf.mxu0
  %v5706 = vadd.f32 %v5417, %v5705
  %v5707 = vpop.f32.mrf.mxu0
  %5708 = vmatprep.mubr.bf16.mxu0 %v4005
  %5709 = vmatmul.mubr.bf16.gmra.mxu0 %v3909
  %v5710 = vpop.f32.mrf.mxu0
  %v5711 = vadd.f32 %v5422, %v5710
  %v5712 = vpop.f32.mrf.mxu0
  %v5713 = vpop.f32.mrf.mxu0
  %v5714 = vadd.f32 %v5425, %v5713
  %v5715 = vpop.f32.mrf.mxu0
  %5716 = vmatprep.mubr.bf16.mxu0 %v4006
  %5717 = vmatmul.mubr.bf16.gmra.mxu0 %v3910
  %v5718 = vpop.f32.mrf.mxu0
  %v5719 = vadd.f32 %v5430, %v5718
  %v5720 = vpop.f32.mrf.mxu0
  %v5721 = vpop.f32.mrf.mxu0
  %v5722 = vadd.f32 %v5433, %v5721
  %v5723 = vpop.f32.mrf.mxu0
  %5724 = vmatprep.mubr.bf16.mxu0 %v4007
  %5725 = vmatmul.mubr.bf16.gmra.mxu0 %v3911
  %v5726 = vpop.f32.mrf.mxu0
  %v5727 = vadd.f32 %v5438, %v5726
  %v5728 = vpop.f32.mrf.mxu0
  %v5729 = vpop.f32.mrf.mxu0
  %v5730 = vadd.f32 %v5441, %v5729
  %v5731 = vpop.f32.mrf.mxu0
  %5732 = vmatprep.mubr.bf16.mxu0 %v4008
  %5733 = vmatmul.mubr.bf16.gmra.mxu0 %v3912
  %v5734 = vpop.f32.mrf.mxu0
  %v5735 = vadd.f32 %v5446, %v5734
  %v5736 = vpop.f32.mrf.mxu0
  %v5737 = vpop.f32.mrf.mxu0
  %v5738 = vadd.f32 %v5449, %v5737
  %v5739 = vpop.f32.mrf.mxu0
  %5740 = vdwg.mxu0
  %5741 = vmatprep.subr.bf16.mxu0 0
  %5742 = vmatpush1.bf16.msra.mxu0 %v4785
  %5743 = vmatprep.subr.bf16.mxu0 0
  %5744 = vmatpush1.bf16.msra.mxu0 %v4784
  %5745 = vmatprep.subr.bf16.mxu0 0
  %5746 = vmatpush1.bf16.msra.mxu0 %v4783
  %5747 = vmatprep.subr.bf16.mxu0 0
  %5748 = vmatpush1.bf16.msra.mxu0 %v4782
  %5749 = vmatprep.subr.bf16.mxu0 0
  %5750 = vmatpush1.bf16.msra.mxu0 %v4781
  %5751 = vmatprep.subr.bf16.mxu0 0
  %5752 = vmatpush1.bf16.msra.mxu0 %v4780
  %5753 = vmatprep.subr.bf16.mxu0 0
  %5754 = vmatpush1.bf16.msra.mxu0 %v4779
  %5755 = vmatprep.subr.bf16.mxu0 0
  %5756 = vmatpush1.bf16.msra.mxu0 %v4778
  %5757 = vmatprep.subr.bf16.mxu0 0
  %5758 = vmatpush2.bf16.msra.mxu0 %v4793
  %5759 = vmatprep.subr.bf16.mxu0 0
  %5760 = vmatpush2.bf16.msra.mxu0 %v4792
  %5761 = vmatprep.subr.bf16.mxu0 0
  %5762 = vmatpush2.bf16.msra.mxu0 %v4791
  %5763 = vmatprep.subr.bf16.mxu0 0
  %5764 = vmatpush2.bf16.msra.mxu0 %v4790
  %5765 = vmatprep.subr.bf16.mxu0 0
  %5766 = vmatpush2.bf16.msra.mxu0 %v4789
  %5767 = vmatprep.subr.bf16.mxu0 0
  %5768 = vmatpush2.bf16.msra.mxu0 %v4788
  %5769 = vmatprep.subr.bf16.mxu0 0
  %5770 = vmatpush2.bf16.msra.mxu0 %v4787
  %5771 = vmatprep.subr.bf16.mxu0 0
  %5772 = vmatpush2.bf16.msra.mxu0 %v4786
  %5773 = vmatprep.mubr.bf16.mxu0 %v4170
  %5774 = vmatmul.mubr.bf16.gmra.mxu0 %v4074
  %v5775 = vpop.f32.mrf.mxu0
  %v5776 = vadd.f32 %v5487, %v5775
  %v5777 = vpop.f32.mrf.mxu0
  %v5778 = vpop.f32.mrf.mxu0
  %v5779 = vadd.f32 %v5490, %v5778
  %v5780 = vpop.f32.mrf.mxu0
  %5781 = vmatprep.mubr.bf16.mxu0 %v4171
  %5782 = vmatmul.mubr.bf16.gmra.mxu0 %v4075
  %v5783 = vpop.f32.mrf.mxu0
  %v5784 = vadd.f32 %v5495, %v5783
  %v5785 = vpop.f32.mrf.mxu0
  %v5786 = vpop.f32.mrf.mxu0
  %v5787 = vadd.f32 %v5498, %v5786
  %v5788 = vpop.f32.mrf.mxu0
  %5789 = vmatprep.mubr.bf16.mxu0 %v4172
  %5790 = vmatmul.mubr.bf16.gmra.mxu0 %v4076
  %v5791 = vpop.f32.mrf.mxu0
  %v5792 = vadd.f32 %v5503, %v5791
  %v5793 = vpop.f32.mrf.mxu0
  %v5794 = vpop.f32.mrf.mxu0
  %v5795 = vadd.f32 %v5506, %v5794
  %v5796 = vpop.f32.mrf.mxu0
  %5797 = vmatprep.mubr.bf16.mxu0 %v4173
  %5798 = vmatmul.mubr.bf16.gmra.mxu0 %v4077
  %v5799 = vpop.f32.mrf.mxu0
  %v5800 = vadd.f32 %v5511, %v5799
  %v5801 = vpop.f32.mrf.mxu0
  %v5802 = vpop.f32.mrf.mxu0
  %v5803 = vadd.f32 %v5514, %v5802
  %v5804 = vpop.f32.mrf.mxu0
  %5805 = vmatprep.mubr.bf16.mxu0 %v4174
  %5806 = vmatmul.mubr.bf16.gmra.mxu0 %v4078
  %v5807 = vpop.f32.mrf.mxu0
  %v5808 = vadd.f32 %v5519, %v5807
  %v5809 = vpop.f32.mrf.mxu0
  %v5810 = vpop.f32.mrf.mxu0
  %v5811 = vadd.f32 %v5522, %v5810
  %v5812 = vpop.f32.mrf.mxu0
  %5813 = vmatprep.mubr.bf16.mxu0 %v4175
  %5814 = vmatmul.mubr.bf16.gmra.mxu0 %v4079
  %v5815 = vpop.f32.mrf.mxu0
  %v5816 = vadd.f32 %v5527, %v5815
  %v5817 = vpop.f32.mrf.mxu0
  %v5818 = vpop.f32.mrf.mxu0
  %v5819 = vadd.f32 %v5530, %v5818
  %v5820 = vpop.f32.mrf.mxu0
  %5821 = vmatprep.mubr.bf16.mxu0 %v4176
  %5822 = vmatmul.mubr.bf16.gmra.mxu0 %v4080
  %v5823 = vpop.f32.mrf.mxu0
  %v5824 = vadd.f32 %v5535, %v5823
  %v5825 = vpop.f32.mrf.mxu0
  %v5826 = vpop.f32.mrf.mxu0
  %v5827 = vadd.f32 %v5538, %v5826
  %v5828 = vpop.f32.mrf.mxu0
  %5829 = vmatprep.mubr.bf16.mxu0 %v4177
  %5830 = vmatmul.mubr.bf16.gmra.mxu0 %v4081
  %v5831 = vpop.f32.mrf.mxu0
  %v5832 = vadd.f32 %v5543, %v5831
  %v5833 = vpop.f32.mrf.mxu0
  %v5834 = vpop.f32.mrf.mxu0
  %v5835 = vadd.f32 %v5546, %v5834
  %v5836 = vpop.f32.mrf.mxu0
  %5837 = vmatprep.mubr.bf16.mxu0 %v4178
  %5838 = vmatmul.mubr.bf16.gmra.mxu0 %v4082
  %v5839 = vpop.f32.mrf.mxu0
  %v5840 = vadd.f32 %v5551, %v5839
  %v5841 = vpop.f32.mrf.mxu0
  %v5842 = vpop.f32.mrf.mxu0
  %v5843 = vadd.f32 %v5554, %v5842
  %v5844 = vpop.f32.mrf.mxu0
  %5845 = vmatprep.mubr.bf16.mxu0 %v4179
  %5846 = vmatmul.mubr.bf16.gmra.mxu0 %v4083
  %v5847 = vpop.f32.mrf.mxu0
  %v5848 = vadd.f32 %v5559, %v5847
  %v5849 = vpop.f32.mrf.mxu0
  %v5850 = vpop.f32.mrf.mxu0
  %v5851 = vadd.f32 %v5562, %v5850
  %v5852 = vpop.f32.mrf.mxu0
  %5853 = vmatprep.mubr.bf16.mxu0 %v4180
  %5854 = vmatmul.mubr.bf16.gmra.mxu0 %v4084
  %v5855 = vpop.f32.mrf.mxu0
  %v5856 = vadd.f32 %v5567, %v5855
  %v5857 = vpop.f32.mrf.mxu0
  %v5858 = vpop.f32.mrf.mxu0
  %v5859 = vadd.f32 %v5570, %v5858
  %v5860 = vpop.f32.mrf.mxu0
  %5861 = vmatprep.mubr.bf16.mxu0 %v4181
  %5862 = vmatmul.mubr.bf16.gmra.mxu0 %v4085
  %v5863 = vpop.f32.mrf.mxu0
  %v5864 = vadd.f32 %v5575, %v5863
  %v5865 = vpop.f32.mrf.mxu0
  %v5866 = vpop.f32.mrf.mxu0
  %v5867 = vadd.f32 %v5578, %v5866
  %v5868 = vpop.f32.mrf.mxu0
  %5869 = vmatprep.mubr.bf16.mxu0 %v4182
  %5870 = vmatmul.mubr.bf16.gmra.mxu0 %v4086
  %v5871 = vpop.f32.mrf.mxu0
  %v5872 = vadd.f32 %v5583, %v5871
  %v5873 = vpop.f32.mrf.mxu0
  %v5874 = vpop.f32.mrf.mxu0
  %v5875 = vadd.f32 %v5586, %v5874
  %v5876 = vpop.f32.mrf.mxu0
  %5877 = vmatprep.mubr.bf16.mxu0 %v4183
  %5878 = vmatmul.mubr.bf16.gmra.mxu0 %v4087
  %v5879 = vpop.f32.mrf.mxu0
  %v5880 = vadd.f32 %v5591, %v5879
  %v5881 = vpop.f32.mrf.mxu0
  %v5882 = vpop.f32.mrf.mxu0
  %v5883 = vadd.f32 %v5594, %v5882
  %v5884 = vpop.f32.mrf.mxu0
  %5885 = vmatprep.mubr.bf16.mxu0 %v4184
  %5886 = vmatmul.mubr.bf16.gmra.mxu0 %v4088
  %v5887 = vpop.f32.mrf.mxu0
  %v5888 = vadd.f32 %v5599, %v5887
  %v5889 = vpop.f32.mrf.mxu0
  %v5890 = vpop.f32.mrf.mxu0
  %v5891 = vadd.f32 %v5602, %v5890
  %v5892 = vpop.f32.mrf.mxu0
  %5893 = vmatprep.mubr.bf16.mxu0 %v4185
  %5894 = vmatmul.mubr.bf16.gmra.mxu0 %v4089
  %v5895 = vpop.f32.mrf.mxu0
  %v5896 = vadd.f32 %v5607, %v5895
  %v5897 = vpop.f32.mrf.mxu0
  %v5898 = vpop.f32.mrf.mxu0
  %v5899 = vadd.f32 %v5610, %v5898
  %v5900 = vpop.f32.mrf.mxu0
  %5901 = vmatprep.mubr.bf16.mxu0 %v4186
  %5902 = vmatmul.mubr.bf16.gmra.mxu0 %v4090
  %v5903 = vpop.f32.mrf.mxu0
  %v5904 = vadd.f32 %v5615, %v5903
  %v5905 = vpop.f32.mrf.mxu0
  %v5906 = vpop.f32.mrf.mxu0
  %v5907 = vadd.f32 %v5618, %v5906
  %v5908 = vpop.f32.mrf.mxu0
  %5909 = vmatprep.mubr.bf16.mxu0 %v4187
  %5910 = vmatmul.mubr.bf16.gmra.mxu0 %v4091
  %v5911 = vpop.f32.mrf.mxu0
  %v5912 = vadd.f32 %v5623, %v5911
  %v5913 = vpop.f32.mrf.mxu0
  %v5914 = vpop.f32.mrf.mxu0
  %v5915 = vadd.f32 %v5626, %v5914
  %v5916 = vpop.f32.mrf.mxu0
  %5917 = vmatprep.mubr.bf16.mxu0 %v4188
  %5918 = vmatmul.mubr.bf16.gmra.mxu0 %v4092
  %v5919 = vpop.f32.mrf.mxu0
  %v5920 = vadd.f32 %v5631, %v5919
  %v5921 = vpop.f32.mrf.mxu0
  %v5922 = vpop.f32.mrf.mxu0
  %v5923 = vadd.f32 %v5634, %v5922
  %v5924 = vpop.f32.mrf.mxu0
  %5925 = vmatprep.mubr.bf16.mxu0 %v4189
  %5926 = vmatmul.mubr.bf16.gmra.mxu0 %v4093
  %v5927 = vpop.f32.mrf.mxu0
  %v5928 = vadd.f32 %v5639, %v5927
  %v5929 = vpop.f32.mrf.mxu0
  %v5930 = vpop.f32.mrf.mxu0
  %v5931 = vadd.f32 %v5642, %v5930
  %v5932 = vpop.f32.mrf.mxu0
  %5933 = vmatprep.mubr.bf16.mxu0 %v4190
  %5934 = vmatmul.mubr.bf16.gmra.mxu0 %v4094
  %v5935 = vpop.f32.mrf.mxu0
  %v5936 = vadd.f32 %v5647, %v5935
  %v5937 = vpop.f32.mrf.mxu0
  %v5938 = vpop.f32.mrf.mxu0
  %v5939 = vadd.f32 %v5650, %v5938
  %v5940 = vpop.f32.mrf.mxu0
  %5941 = vmatprep.mubr.bf16.mxu0 %v4191
  %5942 = vmatmul.mubr.bf16.gmra.mxu0 %v4095
  %v5943 = vpop.f32.mrf.mxu0
  %v5944 = vadd.f32 %v5655, %v5943
  %v5945 = vpop.f32.mrf.mxu0
  %v5946 = vpop.f32.mrf.mxu0
  %v5947 = vadd.f32 %v5658, %v5946
  %v5948 = vpop.f32.mrf.mxu0
  %5949 = vmatprep.mubr.bf16.mxu0 %v4192
  %5950 = vmatmul.mubr.bf16.gmra.mxu0 %v4096
  %v5951 = vpop.f32.mrf.mxu0
  %v5952 = vadd.f32 %v5663, %v5951
  %v5953 = vpop.f32.mrf.mxu0
  %v5954 = vpop.f32.mrf.mxu0
  %v5955 = vadd.f32 %v5666, %v5954
  %v5956 = vpop.f32.mrf.mxu0
  %5957 = vmatprep.mubr.bf16.mxu0 %v4193
  %5958 = vmatmul.mubr.bf16.gmra.mxu0 %v4097
  %v5959 = vpop.f32.mrf.mxu0
  %v5960 = vadd.f32 %v5671, %v5959
  %v5961 = vpop.f32.mrf.mxu0
  %v5962 = vpop.f32.mrf.mxu0
  %v5963 = vadd.f32 %v5674, %v5962
  %v5964 = vpop.f32.mrf.mxu0
  %5965 = vmatprep.mubr.bf16.mxu0 %v4194
  %5966 = vmatmul.mubr.bf16.gmra.mxu0 %v4098
  %v5967 = vpop.f32.mrf.mxu0
  %v5968 = vadd.f32 %v5679, %v5967
  %v5969 = vpop.f32.mrf.mxu0
  %v5970 = vpop.f32.mrf.mxu0
  %v5971 = vadd.f32 %v5682, %v5970
  %v5972 = vpop.f32.mrf.mxu0
  %5973 = vmatprep.mubr.bf16.mxu0 %v4195
  %5974 = vmatmul.mubr.bf16.gmra.mxu0 %v4099
  %v5975 = vpop.f32.mrf.mxu0
  %v5976 = vadd.f32 %v5687, %v5975
  %v5977 = vpop.f32.mrf.mxu0
  %v5978 = vpop.f32.mrf.mxu0
  %v5979 = vadd.f32 %v5690, %v5978
  %v5980 = vpop.f32.mrf.mxu0
  %5981 = vmatprep.mubr.bf16.mxu0 %v4196
  %5982 = vmatmul.mubr.bf16.gmra.mxu0 %v4100
  %v5983 = vpop.f32.mrf.mxu0
  %v5984 = vadd.f32 %v5695, %v5983
  %v5985 = vpop.f32.mrf.mxu0
  %v5986 = vpop.f32.mrf.mxu0
  %v5987 = vadd.f32 %v5698, %v5986
  %v5988 = vpop.f32.mrf.mxu0
  %5989 = vmatprep.mubr.bf16.mxu0 %v4197
  %5990 = vmatmul.mubr.bf16.gmra.mxu0 %v4101
  %v5991 = vpop.f32.mrf.mxu0
  %v5992 = vadd.f32 %v5703, %v5991
  %v5993 = vpop.f32.mrf.mxu0
  %v5994 = vpop.f32.mrf.mxu0
  %v5995 = vadd.f32 %v5706, %v5994
  %v5996 = vpop.f32.mrf.mxu0
  %5997 = vmatprep.mubr.bf16.mxu0 %v4198
  %5998 = vmatmul.mubr.bf16.gmra.mxu0 %v4102
  %v5999 = vpop.f32.mrf.mxu0
  %v6000 = vadd.f32 %v5711, %v5999
  %v6001 = vpop.f32.mrf.mxu0
  %v6002 = vpop.f32.mrf.mxu0
  %v6003 = vadd.f32 %v5714, %v6002
  %v6004 = vpop.f32.mrf.mxu0
  %6005 = vmatprep.mubr.bf16.mxu0 %v4199
  %6006 = vmatmul.mubr.bf16.gmra.mxu0 %v4103
  %v6007 = vpop.f32.mrf.mxu0
  %v6008 = vadd.f32 %v5719, %v6007
  %v6009 = vpop.f32.mrf.mxu0
  %v6010 = vpop.f32.mrf.mxu0
  %v6011 = vadd.f32 %v5722, %v6010
  %v6012 = vpop.f32.mrf.mxu0
  %6013 = vmatprep.mubr.bf16.mxu0 %v4200
  %6014 = vmatmul.mubr.bf16.gmra.mxu0 %v4104
  %v6015 = vpop.f32.mrf.mxu0
  %v6016 = vadd.f32 %v5727, %v6015
  %v6017 = vpop.f32.mrf.mxu0
  %v6018 = vpop.f32.mrf.mxu0
  %v6019 = vadd.f32 %v5730, %v6018
  %v6020 = vpop.f32.mrf.mxu0
  %6021 = vmatprep.mubr.bf16.mxu0 %v4201
  %6022 = vmatmul.mubr.bf16.gmra.mxu0 %v4105
  %v6023 = vpop.f32.mrf.mxu0
  %v6024 = vadd.f32 %v5735, %v6023
  %v6025 = vpop.f32.mrf.mxu0
  %v6026 = vpop.f32.mrf.mxu0
  %v6027 = vadd.f32 %v5738, %v6026
  %v6028 = vpop.f32.mrf.mxu0
  %6029 = vdwg.mxu0
  %6030 = vmatprep.subr.bf16.mxu0 0
  %6031 = vmatpush1.bf16.msra.mxu0 %v4801
  %6032 = vmatprep.subr.bf16.mxu0 0
  %6033 = vmatpush1.bf16.msra.mxu0 %v4800
  %6034 = vmatprep.subr.bf16.mxu0 0
  %6035 = vmatpush1.bf16.msra.mxu0 %v4799
  %6036 = vmatprep.subr.bf16.mxu0 0
  %6037 = vmatpush1.bf16.msra.mxu0 %v4798
  %6038 = vmatprep.subr.bf16.mxu0 0
  %6039 = vmatpush1.bf16.msra.mxu0 %v4797
  %6040 = vmatprep.subr.bf16.mxu0 0
  %6041 = vmatpush1.bf16.msra.mxu0 %v4796
  %6042 = vmatprep.subr.bf16.mxu0 0
  %6043 = vmatpush1.bf16.msra.mxu0 %v4795
  %6044 = vmatprep.subr.bf16.mxu0 0
  %6045 = vmatpush1.bf16.msra.mxu0 %v4794
  %6046 = vmatprep.subr.bf16.mxu0 0
  %6047 = vmatpush2.bf16.msra.mxu0 0
  %6048 = vmatprep.subr.bf16.mxu0 0
  %6049 = vmatpush2.bf16.msra.mxu0 0
  %6050 = vmatprep.subr.bf16.mxu0 0
  %6051 = vmatpush2.bf16.msra.mxu0 0
  %6052 = vmatprep.subr.bf16.mxu0 0
  %6053 = vmatpush2.bf16.msra.mxu0 0
  %6054 = vmatprep.subr.bf16.mxu0 0
  %6055 = vmatpush2.bf16.msra.mxu0 0
  %6056 = vmatprep.subr.bf16.mxu0 0
  %6057 = vmatpush2.bf16.msra.mxu0 0
  %6058 = vmatprep.subr.bf16.mxu0 0
  %6059 = vmatpush2.bf16.msra.mxu0 0
  %6060 = vmatprep.subr.bf16.mxu0 0
  %6061 = vmatpush2.bf16.msra.mxu0 0
  %6062 = vmatprep.mubr.bf16.mxu0 0
  %6063 = vmatmul.mubr.bf16.gmra.mxu0 %v4266
  %v6064 = vpop.f32.mrf.mxu0
  %v6065 = vadd.f32 %v5776, %v6064
  %v6066 = vpop.f32.mrf.mxu0
  %v6067 = vpop.f32.mrf.mxu0
  %v6068 = vadd.f32 %v5779, %v6067
  %v6069 = vpop.f32.mrf.mxu0
  %6070 = vmatprep.mubr.bf16.mxu0 0
  %6071 = vmatmul.mubr.bf16.gmra.mxu0 %v4267
  %v6072 = vpop.f32.mrf.mxu0
  %v6073 = vadd.f32 %v5784, %v6072
  %v6074 = vpop.f32.mrf.mxu0
  %v6075 = vpop.f32.mrf.mxu0
  %v6076 = vadd.f32 %v5787, %v6075
  %v6077 = vpop.f32.mrf.mxu0
  %6078 = vmatprep.mubr.bf16.mxu0 0
  %6079 = vmatmul.mubr.bf16.gmra.mxu0 %v4268
  %v6080 = vpop.f32.mrf.mxu0
  %v6081 = vadd.f32 %v5792, %v6080
  %v6082 = vpop.f32.mrf.mxu0
  %v6083 = vpop.f32.mrf.mxu0
  %v6084 = vadd.f32 %v5795, %v6083
  %v6085 = vpop.f32.mrf.mxu0
  %6086 = vmatprep.mubr.bf16.mxu0 0
  %6087 = vmatmul.mubr.bf16.gmra.mxu0 %v4269
  %v6088 = vpop.f32.mrf.mxu0
  %v6089 = vadd.f32 %v5800, %v6088
  %v6090 = vpop.f32.mrf.mxu0
  %v6091 = vpop.f32.mrf.mxu0
  %v6092 = vadd.f32 %v5803, %v6091
  %v6093 = vpop.f32.mrf.mxu0
  %6094 = vmatprep.mubr.bf16.mxu0 0
  %6095 = vmatmul.mubr.bf16.gmra.mxu0 %v4270
  %v6096 = vpop.f32.mrf.mxu0
  %v6097 = vadd.f32 %v5808, %v6096
  %v6098 = vpop.f32.mrf.mxu0
  %v6099 = vpop.f32.mrf.mxu0
  %v6100 = vadd.f32 %v5811, %v6099
  %v6101 = vpop.f32.mrf.mxu0
  %6102 = vmatprep.mubr.bf16.mxu0 0
  %6103 = vmatmul.mubr.bf16.gmra.mxu0 %v4271
  %v6104 = vpop.f32.mrf.mxu0
  %v6105 = vadd.f32 %v5816, %v6104
  %v6106 = vpop.f32.mrf.mxu0
  %v6107 = vpop.f32.mrf.mxu0
  %v6108 = vadd.f32 %v5819, %v6107
  %v6109 = vpop.f32.mrf.mxu0
  %6110 = vmatprep.mubr.bf16.mxu0 0
  %6111 = vmatmul.mubr.bf16.gmra.mxu0 %v4272
  %v6112 = vpop.f32.mrf.mxu0
  %v6113 = vadd.f32 %v5824, %v6112
  %v6114 = vpop.f32.mrf.mxu0
  %v6115 = vpop.f32.mrf.mxu0
  %v6116 = vadd.f32 %v5827, %v6115
  %v6117 = vpop.f32.mrf.mxu0
  %6118 = vmatprep.mubr.bf16.mxu0 0
  %6119 = vmatmul.mubr.bf16.gmra.mxu0 %v4273
  %v6120 = vpop.f32.mrf.mxu0
  %v6121 = vadd.f32 %v5832, %v6120
  %v6122 = vpop.f32.mrf.mxu0
  %v6123 = vpop.f32.mrf.mxu0
  %v6124 = vadd.f32 %v5835, %v6123
  %v6125 = vpop.f32.mrf.mxu0
  %6126 = vmatprep.mubr.bf16.mxu0 0
  %6127 = vmatmul.mubr.bf16.gmra.mxu0 %v4274
  %v6128 = vpop.f32.mrf.mxu0
  %v6129 = vadd.f32 %v5840, %v6128
  %v6130 = vpop.f32.mrf.mxu0
  %v6131 = vpop.f32.mrf.mxu0
  %v6132 = vadd.f32 %v5843, %v6131
  %v6133 = vpop.f32.mrf.mxu0
  %6134 = vmatprep.mubr.bf16.mxu0 0
  %6135 = vmatmul.mubr.bf16.gmra.mxu0 %v4275
  %v6136 = vpop.f32.mrf.mxu0
  %v6137 = vadd.f32 %v5848, %v6136
  %v6138 = vpop.f32.mrf.mxu0
  %v6139 = vpop.f32.mrf.mxu0
  %v6140 = vadd.f32 %v5851, %v6139
  %v6141 = vpop.f32.mrf.mxu0
  %6142 = vmatprep.mubr.bf16.mxu0 0
  %6143 = vmatmul.mubr.bf16.gmra.mxu0 %v4276
  %v6144 = vpop.f32.mrf.mxu0
  %v6145 = vadd.f32 %v5856, %v6144
  %v6146 = vpop.f32.mrf.mxu0
  %v6147 = vpop.f32.mrf.mxu0
  %v6148 = vadd.f32 %v5859, %v6147
  %v6149 = vpop.f32.mrf.mxu0
  %6150 = vmatprep.mubr.bf16.mxu0 0
  %6151 = vmatmul.mubr.bf16.gmra.mxu0 %v4277
  %v6152 = vpop.f32.mrf.mxu0
  %v6153 = vadd.f32 %v5864, %v6152
  %v6154 = vpop.f32.mrf.mxu0
  %v6155 = vpop.f32.mrf.mxu0
  %v6156 = vadd.f32 %v5867, %v6155
  %v6157 = vpop.f32.mrf.mxu0
  %6158 = vmatprep.mubr.bf16.mxu0 0
  %6159 = vmatmul.mubr.bf16.gmra.mxu0 %v4278
  %v6160 = vpop.f32.mrf.mxu0
  %v6161 = vadd.f32 %v5872, %v6160
  %v6162 = vpop.f32.mrf.mxu0
  %v6163 = vpop.f32.mrf.mxu0
  %v6164 = vadd.f32 %v5875, %v6163
  %v6165 = vpop.f32.mrf.mxu0
  %6166 = vmatprep.mubr.bf16.mxu0 0
  %6167 = vmatmul.mubr.bf16.gmra.mxu0 %v4279
  %v6168 = vpop.f32.mrf.mxu0
  %v6169 = vadd.f32 %v5880, %v6168
  %v6170 = vpop.f32.mrf.mxu0
  %v6171 = vpop.f32.mrf.mxu0
  %v6172 = vadd.f32 %v5883, %v6171
  %v6173 = vpop.f32.mrf.mxu0
  %6174 = vmatprep.mubr.bf16.mxu0 0
  %6175 = vmatmul.mubr.bf16.gmra.mxu0 %v4280
  %v6176 = vpop.f32.mrf.mxu0
  %v6177 = vadd.f32 %v5888, %v6176
  %v6178 = vpop.f32.mrf.mxu0
  %v6179 = vpop.f32.mrf.mxu0
  %v6180 = vadd.f32 %v5891, %v6179
  %v6181 = vpop.f32.mrf.mxu0
  %6182 = vmatprep.mubr.bf16.mxu0 0
  %6183 = vmatmul.mubr.bf16.gmra.mxu0 %v4281
  %v6184 = vpop.f32.mrf.mxu0
  %v6185 = vadd.f32 %v5896, %v6184
  %v6186 = vpop.f32.mrf.mxu0
  %v6187 = vpop.f32.mrf.mxu0
  %v6188 = vadd.f32 %v5899, %v6187
  %v6189 = vpop.f32.mrf.mxu0
  %6190 = vmatprep.mubr.bf16.mxu0 0
  %6191 = vmatmul.mubr.bf16.gmra.mxu0 %v4282
  %v6192 = vpop.f32.mrf.mxu0
  %v6193 = vadd.f32 %v5904, %v6192
  %v6194 = vpop.f32.mrf.mxu0
  %v6195 = vpop.f32.mrf.mxu0
  %v6196 = vadd.f32 %v5907, %v6195
  %v6197 = vpop.f32.mrf.mxu0
  %6198 = vmatprep.mubr.bf16.mxu0 0
  %6199 = vmatmul.mubr.bf16.gmra.mxu0 %v4283
  %v6200 = vpop.f32.mrf.mxu0
  %v6201 = vadd.f32 %v5912, %v6200
  %v6202 = vpop.f32.mrf.mxu0
  %v6203 = vpop.f32.mrf.mxu0
  %v6204 = vadd.f32 %v5915, %v6203
  %v6205 = vpop.f32.mrf.mxu0
  %6206 = vmatprep.mubr.bf16.mxu0 0
  %6207 = vmatmul.mubr.bf16.gmra.mxu0 %v4284
  %v6208 = vpop.f32.mrf.mxu0
  %v6209 = vadd.f32 %v5920, %v6208
  %v6210 = vpop.f32.mrf.mxu0
  %v6211 = vpop.f32.mrf.mxu0
  %v6212 = vadd.f32 %v5923, %v6211
  %v6213 = vpop.f32.mrf.mxu0
  %6214 = vmatprep.mubr.bf16.mxu0 0
  %6215 = vmatmul.mubr.bf16.gmra.mxu0 %v4285
  %v6216 = vpop.f32.mrf.mxu0
  %v6217 = vadd.f32 %v5928, %v6216
  %v6218 = vpop.f32.mrf.mxu0
  %v6219 = vpop.f32.mrf.mxu0
  %v6220 = vadd.f32 %v5931, %v6219
  %v6221 = vpop.f32.mrf.mxu0
  %6222 = vmatprep.mubr.bf16.mxu0 0
  %6223 = vmatmul.mubr.bf16.gmra.mxu0 %v4286
  %v6224 = vpop.f32.mrf.mxu0
  %v6225 = vadd.f32 %v5936, %v6224
  %v6226 = vpop.f32.mrf.mxu0
  %v6227 = vpop.f32.mrf.mxu0
  %v6228 = vadd.f32 %v5939, %v6227
  %v6229 = vpop.f32.mrf.mxu0
  %6230 = vmatprep.mubr.bf16.mxu0 0
  %6231 = vmatmul.mubr.bf16.gmra.mxu0 %v4287
  %v6232 = vpop.f32.mrf.mxu0
  %v6233 = vadd.f32 %v5944, %v6232
  %v6234 = vpop.f32.mrf.mxu0
  %v6235 = vpop.f32.mrf.mxu0
  %v6236 = vadd.f32 %v5947, %v6235
  %v6237 = vpop.f32.mrf.mxu0
  %6238 = vmatprep.mubr.bf16.mxu0 0
  %6239 = vmatmul.mubr.bf16.gmra.mxu0 %v4288
  %v6240 = vpop.f32.mrf.mxu0
  %v6241 = vadd.f32 %v5952, %v6240
  %v6242 = vpop.f32.mrf.mxu0
  %v6243 = vpop.f32.mrf.mxu0
  %v6244 = vadd.f32 %v5955, %v6243
  %v6245 = vpop.f32.mrf.mxu0
  %6246 = vmatprep.mubr.bf16.mxu0 0
  %6247 = vmatmul.mubr.bf16.gmra.mxu0 %v4289
  %v6248 = vpop.f32.mrf.mxu0
  %v6249 = vadd.f32 %v5960, %v6248
  %v6250 = vpop.f32.mrf.mxu0
  %v6251 = vpop.f32.mrf.mxu0
  %v6252 = vadd.f32 %v5963, %v6251
  %v6253 = vpop.f32.mrf.mxu0
  %6254 = vmatprep.mubr.bf16.mxu0 0
  %6255 = vmatmul.mubr.bf16.gmra.mxu0 %v4290
  %v6256 = vpop.f32.mrf.mxu0
  %v6257 = vadd.f32 %v5968, %v6256
  %v6258 = vpop.f32.mrf.mxu0
  %v6259 = vpop.f32.mrf.mxu0
  %v6260 = vadd.f32 %v5971, %v6259
  %v6261 = vpop.f32.mrf.mxu0
  %6262 = vmatprep.mubr.bf16.mxu0 0
  %6263 = vmatmul.mubr.bf16.gmra.mxu0 %v4291
  %v6264 = vpop.f32.mrf.mxu0
  %v6265 = vadd.f32 %v5976, %v6264
  %v6266 = vpop.f32.mrf.mxu0
  %v6267 = vpop.f32.mrf.mxu0
  %v6268 = vadd.f32 %v5979, %v6267
  %v6269 = vpop.f32.mrf.mxu0
  %6270 = vmatprep.mubr.bf16.mxu0 0
  %6271 = vmatmul.mubr.bf16.gmra.mxu0 %v4292
  %v6272 = vpop.f32.mrf.mxu0
  %v6273 = vadd.f32 %v5984, %v6272
  %v6274 = vpop.f32.mrf.mxu0
  %v6275 = vpop.f32.mrf.mxu0
  %v6276 = vadd.f32 %v5987, %v6275
  %v6277 = vpop.f32.mrf.mxu0
  %6278 = vmatprep.mubr.bf16.mxu0 0
  %6279 = vmatmul.mubr.bf16.gmra.mxu0 %v4293
  %v6280 = vpop.f32.mrf.mxu0
  %v6281 = vadd.f32 %v5992, %v6280
  %v6282 = vpop.f32.mrf.mxu0
  %v6283 = vpop.f32.mrf.mxu0
  %v6284 = vadd.f32 %v5995, %v6283
  %v6285 = vpop.f32.mrf.mxu0
  %6286 = vmatprep.mubr.bf16.mxu0 0
  %6287 = vmatmul.mubr.bf16.gmra.mxu0 %v4294
  %v6288 = vpop.f32.mrf.mxu0
  %v6289 = vadd.f32 %v6000, %v6288
  %v6290 = vpop.f32.mrf.mxu0
  %v6291 = vpop.f32.mrf.mxu0
  %v6292 = vadd.f32 %v6003, %v6291
  %v6293 = vpop.f32.mrf.mxu0
  %6294 = vmatprep.mubr.bf16.mxu0 0
  %6295 = vmatmul.mubr.bf16.gmra.mxu0 %v4295
  %v6296 = vpop.f32.mrf.mxu0
  %v6297 = vadd.f32 %v6008, %v6296
  %v6298 = vpop.f32.mrf.mxu0
  %v6299 = vpop.f32.mrf.mxu0
  %v6300 = vadd.f32 %v6011, %v6299
  %v6301 = vpop.f32.mrf.mxu0
  %6302 = vmatprep.mubr.bf16.mxu0 0
  %6303 = vmatmul.mubr.bf16.gmra.mxu0 %v4296
  %v6304 = vpop.f32.mrf.mxu0
  %v6305 = vadd.f32 %v6016, %v6304
  %v6306 = vpop.f32.mrf.mxu0
  %v6307 = vpop.f32.mrf.mxu0
  %v6308 = vadd.f32 %v6019, %v6307
  %v6309 = vpop.f32.mrf.mxu0
  %6310 = vmatprep.mubr.bf16.mxu0 0
  %6311 = vmatmul.mubr.bf16.gmra.mxu0 %v4297
  %v6312 = vpop.f32.mrf.mxu0
  %v6313 = vadd.f32 %v6024, %v6312
  %v6314 = vpop.f32.mrf.mxu0
  %v6315 = vpop.f32.mrf.mxu0
  %v6316 = vadd.f32 %v6027, %v6315
  %v6317 = vpop.f32.mrf.mxu0
  %6318 = vdwg.mxu0
  %v6319 = vld [vmem:[%s5] sm:$0x1]
  %v6320 = vld [vmem:[%s6] sm:$0x1]
  %v6321 = vsel %vm2032, %v6065, 0.0
  %v6322 = vsel %vm2032, %v6068, 0.0
  %v6323 = vadd.f32 %v6321, %v6322
  %v6324 = vsel %vm2032, %v6073, 0.0
  %v6325 = vadd.f32 %v6323, %v6324
  %v6326 = vsel %vm2032, %v6076, 0.0
  %v6327 = vadd.f32 %v6325, %v6326
  %v6328 = vsel %vm2032, %v6081, 0.0
  %v6329 = vadd.f32 %v6327, %v6328
  %v6330 = vsel %vm2032, %v6084, 0.0
  %v6331 = vadd.f32 %v6329, %v6330
  %v6332 = vsel %vm2032, %v6089, 0.0
  %v6333 = vadd.f32 %v6331, %v6332
  %v6334 = vsel %vm2032, %v6092, 0.0
  %v6335 = vadd.f32 %v6333, %v6334
  %v6336 = vsel %vm2032, %v6097, 0.0
  %v6337 = vadd.f32 %v6335, %v6336
  %v6338 = vsel %vm2032, %v6100, 0.0
  %v6339 = vadd.f32 %v6337, %v6338
  %v6340 = vsel %vm2032, %v6105, 0.0
  %v6341 = vadd.f32 %v6339, %v6340
  %v6342 = vsel %vm2032, %v6108, 0.0
  %v6343 = vadd.f32 %v6341, %v6342
  %v6344 = vsel %vm2032, %v6113, 0.0
  %v6345 = vadd.f32 %v6343, %v6344
  %v6346 = vsel %vm2032, %v6116, 0.0
  %v6347 = vadd.f32 %v6345, %v6346
  %v6348 = vsel %vm2032, %v6121, 0.0
  %v6349 = vadd.f32 %v6347, %v6348
  %v6350 = vsel %vm2032, %v6124, 0.0
  %v6351 = vadd.f32 %v6349, %v6350
  %v6352 = vsel %vm2032, %v6129, 0.0
  %v6353 = vadd.f32 %v6351, %v6352
  %v6354 = vsel %vm2032, %v6132, 0.0
  %v6355 = vadd.f32 %v6353, %v6354
  %v6356 = vsel %vm2032, %v6137, 0.0
  %v6357 = vadd.f32 %v6355, %v6356
  %v6358 = vsel %vm2032, %v6140, 0.0
  %v6359 = vadd.f32 %v6357, %v6358
  %v6360 = vsel %vm2032, %v6145, 0.0
  %v6361 = vadd.f32 %v6359, %v6360
  %v6362 = vsel %vm2032, %v6148, 0.0
  %v6363 = vadd.f32 %v6361, %v6362
  %v6364 = vsel %vm2032, %v6153, 0.0
  %v6365 = vadd.f32 %v6363, %v6364
  %v6366 = vsel %vm2032, %v6156, 0.0
  %v6367 = vadd.f32 %v6365, %v6366
  %v6368 = vsel %vm2032, %v6161, 0.0
  %v6369 = vadd.f32 %v6367, %v6368
  %v6370 = vsel %vm2032, %v6164, 0.0
  %v6371 = vadd.f32 %v6369, %v6370
  %v6372 = vsel %vm2032, %v6169, 0.0
  %v6373 = vadd.f32 %v6371, %v6372
  %v6374 = vsel %vm2032, %v6172, 0.0
  %v6375 = vadd.f32 %v6373, %v6374
  %v6376 = vsel %vm2032, %v6177, 0.0
  %v6377 = vadd.f32 %v6375, %v6376
  %v6378 = vsel %vm2032, %v6180, 0.0
  %v6379 = vadd.f32 %v6377, %v6378
  %v6380 = vsel %vm2032, %v6185, 0.0
  %v6381 = vadd.f32 %v6379, %v6380
  %v6382 = vsel %vm2032, %v6188, 0.0
  %v6383 = vadd.f32 %v6381, %v6382
  %v6384 = vsel %vm2032, %v6193, 0.0
  %v6385 = vadd.f32 %v6383, %v6384
  %v6386 = vsel %vm2032, %v6196, 0.0
  %v6387 = vadd.f32 %v6385, %v6386
  %v6388 = vsel %vm2032, %v6201, 0.0
  %v6389 = vadd.f32 %v6387, %v6388
  %v6390 = vsel %vm2032, %v6204, 0.0
  %v6391 = vadd.f32 %v6389, %v6390
  %v6392 = vsel %vm2032, %v6209, 0.0
  %v6393 = vadd.f32 %v6391, %v6392
  %v6394 = vsel %vm2032, %v6212, 0.0
  %v6395 = vadd.f32 %v6393, %v6394
  %v6396 = vsel %vm2032, %v6217, 0.0
  %v6397 = vadd.f32 %v6395, %v6396
  %v6398 = vsel %vm2032, %v6220, 0.0
  %v6399 = vadd.f32 %v6397, %v6398
  %v6400 = vsel %vm2032, %v6225, 0.0
  %v6401 = vadd.f32 %v6399, %v6400
  %v6402 = vsel %vm2032, %v6228, 0.0
  %v6403 = vadd.f32 %v6401, %v6402
  %v6404 = vsel %vm2032, %v6233, 0.0
  %v6405 = vadd.f32 %v6403, %v6404
  %v6406 = vsel %vm2032, %v6236, 0.0
  %v6407 = vadd.f32 %v6405, %v6406
  %v6408 = vsel %vm2032, %v6241, 0.0
  %v6409 = vadd.f32 %v6407, %v6408
  %v6410 = vsel %vm2032, %v6244, 0.0
  %v6411 = vadd.f32 %v6409, %v6410
  %v6412 = vsel %vm2032, %v6249, 0.0
  %v6413 = vadd.f32 %v6411, %v6412
  %v6414 = vsel %vm2032, %v6252, 0.0
  %v6415 = vadd.f32 %v6413, %v6414
  %v6416 = vsel %vm2032, %v6257, 0.0
  %v6417 = vadd.f32 %v6415, %v6416
  %v6418 = vsel %vm2032, %v6260, 0.0
  %v6419 = vadd.f32 %v6417, %v6418
  %v6420 = vsel %vm2032, %v6265, 0.0
  %v6421 = vadd.f32 %v6419, %v6420
  %v6422 = vsel %vm2032, %v6268, 0.0
  %v6423 = vadd.f32 %v6421, %v6422
  %v6424 = vsel %vm2032, %v6273, 0.0
  %v6425 = vadd.f32 %v6423, %v6424
  %v6426 = vsel %vm2032, %v6276, 0.0
  %v6427 = vadd.f32 %v6425, %v6426
  %v6428 = vsel %vm2032, %v6281, 0.0
  %v6429 = vadd.f32 %v6427, %v6428
  %v6430 = vsel %vm2032, %v6284, 0.0
  %v6431 = vadd.f32 %v6429, %v6430
  %v6432 = vsel %vm2032, %v6289, 0.0
  %v6433 = vadd.f32 %v6431, %v6432
  %v6434 = vsel %vm2032, %v6292, 0.0
  %v6435 = vadd.f32 %v6433, %v6434
  %v6436 = vsel %vm2032, %v6297, 0.0
  %v6437 = vadd.f32 %v6435, %v6436
  %v6438 = vsel %vm2032, %v6300, 0.0
  %v6439 = vadd.f32 %v6437, %v6438
  %v6440 = vsel %vm2032, %v6305, 0.0
  %v6441 = vadd.f32 %v6439, %v6440
  %v6442 = vsel %vm2032, %v6308, 0.0
  %v6443 = vadd.f32 %v6441, %v6442
  %v6444 = vsel %vm2032, %v6313, 0.0
  %v6445 = vadd.f32 %v6443, %v6444
  %v6446 = vsel %vm2032, %v6316, 0.0
  %v6447 = vadd.f32 %v6445, %v6446
  %v6448 = vrot.slane %v6447, 4
  %v6449 = vadd.f32 %v6447, %v6448
  %v6450 = vrot.slane %v6449, 2
  %v6451 = vadd.f32 %v6449, %v6450
  %v6452 = vrot.slane %v6451, 1
  %v6453 = vadd.f32 %v6451, %v6452
  %v6454 = vmul.f32 %v6453, 0.001953125
  %v6455 = vmul.f32 %v6065, %v6065
  %v6456 = vmul.f32 %v6068, %v6068
  %v6457 = vmul.f32 %v6073, %v6073
  %v6458 = vmul.f32 %v6076, %v6076
  %v6459 = vmul.f32 %v6081, %v6081
  %v6460 = vmul.f32 %v6084, %v6084
  %v6461 = vmul.f32 %v6089, %v6089
  %v6462 = vmul.f32 %v6092, %v6092
  %v6463 = vmul.f32 %v6097, %v6097
  %v6464 = vmul.f32 %v6100, %v6100
  %v6465 = vmul.f32 %v6105, %v6105
  %v6466 = vmul.f32 %v6108, %v6108
  %v6467 = vmul.f32 %v6113, %v6113
  %v6468 = vmul.f32 %v6116, %v6116
  %v6469 = vmul.f32 %v6121, %v6121
  %v6470 = vmul.f32 %v6124, %v6124
  %v6471 = vmul.f32 %v6129, %v6129
  %v6472 = vmul.f32 %v6132, %v6132
  %v6473 = vmul.f32 %v6137, %v6137
  %v6474 = vmul.f32 %v6140, %v6140
  %v6475 = vmul.f32 %v6145, %v6145
  %v6476 = vmul.f32 %v6148, %v6148
  %v6477 = vmul.f32 %v6153, %v6153
  %v6478 = vmul.f32 %v6156, %v6156
  %v6479 = vmul.f32 %v6161, %v6161
  %v6480 = vmul.f32 %v6164, %v6164
  %v6481 = vmul.f32 %v6169, %v6169
  %v6482 = vmul.f32 %v6172, %v6172
  %v6483 = vmul.f32 %v6177, %v6177
  %v6484 = vmul.f32 %v6180, %v6180
  %v6485 = vmul.f32 %v6185, %v6185
  %v6486 = vmul.f32 %v6188, %v6188
  %v6487 = vmul.f32 %v6193, %v6193
  %v6488 = vmul.f32 %v6196, %v6196
  %v6489 = vmul.f32 %v6201, %v6201
  %v6490 = vmul.f32 %v6204, %v6204
  %v6491 = vmul.f32 %v6209, %v6209
  %v6492 = vmul.f32 %v6212, %v6212
  %v6493 = vmul.f32 %v6217, %v6217
  %v6494 = vmul.f32 %v6220, %v6220
  %v6495 = vmul.f32 %v6225, %v6225
  %v6496 = vmul.f32 %v6228, %v6228
  %v6497 = vmul.f32 %v6233, %v6233
  %v6498 = vmul.f32 %v6236, %v6236
  %v6499 = vmul.f32 %v6241, %v6241
  %v6500 = vmul.f32 %v6244, %v6244
  %v6501 = vmul.f32 %v6249, %v6249
  %v6502 = vmul.f32 %v6252, %v6252
  %v6503 = vmul.f32 %v6257, %v6257
  %v6504 = vmul.f32 %v6260, %v6260
  %v6505 = vmul.f32 %v6265, %v6265
  %v6506 = vmul.f32 %v6268, %v6268
  %v6507 = vmul.f32 %v6273, %v6273
  %v6508 = vmul.f32 %v6276, %v6276
  %v6509 = vmul.f32 %v6281, %v6281
  %v6510 = vmul.f32 %v6284, %v6284
  %v6511 = vmul.f32 %v6289, %v6289
  %v6512 = vmul.f32 %v6292, %v6292
  %v6513 = vmul.f32 %v6297, %v6297
  %v6514 = vmul.f32 %v6300, %v6300
  %v6515 = vmul.f32 %v6305, %v6305
  %v6516 = vmul.f32 %v6308, %v6308
  %v6517 = vmul.f32 %v6313, %v6313
  %v6518 = vmul.f32 %v6316, %v6316
  %v6519 = vsel %vm2032, %v6455, 0.0
  %v6520 = vsel %vm2032, %v6456, 0.0
  %v6521 = vadd.f32 %v6519, %v6520
  %v6522 = vsel %vm2032, %v6457, 0.0
  %v6523 = vadd.f32 %v6521, %v6522
  %v6524 = vsel %vm2032, %v6458, 0.0
  %v6525 = vadd.f32 %v6523, %v6524
  %v6526 = vsel %vm2032, %v6459, 0.0
  %v6527 = vadd.f32 %v6525, %v6526
  %v6528 = vsel %vm2032, %v6460, 0.0
  %v6529 = vadd.f32 %v6527, %v6528
  %v6530 = vsel %vm2032, %v6461, 0.0
  %v6531 = vadd.f32 %v6529, %v6530
  %v6532 = vsel %vm2032, %v6462, 0.0
  %v6533 = vadd.f32 %v6531, %v6532
  %v6534 = vsel %vm2032, %v6463, 0.0
  %v6535 = vadd.f32 %v6533, %v6534
  %v6536 = vsel %vm2032, %v6464, 0.0
  %v6537 = vadd.f32 %v6535, %v6536
  %v6538 = vsel %vm2032, %v6465, 0.0
  %v6539 = vadd.f32 %v6537, %v6538
  %v6540 = vsel %vm2032, %v6466, 0.0
  %v6541 = vadd.f32 %v6539, %v6540
  %v6542 = vsel %vm2032, %v6467, 0.0
  %v6543 = vadd.f32 %v6541, %v6542
  %v6544 = vsel %vm2032, %v6468, 0.0
  %v6545 = vadd.f32 %v6543, %v6544
  %v6546 = vsel %vm2032, %v6469, 0.0
  %v6547 = vadd.f32 %v6545, %v6546
  %v6548 = vsel %vm2032, %v6470, 0.0
  %v6549 = vadd.f32 %v6547, %v6548
  %v6550 = vsel %vm2032, %v6471, 0.0
  %v6551 = vadd.f32 %v6549, %v6550
  %v6552 = vsel %vm2032, %v6472, 0.0
  %v6553 = vadd.f32 %v6551, %v6552
  %v6554 = vsel %vm2032, %v6473, 0.0
  %v6555 = vadd.f32 %v6553, %v6554
  %v6556 = vsel %vm2032, %v6474, 0.0
  %v6557 = vadd.f32 %v6555, %v6556
  %v6558 = vsel %vm2032, %v6475, 0.0
  %v6559 = vadd.f32 %v6557, %v6558
  %v6560 = vsel %vm2032, %v6476, 0.0
  %v6561 = vadd.f32 %v6559, %v6560
  %v6562 = vsel %vm2032, %v6477, 0.0
  %v6563 = vadd.f32 %v6561, %v6562
  %v6564 = vsel %vm2032, %v6478, 0.0
  %v6565 = vadd.f32 %v6563, %v6564
  %v6566 = vsel %vm2032, %v6479, 0.0
  %v6567 = vadd.f32 %v6565, %v6566
  %v6568 = vsel %vm2032, %v6480, 0.0
  %v6569 = vadd.f32 %v6567, %v6568
  %v6570 = vsel %vm2032, %v6481, 0.0
  %v6571 = vadd.f32 %v6569, %v6570
  %v6572 = vsel %vm2032, %v6482, 0.0
  %v6573 = vadd.f32 %v6571, %v6572
  %v6574 = vsel %vm2032, %v6483, 0.0
  %v6575 = vadd.f32 %v6573, %v6574
  %v6576 = vsel %vm2032, %v6484, 0.0
  %v6577 = vadd.f32 %v6575, %v6576
  %v6578 = vsel %vm2032, %v6485, 0.0
  %v6579 = vadd.f32 %v6577, %v6578
  %v6580 = vsel %vm2032, %v6486, 0.0
  %v6581 = vadd.f32 %v6579, %v6580
  %v6582 = vsel %vm2032, %v6487, 0.0
  %v6583 = vadd.f32 %v6581, %v6582
  %v6584 = vsel %vm2032, %v6488, 0.0
  %v6585 = vadd.f32 %v6583, %v6584
  %v6586 = vsel %vm2032, %v6489, 0.0
  %v6587 = vadd.f32 %v6585, %v6586
  %v6588 = vsel %vm2032, %v6490, 0.0
  %v6589 = vadd.f32 %v6587, %v6588
  %v6590 = vsel %vm2032, %v6491, 0.0
  %v6591 = vadd.f32 %v6589, %v6590
  %v6592 = vsel %vm2032, %v6492, 0.0
  %v6593 = vadd.f32 %v6591, %v6592
  %v6594 = vsel %vm2032, %v6493, 0.0
  %v6595 = vadd.f32 %v6593, %v6594
  %v6596 = vsel %vm2032, %v6494, 0.0
  %v6597 = vadd.f32 %v6595, %v6596
  %v6598 = vsel %vm2032, %v6495, 0.0
  %v6599 = vadd.f32 %v6597, %v6598
  %v6600 = vsel %vm2032, %v6496, 0.0
  %v6601 = vadd.f32 %v6599, %v6600
  %v6602 = vsel %vm2032, %v6497, 0.0
  %v6603 = vadd.f32 %v6601, %v6602
  %v6604 = vsel %vm2032, %v6498, 0.0
  %v6605 = vadd.f32 %v6603, %v6604
  %v6606 = vsel %vm2032, %v6499, 0.0
  %v6607 = vadd.f32 %v6605, %v6606
  %v6608 = vsel %vm2032, %v6500, 0.0
  %v6609 = vadd.f32 %v6607, %v6608
  %v6610 = vsel %vm2032, %v6501, 0.0
  %v6611 = vadd.f32 %v6609, %v6610
  %v6612 = vsel %vm2032, %v6502, 0.0
  %v6613 = vadd.f32 %v6611, %v6612
  %v6614 = vsel %vm2032, %v6503, 0.0
  %v6615 = vadd.f32 %v6613, %v6614
  %v6616 = vsel %vm2032, %v6504, 0.0
  %v6617 = vadd.f32 %v6615, %v6616
  %v6618 = vsel %vm2032, %v6505, 0.0
  %v6619 = vadd.f32 %v6617, %v6618
  %v6620 = vsel %vm2032, %v6506, 0.0
  %v6621 = vadd.f32 %v6619, %v6620
  %v6622 = vsel %vm2032, %v6507, 0.0
  %v6623 = vadd.f32 %v6621, %v6622
  %v6624 = vsel %vm2032, %v6508, 0.0
  %v6625 = vadd.f32 %v6623, %v6624
  %v6626 = vsel %vm2032, %v6509, 0.0
  %v6627 = vadd.f32 %v6625, %v6626
  %v6628 = vsel %vm2032, %v6510, 0.0
  %v6629 = vadd.f32 %v6627, %v6628
  %v6630 = vsel %vm2032, %v6511, 0.0
  %v6631 = vadd.f32 %v6629, %v6630
  %v6632 = vsel %vm2032, %v6512, 0.0
  %v6633 = vadd.f32 %v6631, %v6632
  %v6634 = vsel %vm2032, %v6513, 0.0
  %v6635 = vadd.f32 %v6633, %v6634
  %v6636 = vsel %vm2032, %v6514, 0.0
  %v6637 = vadd.f32 %v6635, %v6636
  %v6638 = vsel %vm2032, %v6515, 0.0
  %v6639 = vadd.f32 %v6637, %v6638
  %v6640 = vsel %vm2032, %v6516, 0.0
  %v6641 = vadd.f32 %v6639, %v6640
  %v6642 = vsel %vm2032, %v6517, 0.0
  %v6643 = vadd.f32 %v6641, %v6642
  %v6644 = vsel %vm2032, %v6518, 0.0
  %v6645 = vadd.f32 %v6643, %v6644
  %v6646 = vrot.slane %v6645, 4
  %v6647 = vadd.f32 %v6645, %v6646
  %v6648 = vrot.slane %v6647, 2
  %v6649 = vadd.f32 %v6647, %v6648
  %v6650 = vrot.slane %v6649, 1
  %v6651 = vadd.f32 %v6649, %v6650
  %v6652 = vmul.f32 %v6651, 0.001953125
  %v6653 = vmul.f32 %v6454, %v6454
  %v6654 = vsub.f32 %v6652, %v6653
  %v6655 = vadd.f32 %v6654, 1e-05
  %v6656 = vrsqrt.pop %v6655
  %v6657 = vmul.f32 %v6319, %v6656
  %v6658 = vsub.f32 %v6065, %v6454
  %v6659 = vsub.f32 %v6068, %v6454
  %v6660 = vsub.f32 %v6073, %v6454
  %v6661 = vsub.f32 %v6076, %v6454
  %v6662 = vsub.f32 %v6081, %v6454
  %v6663 = vsub.f32 %v6084, %v6454
  %v6664 = vsub.f32 %v6089, %v6454
  %v6665 = vsub.f32 %v6092, %v6454
  %v6666 = vsub.f32 %v6097, %v6454
  %v6667 = vsub.f32 %v6100, %v6454
  %v6668 = vsub.f32 %v6105, %v6454
  %v6669 = vsub.f32 %v6108, %v6454
  %v6670 = vsub.f32 %v6113, %v6454
  %v6671 = vsub.f32 %v6116, %v6454
  %v6672 = vsub.f32 %v6121, %v6454
  %v6673 = vsub.f32 %v6124, %v6454
  %v6674 = vsub.f32 %v6129, %v6454
  %v6675 = vsub.f32 %v6132, %v6454
  %v6676 = vsub.f32 %v6137, %v6454
  %v6677 = vsub.f32 %v6140, %v6454
  %v6678 = vsub.f32 %v6145, %v6454
  %v6679 = vsub.f32 %v6148, %v6454
  %v6680 = vsub.f32 %v6153, %v6454
  %v6681 = vsub.f32 %v6156, %v6454
  %v6682 = vsub.f32 %v6161, %v6454
  %v6683 = vsub.f32 %v6164, %v6454
  %v6684 = vsub.f32 %v6169, %v6454
  %v6685 = vsub.f32 %v6172, %v6454
  %v6686 = vsub.f32 %v6177, %v6454
  %v6687 = vsub.f32 %v6180, %v6454
  %v6688 = vsub.f32 %v6185, %v6454
  %v6689 = vsub.f32 %v6188, %v6454
  %v6690 = vsub.f32 %v6193, %v6454
  %v6691 = vsub.f32 %v6196, %v6454
  %v6692 = vsub.f32 %v6201, %v6454
  %v6693 = vsub.f32 %v6204, %v6454
  %v6694 = vsub.f32 %v6209, %v6454
  %v6695 = vsub.f32 %v6212, %v6454
  %v6696 = vsub.f32 %v6217, %v6454
  %v6697 = vsub.f32 %v6220, %v6454
  %v6698 = vsub.f32 %v6225, %v6454
  %v6699 = vsub.f32 %v6228, %v6454
  %v6700 = vsub.f32 %v6233, %v6454
  %v6701 = vsub.f32 %v6236, %v6454
  %v6702 = vsub.f32 %v6241, %v6454
  %v6703 = vsub.f32 %v6244, %v6454
  %v6704 = vsub.f32 %v6249, %v6454
  %v6705 = vsub.f32 %v6252, %v6454
  %v6706 = vsub.f32 %v6257, %v6454
  %v6707 = vsub.f32 %v6260, %v6454
  %v6708 = vsub.f32 %v6265, %v6454
  %v6709 = vsub.f32 %v6268, %v6454
  %v6710 = vsub.f32 %v6273, %v6454
  %v6711 = vsub.f32 %v6276, %v6454
  %v6712 = vsub.f32 %v6281, %v6454
  %v6713 = vsub.f32 %v6284, %v6454
  %v6714 = vsub.f32 %v6289, %v6454
  %v6715 = vsub.f32 %v6292, %v6454
  %v6716 = vsub.f32 %v6297, %v6454
  %v6717 = vsub.f32 %v6300, %v6454
  %v6718 = vsub.f32 %v6305, %v6454
  %v6719 = vsub.f32 %v6308, %v6454
  %v6720 = vsub.f32 %v6313, %v6454
  %v6721 = vsub.f32 %v6316, %v6454
  %v6723 = vlaneseq
  %v6724 = vshrl.u32 %v6723, 7
  %v6725 = vsub.s32 0, %v6724
  %v6726 = vrot.slane %v6657, %v6725
  %v6728 = vmul.f32 %v6658, %v6726
  %v6729 = vmul.f32 %v6659, %v6726
  %v6730 = vmul.f32 %v6660, %v6726
  %v6731 = vmul.f32 %v6661, %v6726
  %v6732 = vmul.f32 %v6662, %v6726
  %v6733 = vmul.f32 %v6663, %v6726
  %v6734 = vmul.f32 %v6664, %v6726
  %v6735 = vmul.f32 %v6665, %v6726
  %v6736 = vmul.f32 %v6666, %v6726
  %v6737 = vmul.f32 %v6667, %v6726
  %v6738 = vmul.f32 %v6668, %v6726
  %v6739 = vmul.f32 %v6669, %v6726
  %v6740 = vmul.f32 %v6670, %v6726
  %v6741 = vmul.f32 %v6671, %v6726
  %v6742 = vmul.f32 %v6672, %v6726
  %v6743 = vmul.f32 %v6673, %v6726
  %v6744 = vmul.f32 %v6674, %v6726
  %v6745 = vmul.f32 %v6675, %v6726
  %v6746 = vmul.f32 %v6676, %v6726
  %v6747 = vmul.f32 %v6677, %v6726
  %v6748 = vmul.f32 %v6678, %v6726
  %v6749 = vmul.f32 %v6679, %v6726
  %v6750 = vmul.f32 %v6680, %v6726
  %v6751 = vmul.f32 %v6681, %v6726
  %v6752 = vmul.f32 %v6682, %v6726
  %v6753 = vmul.f32 %v6683, %v6726
  %v6754 = vmul.f32 %v6684, %v6726
  %v6755 = vmul.f32 %v6685, %v6726
  %v6756 = vmul.f32 %v6686, %v6726
  %v6757 = vmul.f32 %v6687, %v6726
  %v6758 = vmul.f32 %v6688, %v6726
  %v6759 = vmul.f32 %v6689, %v6726
  %v6760 = vmul.f32 %v6690, %v6726
  %v6761 = vmul.f32 %v6691, %v6726
  %v6762 = vmul.f32 %v6692, %v6726
  %v6763 = vmul.f32 %v6693, %v6726
  %v6764 = vmul.f32 %v6694, %v6726
  %v6765 = vmul.f32 %v6695, %v6726
  %v6766 = vmul.f32 %v6696, %v6726
  %v6767 = vmul.f32 %v6697, %v6726
  %v6768 = vmul.f32 %v6698, %v6726
  %v6769 = vmul.f32 %v6699, %v6726
  %v6770 = vmul.f32 %v6700, %v6726
  %v6771 = vmul.f32 %v6701, %v6726
  %v6772 = vmul.f32 %v6702, %v6726
  %v6773 = vmul.f32 %v6703, %v6726
  %v6774 = vmul.f32 %v6704, %v6726
  %v6775 = vmul.f32 %v6705, %v6726
  %v6776 = vmul.f32 %v6706, %v6726
  %v6777 = vmul.f32 %v6707, %v6726
  %v6778 = vmul.f32 %v6708, %v6726
  %v6779 = vmul.f32 %v6709, %v6726
  %v6780 = vmul.f32 %v6710, %v6726
  %v6781 = vmul.f32 %v6711, %v6726
  %v6782 = vmul.f32 %v6712, %v6726
  %v6783 = vmul.f32 %v6713, %v6726
  %v6784 = vmul.f32 %v6714, %v6726
  %v6785 = vmul.f32 %v6715, %v6726
  %v6786 = vmul.f32 %v6716, %v6726
  %v6787 = vmul.f32 %v6717, %v6726
  %v6788 = vmul.f32 %v6718, %v6726
  %v6789 = vmul.f32 %v6719, %v6726
  %v6790 = vmul.f32 %v6720, %v6726
  %v6791 = vmul.f32 %v6721, %v6726
  %v6793 = vlaneseq
  %v6794 = vshrl.u32 %v6793, 7
  %v6795 = vsub.s32 0, %v6794
  %v6796 = vrot.slane %v6320, %v6795
  %v6798 = vadd.f32 %v6728, %v6796
  %v6799 = vadd.f32 %v6729, %v6796
  %v6800 = vadd.f32 %v6730, %v6796
  %v6801 = vadd.f32 %v6731, %v6796
  %v6802 = vadd.f32 %v6732, %v6796
  %v6803 = vadd.f32 %v6733, %v6796
  %v6804 = vadd.f32 %v6734, %v6796
  %v6805 = vadd.f32 %v6735, %v6796
  %v6806 = vadd.f32 %v6736, %v6796
  %v6807 = vadd.f32 %v6737, %v6796
  %v6808 = vadd.f32 %v6738, %v6796
  %v6809 = vadd.f32 %v6739, %v6796
  %v6810 = vadd.f32 %v6740, %v6796
  %v6811 = vadd.f32 %v6741, %v6796
  %v6812 = vadd.f32 %v6742, %v6796
  %v6813 = vadd.f32 %v6743, %v6796
  %v6814 = vadd.f32 %v6744, %v6796
  %v6815 = vadd.f32 %v6745, %v6796
  %v6816 = vadd.f32 %v6746, %v6796
  %v6817 = vadd.f32 %v6747, %v6796
  %v6818 = vadd.f32 %v6748, %v6796
  %v6819 = vadd.f32 %v6749, %v6796
  %v6820 = vadd.f32 %v6750, %v6796
  %v6821 = vadd.f32 %v6751, %v6796
  %v6822 = vadd.f32 %v6752, %v6796
  %v6823 = vadd.f32 %v6753, %v6796
  %v6824 = vadd.f32 %v6754, %v6796
  %v6825 = vadd.f32 %v6755, %v6796
  %v6826 = vadd.f32 %v6756, %v6796
  %v6827 = vadd.f32 %v6757, %v6796
  %v6828 = vadd.f32 %v6758, %v6796
  %v6829 = vadd.f32 %v6759, %v6796
  %v6830 = vadd.f32 %v6760, %v6796
  %v6831 = vadd.f32 %v6761, %v6796
  %v6832 = vadd.f32 %v6762, %v6796
  %v6833 = vadd.f32 %v6763, %v6796
  %v6834 = vadd.f32 %v6764, %v6796
  %v6835 = vadd.f32 %v6765, %v6796
  %v6836 = vadd.f32 %v6766, %v6796
  %v6837 = vadd.f32 %v6767, %v6796
  %v6838 = vadd.f32 %v6768, %v6796
  %v6839 = vadd.f32 %v6769, %v6796
  %v6840 = vadd.f32 %v6770, %v6796
  %v6841 = vadd.f32 %v6771, %v6796
  %v6842 = vadd.f32 %v6772, %v6796
  %v6843 = vadd.f32 %v6773, %v6796
  %v6844 = vadd.f32 %v6774, %v6796
  %v6845 = vadd.f32 %v6775, %v6796
  %v6846 = vadd.f32 %v6776, %v6796
  %v6847 = vadd.f32 %v6777, %v6796
  %v6848 = vadd.f32 %v6778, %v6796
  %v6849 = vadd.f32 %v6779, %v6796
  %v6850 = vadd.f32 %v6780, %v6796
  %v6851 = vadd.f32 %v6781, %v6796
  %v6852 = vadd.f32 %v6782, %v6796
  %v6853 = vadd.f32 %v6783, %v6796
  %v6854 = vadd.f32 %v6784, %v6796
  %v6855 = vadd.f32 %v6785, %v6796
  %v6856 = vadd.f32 %v6786, %v6796
  %v6857 = vadd.f32 %v6787, %v6796
  %v6858 = vadd.f32 %v6788, %v6796
  %v6859 = vadd.f32 %v6789, %v6796
  %v6860 = vadd.f32 %v6790, %v6796
  %v6861 = vadd.f32 %v6791, %v6796
  %v6862 = vmax.f32 %v6798, 0.0
  %v6863 = vmax.f32 %v6799, 0.0
  %v6864 = vmax.f32 %v6800, 0.0
  %v6865 = vmax.f32 %v6801, 0.0
  %v6866 = vmax.f32 %v6802, 0.0
  %v6867 = vmax.f32 %v6803, 0.0
  %v6868 = vmax.f32 %v6804, 0.0
  %v6869 = vmax.f32 %v6805, 0.0
  %v6870 = vmax.f32 %v6806, 0.0
  %v6871 = vmax.f32 %v6807, 0.0
  %v6872 = vmax.f32 %v6808, 0.0
  %v6873 = vmax.f32 %v6809, 0.0
  %v6874 = vmax.f32 %v6810, 0.0
  %v6875 = vmax.f32 %v6811, 0.0
  %v6876 = vmax.f32 %v6812, 0.0
  %v6877 = vmax.f32 %v6813, 0.0
  %v6878 = vmax.f32 %v6814, 0.0
  %v6879 = vmax.f32 %v6815, 0.0
  %v6880 = vmax.f32 %v6816, 0.0
  %v6881 = vmax.f32 %v6817, 0.0
  %v6882 = vmax.f32 %v6818, 0.0
  %v6883 = vmax.f32 %v6819, 0.0
  %v6884 = vmax.f32 %v6820, 0.0
  %v6885 = vmax.f32 %v6821, 0.0
  %v6886 = vmax.f32 %v6822, 0.0
  %v6887 = vmax.f32 %v6823, 0.0
  %v6888 = vmax.f32 %v6824, 0.0
  %v6889 = vmax.f32 %v6825, 0.0
  %v6890 = vmax.f32 %v6826, 0.0
  %v6891 = vmax.f32 %v6827, 0.0
  %v6892 = vmax.f32 %v6828, 0.0
  %v6893 = vmax.f32 %v6829, 0.0
  %v6894 = vmax.f32 %v6830, 0.0
  %v6895 = vmax.f32 %v6831, 0.0
  %v6896 = vmax.f32 %v6832, 0.0
  %v6897 = vmax.f32 %v6833, 0.0
  %v6898 = vmax.f32 %v6834, 0.0
  %v6899 = vmax.f32 %v6835, 0.0
  %v6900 = vmax.f32 %v6836, 0.0
  %v6901 = vmax.f32 %v6837, 0.0
  %v6902 = vmax.f32 %v6838, 0.0
  %v6903 = vmax.f32 %v6839, 0.0
  %v6904 = vmax.f32 %v6840, 0.0
  %v6905 = vmax.f32 %v6841, 0.0
  %v6906 = vmax.f32 %v6842, 0.0
  %v6907 = vmax.f32 %v6843, 0.0
  %v6908 = vmax.f32 %v6844, 0.0
  %v6909 = vmax.f32 %v6845, 0.0
  %v6910 = vmax.f32 %v6846, 0.0
  %v6911 = vmax.f32 %v6847, 0.0
  %v6912 = vmax.f32 %v6848, 0.0
  %v6913 = vmax.f32 %v6849, 0.0
  %v6914 = vmax.f32 %v6850, 0.0
  %v6915 = vmax.f32 %v6851, 0.0
  %v6916 = vmax.f32 %v6852, 0.0
  %v6917 = vmax.f32 %v6853, 0.0
  %v6918 = vmax.f32 %v6854, 0.0
  %v6919 = vmax.f32 %v6855, 0.0
  %v6920 = vmax.f32 %v6856, 0.0
  %v6921 = vmax.f32 %v6857, 0.0
  %v6922 = vmax.f32 %v6858, 0.0
  %v6923 = vmax.f32 %v6859, 0.0
  %v6924 = vmax.f32 %v6860, 0.0
  %v6925 = vmax.f32 %v6861, 0.0
  %6926 = vst.msk [vmem:[#allocation4] sm:$0xff] %vm2032, 0.0
  %6927 = vst.msk [vmem:[#allocation4 + $0x8] sm:$0xff] %vm2032, 0.0
  %vm6928 = vcmask 517120
  %6929 = vst.msk [vmem:[#allocation4 + $0x10] sm:$0x3] %vm6928, 0.0
  %6930 = vst.msk [vmem:[#allocation4 + $0x18] sm:$0xff] %vm2032, 0.0
  %6931 = vst.msk [vmem:[#allocation4 + $0x20] sm:$0xff] %vm2032, 0.0
  %6932 = vst.msk [vmem:[#allocation4 + $0x28] sm:$0x3] %vm6928, 0.0
  %6933 = vst.msk [vmem:[#allocation4 + $0x30] sm:$0xff] %vm2032, 0.0
  %6934 = vst.msk [vmem:[#allocation4 + $0x38] sm:$0xff] %vm2032, 0.0
  %6935 = vst.msk [vmem:[#allocation4 + $0x40] sm:$0x3] %vm6928, 0.0
  %6936 = vst.msk [vmem:[#allocation4 + $0x48] sm:$0xff] %vm2032, 0.0
  %6937 = vst.msk [vmem:[#allocation4 + $0x50] sm:$0xff] %vm2032, 0.0
  %6938 = vst.msk [vmem:[#allocation4 + $0x58] sm:$0x3] %vm6928, 0.0
  %6939 = vst.msk [vmem:[#allocation4 + $0x60] sm:$0xff] %vm2032, 0.0
  %6940 = vst.msk [vmem:[#allocation4 + $0x68] sm:$0xff] %vm2032, 0.0
  %6941 = vst.msk [vmem:[#allocation4 + $0x70] sm:$0x3] %vm6928, 0.0
  %6942 = vst.msk [vmem:[#allocation4 + $0x78] sm:$0xff] %vm2032, 0.0
  %6943 = vst.msk [vmem:[#allocation4 + $0x80] sm:$0xff] %vm2032, 0.0
  %6944 = vst.msk [vmem:[#allocation4 + $0x88] sm:$0x3] %vm6928, 0.0
  %6945 = vst.msk [vmem:[#allocation4 + $0x90] sm:$0xff] %vm2032, 0.0
  %6946 = vst.msk [vmem:[#allocation4 + $0x98] sm:$0xff] %vm2032, 0.0
  %6947 = vst.msk [vmem:[#allocation4 + $0xa0] sm:$0x3] %vm6928, 0.0
  %6948 = vst.msk [vmem:[#allocation4 + $0xa8] sm:$0xff] %vm2032, 0.0
  %6949 = vst.msk [vmem:[#allocation4 + $0xb0] sm:$0xff] %vm2032, 0.0
  %6950 = vst.msk [vmem:[#allocation4 + $0xb8] sm:$0x3] %vm6928, 0.0
  %6951 = vst.msk [vmem:[#allocation4 + $0xc0] sm:$0xff] %vm2032, 0.0
  %6952 = vst.msk [vmem:[#allocation4 + $0xc8] sm:$0xff] %vm2032, 0.0
  %6953 = vst.msk [vmem:[#allocation4 + $0xd0] sm:$0x3] %vm6928, 0.0
  %6954 = vst.msk [vmem:[#allocation4 + $0xd8] sm:$0xff] %vm2032, 0.0
  %6955 = vst.msk [vmem:[#allocation4 + $0xe0] sm:$0xff] %vm2032, 0.0
  %6956 = vst.msk [vmem:[#allocation4 + $0xe8] sm:$0x3] %vm6928, 0.0
  %6957 = vst.msk [vmem:[#allocation4 + $0xf0] sm:$0xff] %vm2032, 0.0
  %6958 = vst.msk [vmem:[#allocation4 + $0xf8] sm:$0xff] %vm2032, 0.0
  %6959 = vst.msk [vmem:[#allocation4 + $0x100] sm:$0x3] %vm6928, 0.0
  %6960 = vst.msk [vmem:[#allocation4 + $0x108] sm:$0xff] %vm2032, 0.0
  %6961 = vst.msk [vmem:[#allocation4 + $0x110] sm:$0xff] %vm2032, 0.0
  %6962 = vst.msk [vmem:[#allocation4 + $0x118] sm:$0x3] %vm6928, 0.0
  %6963 = vst.msk [vmem:[#allocation4 + $0x120] sm:$0xff] %vm2032, 0.0
  %6964 = vst.msk [vmem:[#allocation4 + $0x128] sm:$0xff] %vm2032, 0.0
  %6965 = vst.msk [vmem:[#allocation4 + $0x130] sm:$0x3] %vm6928, 0.0
  %6966 = vst.msk [vmem:[#allocation4 + $0x138] sm:$0xff] %vm2032, 0.0
  %6967 = vst.msk [vmem:[#allocation4 + $0x140] sm:$0xff] %vm2032, 0.0
  %6968 = vst.msk [vmem:[#allocation4 + $0x148] sm:$0x3] %vm6928, 0.0
  %6969 = vst.msk [vmem:[#allocation4 + $0x150] sm:$0xff] %vm2032, 0.0
  %6970 = vst.msk [vmem:[#allocation4 + $0x158] sm:$0xff] %vm2032, 0.0
  %6971 = vst.msk [vmem:[#allocation4 + $0x160] sm:$0x3] %vm6928, 0.0
  %6972 = vst.msk [vmem:[#allocation4 + $0x168] sm:$0xff] %vm2032, 0.0
  %6973 = vst.msk [vmem:[#allocation4 + $0x170] sm:$0xff] %vm2032, 0.0
  %6974 = vst.msk [vmem:[#allocation4 + $0x178] sm:$0x3] %vm6928, 0.0
  %6975 = vst.msk [vmem:[#allocation4 + $0x180] sm:$0xff] %vm2032, 0.0
  %6976 = vst.msk [vmem:[#allocation4 + $0x188] sm:$0xff] %vm2032, 0.0
  %6977 = vst.msk [vmem:[#allocation4 + $0x190] sm:$0x3] %vm6928, 0.0
  %6978 = vst.msk [vmem:[#allocation4 + $0x198] sm:$0xff] %vm2032, 0.0
  %6979 = vst.msk [vmem:[#allocation4 + $0x1a0] sm:$0xff] %vm2032, 0.0
  %6980 = vst.msk [vmem:[#allocation4 + $0x1a8] sm:$0x3] %vm6928, 0.0
  %6981 = vst.msk [vmem:[#allocation4 + $0x1b0] sm:$0xff] %vm2032, 0.0
  %6982 = vst.msk [vmem:[#allocation4 + $0x1b8] sm:$0xff] %vm2032, 0.0
  %6983 = vst.msk [vmem:[#allocation4 + $0x1c0] sm:$0x3] %vm6928, 0.0
  %6984 = vst.msk [vmem:[#allocation4 + $0x1c8] sm:$0xff] %vm2032, 0.0
  %6985 = vst.msk [vmem:[#allocation4 + $0x1d0] sm:$0xff] %vm2032, 0.0
  %6986 = vst.msk [vmem:[#allocation4 + $0x1d8] sm:$0x3] %vm6928, 0.0
  %6987 = vst.msk [vmem:[#allocation4 + $0x1e0] sm:$0xff] %vm2032, 0.0
  %6988 = vst.msk [vmem:[#allocation4 + $0x1e8] sm:$0xff] %vm2032, 0.0
  %6989 = vst.msk [vmem:[#allocation4 + $0x1f0] sm:$0x3] %vm6928, 0.0
  %6990 = vst.msk [vmem:[#allocation4 + $0x1f8] sm:$0xff] %vm2032, 0.0
  %6991 = vst.msk [vmem:[#allocation4 + $0x200] sm:$0xff] %vm2032, 0.0
  %6992 = vst.msk [vmem:[#allocation4 + $0x208] sm:$0x3] %vm6928, 0.0
  %6993 = vst.msk [vmem:[#allocation4 + $0x210] sm:$0xff] %vm2032, 0.0
  %6994 = vst.msk [vmem:[#allocation4 + $0x218] sm:$0xff] %vm2032, 0.0
  %6995 = vst.msk [vmem:[#allocation4 + $0x220] sm:$0x3] %vm6928, 0.0
  %6996 = vst.msk [vmem:[#allocation4 + $0x228] sm:$0xff] %vm2032, 0.0
  %6997 = vst.msk [vmem:[#allocation4 + $0x230] sm:$0xff] %vm2032, 0.0
  %6998 = vst.msk [vmem:[#allocation4 + $0x238] sm:$0x3] %vm6928, 0.0
  %6999 = vst.msk [vmem:[#allocation4 + $0x240] sm:$0xff] %vm2032, 0.0
  %7000 = vst.msk [vmem:[#allocation4 + $0x248] sm:$0xff] %vm2032, 0.0
  %7001 = vst.msk [vmem:[#allocation4 + $0x250] sm:$0x3] %vm6928, 0.0
  %7002 = vst.msk [vmem:[#allocation4 + $0x258] sm:$0xff] %vm2032, 0.0
  %7003 = vst.msk [vmem:[#allocation4 + $0x260] sm:$0xff] %vm2032, 0.0
  %7004 = vst.msk [vmem:[#allocation4 + $0x268] sm:$0x3] %vm6928, 0.0
  %7005 = vst.msk [vmem:[#allocation4 + $0x270] sm:$0xff] %vm2032, 0.0
  %7006 = vst.msk [vmem:[#allocation4 + $0x278] sm:$0xff] %vm2032, 0.0
  %7007 = vst.msk [vmem:[#allocation4 + $0x280] sm:$0x3] %vm6928, 0.0
  %7008 = vst.msk [vmem:[#allocation4 + $0x288] sm:$0xff] %vm2032, 0.0
  %7009 = vst.msk [vmem:[#allocation4 + $0x290] sm:$0xff] %vm2032, 0.0
  %7010 = vst.msk [vmem:[#allocation4 + $0x298] sm:$0x3] %vm6928, 0.0
  %7011 = vst.msk [vmem:[#allocation4 + $0x2a0] sm:$0xff] %vm2032, 0.0
  %7012 = vst.msk [vmem:[#allocation4 + $0x2a8] sm:$0xff] %vm2032, 0.0
  %7013 = vst.msk [vmem:[#allocation4 + $0x2b0] sm:$0x3] %vm6928, 0.0
  %7014 = vst.msk [vmem:[#allocation4 + $0x2b8] sm:$0xff] %vm2032, 0.0
  %7015 = vst.msk [vmem:[#allocation4 + $0x2c0] sm:$0xff] %vm2032, 0.0
  %7016 = vst.msk [vmem:[#allocation4 + $0x2c8] sm:$0x3] %vm6928, 0.0
  %7017 = vst.msk [vmem:[#allocation4 + $0x2d0] sm:$0xff] %vm2032, 0.0
  %7018 = vst.msk [vmem:[#allocation4 + $0x2d8] sm:$0xff] %vm2032, 0.0
  %7019 = vst.msk [vmem:[#allocation4 + $0x2e0] sm:$0x3] %vm6928, 0.0
  %7020 = vst.msk [vmem:[#allocation4 + $0x2e8] sm:$0xff] %vm2032, 0.0
  %7021 = vst.msk [vmem:[#allocation4 + $0x2f0] sm:$0xff] %vm2032, 0.0
  %7022 = vst.msk [vmem:[#allocation4 + $0x2f8] sm:$0x3] %vm6928, 0.0
  %7023 = vst.msk [vmem:[#allocation4 + $0x300] sm:$0xff] %vm2032, 0.0
  %7024 = vst.msk [vmem:[#allocation4 + $0x308] sm:$0xff] %vm2032, 0.0
  %7025 = vst.msk [vmem:[#allocation4 + $0x310] sm:$0x3] %vm6928, 0.0
  %7026 = vst.msk [vmem:[#allocation4 + $0x318] sm:$0xff] %vm2032, 0.0
  %7027 = vst.msk [vmem:[#allocation4 + $0x320] sm:$0xff] %vm2032, 0.0
  %7028 = vst.msk [vmem:[#allocation4 + $0x328] sm:$0x3] %vm6928, 0.0
  %7029 = vst.msk [vmem:[#allocation4 + $0x330] sm:$0xff] %vm2032, 0.0
  %7030 = vst.msk [vmem:[#allocation4 + $0x338] sm:$0xff] %vm2032, 0.0
  %7031 = vst.msk [vmem:[#allocation4 + $0x340] sm:$0x3] %vm6928, 0.0
  %7032 = vst.msk [vmem:[#allocation4 + $0x348] sm:$0xff] %vm2032, 0.0
  %7033 = vst.msk [vmem:[#allocation4 + $0x350] sm:$0xff] %vm2032, 0.0
  %7034 = vst.msk [vmem:[#allocation4 + $0x358] sm:$0x3] %vm6928, 0.0
  %s7035 = scalar_lea.vmem [#allocation4], 24
  %7036 = vst.msk [vmem:[%s7035 + $0x1] sm:$0xff] %vm2032, %v6862
  %7037 = vst.msk [vmem:[%s7035 + $0x9] sm:$0xff] %vm2032, %v6863
  %7038 = vst.msk [vmem:[%s7035 + $0x19] sm:$0xff] %vm2032, %v6864
  %7039 = vst.msk [vmem:[%s7035 + $0x21] sm:$0xff] %vm2032, %v6865
  %7040 = vst.msk [vmem:[%s7035 + $0x31] sm:$0xff] %vm2032, %v6866
  %7041 = vst.msk [vmem:[%s7035 + $0x39] sm:$0xff] %vm2032, %v6867
  %7042 = vst.msk [vmem:[%s7035 + $0x49] sm:$0xff] %vm2032, %v6868
  %7043 = vst.msk [vmem:[%s7035 + $0x51] sm:$0xff] %vm2032, %v6869
  %7044 = vst.msk [vmem:[%s7035 + $0x61] sm:$0xff] %vm2032, %v6870
  %7045 = vst.msk [vmem:[%s7035 + $0x69] sm:$0xff] %vm2032, %v6871
  %7046 = vst.msk [vmem:[%s7035 + $0x79] sm:$0xff] %vm2032, %v6872
  %7047 = vst.msk [vmem:[%s7035 + $0x81] sm:$0xff] %vm2032, %v6873
  %7048 = vst.msk [vmem:[%s7035 + $0x91] sm:$0xff] %vm2032, %v6874
  %7049 = vst.msk [vmem:[%s7035 + $0x99] sm:$0xff] %vm2032, %v6875
  %7050 = vst.msk [vmem:[%s7035 + $0xa9] sm:$0xff] %vm2032, %v6876
  %7051 = vst.msk [vmem:[%s7035 + $0xb1] sm:$0xff] %vm2032, %v6877
  %7052 = vst.msk [vmem:[%s7035 + $0xc1] sm:$0xff] %vm2032, %v6878
  %7053 = vst.msk [vmem:[%s7035 + $0xc9] sm:$0xff] %vm2032, %v6879
  %7054 = vst.msk [vmem:[%s7035 + $0xd9] sm:$0xff] %vm2032, %v6880
  %7055 = vst.msk [vmem:[%s7035 + $0xe1] sm:$0xff] %vm2032, %v6881
  %7056 = vst.msk [vmem:[%s7035 + $0xf1] sm:$0xff] %vm2032, %v6882
  %7057 = vst.msk [vmem:[%s7035 + $0xf9] sm:$0xff] %vm2032, %v6883
  %7058 = vst.msk [vmem:[%s7035 + $0x109] sm:$0xff] %vm2032, %v6884
  %7059 = vst.msk [vmem:[%s7035 + $0x111] sm:$0xff] %vm2032, %v6885
  %7060 = vst.msk [vmem:[%s7035 + $0x121] sm:$0xff] %vm2032, %v6886
  %7061 = vst.msk [vmem:[%s7035 + $0x129] sm:$0xff] %vm2032, %v6887
  %7062 = vst.msk [vmem:[%s7035 + $0x139] sm:$0xff] %vm2032, %v6888
  %7063 = vst.msk [vmem:[%s7035 + $0x141] sm:$0xff] %vm2032, %v6889
  %7064 = vst.msk [vmem:[%s7035 + $0x151] sm:$0xff] %vm2032, %v6890
  %7065 = vst.msk [vmem:[%s7035 + $0x159] sm:$0xff] %vm2032, %v6891
  %7066 = vst.msk [vmem:[%s7035 + $0x169] sm:$0xff] %vm2032, %v6892
  %7067 = vst.msk [vmem:[%s7035 + $0x171] sm:$0xff] %vm2032, %v6893
  %7068 = vst.msk [vmem:[%s7035 + $0x1b1] sm:$0xff] %vm2032, %v6894
  %7069 = vst.msk [vmem:[%s7035 + $0x1b9] sm:$0xff] %vm2032, %v6895
  %7070 = vst.msk [vmem:[%s7035 + $0x1c9] sm:$0xff] %vm2032, %v6896
  %7071 = vst.msk [vmem:[%s7035 + $0x1d1] sm:$0xff] %vm2032, %v6897
  %7072 = vst.msk [vmem:[%s7035 + $0x1e1] sm:$0xff] %vm2032, %v6898
  %7073 = vst.msk [vmem:[%s7035 + $0x1e9] sm:$0xff] %vm2032, %v6899
  %7074 = vst.msk [vmem:[%s7035 + $0x1f9] sm:$0xff] %vm2032, %v6900
  %7075 = vst.msk [vmem:[%s7035 + $0x201] sm:$0xff] %vm2032, %v6901
  %7076 = vst.msk [vmem:[%s7035 + $0x211] sm:$0xff] %vm2032, %v6902
  %7077 = vst.msk [vmem:[%s7035 + $0x219] sm:$0xff] %vm2032, %v6903
  %7078 = vst.msk [vmem:[%s7035 + $0x229] sm:$0xff] %vm2032, %v6904
  %7079 = vst.msk [vmem:[%s7035 + $0x231] sm:$0xff] %vm2032, %v6905
  %7080 = vst.msk [vmem:[%s7035 + $0x241] sm:$0xff] %vm2032, %v6906
  %7081 = vst.msk [vmem:[%s7035 + $0x249] sm:$0xff] %vm2032, %v6907
  %7082 = vst.msk [vmem:[%s7035 + $0x259] sm:$0xff] %vm2032, %v6908
  %7083 = vst.msk [vmem:[%s7035 + $0x261] sm:$0xff] %vm2032, %v6909
  %7084 = vst.msk [vmem:[%s7035 + $0x271] sm:$0xff] %vm2032, %v6910
  %7085 = vst.msk [vmem:[%s7035 + $0x279] sm:$0xff] %vm2032, %v6911
  %7086 = vst.msk [vmem:[%s7035 + $0x289] sm:$0xff] %vm2032, %v6912
  %7087 = vst.msk [vmem:[%s7035 + $0x291] sm:$0xff] %vm2032, %v6913
  %7088 = vst.msk [vmem:[%s7035 + $0x2a1] sm:$0xff] %vm2032, %v6914
  %7089 = vst.msk [vmem:[%s7035 + $0x2a9] sm:$0xff] %vm2032, %v6915
  %7090 = vst.msk [vmem:[%s7035 + $0x2b9] sm:$0xff] %vm2032, %v6916
  %7091 = vst.msk [vmem:[%s7035 + $0x2c1] sm:$0xff] %vm2032, %v6917
  %7092 = vst.msk [vmem:[%s7035 + $0x2d1] sm:$0xff] %vm2032, %v6918
  %7093 = vst.msk [vmem:[%s7035 + $0x2d9] sm:$0xff] %vm2032, %v6919
  %7094 = vst.msk [vmem:[%s7035 + $0x2e9] sm:$0xff] %vm2032, %v6920
  %7095 = vst.msk [vmem:[%s7035 + $0x2f1] sm:$0xff] %vm2032, %v6921
  %7096 = vst.msk [vmem:[%s7035 + $0x301] sm:$0xff] %vm2032, %v6922
  %7097 = vst.msk [vmem:[%s7035 + $0x309] sm:$0xff] %vm2032, %v6923
  %7098 = vst.msk [vmem:[%s7035 + $0x319] sm:$0xff] %vm2032, %v6924
  %7099 = vst.msk [vmem:[%s7035 + $0x321] sm:$0xff] %vm2032, %v6925
  %v7100 = vld [vmem:[#allocation4] sm:$0xff]
  %v7101 = vld [vmem:[#allocation4 + $0x8] sm:$0xff]
  %v7102 = vld [vmem:[#allocation4 + $0x18] sm:$0xff]
  %v7103 = vld [vmem:[#allocation4 + $0x20] sm:$0xff]
  %v7104 = vld [vmem:[#allocation4 + $0x30] sm:$0xff]
  %v7105 = vld [vmem:[#allocation4 + $0x38] sm:$0xff]
  %v7106 = vld [vmem:[#allocation4 + $0x48] sm:$0xff]
  %v7107 = vld [vmem:[#allocation4 + $0x50] sm:$0xff]
  %v7108 = vld [vmem:[#allocation4 + $0x60] sm:$0xff]
  %v7109 = vld [vmem:[#allocation4 + $0x68] sm:$0xff]
  %v7110 = vld [vmem:[#allocation4 + $0x78] sm:$0xff]
  %v7111 = vld [vmem:[#allocation4 + $0x80] sm:$0xff]
  %v7112 = vld [vmem:[#allocation4 + $0x90] sm:$0xff]
  %v7113 = vld [vmem:[#allocation4 + $0x98] sm:$0xff]
  %v7114 = vld [vmem:[#allocation4 + $0xa8] sm:$0xff]
  %v7115 = vld [vmem:[#allocation4 + $0xb0] sm:$0xff]
  %v7116 = vld [vmem:[#allocation4 + $0xc0] sm:$0xff]
  %v7117 = vld [vmem:[#allocation4 + $0xc8] sm:$0xff]
  %v7118 = vld [vmem:[#allocation4 + $0xd8] sm:$0xff]
  %v7119 = vld [vmem:[#allocation4 + $0xe0] sm:$0xff]
  %v7120 = vld [vmem:[#allocation4 + $0xf0] sm:$0xff]
  %v7121 = vld [vmem:[#allocation4 + $0xf8] sm:$0xff]
  %v7122 = vld [vmem:[#allocation4 + $0x108] sm:$0xff]
  %v7123 = vld [vmem:[#allocation4 + $0x110] sm:$0xff]
  %v7124 = vld [vmem:[#allocation4 + $0x120] sm:$0xff]
  %v7125 = vld [vmem:[#allocation4 + $0x128] sm:$0xff]
  %v7126 = vld [vmem:[#allocation4 + $0x138] sm:$0xff]
  %v7127 = vld [vmem:[#allocation4 + $0x140] sm:$0xff]
  %v7128 = vld [vmem:[#allocation4 + $0x150] sm:$0xff]
  %v7129 = vld [vmem:[#allocation4 + $0x158] sm:$0xff]
  %v7130 = vld [vmem:[#allocation4 + $0x168] sm:$0xff]
  %v7131 = vld [vmem:[#allocation4 + $0x170] sm:$0xff]
  %v7132 = vld [vmem:[#allocation4 + $0x1b0] sm:$0xff]
  %v7133 = vld [vmem:[#allocation4 + $0x1b8] sm:$0xff]
  %v7134 = vld [vmem:[#allocation4 + $0x1c8] sm:$0xff]
  %v7135 = vld [vmem:[#allocation4 + $0x1d0] sm:$0xff]
  %v7136 = vld [vmem:[#allocation4 + $0x1e0] sm:$0xff]
  %v7137 = vld [vmem:[#allocation4 + $0x1e8] sm:$0xff]
  %v7138 = vld [vmem:[#allocation4 + $0x1f8] sm:$0xff]
  %v7139 = vld [vmem:[#allocation4 + $0x200] sm:$0xff]
  %v7140 = vld [vmem:[#allocation4 + $0x210] sm:$0xff]
  %v7141 = vld [vmem:[#allocation4 + $0x218] sm:$0xff]
  %v7142 = vld [vmem:[#allocation4 + $0x228] sm:$0xff]
  %v7143 = vld [vmem:[#allocation4 + $0x230] sm:$0xff]
  %v7144 = vld [vmem:[#allocation4 + $0x240] sm:$0xff]
  %v7145 = vld [vmem:[#allocation4 + $0x248] sm:$0xff]
  %v7146 = vld [vmem:[#allocation4 + $0x258] sm:$0xff]
  %v7147 = vld [vmem:[#allocation4 + $0x260] sm:$0xff]
  %v7148 = vld [vmem:[#allocation4 + $0x270] sm:$0xff]
  %v7149 = vld [vmem:[#allocation4 + $0x278] sm:$0xff]
  %v7150 = vld [vmem:[#allocation4 + $0x288] sm:$0xff]
  %v7151 = vld [vmem:[#allocation4 + $0x290] sm:$0xff]
  %v7152 = vld [vmem:[#allocation4 + $0x2a0] sm:$0xff]
  %v7153 = vld [vmem:[#allocation4 + $0x2a8] sm:$0xff]
  %v7154 = vld [vmem:[#allocation4 + $0x2b8] sm:$0xff]
  %v7155 = vld [vmem:[#allocation4 + $0x2c0] sm:$0xff]
  %v7156 = vld [vmem:[#allocation4 + $0x2d0] sm:$0xff]
  %v7157 = vld [vmem:[#allocation4 + $0x2d8] sm:$0xff]
  %v7158 = vld [vmem:[#allocation4 + $0x2e8] sm:$0xff]
  %v7159 = vld [vmem:[#allocation4 + $0x2f0] sm:$0xff]
  %v7160 = vld [vmem:[#allocation4 + $0x300] sm:$0xff]
  %v7161 = vld [vmem:[#allocation4 + $0x308] sm:$0xff]
  %v7162 = vld [vmem:[#allocation4 + $0x318] sm:$0xff]
  %v7163 = vld [vmem:[#allocation4 + $0x320] sm:$0xff]
  %v7164 = vld [vmem:[#allocation4 + $0x1] sm:$0xff]
  %v7165 = vld [vmem:[#allocation4 + $0x9] sm:$0xff]
  %v7166 = vld [vmem:[#allocation4 + $0x19] sm:$0xff]
  %v7167 = vld [vmem:[#allocation4 + $0x21] sm:$0xff]
  %v7168 = vld [vmem:[#allocation4 + $0x31] sm:$0xff]
  %v7169 = vld [vmem:[#allocation4 + $0x39] sm:$0xff]
  %v7170 = vld [vmem:[#allocation4 + $0x49] sm:$0xff]
  %v7171 = vld [vmem:[#allocation4 + $0x51] sm:$0xff]
  %v7172 = vld [vmem:[#allocation4 + $0x61] sm:$0xff]
  %v7173 = vld [vmem:[#allocation4 + $0x69] sm:$0xff]
  %v7174 = vld [vmem:[#allocation4 + $0x79] sm:$0xff]
  %v7175 = vld [vmem:[#allocation4 + $0x81] sm:$0xff]
  %v7176 = vld [vmem:[#allocation4 + $0x91] sm:$0xff]
  %v7177 = vld [vmem:[#allocation4 + $0x99] sm:$0xff]
  %v7178 = vld [vmem:[#allocation4 + $0xa9] sm:$0xff]
  %v7179 = vld [vmem:[#allocation4 + $0xb1] sm:$0xff]
  %v7180 = vld [vmem:[#allocation4 + $0xc1] sm:$0xff]
  %v7181 = vld [vmem:[#allocation4 + $0xc9] sm:$0xff]
  %v7182 = vld [vmem:[#allocation4 + $0xd9] sm:$0xff]
  %v7183 = vld [vmem:[#allocation4 + $0xe1] sm:$0xff]
  %v7184 = vld [vmem:[#allocation4 + $0xf1] sm:$0xff]
  %v7185 = vld [vmem:[#allocation4 + $0xf9] sm:$0xff]
  %v7186 = vld [vmem:[#allocation4 + $0x109] sm:$0xff]
  %v7187 = vld [vmem:[#allocation4 + $0x111] sm:$0xff]
  %v7188 = vld [vmem:[#allocation4 + $0x121] sm:$0xff]
  %v7189 = vld [vmem:[#allocation4 + $0x129] sm:$0xff]
  %v7190 = vld [vmem:[#allocation4 + $0x139] sm:$0xff]
  %v7191 = vld [vmem:[#allocation4 + $0x141] sm:$0xff]
  %v7192 = vld [vmem:[#allocation4 + $0x151] sm:$0xff]
  %v7193 = vld [vmem:[#allocation4 + $0x159] sm:$0xff]
  %v7194 = vld [vmem:[#allocation4 + $0x169] sm:$0xff]
  %v7195 = vld [vmem:[#allocation4 + $0x171] sm:$0xff]
  %v7196 = vld [vmem:[#allocation4 + $0x1b1] sm:$0xff]
  %v7197 = vld [vmem:[#allocation4 + $0x1b9] sm:$0xff]
  %v7198 = vld [vmem:[#allocation4 + $0x1c9] sm:$0xff]
  %v7199 = vld [vmem:[#allocation4 + $0x1d1] sm:$0xff]
  %v7200 = vld [vmem:[#allocation4 + $0x1e1] sm:$0xff]
  %v7201 = vld [vmem:[#allocation4 + $0x1e9] sm:$0xff]
  %v7202 = vld [vmem:[#allocation4 + $0x1f9] sm:$0xff]
  %v7203 = vld [vmem:[#allocation4 + $0x201] sm:$0xff]
  %v7204 = vld [vmem:[#allocation4 + $0x211] sm:$0xff]
  %v7205 = vld [vmem:[#allocation4 + $0x219] sm:$0xff]
  %v7206 = vld [vmem:[#allocation4 + $0x229] sm:$0xff]
  %v7207 = vld [vmem:[#allocation4 + $0x231] sm:$0xff]
  %v7208 = vld [vmem:[#allocation4 + $0x241] sm:$0xff]
  %v7209 = vld [vmem:[#allocation4 + $0x249] sm:$0xff]
  %v7210 = vld [vmem:[#allocation4 + $0x259] sm:$0xff]
  %v7211 = vld [vmem:[#allocation4 + $0x261] sm:$0xff]
  %v7212 = vld [vmem:[#allocation4 + $0x271] sm:$0xff]
  %v7213 = vld [vmem:[#allocation4 + $0x279] sm:$0xff]
  %v7214 = vld [vmem:[#allocation4 + $0x289] sm:$0xff]
  %v7215 = vld [vmem:[#allocation4 + $0x291] sm:$0xff]
  %v7216 = vld [vmem:[#allocation4 + $0x2a1] sm:$0xff]
  %v7217 = vld [vmem:[#allocation4 + $0x2a9] sm:$0xff]
  %v7218 = vld [vmem:[#allocation4 + $0x2b9] sm:$0xff]
  %v7219 = vld [vmem:[#allocation4 + $0x2c1] sm:$0xff]
  %v7220 = vld [vmem:[#allocation4 + $0x2d1] sm:$0xff]
  %v7221 = vld [vmem:[#allocation4 + $0x2d9] sm:$0xff]
  %v7222 = vld [vmem:[#allocation4 + $0x2e9] sm:$0xff]
  %v7223 = vld [vmem:[#allocation4 + $0x2f1] sm:$0xff]
  %v7224 = vld [vmem:[#allocation4 + $0x301] sm:$0xff]
  %v7225 = vld [vmem:[#allocation4 + $0x309] sm:$0xff]
  %v7226 = vld [vmem:[#allocation4 + $0x319] sm:$0xff]
  %v7227 = vld [vmem:[#allocation4 + $0x321] sm:$0xff]
  %v7228 = vld [vmem:[#allocation4 + $0x2] sm:$0xff]
  %v7229 = vld [vmem:[#allocation4 + $0xa] sm:$0xff]
  %v7230 = vld [vmem:[#allocation4 + $0x1a] sm:$0xff]
  %v7231 = vld [vmem:[#allocation4 + $0x22] sm:$0xff]
  %v7232 = vld [vmem:[#allocation4 + $0x32] sm:$0xff]
  %v7233 = vld [vmem:[#allocation4 + $0x3a] sm:$0xff]
  %v7234 = vld [vmem:[#allocation4 + $0x4a] sm:$0xff]
  %v7235 = vld [vmem:[#allocation4 + $0x52] sm:$0xff]
  %v7236 = vld [vmem:[#allocation4 + $0x62] sm:$0xff]
  %v7237 = vld [vmem:[#allocation4 + $0x6a] sm:$0xff]
  %v7238 = vld [vmem:[#allocation4 + $0x7a] sm:$0xff]
  %v7239 = vld [vmem:[#allocation4 + $0x82] sm:$0xff]
  %v7240 = vld [vmem:[#allocation4 + $0x92] sm:$0xff]
  %v7241 = vld [vmem:[#allocation4 + $0x9a] sm:$0xff]
  %v7242 = vld [vmem:[#allocation4 + $0xaa] sm:$0xff]
  %v7243 = vld [vmem:[#allocation4 + $0xb2] sm:$0xff]
  %v7244 = vld [vmem:[#allocation4 + $0xc2] sm:$0xff]
  %v7245 = vld [vmem:[#allocation4 + $0xca] sm:$0xff]
  %v7246 = vld [vmem:[#allocation4 + $0xda] sm:$0xff]
  %v7247 = vld [vmem:[#allocation4 + $0xe2] sm:$0xff]
  %v7248 = vld [vmem:[#allocation4 + $0xf2] sm:$0xff]
  %v7249 = vld [vmem:[#allocation4 + $0xfa] sm:$0xff]
  %v7250 = vld [vmem:[#allocation4 + $0x10a] sm:$0xff]
  %v7251 = vld [vmem:[#allocation4 + $0x112] sm:$0xff]
  %v7252 = vld [vmem:[#allocation4 + $0x122] sm:$0xff]
  %v7253 = vld [vmem:[#allocation4 + $0x12a] sm:$0xff]
  %v7254 = vld [vmem:[#allocation4 + $0x13a] sm:$0xff]
  %v7255 = vld [vmem:[#allocation4 + $0x142] sm:$0xff]
  %v7256 = vld [vmem:[#allocation4 + $0x152] sm:$0xff]
  %v7257 = vld [vmem:[#allocation4 + $0x15a] sm:$0xff]
  %v7258 = vld [vmem:[#allocation4 + $0x16a] sm:$0xff]
  %v7259 = vld [vmem:[#allocation4 + $0x172] sm:$0xff]
  %v7260 = vld [vmem:[#allocation4 + $0x1b2] sm:$0xff]
  %v7261 = vld [vmem:[#allocation4 + $0x1ba] sm:$0xff]
  %v7262 = vld [vmem:[#allocation4 + $0x1ca] sm:$0xff]
  %v7263 = vld [vmem:[#allocation4 + $0x1d2] sm:$0xff]
  %v7264 = vld [vmem:[#allocation4 + $0x1e2] sm:$0xff]
  %v7265 = vld [vmem:[#allocation4 + $0x1ea] sm:$0xff]
  %v7266 = vld [vmem:[#allocation4 + $0x1fa] sm:$0xff]
  %v7267 = vld [vmem:[#allocation4 + $0x202] sm:$0xff]
  %v7268 = vld [vmem:[#allocation4 + $0x212] sm:$0xff]
  %v7269 = vld [vmem:[#allocation4 + $0x21a] sm:$0xff]
  %v7270 = vld [vmem:[#allocation4 + $0x22a] sm:$0xff]
  %v7271 = vld [vmem:[#allocation4 + $0x232] sm:$0xff]
  %v7272 = vld [vmem:[#allocation4 + $0x242] sm:$0xff]
  %v7273 = vld [vmem:[#allocation4 + $0x24a] sm:$0xff]
  %v7274 = vld [vmem:[#allocation4 + $0x25a] sm:$0xff]
  %v7275 = vld [vmem:[#allocation4 + $0x262] sm:$0xff]
  %v7276 = vld [vmem:[#allocation4 + $0x272] sm:$0xff]
  %v7277 = vld [vmem:[#allocation4 + $0x27a] sm:$0xff]
  %v7278 = vld [vmem:[#allocation4 + $0x28a] sm:$0xff]
  %v7279 = vld [vmem:[#allocation4 + $0x292] sm:$0xff]
  %v7280 = vld [vmem:[#allocation4 + $0x2a2] sm:$0xff]
  %v7281 = vld [vmem:[#allocation4 + $0x2aa] sm:$0xff]
  %v7282 = vld [vmem:[#allocation4 + $0x2ba] sm:$0xff]
  %v7283 = vld [vmem:[#allocation4 + $0x2c2] sm:$0xff]
  %v7284 = vld [vmem:[#allocation4 + $0x2d2] sm:$0xff]
  %v7285 = vld [vmem:[#allocation4 + $0x2da] sm:$0xff]
  %v7286 = vld [vmem:[#allocation4 + $0x2ea] sm:$0xff]
  %v7287 = vld [vmem:[#allocation4 + $0x2f2] sm:$0xff]
  %v7288 = vld [vmem:[#allocation4 + $0x302] sm:$0xff]
  %v7289 = vld [vmem:[#allocation4 + $0x30a] sm:$0xff]
  %v7290 = vld [vmem:[#allocation4 + $0x31a] sm:$0xff]
  %v7291 = vld [vmem:[#allocation4 + $0x322] sm:$0xff]
  %v7292 = vld [vmem:[%s7035] sm:$0xff]
  %v7293 = vld [vmem:[%s7035 + $0x8] sm:$0xff]
  %v7294 = vld [vmem:[%s7035 + $0x18] sm:$0xff]
  %v7295 = vld [vmem:[%s7035 + $0x20] sm:$0xff]
  %v7296 = vld [vmem:[%s7035 + $0x30] sm:$0xff]
  %v7297 = vld [vmem:[%s7035 + $0x38] sm:$0xff]
  %v7298 = vld [vmem:[%s7035 + $0x48] sm:$0xff]
  %v7299 = vld [vmem:[%s7035 + $0x50] sm:$0xff]
  %v7300 = vld [vmem:[%s7035 + $0x60] sm:$0xff]
  %v7301 = vld [vmem:[%s7035 + $0x68] sm:$0xff]
  %v7302 = vld [vmem:[%s7035 + $0x78] sm:$0xff]
  %v7303 = vld [vmem:[%s7035 + $0x80] sm:$0xff]
  %v7304 = vld [vmem:[%s7035 + $0x90] sm:$0xff]
  %v7305 = vld [vmem:[%s7035 + $0x98] sm:$0xff]
  %v7306 = vld [vmem:[%s7035 + $0xa8] sm:$0xff]
  %v7307 = vld [vmem:[%s7035 + $0xb0] sm:$0xff]
  %v7308 = vld [vmem:[%s7035 + $0xc0] sm:$0xff]
  %v7309 = vld [vmem:[%s7035 + $0xc8] sm:$0xff]
  %v7310 = vld [vmem:[%s7035 + $0xd8] sm:$0xff]
  %v7311 = vld [vmem:[%s7035 + $0xe0] sm:$0xff]
  %v7312 = vld [vmem:[%s7035 + $0xf0] sm:$0xff]
  %v7313 = vld [vmem:[%s7035 + $0xf8] sm:$0xff]
  %v7314 = vld [vmem:[%s7035 + $0x108] sm:$0xff]
  %v7315 = vld [vmem:[%s7035 + $0x110] sm:$0xff]
  %v7316 = vld [vmem:[%s7035 + $0x120] sm:$0xff]
  %v7317 = vld [vmem:[%s7035 + $0x128] sm:$0xff]
  %v7318 = vld [vmem:[%s7035 + $0x138] sm:$0xff]
  %v7319 = vld [vmem:[%s7035 + $0x140] sm:$0xff]
  %v7320 = vld [vmem:[%s7035 + $0x150] sm:$0xff]
  %v7321 = vld [vmem:[%s7035 + $0x158] sm:$0xff]
  %v7322 = vld [vmem:[%s7035 + $0x168] sm:$0xff]
  %v7323 = vld [vmem:[%s7035 + $0x170] sm:$0xff]
  %v7324 = vld [vmem:[%s7035 + $0x1b0] sm:$0xff]
  %v7325 = vld [vmem:[%s7035 + $0x1b8] sm:$0xff]
  %v7326 = vld [vmem:[%s7035 + $0x1c8] sm:$0xff]
  %v7327 = vld [vmem:[%s7035 + $0x1d0] sm:$0xff]
  %v7328 = vld [vmem:[%s7035 + $0x1e0] sm:$0xff]
  %v7329 = vld [vmem:[%s7035 + $0x1e8] sm:$0xff]
  %v7330 = vld [vmem:[%s7035 + $0x1f8] sm:$0xff]
  %v7331 = vld [vmem:[%s7035 + $0x200] sm:$0xff]
  %v7332 = vld [vmem:[%s7035 + $0x210] sm:$0xff]
  %v7333 = vld [vmem:[%s7035 + $0x218] sm:$0xff]
  %v7334 = vld [vmem:[%s7035 + $0x228] sm:$0xff]
  %v7335 = vld [vmem:[%s7035 + $0x230] sm:$0xff]
  %v7336 = vld [vmem:[%s7035 + $0x240] sm:$0xff]
  %v7337 = vld [vmem:[%s7035 + $0x248] sm:$0xff]
  %v7338 = vld [vmem:[%s7035 + $0x258] sm:$0xff]
  %v7339 = vld [vmem:[%s7035 + $0x260] sm:$0xff]
  %v7340 = vld [vmem:[%s7035 + $0x270] sm:$0xff]
  %v7341 = vld [vmem:[%s7035 + $0x278] sm:$0xff]
  %v7342 = vld [vmem:[%s7035 + $0x288] sm:$0xff]
  %v7343 = vld [vmem:[%s7035 + $0x290] sm:$0xff]
  %v7344 = vld [vmem:[%s7035 + $0x2a0] sm:$0xff]
  %v7345 = vld [vmem:[%s7035 + $0x2a8] sm:$0xff]
  %v7346 = vld [vmem:[%s7035 + $0x2b8] sm:$0xff]
  %v7347 = vld [vmem:[%s7035 + $0x2c0] sm:$0xff]
  %v7348 = vld [vmem:[%s7035 + $0x2d0] sm:$0xff]
  %v7349 = vld [vmem:[%s7035 + $0x2d8] sm:$0xff]
  %v7350 = vld [vmem:[%s7035 + $0x2e8] sm:$0xff]
  %v7351 = vld [vmem:[%s7035 + $0x2f0] sm:$0xff]
  %v7352 = vld [vmem:[%s7035 + $0x300] sm:$0xff]
  %v7353 = vld [vmem:[%s7035 + $0x308] sm:$0xff]
  %v7354 = vld [vmem:[%s7035 + $0x318] sm:$0xff]
  %v7355 = vld [vmem:[%s7035 + $0x320] sm:$0xff]
  %v7356 = vld [vmem:[%s7035 + $0x1] sm:$0xff]
  %v7357 = vld [vmem:[%s7035 + $0x9] sm:$0xff]
  %v7358 = vld [vmem:[%s7035 + $0x19] sm:$0xff]
  %v7359 = vld [vmem:[%s7035 + $0x21] sm:$0xff]
  %v7360 = vld [vmem:[%s7035 + $0x31] sm:$0xff]
  %v7361 = vld [vmem:[%s7035 + $0x39] sm:$0xff]
  %v7362 = vld [vmem:[%s7035 + $0x49] sm:$0xff]
  %v7363 = vld [vmem:[%s7035 + $0x51] sm:$0xff]
  %v7364 = vld [vmem:[%s7035 + $0x61] sm:$0xff]
  %v7365 = vld [vmem:[%s7035 + $0x69] sm:$0xff]
  %v7366 = vld [vmem:[%s7035 + $0x79] sm:$0xff]
  %v7367 = vld [vmem:[%s7035 + $0x81] sm:$0xff]
  %v7368 = vld [vmem:[%s7035 + $0x91] sm:$0xff]
  %v7369 = vld [vmem:[%s7035 + $0x99] sm:$0xff]
  %v7370 = vld [vmem:[%s7035 + $0xa9] sm:$0xff]
  %v7371 = vld [vmem:[%s7035 + $0xb1] sm:$0xff]
  %v7372 = vld [vmem:[%s7035 + $0xc1] sm:$0xff]
  %v7373 = vld [vmem:[%s7035 + $0xc9] sm:$0xff]
  %v7374 = vld [vmem:[%s7035 + $0xd9] sm:$0xff]
  %v7375 = vld [vmem:[%s7035 + $0xe1] sm:$0xff]
  %v7376 = vld [vmem:[%s7035 + $0xf1] sm:$0xff]
  %v7377 = vld [vmem:[%s7035 + $0xf9] sm:$0xff]
  %v7378 = vld [vmem:[%s7035 + $0x109] sm:$0xff]
  %v7379 = vld [vmem:[%s7035 + $0x111] sm:$0xff]
  %v7380 = vld [vmem:[%s7035 + $0x121] sm:$0xff]
  %v7381 = vld [vmem:[%s7035 + $0x129] sm:$0xff]
  %v7382 = vld [vmem:[%s7035 + $0x139] sm:$0xff]
  %v7383 = vld [vmem:[%s7035 + $0x141] sm:$0xff]
  %v7384 = vld [vmem:[%s7035 + $0x151] sm:$0xff]
  %v7385 = vld [vmem:[%s7035 + $0x159] sm:$0xff]
  %v7386 = vld [vmem:[%s7035 + $0x169] sm:$0xff]
  %v7387 = vld [vmem:[%s7035 + $0x171] sm:$0xff]
  %v7388 = vld [vmem:[%s7035 + $0x1b1] sm:$0xff]
  %v7389 = vld [vmem:[%s7035 + $0x1b9] sm:$0xff]
  %v7390 = vld [vmem:[%s7035 + $0x1c9] sm:$0xff]
  %v7391 = vld [vmem:[%s7035 + $0x1d1] sm:$0xff]
  %v7392 = vld [vmem:[%s7035 + $0x1e1] sm:$0xff]
  %v7393 = vld [vmem:[%s7035 + $0x1e9] sm:$0xff]
  %v7394 = vld [vmem:[%s7035 + $0x1f9] sm:$0xff]
  %v7395 = vld [vmem:[%s7035 + $0x201] sm:$0xff]
  %v7396 = vld [vmem:[%s7035 + $0x211] sm:$0xff]
  %v7397 = vld [vmem:[%s7035 + $0x219] sm:$0xff]
  %v7398 = vld [vmem:[%s7035 + $0x229] sm:$0xff]
  %v7399 = vld [vmem:[%s7035 + $0x231] sm:$0xff]
  %v7400 = vld [vmem:[%s7035 + $0x241] sm:$0xff]
  %v7401 = vld [vmem:[%s7035 + $0x249] sm:$0xff]
  %v7402 = vld [vmem:[%s7035 + $0x259] sm:$0xff]
  %v7403 = vld [vmem:[%s7035 + $0x261] sm:$0xff]
  %v7404 = vld [vmem:[%s7035 + $0x271] sm:$0xff]
  %v7405 = vld [vmem:[%s7035 + $0x279] sm:$0xff]
  %v7406 = vld [vmem:[%s7035 + $0x289] sm:$0xff]
  %v7407 = vld [vmem:[%s7035 + $0x291] sm:$0xff]
  %v7408 = vld [vmem:[%s7035 + $0x2a1] sm:$0xff]
  %v7409 = vld [vmem:[%s7035 + $0x2a9] sm:$0xff]
  %v7410 = vld [vmem:[%s7035 + $0x2b9] sm:$0xff]
  %v7411 = vld [vmem:[%s7035 + $0x2c1] sm:$0xff]
  %v7412 = vld [vmem:[%s7035 + $0x2d1] sm:$0xff]
  %v7413 = vld [vmem:[%s7035 + $0x2d9] sm:$0xff]
  %v7414 = vld [vmem:[%s7035 + $0x2e9] sm:$0xff]
  %v7415 = vld [vmem:[%s7035 + $0x2f1] sm:$0xff]
  %v7416 = vld [vmem:[%s7035 + $0x301] sm:$0xff]
  %v7417 = vld [vmem:[%s7035 + $0x309] sm:$0xff]
  %v7418 = vld [vmem:[%s7035 + $0x319] sm:$0xff]
  %v7419 = vld [vmem:[%s7035 + $0x321] sm:$0xff]
  %v7420 = vld [vmem:[%s7035 + $0x2] sm:$0xff]
  %v7421 = vld [vmem:[%s7035 + $0xa] sm:$0xff]
  %v7422 = vld [vmem:[%s7035 + $0x1a] sm:$0xff]
  %v7423 = vld [vmem:[%s7035 + $0x22] sm:$0xff]
  %v7424 = vld [vmem:[%s7035 + $0x32] sm:$0xff]
  %v7425 = vld [vmem:[%s7035 + $0x3a] sm:$0xff]
  %v7426 = vld [vmem:[%s7035 + $0x4a] sm:$0xff]
  %v7427 = vld [vmem:[%s7035 + $0x52] sm:$0xff]
  %v7428 = vld [vmem:[%s7035 + $0x62] sm:$0xff]
  %v7429 = vld [vmem:[%s7035 + $0x6a] sm:$0xff]
  %v7430 = vld [vmem:[%s7035 + $0x7a] sm:$0xff]
  %v7431 = vld [vmem:[%s7035 + $0x82] sm:$0xff]
  %v7432 = vld [vmem:[%s7035 + $0x92] sm:$0xff]
  %v7433 = vld [vmem:[%s7035 + $0x9a] sm:$0xff]
  %v7434 = vld [vmem:[%s7035 + $0xaa] sm:$0xff]
  %v7435 = vld [vmem:[%s7035 + $0xb2] sm:$0xff]
  %v7436 = vld [vmem:[%s7035 + $0xc2] sm:$0xff]
  %v7437 = vld [vmem:[%s7035 + $0xca] sm:$0xff]
  %v7438 = vld [vmem:[%s7035 + $0xda] sm:$0xff]
  %v7439 = vld [vmem:[%s7035 + $0xe2] sm:$0xff]
  %v7440 = vld [vmem:[%s7035 + $0xf2] sm:$0xff]
  %v7441 = vld [vmem:[%s7035 + $0xfa] sm:$0xff]
  %v7442 = vld [vmem:[%s7035 + $0x10a] sm:$0xff]
  %v7443 = vld [vmem:[%s7035 + $0x112] sm:$0xff]
  %v7444 = vld [vmem:[%s7035 + $0x122] sm:$0xff]
  %v7445 = vld [vmem:[%s7035 + $0x12a] sm:$0xff]
  %v7446 = vld [vmem:[%s7035 + $0x13a] sm:$0xff]
  %v7447 = vld [vmem:[%s7035 + $0x142] sm:$0xff]
  %v7448 = vld [vmem:[%s7035 + $0x152] sm:$0xff]
  %v7449 = vld [vmem:[%s7035 + $0x15a] sm:$0xff]
  %v7450 = vld [vmem:[%s7035 + $0x16a] sm:$0xff]
  %v7451 = vld [vmem:[%s7035 + $0x172] sm:$0xff]
  %v7452 = vld [vmem:[%s7035 + $0x1b2] sm:$0xff]
  %v7453 = vld [vmem:[%s7035 + $0x1ba] sm:$0xff]
  %v7454 = vld [vmem:[%s7035 + $0x1ca] sm:$0xff]
  %v7455 = vld [vmem:[%s7035 + $0x1d2] sm:$0xff]
  %v7456 = vld [vmem:[%s7035 + $0x1e2] sm:$0xff]
  %v7457 = vld [vmem:[%s7035 + $0x1ea] sm:$0xff]
  %v7458 = vld [vmem:[%s7035 + $0x1fa] sm:$0xff]
  %v7459 = vld [vmem:[%s7035 + $0x202] sm:$0xff]
  %v7460 = vld [vmem:[%s7035 + $0x212] sm:$0xff]
  %v7461 = vld [vmem:[%s7035 + $0x21a] sm:$0xff]
  %v7462 = vld [vmem:[%s7035 + $0x22a] sm:$0xff]
  %v7463 = vld [vmem:[%s7035 + $0x232] sm:$0xff]
  %v7464 = vld [vmem:[%s7035 + $0x242] sm:$0xff]
  %v7465 = vld [vmem:[%s7035 + $0x24a] sm:$0xff]
  %v7466 = vld [vmem:[%s7035 + $0x25a] sm:$0xff]
  %v7467 = vld [vmem:[%s7035 + $0x262] sm:$0xff]
  %v7468 = vld [vmem:[%s7035 + $0x272] sm:$0xff]
  %v7469 = vld [vmem:[%s7035 + $0x27a] sm:$0xff]
  %v7470 = vld [vmem:[%s7035 + $0x28a] sm:$0xff]
  %v7471 = vld [vmem:[%s7035 + $0x292] sm:$0xff]
  %v7472 = vld [vmem:[%s7035 + $0x2a2] sm:$0xff]
  %v7473 = vld [vmem:[%s7035 + $0x2aa] sm:$0xff]
  %v7474 = vld [vmem:[%s7035 + $0x2ba] sm:$0xff]
  %v7475 = vld [vmem:[%s7035 + $0x2c2] sm:$0xff]
  %v7476 = vld [vmem:[%s7035 + $0x2d2] sm:$0xff]
  %v7477 = vld [vmem:[%s7035 + $0x2da] sm:$0xff]
  %v7478 = vld [vmem:[%s7035 + $0x2ea] sm:$0xff]
  %v7479 = vld [vmem:[%s7035 + $0x2f2] sm:$0xff]
  %v7480 = vld [vmem:[%s7035 + $0x302] sm:$0xff]
  %v7481 = vld [vmem:[%s7035 + $0x30a] sm:$0xff]
  %v7482 = vld [vmem:[%s7035 + $0x31a] sm:$0xff]
  %v7483 = vld [vmem:[%s7035 + $0x322] sm:$0xff]
  %s7484 = scalar_lea.vmem [#allocation4], 48
  %v7485 = vld [vmem:[%s7484] sm:$0xff]
  %v7486 = vld [vmem:[%s7484 + $0x8] sm:$0xff]
  %v7487 = vld [vmem:[%s7484 + $0x18] sm:$0xff]
  %v7488 = vld [vmem:[%s7484 + $0x20] sm:$0xff]
  %v7489 = vld [vmem:[%s7484 + $0x30] sm:$0xff]
  %v7490 = vld [vmem:[%s7484 + $0x38] sm:$0xff]
  %v7491 = vld [vmem:[%s7484 + $0x48] sm:$0xff]
  %v7492 = vld [vmem:[%s7484 + $0x50] sm:$0xff]
  %v7493 = vld [vmem:[%s7484 + $0x60] sm:$0xff]
  %v7494 = vld [vmem:[%s7484 + $0x68] sm:$0xff]
  %v7495 = vld [vmem:[%s7484 + $0x78] sm:$0xff]
  %v7496 = vld [vmem:[%s7484 + $0x80] sm:$0xff]
  %v7497 = vld [vmem:[%s7484 + $0x90] sm:$0xff]
  %v7498 = vld [vmem:[%s7484 + $0x98] sm:$0xff]
  %v7499 = vld [vmem:[%s7484 + $0xa8] sm:$0xff]
  %v7500 = vld [vmem:[%s7484 + $0xb0] sm:$0xff]
  %v7501 = vld [vmem:[%s7484 + $0xc0] sm:$0xff]
  %v7502 = vld [vmem:[%s7484 + $0xc8] sm:$0xff]
  %v7503 = vld [vmem:[%s7484 + $0xd8] sm:$0xff]
  %v7504 = vld [vmem:[%s7484 + $0xe0] sm:$0xff]
  %v7505 = vld [vmem:[%s7484 + $0xf0] sm:$0xff]
  %v7506 = vld [vmem:[%s7484 + $0xf8] sm:$0xff]
  %v7507 = vld [vmem:[%s7484 + $0x108] sm:$0xff]
  %v7508 = vld [vmem:[%s7484 + $0x110] sm:$0xff]
  %v7509 = vld [vmem:[%s7484 + $0x120] sm:$0xff]
  %v7510 = vld [vmem:[%s7484 + $0x128] sm:$0xff]
  %v7511 = vld [vmem:[%s7484 + $0x138] sm:$0xff]
  %v7512 = vld [vmem:[%s7484 + $0x140] sm:$0xff]
  %v7513 = vld [vmem:[%s7484 + $0x150] sm:$0xff]
  %v7514 = vld [vmem:[%s7484 + $0x158] sm:$0xff]
  %v7515 = vld [vmem:[%s7484 + $0x168] sm:$0xff]
  %v7516 = vld [vmem:[%s7484 + $0x170] sm:$0xff]
  %v7517 = vld [vmem:[%s7484 + $0x1b0] sm:$0xff]
  %v7518 = vld [vmem:[%s7484 + $0x1b8] sm:$0xff]
  %v7519 = vld [vmem:[%s7484 + $0x1c8] sm:$0xff]
  %v7520 = vld [vmem:[%s7484 + $0x1d0] sm:$0xff]
  %v7521 = vld [vmem:[%s7484 + $0x1e0] sm:$0xff]
  %v7522 = vld [vmem:[%s7484 + $0x1e8] sm:$0xff]
  %v7523 = vld [vmem:[%s7484 + $0x1f8] sm:$0xff]
  %v7524 = vld [vmem:[%s7484 + $0x200] sm:$0xff]
  %v7525 = vld [vmem:[%s7484 + $0x210] sm:$0xff]
  %v7526 = vld [vmem:[%s7484 + $0x218] sm:$0xff]
  %v7527 = vld [vmem:[%s7484 + $0x228] sm:$0xff]
  %v7528 = vld [vmem:[%s7484 + $0x230] sm:$0xff]
  %v7529 = vld [vmem:[%s7484 + $0x240] sm:$0xff]
  %v7530 = vld [vmem:[%s7484 + $0x248] sm:$0xff]
  %v7531 = vld [vmem:[%s7484 + $0x258] sm:$0xff]
  %v7532 = vld [vmem:[%s7484 + $0x260] sm:$0xff]
  %v7533 = vld [vmem:[%s7484 + $0x270] sm:$0xff]
  %v7534 = vld [vmem:[%s7484 + $0x278] sm:$0xff]
  %v7535 = vld [vmem:[%s7484 + $0x288] sm:$0xff]
  %v7536 = vld [vmem:[%s7484 + $0x290] sm:$0xff]
  %v7537 = vld [vmem:[%s7484 + $0x2a0] sm:$0xff]
  %v7538 = vld [vmem:[%s7484 + $0x2a8] sm:$0xff]
  %v7539 = vld [vmem:[%s7484 + $0x2b8] sm:$0xff]
  %v7540 = vld [vmem:[%s7484 + $0x2c0] sm:$0xff]
  %v7541 = vld [vmem:[%s7484 + $0x2d0] sm:$0xff]
  %v7542 = vld [vmem:[%s7484 + $0x2d8] sm:$0xff]
  %v7543 = vld [vmem:[%s7484 + $0x2e8] sm:$0xff]
  %v7544 = vld [vmem:[%s7484 + $0x2f0] sm:$0xff]
  %v7545 = vld [vmem:[%s7484 + $0x300] sm:$0xff]
  %v7546 = vld [vmem:[%s7484 + $0x308] sm:$0xff]
  %v7547 = vld [vmem:[%s7484 + $0x318] sm:$0xff]
  %v7548 = vld [vmem:[%s7484 + $0x320] sm:$0xff]
  %v7549 = vld [vmem:[%s7484 + $0x1] sm:$0xff]
  %v7550 = vld [vmem:[%s7484 + $0x9] sm:$0xff]
  %v7551 = vld [vmem:[%s7484 + $0x19] sm:$0xff]
  %v7552 = vld [vmem:[%s7484 + $0x21] sm:$0xff]
  %v7553 = vld [vmem:[%s7484 + $0x31] sm:$0xff]
  %v7554 = vld [vmem:[%s7484 + $0x39] sm:$0xff]
  %v7555 = vld [vmem:[%s7484 + $0x49] sm:$0xff]
  %v7556 = vld [vmem:[%s7484 + $0x51] sm:$0xff]
  %v7557 = vld [vmem:[%s7484 + $0x61] sm:$0xff]
  %v7558 = vld [vmem:[%s7484 + $0x69] sm:$0xff]
  %v7559 = vld [vmem:[%s7484 + $0x79] sm:$0xff]
  %v7560 = vld [vmem:[%s7484 + $0x81] sm:$0xff]
  %v7561 = vld [vmem:[%s7484 + $0x91] sm:$0xff]
  %v7562 = vld [vmem:[%s7484 + $0x99] sm:$0xff]
  %v7563 = vld [vmem:[%s7484 + $0xa9] sm:$0xff]
  %v7564 = vld [vmem:[%s7484 + $0xb1] sm:$0xff]
  %v7565 = vld [vmem:[%s7484 + $0xc1] sm:$0xff]
  %v7566 = vld [vmem:[%s7484 + $0xc9] sm:$0xff]
  %v7567 = vld [vmem:[%s7484 + $0xd9] sm:$0xff]
  %v7568 = vld [vmem:[%s7484 + $0xe1] sm:$0xff]
  %v7569 = vld [vmem:[%s7484 + $0xf1] sm:$0xff]
  %v7570 = vld [vmem:[%s7484 + $0xf9] sm:$0xff]
  %v7571 = vld [vmem:[%s7484 + $0x109] sm:$0xff]
  %v7572 = vld [vmem:[%s7484 + $0x111] sm:$0xff]
  %v7573 = vld [vmem:[%s7484 + $0x121] sm:$0xff]
  %v7574 = vld [vmem:[%s7484 + $0x129] sm:$0xff]
  %v7575 = vld [vmem:[%s7484 + $0x139] sm:$0xff]
  %v7576 = vld [vmem:[%s7484 + $0x141] sm:$0xff]
  %v7577 = vld [vmem:[%s7484 + $0x151] sm:$0xff]
  %v7578 = vld [vmem:[%s7484 + $0x159] sm:$0xff]
  %v7579 = vld [vmem:[%s7484 + $0x169] sm:$0xff]
  %v7580 = vld [vmem:[%s7484 + $0x171] sm:$0xff]
  %v7581 = vld [vmem:[%s7484 + $0x1b1] sm:$0xff]
  %v7582 = vld [vmem:[%s7484 + $0x1b9] sm:$0xff]
  %v7583 = vld [vmem:[%s7484 + $0x1c9] sm:$0xff]
  %v7584 = vld [vmem:[%s7484 + $0x1d1] sm:$0xff]
  %v7585 = vld [vmem:[%s7484 + $0x1e1] sm:$0xff]
  %v7586 = vld [vmem:[%s7484 + $0x1e9] sm:$0xff]
  %v7587 = vld [vmem:[%s7484 + $0x1f9] sm:$0xff]
  %v7588 = vld [vmem:[%s7484 + $0x201] sm:$0xff]
  %v7589 = vld [vmem:[%s7484 + $0x211] sm:$0xff]
  %v7590 = vld [vmem:[%s7484 + $0x219] sm:$0xff]
  %v7591 = vld [vmem:[%s7484 + $0x229] sm:$0xff]
  %v7592 = vld [vmem:[%s7484 + $0x231] sm:$0xff]
  %v7593 = vld [vmem:[%s7484 + $0x241] sm:$0xff]
  %v7594 = vld [vmem:[%s7484 + $0x249] sm:$0xff]
  %v7595 = vld [vmem:[%s7484 + $0x259] sm:$0xff]
  %v7596 = vld [vmem:[%s7484 + $0x261] sm:$0xff]
  %v7597 = vld [vmem:[%s7484 + $0x271] sm:$0xff]
  %v7598 = vld [vmem:[%s7484 + $0x279] sm:$0xff]
  %v7599 = vld [vmem:[%s7484 + $0x289] sm:$0xff]
  %v7600 = vld [vmem:[%s7484 + $0x291] sm:$0xff]
  %v7601 = vld [vmem:[%s7484 + $0x2a1] sm:$0xff]
  %v7602 = vld [vmem:[%s7484 + $0x2a9] sm:$0xff]
  %v7603 = vld [vmem:[%s7484 + $0x2b9] sm:$0xff]
  %v7604 = vld [vmem:[%s7484 + $0x2c1] sm:$0xff]
  %v7605 = vld [vmem:[%s7484 + $0x2d1] sm:$0xff]
  %v7606 = vld [vmem:[%s7484 + $0x2d9] sm:$0xff]
  %v7607 = vld [vmem:[%s7484 + $0x2e9] sm:$0xff]
  %v7608 = vld [vmem:[%s7484 + $0x2f1] sm:$0xff]
  %v7609 = vld [vmem:[%s7484 + $0x301] sm:$0xff]
  %v7610 = vld [vmem:[%s7484 + $0x309] sm:$0xff]
  %v7611 = vld [vmem:[%s7484 + $0x319] sm:$0xff]
  %v7612 = vld [vmem:[%s7484 + $0x321] sm:$0xff]
  %v7613 = vld [vmem:[%s7484 + $0x2] sm:$0xff]
  %v7614 = vld [vmem:[%s7484 + $0xa] sm:$0xff]
  %v7615 = vld [vmem:[%s7484 + $0x1a] sm:$0xff]
  %v7616 = vld [vmem:[%s7484 + $0x22] sm:$0xff]
  %v7617 = vld [vmem:[%s7484 + $0x32] sm:$0xff]
  %v7618 = vld [vmem:[%s7484 + $0x3a] sm:$0xff]
  %v7619 = vld [vmem:[%s7484 + $0x4a] sm:$0xff]
  %v7620 = vld [vmem:[%s7484 + $0x52] sm:$0xff]
  %v7621 = vld [vmem:[%s7484 + $0x62] sm:$0xff]
  %v7622 = vld [vmem:[%s7484 + $0x6a] sm:$0xff]
  %v7623 = vld [vmem:[%s7484 + $0x7a] sm:$0xff]
  %v7624 = vld [vmem:[%s7484 + $0x82] sm:$0xff]
  %v7625 = vld [vmem:[%s7484 + $0x92] sm:$0xff]
  %v7626 = vld [vmem:[%s7484 + $0x9a] sm:$0xff]
  %v7627 = vld [vmem:[%s7484 + $0xaa] sm:$0xff]
  %v7628 = vld [vmem:[%s7484 + $0xb2] sm:$0xff]
  %v7629 = vld [vmem:[%s7484 + $0xc2] sm:$0xff]
  %v7630 = vld [vmem:[%s7484 + $0xca] sm:$0xff]
  %v7631 = vld [vmem:[%s7484 + $0xda] sm:$0xff]
  %v7632 = vld [vmem:[%s7484 + $0xe2] sm:$0xff]
  %v7633 = vld [vmem:[%s7484 + $0xf2] sm:$0xff]
  %v7634 = vld [vmem:[%s7484 + $0xfa] sm:$0xff]
  %v7635 = vld [vmem:[%s7484 + $0x10a] sm:$0xff]
  %v7636 = vld [vmem:[%s7484 + $0x112] sm:$0xff]
  %v7637 = vld [vmem:[%s7484 + $0x122] sm:$0xff]
  %v7638 = vld [vmem:[%s7484 + $0x12a] sm:$0xff]
  %v7639 = vld [vmem:[%s7484 + $0x13a] sm:$0xff]
  %v7640 = vld [vmem:[%s7484 + $0x142] sm:$0xff]
  %v7641 = vld [vmem:[%s7484 + $0x152] sm:$0xff]
  %v7642 = vld [vmem:[%s7484 + $0x15a] sm:$0xff]
  %v7643 = vld [vmem:[%s7484 + $0x16a] sm:$0xff]
  %v7644 = vld [vmem:[%s7484 + $0x172] sm:$0xff]
  %v7645 = vld [vmem:[%s7484 + $0x1b2] sm:$0xff]
  %v7646 = vld [vmem:[%s7484 + $0x1ba] sm:$0xff]
  %v7647 = vld [vmem:[%s7484 + $0x1ca] sm:$0xff]
  %v7648 = vld [vmem:[%s7484 + $0x1d2] sm:$0xff]
  %v7649 = vld [vmem:[%s7484 + $0x1e2] sm:$0xff]
  %v7650 = vld [vmem:[%s7484 + $0x1ea] sm:$0xff]
  %v7651 = vld [vmem:[%s7484 + $0x1fa] sm:$0xff]
  %v7652 = vld [vmem:[%s7484 + $0x202] sm:$0xff]
  %v7653 = vld [vmem:[%s7484 + $0x212] sm:$0xff]
  %v7654 = vld [vmem:[%s7484 + $0x21a] sm:$0xff]
  %v7655 = vld [vmem:[%s7484 + $0x22a] sm:$0xff]
  %v7656 = vld [vmem:[%s7484 + $0x232] sm:$0xff]
  %v7657 = vld [vmem:[%s7484 + $0x242] sm:$0xff]
  %v7658 = vld [vmem:[%s7484 + $0x24a] sm:$0xff]
  %v7659 = vld [vmem:[%s7484 + $0x25a] sm:$0xff]
  %v7660 = vld [vmem:[%s7484 + $0x262] sm:$0xff]
  %v7661 = vld [vmem:[%s7484 + $0x272] sm:$0xff]
  %v7662 = vld [vmem:[%s7484 + $0x27a] sm:$0xff]
  %v7663 = vld [vmem:[%s7484 + $0x28a] sm:$0xff]
  %v7664 = vld [vmem:[%s7484 + $0x292] sm:$0xff]
  %v7665 = vld [vmem:[%s7484 + $0x2a2] sm:$0xff]
  %v7666 = vld [vmem:[%s7484 + $0x2aa] sm:$0xff]
  %v7667 = vld [vmem:[%s7484 + $0x2ba] sm:$0xff]
  %v7668 = vld [vmem:[%s7484 + $0x2c2] sm:$0xff]
  %v7669 = vld [vmem:[%s7484 + $0x2d2] sm:$0xff]
  %v7670 = vld [vmem:[%s7484 + $0x2da] sm:$0xff]
  %v7671 = vld [vmem:[%s7484 + $0x2ea] sm:$0xff]
  %v7672 = vld [vmem:[%s7484 + $0x2f2] sm:$0xff]
  %v7673 = vld [vmem:[%s7484 + $0x302] sm:$0xff]
  %v7674 = vld [vmem:[%s7484 + $0x30a] sm:$0xff]
  %v7675 = vld [vmem:[%s7484 + $0x31a] sm:$0xff]
  %v7676 = vld [vmem:[%s7484 + $0x322] sm:$0xff]
  %7741 = vrot.lane.b32.xlu0 %v7164, 64
  %v7742 = vpop.permute.xlu0 %7741
  %7743 = vrot.lane.b32.xlu0 %v7165, 64
  %v7744 = vpop.permute.xlu0 %7743
  %7745 = vrot.lane.b32.xlu0 %v7166, 64
  %v7746 = vpop.permute.xlu0 %7745
  %7747 = vrot.lane.b32.xlu0 %v7167, 64
  %v7748 = vpop.permute.xlu0 %7747
  %7749 = vrot.lane.b32.xlu0 %v7168, 64
  %v7750 = vpop.permute.xlu0 %7749
  %7751 = vrot.lane.b32.xlu0 %v7169, 64
  %v7752 = vpop.permute.xlu0 %7751
  %7753 = vrot.lane.b32.xlu0 %v7170, 64
  %v7754 = vpop.permute.xlu0 %7753
  %7755 = vrot.lane.b32.xlu0 %v7171, 64
  %v7756 = vpop.permute.xlu0 %7755
  %7757 = vrot.lane.b32.xlu0 %v7172, 64
  %v7758 = vpop.permute.xlu0 %7757
  %7759 = vrot.lane.b32.xlu0 %v7173, 64
  %v7760 = vpop.permute.xlu0 %7759
  %7761 = vrot.lane.b32.xlu0 %v7174, 64
  %v7762 = vpop.permute.xlu0 %7761
  %7763 = vrot.lane.b32.xlu0 %v7175, 64
  %v7764 = vpop.permute.xlu0 %7763
  %7765 = vrot.lane.b32.xlu0 %v7176, 64
  %v7766 = vpop.permute.xlu0 %7765
  %7767 = vrot.lane.b32.xlu0 %v7177, 64
  %v7768 = vpop.permute.xlu0 %7767
  %7769 = vrot.lane.b32.xlu0 %v7178, 64
  %v7770 = vpop.permute.xlu0 %7769
  %7771 = vrot.lane.b32.xlu0 %v7179, 64
  %v7772 = vpop.permute.xlu0 %7771
  %7773 = vrot.lane.b32.xlu0 %v7180, 64
  %v7774 = vpop.permute.xlu0 %7773
  %7775 = vrot.lane.b32.xlu0 %v7181, 64
  %v7776 = vpop.permute.xlu0 %7775
  %7777 = vrot.lane.b32.xlu0 %v7182, 64
  %v7778 = vpop.permute.xlu0 %7777
  %7779 = vrot.lane.b32.xlu0 %v7183, 64
  %v7780 = vpop.permute.xlu0 %7779
  %7781 = vrot.lane.b32.xlu0 %v7184, 64
  %v7782 = vpop.permute.xlu0 %7781
  %7783 = vrot.lane.b32.xlu0 %v7185, 64
  %v7784 = vpop.permute.xlu0 %7783
  %7785 = vrot.lane.b32.xlu0 %v7186, 64
  %v7786 = vpop.permute.xlu0 %7785
  %7787 = vrot.lane.b32.xlu0 %v7187, 64
  %v7788 = vpop.permute.xlu0 %7787
  %7789 = vrot.lane.b32.xlu0 %v7188, 64
  %v7790 = vpop.permute.xlu0 %7789
  %7791 = vrot.lane.b32.xlu0 %v7189, 64
  %v7792 = vpop.permute.xlu0 %7791
  %7793 = vrot.lane.b32.xlu0 %v7190, 64
  %v7794 = vpop.permute.xlu0 %7793
  %7795 = vrot.lane.b32.xlu0 %v7191, 64
  %v7796 = vpop.permute.xlu0 %7795
  %7797 = vrot.lane.b32.xlu0 %v7192, 64
  %v7798 = vpop.permute.xlu0 %7797
  %7799 = vrot.lane.b32.xlu0 %v7193, 64
  %v7800 = vpop.permute.xlu0 %7799
  %7801 = vrot.lane.b32.xlu0 %v7194, 64
  %v7802 = vpop.permute.xlu0 %7801
  %7803 = vrot.lane.b32.xlu0 %v7195, 64
  %v7804 = vpop.permute.xlu0 %7803
  %7805 = vrot.lane.b32.xlu0 %v7196, 64
  %v7806 = vpop.permute.xlu0 %7805
  %7807 = vrot.lane.b32.xlu0 %v7197, 64
  %v7808 = vpop.permute.xlu0 %7807
  %7809 = vrot.lane.b32.xlu0 %v7198, 64
  %v7810 = vpop.permute.xlu0 %7809
  %7811 = vrot.lane.b32.xlu0 %v7199, 64
  %v7812 = vpop.permute.xlu0 %7811
  %7813 = vrot.lane.b32.xlu0 %v7200, 64
  %v7814 = vpop.permute.xlu0 %7813
  %7815 = vrot.lane.b32.xlu0 %v7201, 64
  %v7816 = vpop.permute.xlu0 %7815
  %7817 = vrot.lane.b32.xlu0 %v7202, 64
  %v7818 = vpop.permute.xlu0 %7817
  %7819 = vrot.lane.b32.xlu0 %v7203, 64
  %v7820 = vpop.permute.xlu0 %7819
  %7821 = vrot.lane.b32.xlu0 %v7204, 64
  %v7822 = vpop.permute.xlu0 %7821
  %7823 = vrot.lane.b32.xlu0 %v7205, 64
  %v7824 = vpop.permute.xlu0 %7823
  %7825 = vrot.lane.b32.xlu0 %v7206, 64
  %v7826 = vpop.permute.xlu0 %7825
  %7827 = vrot.lane.b32.xlu0 %v7207, 64
  %v7828 = vpop.permute.xlu0 %7827
  %7829 = vrot.lane.b32.xlu0 %v7208, 64
  %v7830 = vpop.permute.xlu0 %7829
  %7831 = vrot.lane.b32.xlu0 %v7209, 64
  %v7832 = vpop.permute.xlu0 %7831
  %7833 = vrot.lane.b32.xlu0 %v7210, 64
  %v7834 = vpop.permute.xlu0 %7833
  %7835 = vrot.lane.b32.xlu0 %v7211, 64
  %v7836 = vpop.permute.xlu0 %7835
  %7837 = vrot.lane.b32.xlu0 %v7212, 64
  %v7838 = vpop.permute.xlu0 %7837
  %7839 = vrot.lane.b32.xlu0 %v7213, 64
  %v7840 = vpop.permute.xlu0 %7839
  %7841 = vrot.lane.b32.xlu0 %v7214, 64
  %v7842 = vpop.permute.xlu0 %7841
  %7843 = vrot.lane.b32.xlu0 %v7215, 64
  %v7844 = vpop.permute.xlu0 %7843
  %7845 = vrot.lane.b32.xlu0 %v7216, 64
  %v7846 = vpop.permute.xlu0 %7845
  %7847 = vrot.lane.b32.xlu0 %v7217, 64
  %v7848 = vpop.permute.xlu0 %7847
  %7849 = vrot.lane.b32.xlu0 %v7218, 64
  %v7850 = vpop.permute.xlu0 %7849
  %7851 = vrot.lane.b32.xlu0 %v7219, 64
  %v7852 = vpop.permute.xlu0 %7851
  %7853 = vrot.lane.b32.xlu0 %v7220, 64
  %v7854 = vpop.permute.xlu0 %7853
  %7855 = vrot.lane.b32.xlu0 %v7221, 64
  %v7856 = vpop.permute.xlu0 %7855
  %7857 = vrot.lane.b32.xlu0 %v7222, 64
  %v7858 = vpop.permute.xlu0 %7857
  %7859 = vrot.lane.b32.xlu0 %v7223, 64
  %v7860 = vpop.permute.xlu0 %7859
  %7861 = vrot.lane.b32.xlu0 %v7224, 64
  %v7862 = vpop.permute.xlu0 %7861
  %7863 = vrot.lane.b32.xlu0 %v7225, 64
  %v7864 = vpop.permute.xlu0 %7863
  %7865 = vrot.lane.b32.xlu0 %v7226, 64
  %v7866 = vpop.permute.xlu0 %7865
  %7867 = vrot.lane.b32.xlu0 %v7227, 64
  %v7868 = vpop.permute.xlu0 %7867
  %7997 = vrot.lane.b32.xlu0 %v7292, 64
  %v7998 = vpop.permute.xlu0 %7997
  %7999 = vrot.lane.b32.xlu0 %v7293, 64
  %v8000 = vpop.permute.xlu0 %7999
  %8001 = vrot.lane.b32.xlu0 %v7294, 64
  %v8002 = vpop.permute.xlu0 %8001
  %8003 = vrot.lane.b32.xlu0 %v7295, 64
  %v8004 = vpop.permute.xlu0 %8003
  %8005 = vrot.lane.b32.xlu0 %v7296, 64
  %v8006 = vpop.permute.xlu0 %8005
  %8007 = vrot.lane.b32.xlu0 %v7297, 64
  %v8008 = vpop.permute.xlu0 %8007
  %8009 = vrot.lane.b32.xlu0 %v7298, 64
  %v8010 = vpop.permute.xlu0 %8009
  %8011 = vrot.lane.b32.xlu0 %v7299, 64
  %v8012 = vpop.permute.xlu0 %8011
  %8013 = vrot.lane.b32.xlu0 %v7300, 64
  %v8014 = vpop.permute.xlu0 %8013
  %8015 = vrot.lane.b32.xlu0 %v7301, 64
  %v8016 = vpop.permute.xlu0 %8015
  %8017 = vrot.lane.b32.xlu0 %v7302, 64
  %v8018 = vpop.permute.xlu0 %8017
  %8019 = vrot.lane.b32.xlu0 %v7303, 64
  %v8020 = vpop.permute.xlu0 %8019
  %8021 = vrot.lane.b32.xlu0 %v7304, 64
  %v8022 = vpop.permute.xlu0 %8021
  %8023 = vrot.lane.b32.xlu0 %v7305, 64
  %v8024 = vpop.permute.xlu0 %8023
  %8025 = vrot.lane.b32.xlu0 %v7306, 64
  %v8026 = vpop.permute.xlu0 %8025
  %8027 = vrot.lane.b32.xlu0 %v7307, 64
  %v8028 = vpop.permute.xlu0 %8027
  %8029 = vrot.lane.b32.xlu0 %v7308, 64
  %v8030 = vpop.permute.xlu0 %8029
  %8031 = vrot.lane.b32.xlu0 %v7309, 64
  %v8032 = vpop.permute.xlu0 %8031
  %8033 = vrot.lane.b32.xlu0 %v7310, 64
  %v8034 = vpop.permute.xlu0 %8033
  %8035 = vrot.lane.b32.xlu0 %v7311, 64
  %v8036 = vpop.permute.xlu0 %8035
  %8037 = vrot.lane.b32.xlu0 %v7312, 64
  %v8038 = vpop.permute.xlu0 %8037
  %8039 = vrot.lane.b32.xlu0 %v7313, 64
  %v8040 = vpop.permute.xlu0 %8039
  %8041 = vrot.lane.b32.xlu0 %v7314, 64
  %v8042 = vpop.permute.xlu0 %8041
  %8043 = vrot.lane.b32.xlu0 %v7315, 64
  %v8044 = vpop.permute.xlu0 %8043
  %8045 = vrot.lane.b32.xlu0 %v7316, 64
  %v8046 = vpop.permute.xlu0 %8045
  %8047 = vrot.lane.b32.xlu0 %v7317, 64
  %v8048 = vpop.permute.xlu0 %8047
  %8049 = vrot.lane.b32.xlu0 %v7318, 64
  %v8050 = vpop.permute.xlu0 %8049
  %8051 = vrot.lane.b32.xlu0 %v7319, 64
  %v8052 = vpop.permute.xlu0 %8051
  %8053 = vrot.lane.b32.xlu0 %v7320, 64
  %v8054 = vpop.permute.xlu0 %8053
  %8055 = vrot.lane.b32.xlu0 %v7321, 64
  %v8056 = vpop.permute.xlu0 %8055
  %8057 = vrot.lane.b32.xlu0 %v7322, 64
  %v8058 = vpop.permute.xlu0 %8057
  %8059 = vrot.lane.b32.xlu0 %v7323, 64
  %v8060 = vpop.permute.xlu0 %8059
  %8061 = vrot.lane.b32.xlu0 %v7324, 64
  %v8062 = vpop.permute.xlu0 %8061
  %8063 = vrot.lane.b32.xlu0 %v7325, 64
  %v8064 = vpop.permute.xlu0 %8063
  %8065 = vrot.lane.b32.xlu0 %v7326, 64
  %v8066 = vpop.permute.xlu0 %8065
  %8067 = vrot.lane.b32.xlu0 %v7327, 64
  %v8068 = vpop.permute.xlu0 %8067
  %8069 = vrot.lane.b32.xlu0 %v7328, 64
  %v8070 = vpop.permute.xlu0 %8069
  %8071 = vrot.lane.b32.xlu0 %v7329, 64
  %v8072 = vpop.permute.xlu0 %8071
  %8073 = vrot.lane.b32.xlu0 %v7330, 64
  %v8074 = vpop.permute.xlu0 %8073
  %8075 = vrot.lane.b32.xlu0 %v7331, 64
  %v8076 = vpop.permute.xlu0 %8075
  %8077 = vrot.lane.b32.xlu0 %v7332, 64
  %v8078 = vpop.permute.xlu0 %8077
  %8079 = vrot.lane.b32.xlu0 %v7333, 64
  %v8080 = vpop.permute.xlu0 %8079
  %8081 = vrot.lane.b32.xlu0 %v7334, 64
  %v8082 = vpop.permute.xlu0 %8081
  %8083 = vrot.lane.b32.xlu0 %v7335, 64
  %v8084 = vpop.permute.xlu0 %8083
  %8085 = vrot.lane.b32.xlu0 %v7336, 64
  %v8086 = vpop.permute.xlu0 %8085
  %8087 = vrot.lane.b32.xlu0 %v7337, 64
  %v8088 = vpop.permute.xlu0 %8087
  %8089 = vrot.lane.b32.xlu0 %v7338, 64
  %v8090 = vpop.permute.xlu0 %8089
  %8091 = vrot.lane.b32.xlu0 %v7339, 64
  %v8092 = vpop.permute.xlu0 %8091
  %8093 = vrot.lane.b32.xlu0 %v7340, 64
  %v8094 = vpop.permute.xlu0 %8093
  %8095 = vrot.lane.b32.xlu0 %v7341, 64
  %v8096 = vpop.permute.xlu0 %8095
  %8097 = vrot.lane.b32.xlu0 %v7342, 64
  %v8098 = vpop.permute.xlu0 %8097
  %8099 = vrot.lane.b32.xlu0 %v7343, 64
  %v8100 = vpop.permute.xlu0 %8099
  %8101 = vrot.lane.b32.xlu0 %v7344, 64
  %v8102 = vpop.permute.xlu0 %8101
  %8103 = vrot.lane.b32.xlu0 %v7345, 64
  %v8104 = vpop.permute.xlu0 %8103
  %8105 = vrot.lane.b32.xlu0 %v7346, 64
  %v8106 = vpop.permute.xlu0 %8105
  %8107 = vrot.lane.b32.xlu0 %v7347, 64
  %v8108 = vpop.permute.xlu0 %8107
  %8109 = vrot.lane.b32.xlu0 %v7348, 64
  %v8110 = vpop.permute.xlu0 %8109
  %8111 = vrot.lane.b32.xlu0 %v7349, 64
  %v8112 = vpop.permute.xlu0 %8111
  %8113 = vrot.lane.b32.xlu0 %v7350, 64
  %v8114 = vpop.permute.xlu0 %8113
  %8115 = vrot.lane.b32.xlu0 %v7351, 64
  %v8116 = vpop.permute.xlu0 %8115
  %8117 = vrot.lane.b32.xlu0 %v7352, 64
  %v8118 = vpop.permute.xlu0 %8117
  %8119 = vrot.lane.b32.xlu0 %v7353, 64
  %v8120 = vpop.permute.xlu0 %8119
  %8121 = vrot.lane.b32.xlu0 %v7354, 64
  %v8122 = vpop.permute.xlu0 %8121
  %8123 = vrot.lane.b32.xlu0 %v7355, 64
  %v8124 = vpop.permute.xlu0 %8123
  %8253 = vrot.lane.b32.xlu0 %v7420, 64
  %v8254 = vpop.permute.xlu0 %8253
  %8255 = vrot.lane.b32.xlu0 %v7421, 64
  %v8256 = vpop.permute.xlu0 %8255
  %8257 = vrot.lane.b32.xlu0 %v7422, 64
  %v8258 = vpop.permute.xlu0 %8257
  %8259 = vrot.lane.b32.xlu0 %v7423, 64
  %v8260 = vpop.permute.xlu0 %8259
  %8261 = vrot.lane.b32.xlu0 %v7424, 64
  %v8262 = vpop.permute.xlu0 %8261
  %8263 = vrot.lane.b32.xlu0 %v7425, 64
  %v8264 = vpop.permute.xlu0 %8263
  %8265 = vrot.lane.b32.xlu0 %v7426, 64
  %v8266 = vpop.permute.xlu0 %8265
  %8267 = vrot.lane.b32.xlu0 %v7427, 64
  %v8268 = vpop.permute.xlu0 %8267
  %8269 = vrot.lane.b32.xlu0 %v7428, 64
  %v8270 = vpop.permute.xlu0 %8269
  %8271 = vrot.lane.b32.xlu0 %v7429, 64
  %v8272 = vpop.permute.xlu0 %8271
  %8273 = vrot.lane.b32.xlu0 %v7430, 64
  %v8274 = vpop.permute.xlu0 %8273
  %8275 = vrot.lane.b32.xlu0 %v7431, 64
  %v8276 = vpop.permute.xlu0 %8275
  %8277 = vrot.lane.b32.xlu0 %v7432, 64
  %v8278 = vpop.permute.xlu0 %8277
  %8279 = vrot.lane.b32.xlu0 %v7433, 64
  %v8280 = vpop.permute.xlu0 %8279
  %8281 = vrot.lane.b32.xlu0 %v7434, 64
  %v8282 = vpop.permute.xlu0 %8281
  %8283 = vrot.lane.b32.xlu0 %v7435, 64
  %v8284 = vpop.permute.xlu0 %8283
  %8285 = vrot.lane.b32.xlu0 %v7436, 64
  %v8286 = vpop.permute.xlu0 %8285
  %8287 = vrot.lane.b32.xlu0 %v7437, 64
  %v8288 = vpop.permute.xlu0 %8287
  %8289 = vrot.lane.b32.xlu0 %v7438, 64
  %v8290 = vpop.permute.xlu0 %8289
  %8291 = vrot.lane.b32.xlu0 %v7439, 64
  %v8292 = vpop.permute.xlu0 %8291
  %8293 = vrot.lane.b32.xlu0 %v7440, 64
  %v8294 = vpop.permute.xlu0 %8293
  %8295 = vrot.lane.b32.xlu0 %v7441, 64
  %v8296 = vpop.permute.xlu0 %8295
  %8297 = vrot.lane.b32.xlu0 %v7442, 64
  %v8298 = vpop.permute.xlu0 %8297
  %8299 = vrot.lane.b32.xlu0 %v7443, 64
  %v8300 = vpop.permute.xlu0 %8299
  %8301 = vrot.lane.b32.xlu0 %v7444, 64
  %v8302 = vpop.permute.xlu0 %8301
  %8303 = vrot.lane.b32.xlu0 %v7445, 64
  %v8304 = vpop.permute.xlu0 %8303
  %8305 = vrot.lane.b32.xlu0 %v7446, 64
  %v8306 = vpop.permute.xlu0 %8305
  %8307 = vrot.lane.b32.xlu0 %v7447, 64
  %v8308 = vpop.permute.xlu0 %8307
  %8309 = vrot.lane.b32.xlu0 %v7448, 64
  %v8310 = vpop.permute.xlu0 %8309
  %8311 = vrot.lane.b32.xlu0 %v7449, 64
  %v8312 = vpop.permute.xlu0 %8311
  %8313 = vrot.lane.b32.xlu0 %v7450, 64
  %v8314 = vpop.permute.xlu0 %8313
  %8315 = vrot.lane.b32.xlu0 %v7451, 64
  %v8316 = vpop.permute.xlu0 %8315
  %8317 = vrot.lane.b32.xlu0 %v7452, 64
  %v8318 = vpop.permute.xlu0 %8317
  %8319 = vrot.lane.b32.xlu0 %v7453, 64
  %v8320 = vpop.permute.xlu0 %8319
  %8321 = vrot.lane.b32.xlu0 %v7454, 64
  %v8322 = vpop.permute.xlu0 %8321
  %8323 = vrot.lane.b32.xlu0 %v7455, 64
  %v8324 = vpop.permute.xlu0 %8323
  %8325 = vrot.lane.b32.xlu0 %v7456, 64
  %v8326 = vpop.permute.xlu0 %8325
  %8327 = vrot.lane.b32.xlu0 %v7457, 64
  %v8328 = vpop.permute.xlu0 %8327
  %8329 = vrot.lane.b32.xlu0 %v7458, 64
  %v8330 = vpop.permute.xlu0 %8329
  %8331 = vrot.lane.b32.xlu0 %v7459, 64
  %v8332 = vpop.permute.xlu0 %8331
  %8333 = vrot.lane.b32.xlu0 %v7460, 64
  %v8334 = vpop.permute.xlu0 %8333
  %8335 = vrot.lane.b32.xlu0 %v7461, 64
  %v8336 = vpop.permute.xlu0 %8335
  %8337 = vrot.lane.b32.xlu0 %v7462, 64
  %v8338 = vpop.permute.xlu0 %8337
  %8339 = vrot.lane.b32.xlu0 %v7463, 64
  %v8340 = vpop.permute.xlu0 %8339
  %8341 = vrot.lane.b32.xlu0 %v7464, 64
  %v8342 = vpop.permute.xlu0 %8341
  %8343 = vrot.lane.b32.xlu0 %v7465, 64
  %v8344 = vpop.permute.xlu0 %8343
  %8345 = vrot.lane.b32.xlu0 %v7466, 64
  %v8346 = vpop.permute.xlu0 %8345
  %8347 = vrot.lane.b32.xlu0 %v7467, 64
  %v8348 = vpop.permute.xlu0 %8347
  %8349 = vrot.lane.b32.xlu0 %v7468, 64
  %v8350 = vpop.permute.xlu0 %8349
  %8351 = vrot.lane.b32.xlu0 %v7469, 64
  %v8352 = vpop.permute.xlu0 %8351
  %8353 = vrot.lane.b32.xlu0 %v7470, 64
  %v8354 = vpop.permute.xlu0 %8353
  %8355 = vrot.lane.b32.xlu0 %v7471, 64
  %v8356 = vpop.permute.xlu0 %8355
  %8357 = vrot.lane.b32.xlu0 %v7472, 64
  %v8358 = vpop.permute.xlu0 %8357
  %8359 = vrot.lane.b32.xlu0 %v7473, 64
  %v8360 = vpop.permute.xlu0 %8359
  %8361 = vrot.lane.b32.xlu0 %v7474, 64
  %v8362 = vpop.permute.xlu0 %8361
  %8363 = vrot.lane.b32.xlu0 %v7475, 64
  %v8364 = vpop.permute.xlu0 %8363
  %8365 = vrot.lane.b32.xlu0 %v7476, 64
  %v8366 = vpop.permute.xlu0 %8365
  %8367 = vrot.lane.b32.xlu0 %v7477, 64
  %v8368 = vpop.permute.xlu0 %8367
  %8369 = vrot.lane.b32.xlu0 %v7478, 64
  %v8370 = vpop.permute.xlu0 %8369
  %8371 = vrot.lane.b32.xlu0 %v7479, 64
  %v8372 = vpop.permute.xlu0 %8371
  %8373 = vrot.lane.b32.xlu0 %v7480, 64
  %v8374 = vpop.permute.xlu0 %8373
  %8375 = vrot.lane.b32.xlu0 %v7481, 64
  %v8376 = vpop.permute.xlu0 %8375
  %8377 = vrot.lane.b32.xlu0 %v7482, 64
  %v8378 = vpop.permute.xlu0 %8377
  %8379 = vrot.lane.b32.xlu0 %v7483, 64
  %v8380 = vpop.permute.xlu0 %8379
  %8509 = vrot.lane.b32.xlu0 %v7549, 64
  %v8510 = vpop.permute.xlu0 %8509
  %8511 = vrot.lane.b32.xlu0 %v7550, 64
  %v8512 = vpop.permute.xlu0 %8511
  %8513 = vrot.lane.b32.xlu0 %v7551, 64
  %v8514 = vpop.permute.xlu0 %8513
  %8515 = vrot.lane.b32.xlu0 %v7552, 64
  %v8516 = vpop.permute.xlu0 %8515
  %8517 = vrot.lane.b32.xlu0 %v7553, 64
  %v8518 = vpop.permute.xlu0 %8517
  %8519 = vrot.lane.b32.xlu0 %v7554, 64
  %v8520 = vpop.permute.xlu0 %8519
  %8521 = vrot.lane.b32.xlu0 %v7555, 64
  %v8522 = vpop.permute.xlu0 %8521
  %8523 = vrot.lane.b32.xlu0 %v7556, 64
  %v8524 = vpop.permute.xlu0 %8523
  %8525 = vrot.lane.b32.xlu0 %v7557, 64
  %v8526 = vpop.permute.xlu0 %8525
  %8527 = vrot.lane.b32.xlu0 %v7558, 64
  %v8528 = vpop.permute.xlu0 %8527
  %8529 = vrot.lane.b32.xlu0 %v7559, 64
  %v8530 = vpop.permute.xlu0 %8529
  %8531 = vrot.lane.b32.xlu0 %v7560, 64
  %v8532 = vpop.permute.xlu0 %8531
  %8533 = vrot.lane.b32.xlu0 %v7561, 64
  %v8534 = vpop.permute.xlu0 %8533
  %8535 = vrot.lane.b32.xlu0 %v7562, 64
  %v8536 = vpop.permute.xlu0 %8535
  %8537 = vrot.lane.b32.xlu0 %v7563, 64
  %v8538 = vpop.permute.xlu0 %8537
  %8539 = vrot.lane.b32.xlu0 %v7564, 64
  %v8540 = vpop.permute.xlu0 %8539
  %8541 = vrot.lane.b32.xlu0 %v7565, 64
  %v8542 = vpop.permute.xlu0 %8541
  %8543 = vrot.lane.b32.xlu0 %v7566, 64
  %v8544 = vpop.permute.xlu0 %8543
  %8545 = vrot.lane.b32.xlu0 %v7567, 64
  %v8546 = vpop.permute.xlu0 %8545
  %8547 = vrot.lane.b32.xlu0 %v7568, 64
  %v8548 = vpop.permute.xlu0 %8547
  %8549 = vrot.lane.b32.xlu0 %v7569, 64
  %v8550 = vpop.permute.xlu0 %8549
  %8551 = vrot.lane.b32.xlu0 %v7570, 64
  %v8552 = vpop.permute.xlu0 %8551
  %8553 = vrot.lane.b32.xlu0 %v7571, 64
  %v8554 = vpop.permute.xlu0 %8553
  %8555 = vrot.lane.b32.xlu0 %v7572, 64
  %v8556 = vpop.permute.xlu0 %8555
  %8557 = vrot.lane.b32.xlu0 %v7573, 64
  %v8558 = vpop.permute.xlu0 %8557
  %8559 = vrot.lane.b32.xlu0 %v7574, 64
  %v8560 = vpop.permute.xlu0 %8559
  %8561 = vrot.lane.b32.xlu0 %v7575, 64
  %v8562 = vpop.permute.xlu0 %8561
  %8563 = vrot.lane.b32.xlu0 %v7576, 64
  %v8564 = vpop.permute.xlu0 %8563
  %8565 = vrot.lane.b32.xlu0 %v7577, 64
  %v8566 = vpop.permute.xlu0 %8565
  %8567 = vrot.lane.b32.xlu0 %v7578, 64
  %v8568 = vpop.permute.xlu0 %8567
  %8569 = vrot.lane.b32.xlu0 %v7579, 64
  %v8570 = vpop.permute.xlu0 %8569
  %8571 = vrot.lane.b32.xlu0 %v7580, 64
  %v8572 = vpop.permute.xlu0 %8571
  %8573 = vrot.lane.b32.xlu0 %v7581, 64
  %v8574 = vpop.permute.xlu0 %8573
  %8575 = vrot.lane.b32.xlu0 %v7582, 64
  %v8576 = vpop.permute.xlu0 %8575
  %8577 = vrot.lane.b32.xlu0 %v7583, 64
  %v8578 = vpop.permute.xlu0 %8577
  %8579 = vrot.lane.b32.xlu0 %v7584, 64
  %v8580 = vpop.permute.xlu0 %8579
  %8581 = vrot.lane.b32.xlu0 %v7585, 64
  %v8582 = vpop.permute.xlu0 %8581
  %8583 = vrot.lane.b32.xlu0 %v7586, 64
  %v8584 = vpop.permute.xlu0 %8583
  %8585 = vrot.lane.b32.xlu0 %v7587, 64
  %v8586 = vpop.permute.xlu0 %8585
  %8587 = vrot.lane.b32.xlu0 %v7588, 64
  %v8588 = vpop.permute.xlu0 %8587
  %8589 = vrot.lane.b32.xlu0 %v7589, 64
  %v8590 = vpop.permute.xlu0 %8589
  %8591 = vrot.lane.b32.xlu0 %v7590, 64
  %v8592 = vpop.permute.xlu0 %8591
  %8593 = vrot.lane.b32.xlu0 %v7591, 64
  %v8594 = vpop.permute.xlu0 %8593
  %8595 = vrot.lane.b32.xlu0 %v7592, 64
  %v8596 = vpop.permute.xlu0 %8595
  %8597 = vrot.lane.b32.xlu0 %v7593, 64
  %v8598 = vpop.permute.xlu0 %8597
  %8599 = vrot.lane.b32.xlu0 %v7594, 64
  %v8600 = vpop.permute.xlu0 %8599
  %8601 = vrot.lane.b32.xlu0 %v7595, 64
  %v8602 = vpop.permute.xlu0 %8601
  %8603 = vrot.lane.b32.xlu0 %v7596, 64
  %v8604 = vpop.permute.xlu0 %8603
  %8605 = vrot.lane.b32.xlu0 %v7597, 64
  %v8606 = vpop.permute.xlu0 %8605
  %8607 = vrot.lane.b32.xlu0 %v7598, 64
  %v8608 = vpop.permute.xlu0 %8607
  %8609 = vrot.lane.b32.xlu0 %v7599, 64
  %v8610 = vpop.permute.xlu0 %8609
  %8611 = vrot.lane.b32.xlu0 %v7600, 64
  %v8612 = vpop.permute.xlu0 %8611
  %8613 = vrot.lane.b32.xlu0 %v7601, 64
  %v8614 = vpop.permute.xlu0 %8613
  %8615 = vrot.lane.b32.xlu0 %v7602, 64
  %v8616 = vpop.permute.xlu0 %8615
  %8617 = vrot.lane.b32.xlu0 %v7603, 64
  %v8618 = vpop.permute.xlu0 %8617
  %8619 = vrot.lane.b32.xlu0 %v7604, 64
  %v8620 = vpop.permute.xlu0 %8619
  %8621 = vrot.lane.b32.xlu0 %v7605, 64
  %v8622 = vpop.permute.xlu0 %8621
  %8623 = vrot.lane.b32.xlu0 %v7606, 64
  %v8624 = vpop.permute.xlu0 %8623
  %8625 = vrot.lane.b32.xlu0 %v7607, 64
  %v8626 = vpop.permute.xlu0 %8625
  %8627 = vrot.lane.b32.xlu0 %v7608, 64
  %v8628 = vpop.permute.xlu0 %8627
  %8629 = vrot.lane.b32.xlu0 %v7609, 64
  %v8630 = vpop.permute.xlu0 %8629
  %8631 = vrot.lane.b32.xlu0 %v7610, 64
  %v8632 = vpop.permute.xlu0 %8631
  %8633 = vrot.lane.b32.xlu0 %v7611, 64
  %v8634 = vpop.permute.xlu0 %8633
  %8635 = vrot.lane.b32.xlu0 %v7612, 64
  %v8636 = vpop.permute.xlu0 %8635
  %v8701 = vsel %vm2032, %v7100, %v7742
  %v8702 = vsel %vm2032, %v7101, %v7744
  %v8703 = vsel %vm2032, %v7102, %v7746
  %v8704 = vsel %vm2032, %v7103, %v7748
  %v8705 = vsel %vm2032, %v7104, %v7750
  %v8706 = vsel %vm2032, %v7105, %v7752
  %v8707 = vsel %vm2032, %v7106, %v7754
  %v8708 = vsel %vm2032, %v7107, %v7756
  %v8709 = vsel %vm2032, %v7108, %v7758
  %v8710 = vsel %vm2032, %v7109, %v7760
  %v8711 = vsel %vm2032, %v7110, %v7762
  %v8712 = vsel %vm2032, %v7111, %v7764
  %v8713 = vsel %vm2032, %v7112, %v7766
  %v8714 = vsel %vm2032, %v7113, %v7768
  %v8715 = vsel %vm2032, %v7114, %v7770
  %v8716 = vsel %vm2032, %v7115, %v7772
  %v8717 = vsel %vm2032, %v7116, %v7774
  %v8718 = vsel %vm2032, %v7117, %v7776
  %v8719 = vsel %vm2032, %v7118, %v7778
  %v8720 = vsel %vm2032, %v7119, %v7780
  %v8721 = vsel %vm2032, %v7120, %v7782
  %v8722 = vsel %vm2032, %v7121, %v7784
  %v8723 = vsel %vm2032, %v7122, %v7786
  %v8724 = vsel %vm2032, %v7123, %v7788
  %v8725 = vsel %vm2032, %v7124, %v7790
  %v8726 = vsel %vm2032, %v7125, %v7792
  %v8727 = vsel %vm2032, %v7126, %v7794
  %v8728 = vsel %vm2032, %v7127, %v7796
  %v8729 = vsel %vm2032, %v7128, %v7798
  %v8730 = vsel %vm2032, %v7129, %v7800
  %v8731 = vsel %vm2032, %v7130, %v7802
  %v8732 = vsel %vm2032, %v7131, %v7804
  %v8733 = vsel %vm2032, %v7132, %v7806
  %v8734 = vsel %vm2032, %v7133, %v7808
  %v8735 = vsel %vm2032, %v7134, %v7810
  %v8736 = vsel %vm2032, %v7135, %v7812
  %v8737 = vsel %vm2032, %v7136, %v7814
  %v8738 = vsel %vm2032, %v7137, %v7816
  %v8739 = vsel %vm2032, %v7138, %v7818
  %v8740 = vsel %vm2032, %v7139, %v7820
  %v8741 = vsel %vm2032, %v7140, %v7822
  %v8742 = vsel %vm2032, %v7141, %v7824
  %v8743 = vsel %vm2032, %v7142, %v7826
  %v8744 = vsel %vm2032, %v7143, %v7828
  %v8745 = vsel %vm2032, %v7144, %v7830
  %v8746 = vsel %vm2032, %v7145, %v7832
  %v8747 = vsel %vm2032, %v7146, %v7834
  %v8748 = vsel %vm2032, %v7147, %v7836
  %v8749 = vsel %vm2032, %v7148, %v7838
  %v8750 = vsel %vm2032, %v7149, %v7840
  %v8751 = vsel %vm2032, %v7150, %v7842
  %v8752 = vsel %vm2032, %v7151, %v7844
  %v8753 = vsel %vm2032, %v7152, %v7846
  %v8754 = vsel %vm2032, %v7153, %v7848
  %v8755 = vsel %vm2032, %v7154, %v7850
  %v8756 = vsel %vm2032, %v7155, %v7852
  %v8757 = vsel %vm2032, %v7156, %v7854
  %v8758 = vsel %vm2032, %v7157, %v7856
  %v8759 = vsel %vm2032, %v7158, %v7858
  %v8760 = vsel %vm2032, %v7159, %v7860
  %v8761 = vsel %vm2032, %v7160, %v7862
  %v8762 = vsel %vm2032, %v7161, %v7864
  %v8763 = vsel %vm2032, %v7162, %v7866
  %v8764 = vsel %vm2032, %v7163, %v7868
  %v8765 = vsel %vm2032, %v7228, %v7998
  %v8766 = vsel %vm2032, %v7229, %v8000
  %v8767 = vsel %vm2032, %v7230, %v8002
  %v8768 = vsel %vm2032, %v7231, %v8004
  %v8769 = vsel %vm2032, %v7232, %v8006
  %v8770 = vsel %vm2032, %v7233, %v8008
  %v8771 = vsel %vm2032, %v7234, %v8010
  %v8772 = vsel %vm2032, %v7235, %v8012
  %v8773 = vsel %vm2032, %v7236, %v8014
  %v8774 = vsel %vm2032, %v7237, %v8016
  %v8775 = vsel %vm2032, %v7238, %v8018
  %v8776 = vsel %vm2032, %v7239, %v8020
  %v8777 = vsel %vm2032, %v7240, %v8022
  %v8778 = vsel %vm2032, %v7241, %v8024
  %v8779 = vsel %vm2032, %v7242, %v8026
  %v8780 = vsel %vm2032, %v7243, %v8028
  %v8781 = vsel %vm2032, %v7244, %v8030
  %v8782 = vsel %vm2032, %v7245, %v8032
  %v8783 = vsel %vm2032, %v7246, %v8034
  %v8784 = vsel %vm2032, %v7247, %v8036
  %v8785 = vsel %vm2032, %v7248, %v8038
  %v8786 = vsel %vm2032, %v7249, %v8040
  %v8787 = vsel %vm2032, %v7250, %v8042
  %v8788 = vsel %vm2032, %v7251, %v8044
  %v8789 = vsel %vm2032, %v7252, %v8046
  %v8790 = vsel %vm2032, %v7253, %v8048
  %v8791 = vsel %vm2032, %v7254, %v8050
  %v8792 = vsel %vm2032, %v7255, %v8052
  %v8793 = vsel %vm2032, %v7256, %v8054
  %v8794 = vsel %vm2032, %v7257, %v8056
  %v8795 = vsel %vm2032, %v7258, %v8058
  %v8796 = vsel %vm2032, %v7259, %v8060
  %v8797 = vsel %vm2032, %v7260, %v8062
  %v8798 = vsel %vm2032, %v7261, %v8064
  %v8799 = vsel %vm2032, %v7262, %v8066
  %v8800 = vsel %vm2032, %v7263, %v8068
  %v8801 = vsel %vm2032, %v7264, %v8070
  %v8802 = vsel %vm2032, %v7265, %v8072
  %v8803 = vsel %vm2032, %v7266, %v8074
  %v8804 = vsel %vm2032, %v7267, %v8076
  %v8805 = vsel %vm2032, %v7268, %v8078
  %v8806 = vsel %vm2032, %v7269, %v8080
  %v8807 = vsel %vm2032, %v7270, %v8082
  %v8808 = vsel %vm2032, %v7271, %v8084
  %v8809 = vsel %vm2032, %v7272, %v8086
  %v8810 = vsel %vm2032, %v7273, %v8088
  %v8811 = vsel %vm2032, %v7274, %v8090
  %v8812 = vsel %vm2032, %v7275, %v8092
  %v8813 = vsel %vm2032, %v7276, %v8094
  %v8814 = vsel %vm2032, %v7277, %v8096
  %v8815 = vsel %vm2032, %v7278, %v8098
  %v8816 = vsel %vm2032, %v7279, %v8100
  %v8817 = vsel %vm2032, %v7280, %v8102
  %v8818 = vsel %vm2032, %v7281, %v8104
  %v8819 = vsel %vm2032, %v7282, %v8106
  %v8820 = vsel %vm2032, %v7283, %v8108
  %v8821 = vsel %vm2032, %v7284, %v8110
  %v8822 = vsel %vm2032, %v7285, %v8112
  %v8823 = vsel %vm2032, %v7286, %v8114
  %v8824 = vsel %vm2032, %v7287, %v8116
  %v8825 = vsel %vm2032, %v7288, %v8118
  %v8826 = vsel %vm2032, %v7289, %v8120
  %v8827 = vsel %vm2032, %v7290, %v8122
  %v8828 = vsel %vm2032, %v7291, %v8124
  %v8829 = vsel %vm2032, %v7356, %v8254
  %v8830 = vsel %vm2032, %v7357, %v8256
  %v8831 = vsel %vm2032, %v7358, %v8258
  %v8832 = vsel %vm2032, %v7359, %v8260
  %v8833 = vsel %vm2032, %v7360, %v8262
  %v8834 = vsel %vm2032, %v7361, %v8264
  %v8835 = vsel %vm2032, %v7362, %v8266
  %v8836 = vsel %vm2032, %v7363, %v8268
  %v8837 = vsel %vm2032, %v7364, %v8270
  %v8838 = vsel %vm2032, %v7365, %v8272
  %v8839 = vsel %vm2032, %v7366, %v8274
  %v8840 = vsel %vm2032, %v7367, %v8276
  %v8841 = vsel %vm2032, %v7368, %v8278
  %v8842 = vsel %vm2032, %v7369, %v8280
  %v8843 = vsel %vm2032, %v7370, %v8282
  %v8844 = vsel %vm2032, %v7371, %v8284
  %v8845 = vsel %vm2032, %v7372, %v8286
  %v8846 = vsel %vm2032, %v7373, %v8288
  %v8847 = vsel %vm2032, %v7374, %v8290
  %v8848 = vsel %vm2032, %v7375, %v8292
  %v8849 = vsel %vm2032, %v7376, %v8294
  %v8850 = vsel %vm2032, %v7377, %v8296
  %v8851 = vsel %vm2032, %v7378, %v8298
  %v8852 = vsel %vm2032, %v7379, %v8300
  %v8853 = vsel %vm2032, %v7380, %v8302
  %v8854 = vsel %vm2032, %v7381, %v8304
  %v8855 = vsel %vm2032, %v7382, %v8306
  %v8856 = vsel %vm2032, %v7383, %v8308
  %v8857 = vsel %vm2032, %v7384, %v8310
  %v8858 = vsel %vm2032, %v7385, %v8312
  %v8859 = vsel %vm2032, %v7386, %v8314
  %v8860 = vsel %vm2032, %v7387, %v8316
  %v8861 = vsel %vm2032, %v7388, %v8318
  %v8862 = vsel %vm2032, %v7389, %v8320
  %v8863 = vsel %vm2032, %v7390, %v8322
  %v8864 = vsel %vm2032, %v7391, %v8324
  %v8865 = vsel %vm2032, %v7392, %v8326
  %v8866 = vsel %vm2032, %v7393, %v8328
  %v8867 = vsel %vm2032, %v7394, %v8330
  %v8868 = vsel %vm2032, %v7395, %v8332
  %v8869 = vsel %vm2032, %v7396, %v8334
  %v8870 = vsel %vm2032, %v7397, %v8336
  %v8871 = vsel %vm2032, %v7398, %v8338
  %v8872 = vsel %vm2032, %v7399, %v8340
  %v8873 = vsel %vm2032, %v7400, %v8342
  %v8874 = vsel %vm2032, %v7401, %v8344
  %v8875 = vsel %vm2032, %v7402, %v8346
  %v8876 = vsel %vm2032, %v7403, %v8348
  %v8877 = vsel %vm2032, %v7404, %v8350
  %v8878 = vsel %vm2032, %v7405, %v8352
  %v8879 = vsel %vm2032, %v7406, %v8354
  %v8880 = vsel %vm2032, %v7407, %v8356
  %v8881 = vsel %vm2032, %v7408, %v8358
  %v8882 = vsel %vm2032, %v7409, %v8360
  %v8883 = vsel %vm2032, %v7410, %v8362
  %v8884 = vsel %vm2032, %v7411, %v8364
  %v8885 = vsel %vm2032, %v7412, %v8366
  %v8886 = vsel %vm2032, %v7413, %v8368
  %v8887 = vsel %vm2032, %v7414, %v8370
  %v8888 = vsel %vm2032, %v7415, %v8372
  %v8889 = vsel %vm2032, %v7416, %v8374
  %v8890 = vsel %vm2032, %v7417, %v8376
  %v8891 = vsel %vm2032, %v7418, %v8378
  %v8892 = vsel %vm2032, %v7419, %v8380
  %v8893 = vsel %vm2032, %v7485, %v8510
  %v8894 = vsel %vm2032, %v7486, %v8512
  %v8895 = vsel %vm2032, %v7487, %v8514
  %v8896 = vsel %vm2032, %v7488, %v8516
  %v8897 = vsel %vm2032, %v7489, %v8518
  %v8898 = vsel %vm2032, %v7490, %v8520
  %v8899 = vsel %vm2032, %v7491, %v8522
  %v8900 = vsel %vm2032, %v7492, %v8524
  %v8901 = vsel %vm2032, %v7493, %v8526
  %v8902 = vsel %vm2032, %v7494, %v8528
  %v8903 = vsel %vm2032, %v7495, %v8530
  %v8904 = vsel %vm2032, %v7496, %v8532
  %v8905 = vsel %vm2032, %v7497, %v8534
  %v8906 = vsel %vm2032, %v7498, %v8536
  %v8907 = vsel %vm2032, %v7499, %v8538
  %v8908 = vsel %vm2032, %v7500, %v8540
  %v8909 = vsel %vm2032, %v7501, %v8542
  %v8910 = vsel %vm2032, %v7502, %v8544
  %v8911 = vsel %vm2032, %v7503, %v8546
  %v8912 = vsel %vm2032, %v7504, %v8548
  %v8913 = vsel %vm2032, %v7505, %v8550
  %v8914 = vsel %vm2032, %v7506, %v8552
  %v8915 = vsel %vm2032, %v7507, %v8554
  %v8916 = vsel %vm2032, %v7508, %v8556
  %v8917 = vsel %vm2032, %v7509, %v8558
  %v8918 = vsel %vm2032, %v7510, %v8560
  %v8919 = vsel %vm2032, %v7511, %v8562
  %v8920 = vsel %vm2032, %v7512, %v8564
  %v8921 = vsel %vm2032, %v7513, %v8566
  %v8922 = vsel %vm2032, %v7514, %v8568
  %v8923 = vsel %vm2032, %v7515, %v8570
  %v8924 = vsel %vm2032, %v7516, %v8572
  %v8925 = vsel %vm2032, %v7517, %v8574
  %v8926 = vsel %vm2032, %v7518, %v8576
  %v8927 = vsel %vm2032, %v7519, %v8578
  %v8928 = vsel %vm2032, %v7520, %v8580
  %v8929 = vsel %vm2032, %v7521, %v8582
  %v8930 = vsel %vm2032, %v7522, %v8584
  %v8931 = vsel %vm2032, %v7523, %v8586
  %v8932 = vsel %vm2032, %v7524, %v8588
  %v8933 = vsel %vm2032, %v7525, %v8590
  %v8934 = vsel %vm2032, %v7526, %v8592
  %v8935 = vsel %vm2032, %v7527, %v8594
  %v8936 = vsel %vm2032, %v7528, %v8596
  %v8937 = vsel %vm2032, %v7529, %v8598
  %v8938 = vsel %vm2032, %v7530, %v8600
  %v8939 = vsel %vm2032, %v7531, %v8602
  %v8940 = vsel %vm2032, %v7532, %v8604
  %v8941 = vsel %vm2032, %v7533, %v8606
  %v8942 = vsel %vm2032, %v7534, %v8608
  %v8943 = vsel %vm2032, %v7535, %v8610
  %v8944 = vsel %vm2032, %v7536, %v8612
  %v8945 = vsel %vm2032, %v7537, %v8614
  %v8946 = vsel %vm2032, %v7538, %v8616
  %v8947 = vsel %vm2032, %v7539, %v8618
  %v8948 = vsel %vm2032, %v7540, %v8620
  %v8949 = vsel %vm2032, %v7541, %v8622
  %v8950 = vsel %vm2032, %v7542, %v8624
  %v8951 = vsel %vm2032, %v7543, %v8626
  %v8952 = vsel %vm2032, %v7544, %v8628
  %v8953 = vsel %vm2032, %v7545, %v8630
  %v8954 = vsel %vm2032, %v7546, %v8632
  %v8955 = vsel %vm2032, %v7547, %v8634
  %v8956 = vsel %vm2032, %v7548, %v8636
  %v8957 = vld [vmem:[%s7] sm:$0x1f]
  %v8959 = vlaneseq
  %v8960 = vshrl.u32 %v8959, 7
  %v8961 = vsub.s32 0, %v8960
  %v8962 = vrot.slane %v8957, %v8961
  %v8963 = vlaneseq
  %v8964 = vshrl.u32 %v8963, 7
  %v8965 = vsub.s32 1, %v8964
  %v8966 = vrot.slane %v8957, %v8965
  %v8967 = vlaneseq
  %v8968 = vshrl.u32 %v8967, 7
  %v8969 = vsub.s32 2, %v8968
  %v8970 = vrot.slane %v8957, %v8969
  %v8971 = vlaneseq
  %v8972 = vshrl.u32 %v8971, 7
  %v8973 = vsub.s32 3, %v8972
  %v8974 = vrot.slane %v8957, %v8973
  %v8975 = vlaneseq
  %v8976 = vshrl.u32 %v8975, 7
  %v8977 = vsub.s32 4, %v8976
  %v8978 = vrot.slane %v8957, %v8977
  %v8983 = vsel %vm2032, %v8978, 0
  %v8986 = vsel %vm2032, %v7613, 0
  %v8989 = vsel %vm2032, %v7614, 0
  %v8992 = vsel %vm2032, %v7615, 0
  %v8995 = vsel %vm2032, %v7616, 0
  %v8998 = vsel %vm2032, %v7617, 0
  %v9001 = vsel %vm2032, %v7618, 0
  %v9004 = vsel %vm2032, %v7619, 0
  %v9007 = vsel %vm2032, %v7620, 0
  %v9010 = vsel %vm2032, %v7621, 0
  %v9013 = vsel %vm2032, %v7622, 0
  %v9016 = vsel %vm2032, %v7623, 0
  %v9019 = vsel %vm2032, %v7624, 0
  %v9022 = vsel %vm2032, %v7625, 0
  %v9025 = vsel %vm2032, %v7626, 0
  %v9028 = vsel %vm2032, %v7627, 0
  %v9031 = vsel %vm2032, %v7628, 0
  %v9034 = vsel %vm2032, %v7629, 0
  %v9037 = vsel %vm2032, %v7630, 0
  %v9040 = vsel %vm2032, %v7631, 0
  %v9043 = vsel %vm2032, %v7632, 0
  %v9046 = vsel %vm2032, %v7633, 0
  %v9049 = vsel %vm2032, %v7634, 0
  %v9052 = vsel %vm2032, %v7635, 0
  %v9055 = vsel %vm2032, %v7636, 0
  %v9058 = vsel %vm2032, %v7637, 0
  %v9061 = vsel %vm2032, %v7638, 0
  %v9064 = vsel %vm2032, %v7639, 0
  %v9067 = vsel %vm2032, %v7640, 0
  %v9070 = vsel %vm2032, %v7641, 0
  %v9073 = vsel %vm2032, %v7642, 0
  %v9076 = vsel %vm2032, %v7643, 0
  %v9079 = vsel %vm2032, %v7644, 0
  %v9082 = vsel %vm2032, %v7645, 0
  %v9085 = vsel %vm2032, %v7646, 0
  %v9088 = vsel %vm2032, %v7647, 0
  %v9091 = vsel %vm2032, %v7648, 0
  %v9094 = vsel %vm2032, %v7649, 0
  %v9097 = vsel %vm2032, %v7650, 0
  %v9100 = vsel %vm2032, %v7651, 0
  %v9103 = vsel %vm2032, %v7652, 0
  %v9106 = vsel %vm2032, %v7653, 0
  %v9109 = vsel %vm2032, %v7654, 0
  %v9112 = vsel %vm2032, %v7655, 0
  %v9115 = vsel %vm2032, %v7656, 0
  %v9118 = vsel %vm2032, %v7657, 0
  %v9121 = vsel %vm2032, %v7658, 0
  %v9124 = vsel %vm2032, %v7659, 0
  %v9127 = vsel %vm2032, %v7660, 0
  %v9130 = vsel %vm2032, %v7661, 0
  %v9133 = vsel %vm2032, %v7662, 0
  %v9136 = vsel %vm2032, %v7663, 0
  %v9139 = vsel %vm2032, %v7664, 0
  %v9142 = vsel %vm2032, %v7665, 0
  %v9145 = vsel %vm2032, %v7666, 0
  %v9148 = vsel %vm2032, %v7667, 0
  %v9151 = vsel %vm2032, %v7668, 0
  %v9154 = vsel %vm2032, %v7669, 0
  %v9157 = vsel %vm2032, %v7670, 0
  %v9160 = vsel %vm2032, %v7671, 0
  %v9163 = vsel %vm2032, %v7672, 0
  %v9166 = vsel %vm2032, %v7673, 0
  %v9169 = vsel %vm2032, %v7674, 0
  %v9172 = vsel %vm2032, %v7675, 0
  %v9175 = vsel %vm2032, %v7676, 0
  %9177 = vmatprep.subr.mxu0 %v8780
  %9178 = vmatpush1.xpose.msra.mxu0 %v8716
  %9179 = vmatprep.subr.mxu0 %v8779
  %9180 = vmatpush1.xpose.msra.mxu0 %v8715
  %9181 = vmatprep.subr.mxu0 %v8778
  %9182 = vmatpush1.xpose.msra.mxu0 %v8714
  %9183 = vmatprep.subr.mxu0 %v8777
  %9184 = vmatpush1.xpose.msra.mxu0 %v8713
  %9185 = vmatprep.subr.mxu0 %v8776
  %9186 = vmatpush1.xpose.msra.mxu0 %v8712
  %9187 = vmatprep.subr.mxu0 %v8775
  %9188 = vmatpush1.xpose.msra.mxu0 %v8711
  %9189 = vmatprep.subr.mxu0 %v8774
  %9190 = vmatpush1.xpose.msra.mxu0 %v8710
  %9191 = vmatprep.subr.mxu0 %v8773
  %9192 = vmatpush1.xpose.msra.mxu0 %v8709
  %9193 = vmatprep.subr.mxu0 %v8772
  %9194 = vmatpush1.xpose.msra.mxu0 %v8708
  %9195 = vmatprep.subr.mxu0 %v8771
  %9196 = vmatpush1.xpose.msra.mxu0 %v8707
  %9197 = vmatprep.subr.mxu0 %v8770
  %9198 = vmatpush1.xpose.msra.mxu0 %v8706
  %9199 = vmatprep.subr.mxu0 %v8769
  %9200 = vmatpush1.xpose.msra.mxu0 %v8705
  %9201 = vmatprep.subr.mxu0 %v8768
  %9202 = vmatpush1.xpose.msra.mxu0 %v8704
  %9203 = vmatprep.subr.mxu0 %v8767
  %9204 = vmatpush1.xpose.msra.mxu0 %v8703
  %9205 = vmatprep.subr.mxu0 %v8766
  %9206 = vmatpush1.xpose.msra.mxu0 %v8702
  %9207 = vmatprep.subr.mxu0 %v8765
  %9208 = vmatpush1.xpose.msra.mxu0 %v8701
  %9209 = vmatprep.subr.mxu0 %v8796
  %9210 = vmatpush2.xpose.msra.mxu0 %v8732
  %9211 = vmatprep.subr.mxu0 %v8795
  %9212 = vmatpush2.xpose.msra.mxu0 %v8731
  %9213 = vmatprep.subr.mxu0 %v8794
  %9214 = vmatpush2.xpose.msra.mxu0 %v8730
  %9215 = vmatprep.subr.mxu0 %v8793
  %9216 = vmatpush2.xpose.msra.mxu0 %v8729
  %9217 = vmatprep.subr.mxu0 %v8792
  %9218 = vmatpush2.xpose.msra.mxu0 %v8728
  %9219 = vmatprep.subr.mxu0 %v8791
  %9220 = vmatpush2.xpose.msra.mxu0 %v8727
  %9221 = vmatprep.subr.mxu0 %v8790
  %9222 = vmatpush2.xpose.msra.mxu0 %v8726
  %9223 = vmatprep.subr.mxu0 %v8789
  %9224 = vmatpush2.xpose.msra.mxu0 %v8725
  %9225 = vmatprep.subr.mxu0 %v8788
  %9226 = vmatpush2.xpose.msra.mxu0 %v8724
  %9227 = vmatprep.subr.mxu0 %v8787
  %9228 = vmatpush2.xpose.msra.mxu0 %v8723
  %9229 = vmatprep.subr.mxu0 %v8786
  %9230 = vmatpush2.xpose.msra.mxu0 %v8722
  %9231 = vmatprep.subr.mxu0 %v8785
  %9232 = vmatpush2.xpose.msra.mxu0 %v8721
  %9233 = vmatprep.subr.mxu0 %v8784
  %9234 = vmatpush2.xpose.msra.mxu0 %v8720
  %9235 = vmatprep.subr.mxu0 %v8783
  %9236 = vmatpush2.xpose.msra.mxu0 %v8719
  %9237 = vmatprep.subr.mxu0 %v8782
  %9238 = vmatpush2.xpose.msra.mxu0 %v8718
  %9239 = vmatprep.subr.mxu0 %v8781
  %9240 = vmatpush2.xpose.msra.mxu0 %v8717
  %9241 = vmatprep.mubr.f32.mxu0 %v8966
  %9242 = vmatmul.mubr.f32.gmra.mxu0 %v8962
  %v9243 = vpop.f32.mrf.mxu0
  %v9244 = vadd.f32 0.0, %v9243
  %v9245 = vpop.f32.mrf.mxu0
  %v9246 = vadd.f32 0.0, %v9245
  %9247 = vdwg.mxu0
  %9248 = vmatprep.subr.mxu0 %v8908
  %9249 = vmatpush1.xpose.msra.mxu0 %v8844
  %9250 = vmatprep.subr.mxu0 %v8907
  %9251 = vmatpush1.xpose.msra.mxu0 %v8843
  %9252 = vmatprep.subr.mxu0 %v8906
  %9253 = vmatpush1.xpose.msra.mxu0 %v8842
  %9254 = vmatprep.subr.mxu0 %v8905
  %9255 = vmatpush1.xpose.msra.mxu0 %v8841
  %9256 = vmatprep.subr.mxu0 %v8904
  %9257 = vmatpush1.xpose.msra.mxu0 %v8840
  %9258 = vmatprep.subr.mxu0 %v8903
  %9259 = vmatpush1.xpose.msra.mxu0 %v8839
  %9260 = vmatprep.subr.mxu0 %v8902
  %9261 = vmatpush1.xpose.msra.mxu0 %v8838
  %9262 = vmatprep.subr.mxu0 %v8901
  %9263 = vmatpush1.xpose.msra.mxu0 %v8837
  %9264 = vmatprep.subr.mxu0 %v8900
  %9265 = vmatpush1.xpose.msra.mxu0 %v8836
  %9266 = vmatprep.subr.mxu0 %v8899
  %9267 = vmatpush1.xpose.msra.mxu0 %v8835
  %9268 = vmatprep.subr.mxu0 %v8898
  %9269 = vmatpush1.xpose.msra.mxu0 %v8834
  %9270 = vmatprep.subr.mxu0 %v8897
  %9271 = vmatpush1.xpose.msra.mxu0 %v8833
  %9272 = vmatprep.subr.mxu0 %v8896
  %9273 = vmatpush1.xpose.msra.mxu0 %v8832
  %9274 = vmatprep.subr.mxu0 %v8895
  %9275 = vmatpush1.xpose.msra.mxu0 %v8831
  %9276 = vmatprep.subr.mxu0 %v8894
  %9277 = vmatpush1.xpose.msra.mxu0 %v8830
  %9278 = vmatprep.subr.mxu0 %v8893
  %9279 = vmatpush1.xpose.msra.mxu0 %v8829
  %9280 = vmatprep.subr.mxu0 %v8924
  %9281 = vmatpush2.xpose.msra.mxu0 %v8860
  %9282 = vmatprep.subr.mxu0 %v8923
  %9283 = vmatpush2.xpose.msra.mxu0 %v8859
  %9284 = vmatprep.subr.mxu0 %v8922
  %9285 = vmatpush2.xpose.msra.mxu0 %v8858
  %9286 = vmatprep.subr.mxu0 %v8921
  %9287 = vmatpush2.xpose.msra.mxu0 %v8857
  %9288 = vmatprep.subr.mxu0 %v8920
  %9289 = vmatpush2.xpose.msra.mxu0 %v8856
  %9290 = vmatprep.subr.mxu0 %v8919
  %9291 = vmatpush2.xpose.msra.mxu0 %v8855
  %9292 = vmatprep.subr.mxu0 %v8918
  %9293 = vmatpush2.xpose.msra.mxu0 %v8854
  %9294 = vmatprep.subr.mxu0 %v8917
  %9295 = vmatpush2.xpose.msra.mxu0 %v8853
  %9296 = vmatprep.subr.mxu0 %v8916
  %9297 = vmatpush2.xpose.msra.mxu0 %v8852
  %9298 = vmatprep.subr.mxu0 %v8915
  %9299 = vmatpush2.xpose.msra.mxu0 %v8851
  %9300 = vmatprep.subr.mxu0 %v8914
  %9301 = vmatpush2.xpose.msra.mxu0 %v8850
  %9302 = vmatprep.subr.mxu0 %v8913
  %9303 = vmatpush2.xpose.msra.mxu0 %v8849
  %9304 = vmatprep.subr.mxu0 %v8912
  %9305 = vmatpush2.xpose.msra.mxu0 %v8848
  %9306 = vmatprep.subr.mxu0 %v8911
  %9307 = vmatpush2.xpose.msra.mxu0 %v8847
  %9308 = vmatprep.subr.mxu0 %v8910
  %9309 = vmatpush2.xpose.msra.mxu0 %v8846
  %9310 = vmatprep.subr.mxu0 %v8909
  %9311 = vmatpush2.xpose.msra.mxu0 %v8845
  %9312 = vmatprep.mubr.f32.mxu0 %v8974
  %9313 = vmatmul.mubr.f32.gmra.mxu0 %v8970
  %v9314 = vpop.f32.mrf.mxu0
  %v9315 = vadd.f32 %v9244, %v9314
  %v9316 = vpop.f32.mrf.mxu0
  %v9317 = vadd.f32 %v9246, %v9316
  %9318 = vdwg.mxu0
  %9319 = vmatprep.subr.mxu0 0.0
  %9320 = vmatpush1.xpose.msra.mxu0 %v9031
  %9321 = vmatprep.subr.mxu0 0.0
  %9322 = vmatpush1.xpose.msra.mxu0 %v9028
  %9323 = vmatprep.subr.mxu0 0.0
  %9324 = vmatpush1.xpose.msra.mxu0 %v9025
  %9325 = vmatprep.subr.mxu0 0.0
  %9326 = vmatpush1.xpose.msra.mxu0 %v9022
  %9327 = vmatprep.subr.mxu0 0.0
  %9328 = vmatpush1.xpose.msra.mxu0 %v9019
  %9329 = vmatprep.subr.mxu0 0.0
  %9330 = vmatpush1.xpose.msra.mxu0 %v9016
  %9331 = vmatprep.subr.mxu0 0.0
  %9332 = vmatpush1.xpose.msra.mxu0 %v9013
  %9333 = vmatprep.subr.mxu0 0.0
  %9334 = vmatpush1.xpose.msra.mxu0 %v9010
  %9335 = vmatprep.subr.mxu0 0.0
  %9336 = vmatpush1.xpose.msra.mxu0 %v9007
  %9337 = vmatprep.subr.mxu0 0.0
  %9338 = vmatpush1.xpose.msra.mxu0 %v9004
  %9339 = vmatprep.subr.mxu0 0.0
  %9340 = vmatpush1.xpose.msra.mxu0 %v9001
  %9341 = vmatprep.subr.mxu0 0.0
  %9342 = vmatpush1.xpose.msra.mxu0 %v8998
  %9343 = vmatprep.subr.mxu0 0.0
  %9344 = vmatpush1.xpose.msra.mxu0 %v8995
  %9345 = vmatprep.subr.mxu0 0.0
  %9346 = vmatpush1.xpose.msra.mxu0 %v8992
  %9347 = vmatprep.subr.mxu0 0.0
  %9348 = vmatpush1.xpose.msra.mxu0 %v8989
  %9349 = vmatprep.subr.mxu0 0.0
  %9350 = vmatpush1.xpose.msra.mxu0 %v8986
  %9351 = vmatprep.subr.mxu0 0.0
  %9352 = vmatpush2.xpose.msra.mxu0 %v9079
  %9353 = vmatprep.subr.mxu0 0.0
  %9354 = vmatpush2.xpose.msra.mxu0 %v9076
  %9355 = vmatprep.subr.mxu0 0.0
  %9356 = vmatpush2.xpose.msra.mxu0 %v9073
  %9357 = vmatprep.subr.mxu0 0.0
  %9358 = vmatpush2.xpose.msra.mxu0 %v9070
  %9359 = vmatprep.subr.mxu0 0.0
  %9360 = vmatpush2.xpose.msra.mxu0 %v9067
  %9361 = vmatprep.subr.mxu0 0.0
  %9362 = vmatpush2.xpose.msra.mxu0 %v9064
  %9363 = vmatprep.subr.mxu0 0.0
  %9364 = vmatpush2.xpose.msra.mxu0 %v9061
  %9365 = vmatprep.subr.mxu0 0.0
  %9366 = vmatpush2.xpose.msra.mxu0 %v9058
  %9367 = vmatprep.subr.mxu0 0.0
  %9368 = vmatpush2.xpose.msra.mxu0 %v9055
  %9369 = vmatprep.subr.mxu0 0.0
  %9370 = vmatpush2.xpose.msra.mxu0 %v9052
  %9371 = vmatprep.subr.mxu0 0.0
  %9372 = vmatpush2.xpose.msra.mxu0 %v9049
  %9373 = vmatprep.subr.mxu0 0.0
  %9374 = vmatpush2.xpose.msra.mxu0 %v9046
  %9375 = vmatprep.subr.mxu0 0.0
  %9376 = vmatpush2.xpose.msra.mxu0 %v9043
  %9377 = vmatprep.subr.mxu0 0.0
  %9378 = vmatpush2.xpose.msra.mxu0 %v9040
  %9379 = vmatprep.subr.mxu0 0.0
  %9380 = vmatpush2.xpose.msra.mxu0 %v9037
  %9381 = vmatprep.subr.mxu0 0.0
  %9382 = vmatpush2.xpose.msra.mxu0 %v9034
  %9383 = vmatprep.mubr.f32.mxu0 0.0
  %9384 = vmatmul.mubr.f32.gmra.mxu0 %v8983
  %v9385 = vpop.f32.mrf.mxu0
  %v9386 = vadd.f32 %v9315, %v9385
  %v9387 = vpop.f32.mrf.mxu0
  %v9388 = vadd.f32 %v9317, %v9387
  %9389 = vdwg.mxu0
  %9390 = vmatprep.subr.mxu0 %v8812
  %9391 = vmatpush1.xpose.msra.mxu0 %v8748
  %9392 = vmatprep.subr.mxu0 %v8811
  %9393 = vmatpush1.xpose.msra.mxu0 %v8747
  %9394 = vmatprep.subr.mxu0 %v8810
  %9395 = vmatpush1.xpose.msra.mxu0 %v8746
  %9396 = vmatprep.subr.mxu0 %v8809
  %9397 = vmatpush1.xpose.msra.mxu0 %v8745
  %9398 = vmatprep.subr.mxu0 %v8808
  %9399 = vmatpush1.xpose.msra.mxu0 %v8744
  %9400 = vmatprep.subr.mxu0 %v8807
  %9401 = vmatpush1.xpose.msra.mxu0 %v8743
  %9402 = vmatprep.subr.mxu0 %v8806
  %9403 = vmatpush1.xpose.msra.mxu0 %v8742
  %9404 = vmatprep.subr.mxu0 %v8805
  %9405 = vmatpush1.xpose.msra.mxu0 %v8741
  %9406 = vmatprep.subr.mxu0 %v8804
  %9407 = vmatpush1.xpose.msra.mxu0 %v8740
  %9408 = vmatprep.subr.mxu0 %v8803
  %9409 = vmatpush1.xpose.msra.mxu0 %v8739
  %9410 = vmatprep.subr.mxu0 %v8802
  %9411 = vmatpush1.xpose.msra.mxu0 %v8738
  %9412 = vmatprep.subr.mxu0 %v8801
  %9413 = vmatpush1.xpose.msra.mxu0 %v8737
  %9414 = vmatprep.subr.mxu0 %v8800
  %9415 = vmatpush1.xpose.msra.mxu0 %v8736
  %9416 = vmatprep.subr.mxu0 %v8799
  %9417 = vmatpush1.xpose.msra.mxu0 %v8735
  %9418 = vmatprep.subr.mxu0 %v8798
  %9419 = vmatpush1.xpose.msra.mxu0 %v8734
  %9420 = vmatprep.subr.mxu0 %v8797
  %9421 = vmatpush1.xpose.msra.mxu0 %v8733
  %9422 = vmatprep.subr.mxu0 %v8828
  %9423 = vmatpush2.xpose.msra.mxu0 %v8764
  %9424 = vmatprep.subr.mxu0 %v8827
  %9425 = vmatpush2.xpose.msra.mxu0 %v8763
  %9426 = vmatprep.subr.mxu0 %v8826
  %9427 = vmatpush2.xpose.msra.mxu0 %v8762
  %9428 = vmatprep.subr.mxu0 %v8825
  %9429 = vmatpush2.xpose.msra.mxu0 %v8761
  %9430 = vmatprep.subr.mxu0 %v8824
  %9431 = vmatpush2.xpose.msra.mxu0 %v8760
  %9432 = vmatprep.subr.mxu0 %v8823
  %9433 = vmatpush2.xpose.msra.mxu0 %v8759
  %9434 = vmatprep.subr.mxu0 %v8822
  %9435 = vmatpush2.xpose.msra.mxu0 %v8758
  %9436 = vmatprep.subr.mxu0 %v8821
  %9437 = vmatpush2.xpose.msra.mxu0 %v8757
  %9438 = vmatprep.subr.mxu0 %v8820
  %9439 = vmatpush2.xpose.msra.mxu0 %v8756
  %9440 = vmatprep.subr.mxu0 %v8819
  %9441 = vmatpush2.xpose.msra.mxu0 %v8755
  %9442 = vmatprep.subr.mxu0 %v8818
  %9443 = vmatpush2.xpose.msra.mxu0 %v8754
  %9444 = vmatprep.subr.mxu0 %v8817
  %9445 = vmatpush2.xpose.msra.mxu0 %v8753
  %9446 = vmatprep.subr.mxu0 %v8816
  %9447 = vmatpush2.xpose.msra.mxu0 %v8752
  %9448 = vmatprep.subr.mxu0 %v8815
  %9449 = vmatpush2.xpose.msra.mxu0 %v8751
  %9450 = vmatprep.subr.mxu0 %v8814
  %9451 = vmatpush2.xpose.msra.mxu0 %v8750
  %9452 = vmatprep.subr.mxu0 %v8813
  %9453 = vmatpush2.xpose.msra.mxu0 %v8749
  %9454 = vmatprep.mubr.f32.mxu0 %v8966
  %9455 = vmatmul.mubr.f32.gmra.mxu0 %v8962
  %v9456 = vpop.f32.mrf.mxu0
  %v9457 = vadd.f32 0.0, %v9456
  %v9458 = vpop.f32.mrf.mxu0
  %v9459 = vadd.f32 0.0, %v9458
  %9460 = vdwg.mxu0
  %9461 = vmatprep.subr.mxu0 %v8940
  %9462 = vmatpush1.xpose.msra.mxu0 %v8876
  %9463 = vmatprep.subr.mxu0 %v8939
  %9464 = vmatpush1.xpose.msra.mxu0 %v8875
  %9465 = vmatprep.subr.mxu0 %v8938
  %9466 = vmatpush1.xpose.msra.mxu0 %v8874
  %9467 = vmatprep.subr.mxu0 %v8937
  %9468 = vmatpush1.xpose.msra.mxu0 %v8873
  %9469 = vmatprep.subr.mxu0 %v8936
  %9470 = vmatpush1.xpose.msra.mxu0 %v8872
  %9471 = vmatprep.subr.mxu0 %v8935
  %9472 = vmatpush1.xpose.msra.mxu0 %v8871
  %9473 = vmatprep.subr.mxu0 %v8934
  %9474 = vmatpush1.xpose.msra.mxu0 %v8870
  %9475 = vmatprep.subr.mxu0 %v8933
  %9476 = vmatpush1.xpose.msra.mxu0 %v8869
  %9477 = vmatprep.subr.mxu0 %v8932
  %9478 = vmatpush1.xpose.msra.mxu0 %v8868
  %9479 = vmatprep.subr.mxu0 %v8931
  %9480 = vmatpush1.xpose.msra.mxu0 %v8867
  %9481 = vmatprep.subr.mxu0 %v8930
  %9482 = vmatpush1.xpose.msra.mxu0 %v8866
  %9483 = vmatprep.subr.mxu0 %v8929
  %9484 = vmatpush1.xpose.msra.mxu0 %v8865
  %9485 = vmatprep.subr.mxu0 %v8928
  %9486 = vmatpush1.xpose.msra.mxu0 %v8864
  %9487 = vmatprep.subr.mxu0 %v8927
  %9488 = vmatpush1.xpose.msra.mxu0 %v8863
  %9489 = vmatprep.subr.mxu0 %v8926
  %9490 = vmatpush1.xpose.msra.mxu0 %v8862
  %9491 = vmatprep.subr.mxu0 %v8925
  %9492 = vmatpush1.xpose.msra.mxu0 %v8861
  %9493 = vmatprep.subr.mxu0 %v8956
  %9494 = vmatpush2.xpose.msra.mxu0 %v8892
  %9495 = vmatprep.subr.mxu0 %v8955
  %9496 = vmatpush2.xpose.msra.mxu0 %v8891
  %9497 = vmatprep.subr.mxu0 %v8954
  %9498 = vmatpush2.xpose.msra.mxu0 %v8890
  %9499 = vmatprep.subr.mxu0 %v8953
  %9500 = vmatpush2.xpose.msra.mxu0 %v8889
  %9501 = vmatprep.subr.mxu0 %v8952
  %9502 = vmatpush2.xpose.msra.mxu0 %v8888
  %9503 = vmatprep.subr.mxu0 %v8951
  %9504 = vmatpush2.xpose.msra.mxu0 %v8887
  %9505 = vmatprep.subr.mxu0 %v8950
  %9506 = vmatpush2.xpose.msra.mxu0 %v8886
  %9507 = vmatprep.subr.mxu0 %v8949
  %9508 = vmatpush2.xpose.msra.mxu0 %v8885
  %9509 = vmatprep.subr.mxu0 %v8948
  %9510 = vmatpush2.xpose.msra.mxu0 %v8884
  %9511 = vmatprep.subr.mxu0 %v8947
  %9512 = vmatpush2.xpose.msra.mxu0 %v8883
  %9513 = vmatprep.subr.mxu0 %v8946
  %9514 = vmatpush2.xpose.msra.mxu0 %v8882
  %9515 = vmatprep.subr.mxu0 %v8945
  %9516 = vmatpush2.xpose.msra.mxu0 %v8881
  %9517 = vmatprep.subr.mxu0 %v8944
  %9518 = vmatpush2.xpose.msra.mxu0 %v8880
  %9519 = vmatprep.subr.mxu0 %v8943
  %9520 = vmatpush2.xpose.msra.mxu0 %v8879
  %9521 = vmatprep.subr.mxu0 %v8942
  %9522 = vmatpush2.xpose.msra.mxu0 %v8878
  %9523 = vmatprep.subr.mxu0 %v8941
  %9524 = vmatpush2.xpose.msra.mxu0 %v8877
  %9525 = vmatprep.mubr.f32.mxu0 %v8974
  %9526 = vmatmul.mubr.f32.gmra.mxu0 %v8970
  %v9527 = vpop.f32.mrf.mxu0
  %v9528 = vadd.f32 %v9457, %v9527
  %v9529 = vpop.f32.mrf.mxu0
  %v9530 = vadd.f32 %v9459, %v9529
  %9531 = vdwg.mxu0
  %9532 = vmatprep.subr.mxu0 0.0
  %9533 = vmatpush1.xpose.msra.mxu0 %v9127
  %9534 = vmatprep.subr.mxu0 0.0
  %9535 = vmatpush1.xpose.msra.mxu0 %v9124
  %9536 = vmatprep.subr.mxu0 0.0
  %9537 = vmatpush1.xpose.msra.mxu0 %v9121
  %9538 = vmatprep.subr.mxu0 0.0
  %9539 = vmatpush1.xpose.msra.mxu0 %v9118
  %9540 = vmatprep.subr.mxu0 0.0
  %9541 = vmatpush1.xpose.msra.mxu0 %v9115
  %9542 = vmatprep.subr.mxu0 0.0
  %9543 = vmatpush1.xpose.msra.mxu0 %v9112
  %9544 = vmatprep.subr.mxu0 0.0
  %9545 = vmatpush1.xpose.msra.mxu0 %v9109
  %9546 = vmatprep.subr.mxu0 0.0
  %9547 = vmatpush1.xpose.msra.mxu0 %v9106
  %9548 = vmatprep.subr.mxu0 0.0
  %9549 = vmatpush1.xpose.msra.mxu0 %v9103
  %9550 = vmatprep.subr.mxu0 0.0
  %9551 = vmatpush1.xpose.msra.mxu0 %v9100
  %9552 = vmatprep.subr.mxu0 0.0
  %9553 = vmatpush1.xpose.msra.mxu0 %v9097
  %9554 = vmatprep.subr.mxu0 0.0
  %9555 = vmatpush1.xpose.msra.mxu0 %v9094
  %9556 = vmatprep.subr.mxu0 0.0
  %9557 = vmatpush1.xpose.msra.mxu0 %v9091
  %9558 = vmatprep.subr.mxu0 0.0
  %9559 = vmatpush1.xpose.msra.mxu0 %v9088
  %9560 = vmatprep.subr.mxu0 0.0
  %9561 = vmatpush1.xpose.msra.mxu0 %v9085
  %9562 = vmatprep.subr.mxu0 0.0
  %9563 = vmatpush1.xpose.msra.mxu0 %v9082
  %9564 = vmatprep.subr.mxu0 0.0
  %9565 = vmatpush2.xpose.msra.mxu0 %v9175
  %9566 = vmatprep.subr.mxu0 0.0
  %9567 = vmatpush2.xpose.msra.mxu0 %v9172
  %9568 = vmatprep.subr.mxu0 0.0
  %9569 = vmatpush2.xpose.msra.mxu0 %v9169
  %9570 = vmatprep.subr.mxu0 0.0
  %9571 = vmatpush2.xpose.msra.mxu0 %v9166
  %9572 = vmatprep.subr.mxu0 0.0
  %9573 = vmatpush2.xpose.msra.mxu0 %v9163
  %9574 = vmatprep.subr.mxu0 0.0
  %9575 = vmatpush2.xpose.msra.mxu0 %v9160
  %9576 = vmatprep.subr.mxu0 0.0
  %9577 = vmatpush2.xpose.msra.mxu0 %v9157
  %9578 = vmatprep.subr.mxu0 0.0
  %9579 = vmatpush2.xpose.msra.mxu0 %v9154
  %9580 = vmatprep.subr.mxu0 0.0
  %9581 = vmatpush2.xpose.msra.mxu0 %v9151
  %9582 = vmatprep.subr.mxu0 0.0
  %9583 = vmatpush2.xpose.msra.mxu0 %v9148
  %9584 = vmatprep.subr.mxu0 0.0
  %9585 = vmatpush2.xpose.msra.mxu0 %v9145
  %9586 = vmatprep.subr.mxu0 0.0
  %9587 = vmatpush2.xpose.msra.mxu0 %v9142
  %9588 = vmatprep.subr.mxu0 0.0
  %9589 = vmatpush2.xpose.msra.mxu0 %v9139
  %9590 = vmatprep.subr.mxu0 0.0
  %9591 = vmatpush2.xpose.msra.mxu0 %v9136
  %9592 = vmatprep.subr.mxu0 0.0
  %9593 = vmatpush2.xpose.msra.mxu0 %v9133
  %9594 = vmatprep.subr.mxu0 0.0
  %9595 = vmatpush2.xpose.msra.mxu0 %v9130
  %9596 = vmatprep.mubr.f32.mxu0 0.0
  %9597 = vmatmul.mubr.f32.gmra.mxu0 %v8983
  %v9598 = vpop.f32.mrf.mxu0
  %v9599 = vadd.f32 %v9528, %v9598
  %v9600 = vpop.f32.mrf.mxu0
  %v9601 = vadd.f32 %v9530, %v9600
  %9602 = vdwg.mxu0
  %v9603 = vmax.f32 %v9386, 0.0
  %v9604 = vmax.f32 %v9388, 0.0
  %v9605 = vmax.f32 %v9599, 0.0
  %v9606 = vmax.f32 %v9601, 0.0
  %v9611 = vcombine.low %v9603, %v9604
  %v9612 = vcombine.low %v9605, %v9606
  %v9614 = vunpack.c.l.s4 1966171168
  %v9615 = vunpack.c.0.s8 %v9614
  %v9616 = vlaneseq
  %v9617 = vshrl.u32 %v9616, 7
  %v9618 = vsub.s32 %v9615, %v9617
  %v9619 = vrot.slane %v9611, %v9618
  %v9621 = vunpack.c.l.s4 1966171168
  %v9622 = vunpack.c.0.s8 %v9621
  %v9623 = vlaneseq
  %v9624 = vshrl.u32 %v9623, 7
  %v9625 = vsub.s32 %v9622, %v9624
  %v9626 = vrot.slane %v9612, %v9625
  %v9627 = vcombine.low %v9619, %v9626
  %v9629 = vunpack.c.l.s4 1966171168
  %v9630 = vunpack.c.0.s8 %v9629
  %v9631 = vlaneseq
  %v9632 = vshrl.u32 %v9631, 7
  %v9633 = vsub.s32 %v9630, %v9632
  %v9634 = vrot.slane %v9627, %v9633
  %v9636 = vlaneseq
  %vm9637 = vcmp.ge.s32.totalorder %v9636, 0
  %vm9638 = vcmp.lt.s32.totalorder %v9636, 512
  %vm9639 = vmand %vm9637, %vm9638
  %9640 = vst.msk [vmem:[%s8] sm:$0xf] %vm9639, %v9634
  // Predicated region
  $region34: #{estmator_forward.1} parent=0 // pred_check
    _
  $region35: #{estmator_forward.1} parent=0 // pred_check_branch
    %9642 = sbr.rel (0) target = $region37
  $region36: #{estmator_forward.1} parent=0 // pred_region
    _
  $region37: #{estmator_forward.1} parent=0 // pred_fallthru
    _
  // Predicated region
  $region38: #{estmator_forward.1} parent=0 // pred_check
    _
  $region39: #{estmator_forward.1} parent=0 // pred_check_branch
    %9644 = sbr.rel (0) target = $region41
  $region40: #{estmator_forward.1} parent=0 // pred_region
    _
  $region41: #{estmator_forward.1} parent=0 // pred_fallthru
    _

</llo_original>
